<compile_context>
chip_gen: v7x
topology: tpu7x:2x2x1
jax: 0.10.0
libtpu: 0.0.40
codegen_flags: <defaults>
</compile_context>

<pallas_src>
import functools

import jax
import jax.numpy as jnp
from jax.experimental import pallas as pl
from jax.experimental.pallas import tpu as pltpu

# ----------------------------- configuration --------------------------------
# (scaled-down but structurally identical to the reference module)
B          = 2     # batch
SEQ        = 8     # encoder (text) length
T_FRAMES   = 3     # number of decoded mel frames
VOCAB      = 50    # in_size for the embedding
EMBED      = 32    # hp.embed_size
ENC_H      = 64    # hp.enc_h_size  (== attention/context size)
PRENET     = 64    # num_prenet_features
HIDDEN     = 128   # decoder LSTM hidden_size
NUM_LAYERS = 2
NUM_MELS   = 80
ATT        = 64    # attention projection size
POSTNET_CH = 128   # PostNet channels (512 in the original) - lane-dense
K          = 5     # PostNet conv kernel size
PAD        = 2     # PostNet conv padding
BN_EPS     = 1e-5
OUT_PAD    = 128   # merged spec(80)+stop(1) projection padded to 128 lanes


def _vmem():
    return pl.BlockSpec(memory_space=pltpu.MemorySpace.VMEM)


def _bf16(x):
    return x.astype(jnp.bfloat16)


# ------------------------------ Pallas kernels -------------------------------
def _encoder_kernel(emb_ref, ew_ref, eb_ref, we_ref, enc_ref, encp_ref):
    # emb: (B*S, EMBED) f32, ew: (EMBED, ENC_H) bf16, we: (ENC_H, ATT) bf16.
    # Fuses encoder stand-in (Linear+tanh) with the query-independent attention
    # "memory" projection so both are produced in a single launch.
    h = jnp.tanh(jnp.dot(_bf16(emb_ref[...]), ew_ref[...],
                         preferred_element_type=jnp.float32) + eb_ref[...])
    enc_ref[...] = h
    encp_ref[...] = jnp.dot(_bf16(h), we_ref[...],
                            preferred_element_type=jnp.float32)


def _decoder_kernel(prev_ref, enc_ref, encp_ref,
                    pw1_ref, pb1_ref, pw2_ref, pb2_ref,
                    wq_ref, v_ref,
                    wih0x_ref, wih0c_ref, whh0_ref, b0_ref,
                    wih1_ref, whh1_ref, b1_ref,
                    pwh_ref, pwc_ref, pb_ref,
                    out_ref,
                    h0, c0, h1, c1):
    # One fused decoder step per grid iteration t (grid axis = frames,
    # "arbitrary"); LSTM state persists in VMEM scratch across iterations.
    t = pl.program_id(0)

    @pl.when(t == 0)
    def _():
        h0[...] = jnp.zeros_like(h0)
        c0[...] = jnp.zeros_like(c0)
        h1[...] = jnp.zeros_like(h1)
        c1[...] = jnp.zeros_like(c1)

    def dot(a, b):
        # bf16 MXU inputs, f32 accumulation (weights already bf16).
        return jnp.dot(_bf16(a), b, preferred_element_type=jnp.float32)

    prev = prev_ref[0]                                          # (B, NUM_MELS)

    # ---- PreNet (Dropout p=0.5 omitted: inference semantics) ----
    x = jnp.maximum(dot(prev, pw1_ref[...]) + pb1_ref[...], 0.0)
    x = jnp.maximum(dot(x, pw2_ref[...]) + pb2_ref[...], 0.0)    # (B, PRENET)

    # ---- additive attention (query = top hidden state, pre-update) ----
    q = dot(h1[...], wq_ref[...])                                # (B, ATT)
    e = jnp.tanh(q[:, None, :] + encp_ref[...])                  # (B, S, ATT)
    scores = jnp.sum(e * v_ref[...][None, :, :], axis=-1)        # (B, S)
    scores = scores - jnp.max(scores, axis=-1, keepdims=True)
    w = jnp.exp(scores)
    w = w * pl.reciprocal(jnp.sum(w, axis=-1, keepdims=True), approx=True)
    context = jnp.sum(w[:, :, None] * enc_ref[...], axis=1)      # (B, ENC_H)

    # ---- LSTM layer 0 (rnn_input = [prenet, context] via split matmuls) ----
    gates0 = (dot(x, wih0x_ref[...]) + dot(context, wih0c_ref[...])
              + dot(h0[...], whh0_ref[...]) + b0_ref[...])       # (B, 4H)
    i0 = jax.nn.sigmoid(gates0[:, 0 * HIDDEN:1 * HIDDEN])
    f0 = jax.nn.sigmoid(gates0[:, 1 * HIDDEN:2 * HIDDEN])
    g0 = jnp.tanh(gates0[:, 2 * HIDDEN:3 * HIDDEN])
    o0 = jax.nn.sigmoid(gates0[:, 3 * HIDDEN:4 * HIDDEN])
    c0_new = f0 * c0[...] + i0 * g0
    h0_new = o0 * jnp.tanh(c0_new)
    c0[...] = c0_new
    h0[...] = h0_new
    # TODO(synk): inter-layer LSTM dropout(0.1) omitted (inference semantics).

    # ---- LSTM layer 1 ----
    gates1 = (dot(h0_new, wih1_ref[...]) + dot(h1[...], whh1_ref[...])
              + b1_ref[...])
    i1 = jax.nn.sigmoid(gates1[:, 0 * HIDDEN:1 * HIDDEN])
    f1 = jax.nn.sigmoid(gates1[:, 1 * HIDDEN:2 * HIDDEN])
    g1 = jnp.tanh(gates1[:, 2 * HIDDEN:3 * HIDDEN])
    o1 = jax.nn.sigmoid(gates1[:, 3 * HIDDEN:4 * HIDDEN])
    c1_new = f1 * c1[...] + i1 * g1
    h1_new = o1 * jnp.tanh(c1_new)
    c1[...] = c1_new
    h1[...] = h1_new

    # ---- merged spec(80)+stop(1) projection, lane-dense 128-wide output ----
    out_ref[0] = (dot(h1_new, pwh_ref[...]) + dot(context, pwc_ref[...])
                  + pb_ref[...])


def _conv_kernel(x_ref, w_ref, scale_ref, shift_ref, o_ref, *, apply_tanh):
    # Conv1d (as im2col matmul, bf16 MXU) + folded BatchNorm1d(+bias) + tanh.
    y = jnp.dot(x_ref[...], w_ref[...], preferred_element_type=jnp.float32)
    y = y * scale_ref[...] + shift_ref[...]
    if apply_tanh:
        y = jnp.tanh(y)
    o_ref[...] = y


# ------------------------------ kernel wrappers -------------------------------
def encoder_forward(emb_flat, enc_w_bf16, enc_b_row, att_we_bf16):
    rows = emb_flat.shape[0]
    enc, encp = pl.pallas_call(
        _encoder_kernel,
        out_shape=(jax.ShapeDtypeStruct((rows, ENC_H), jnp.float32),
                   jax.ShapeDtypeStruct((rows, ATT), jnp.float32)),
        in_specs=[_vmem()] * 4,
        out_specs=(_vmem(), _vmem()),
    )(emb_flat, enc_w_bf16, enc_b_row, att_we_bf16)
    return enc, encp


def decode_frames(params, encoder_out, enc_proj, prev_inputs):
    bb, s, _ = encoder_out.shape
    t_frames = prev_inputs.shape[0]

    # Split / merge weights so all concatenations become in-kernel matmul sums.
    wih0 = params["lstm_wih0"]                               # (PRENET+ENC_H, 4H)
    wih0x, wih0c = _bf16(wih0[:PRENET]), _bf16(wih0[PRENET:])
    wide_w = jnp.concatenate([params["spec_w"], params["stop_w"]], axis=1)
    wide_w = jnp.pad(wide_w, ((0, 0), (0, OUT_PAD - wide_w.shape[1])))
    wide_b = jnp.concatenate([params["spec_b"], params["stop_b"]])
    wide_b = jnp.pad(wide_b, (0, OUT_PAD - wide_b.shape[0])).reshape(1, OUT_PAD)
    pwh, pwc = _bf16(wide_w[:HIDDEN]), _bf16(wide_w[HIDDEN:])

    operands = [
        prev_inputs,                                         # (T, B, NUM_MELS)
        encoder_out, enc_proj,                               # grid-invariant
        _bf16(params["prenet_w1"]), params["prenet_b1"].reshape(1, PRENET),
        _bf16(params["prenet_w2"]), params["prenet_b2"].reshape(1, PRENET),
        _bf16(params["att_wq"]), params["att_v"],
        wih0x, wih0c, _bf16(params["lstm_whh0"]), params["lstm_b0"],
        _bf16(params["lstm_wih1"]), _bf16(params["lstm_whh1"]), params["lstm_b1"],
        pwh, pwc, wide_b,
    ]

    def invariant(shape):
        return pl.BlockSpec(shape, lambda t: (0,) * len(shape))

    in_specs = [pl.BlockSpec((1, bb, NUM_MELS), lambda t: (t, 0, 0))]
    in_specs += [invariant(op.shape) for op in operands[1:]]

    out = pl.pallas_call(
        _decoder_kernel,
        out_shape=jax.ShapeDtypeStruct((t_frames, bb, OUT_PAD), jnp.float32),
        grid_spec=pltpu.PrefetchScalarGridSpec(
            num_scalar_prefetch=0,
            grid=(t_frames,),
            in_specs=in_specs,
            out_specs=pl.BlockSpec((1, bb, OUT_PAD), lambda t: (t, 0, 0)),
            scratch_shapes=[pltpu.VMEM((bb, HIDDEN), jnp.float32)] * 4),
        compiler_params=pltpu.CompilerParams(
            dimension_semantics=("arbitrary",)),   # sequential state over T
    )(*operands)
    return out


def _im2col(x_blc):
    # (N, L, C) -> (N*L, K*C), zero-padded by PAD on the length axis (glue).
    n, l, c = x_blc.shape
    xp = jnp.pad(x_blc, ((0, 0), (PAD, PAD), (0, 0)))
    cols = jnp.stack([xp[:, i:i + l, :] for i in range(K)], axis=2)
    return cols.reshape(n * l, K * c)


def _conv_layer(patches_bf16, wmat_bf16, scale_row, shift_row, *, apply_tanh):
    rows, kcin = patches_bf16.shape
    cout = wmat_bf16.shape[1]
    row_tile = rows // 2                       # 2-way row grid ("parallel")
    return pl.pallas_call(
        functools.partial(_conv_kernel, apply_tanh=apply_tanh),
        out_shape=jax.ShapeDtypeStruct((rows, cout), jnp.float32),
        grid_spec=pltpu.PrefetchScalarGridSpec(
            num_scalar_prefetch=0,
            grid=(rows // row_tile,),
            in_specs=[pl.BlockSpec((row_tile, kcin), lambda i: (i, 0)),
                      pl.BlockSpec((kcin, cout), lambda i: (0, 0)),
                      pl.BlockSpec((1, cout), lambda i: (0, 0)),
                      pl.BlockSpec((1, cout), lambda i: (0, 0))],
            out_specs=pl.BlockSpec((row_tile, cout), lambda i: (i, 0))),
        compiler_params=pltpu.CompilerParams(
            dimension_semantics=("parallel",)),
    )(patches_bf16, wmat_bf16, scale_row, shift_row)


def postnet_forward(params, frames_flat):
    # frames_flat: (T*B, NUM_MELS).  Matches the reference PostNet usage: the
    # Conv1d runs over the mel axis (L=NUM_MELS) with Cin=1, per frame.
    n = frames_flat.shape[0]
    x = frames_flat[:, :, None]                                  # (N, L, 1)
    for i in range(1, 5):
        w, bias = params[f"post_w{i}"], params[f"post_b{i}"]
        gamma, beta = params[f"post_gamma{i}"], params[f"post_beta{i}"]
        mean, var = params[f"post_mean{i}"], params[f"post_var{i}"]
        cout, cin = w.shape[0], w.shape[1]
        wmat = _bf16(jnp.transpose(w, (2, 1, 0)).reshape(K * cin, cout))
        scale = gamma / jnp.sqrt(var + BN_EPS)
        shift = beta + (bias - mean) * scale     # conv bias folded into BN shift
        y = _conv_layer(_bf16(_im2col(x)), wmat,
                        scale.reshape(1, cout), shift.reshape(1, cout),
                        apply_tanh=True)
        x = y.reshape(n, NUM_MELS, cout)
    # Final conv (no BN / tanh); Cout=1 padded to 128 lanes for a dense store.
    w, bias = params["post_w5"], params["post_b5"]
    cin = w.shape[1]
    wmat = jnp.transpose(w, (2, 1, 0)).reshape(K * cin, 1)
    wmat = _bf16(jnp.pad(wmat, ((0, 0), (0, OUT_PAD - 1))))
    shift = jnp.pad(bias, (0, OUT_PAD - 1)).reshape(1, OUT_PAD)
    scale = jnp.ones((1, OUT_PAD), jnp.float32)
    y = _conv_layer(_bf16(_im2col(x)), wmat, scale, shift, apply_tanh=False)
    return y[:, 0].reshape(n, NUM_MELS)


# ------------------------------- full forward ---------------------------------
def tacotron2_forward(params, text, mel_targets):
    bb, s = text.shape
    t_frames = mel_targets.shape[0]

    # Embedding lookup (CustomEmbedding stand-in; plain gather glue).
    emb = params["embed"][text].reshape(bb * s, EMBED)

    # Encoder stand-in + attention memory projection, fused in one kernel.
    enc_flat, encp_flat = encoder_forward(
        emb, _bf16(params["enc_w"]), params["enc_b"].reshape(1, ENC_H),
        _bf16(params["att_we"]))
    encoder_out = enc_flat.reshape(bb, s, ENC_H)
    enc_proj = encp_flat.reshape(bb, s, ATT)

    # teacher_forcing_ratio == 1.0: decoder input for frame t is zeros (t == 0)
    # or mel_targets[t-1]; the postnet output never feeds back, so decode all
    # frames in one gridded kernel and run the postnet once over all frames.
    prev_inputs = jnp.concatenate(
        [jnp.zeros((1, bb, NUM_MELS), jnp.float32), mel_targets[:t_frames - 1]],
        axis=0)

    dec = decode_frames(params, encoder_out, enc_proj, prev_inputs)  # (T,B,128)
    spec_raw = dec[:, :, :NUM_MELS]                                  # (T,B,M)
    stop_tokens = jnp.transpose(dec[:, :, NUM_MELS], (1, 0))         # (B,T) logits

    post = postnet_forward(params, spec_raw.reshape(t_frames * bb, NUM_MELS))
    frames = spec_raw + post.reshape(t_frames, bb, NUM_MELS)

    # init_mask: zeros, never updated (as in the reference).
    masks = jnp.zeros((bb, s, t_frames), jnp.float32)
    return frames, stop_tokens, masks


# ------------------------------ parameter init --------------------------------
def init_params(key):
    keys = jax.random.split(key, 64)
    it = iter(keys)

    def nrm(shape, scale=0.1):
        return scale * jax.random.normal(next(it), shape, dtype=jnp.float32)

    p = {}
    p["embed"] = nrm((VOCAB, EMBED))
    p["enc_w"] = nrm((EMBED, ENC_H))
    p["enc_b"] = nrm((ENC_H,))

    p["prenet_w1"] = nrm((NUM_MELS, PRENET))
    p["prenet_b1"] = nrm((PRENET,))
    p["prenet_w2"] = nrm((PRENET, PRENET))
    p["prenet_b2"] = nrm((PRENET,))

    p["att_wq"] = nrm((HIDDEN, ATT))
    p["att_we"] = nrm((ENC_H, ATT))
    p["att_v"] = nrm((1, ATT))

    p["lstm_wih0"] = nrm((PRENET + ENC_H, 4 * HIDDEN))
    p["lstm_whh0"] = nrm((HIDDEN, 4 * HIDDEN))
    p["lstm_b0"] = nrm((1, 4 * HIDDEN))       # combined b_ih + b_hh
    p["lstm_wih1"] = nrm((HIDDEN, 4 * HIDDEN))
    p["lstm_whh1"] = nrm((HIDDEN, 4 * HIDDEN))
    p["lstm_b1"] = nrm((1, 4 * HIDDEN))

    p["spec_w"] = nrm((HIDDEN + ENC_H, NUM_MELS))
    p["spec_b"] = nrm((NUM_MELS,))
    p["stop_w"] = nrm((HIDDEN + ENC_H, 1))
    p["stop_b"] = nrm((1,))

    chans = [(1, POSTNET_CH), (POSTNET_CH, POSTNET_CH), (POSTNET_CH, POSTNET_CH),
             (POSTNET_CH, POSTNET_CH), (POSTNET_CH, 1)]
    for i, (cin, cout) in enumerate(chans, start=1):
        p[f"post_w{i}"] = nrm((cout, cin, K))
        p[f"post_b{i}"] = nrm((cout,))
        if i < 5:
            p[f"post_gamma{i}"] = 1.0 + nrm((cout,), 0.01)
            p[f"post_beta{i}"] = nrm((cout,), 0.01)
            p[f"post_mean{i}"] = nrm((cout,), 0.01)
            p[f"post_var{i}"] = 1.0 + jnp.abs(nrm((cout,), 0.01))
    return p


# ----------------------------------- main -------------------------------------
if __name__ == "__main__":
    key = jax.random.PRNGKey(0)
    pkey, tkey, mkey = jax.random.split(key, 3)

    params = init_params(pkey)
    text = jax.random.randint(tkey, (B, SEQ), 0, VOCAB)                 # (B, S)
    mel_targets = jax.random.normal(mkey, (T_FRAMES, B, NUM_MELS),
                                    dtype=jnp.float32)                  # (T, B, M)

    fwd = jax.jit(tacotron2_forward)
    frames, stop_tokens, masks = fwd(params, text, mel_targets)
    jax.block_until_ready((frames, stop_tokens, masks))

    assert frames.shape == (T_FRAMES, B, NUM_MELS)
    assert stop_tokens.shape == (B, T_FRAMES)
    assert masks.shape == (B, SEQ, T_FRAMES)
    assert bool(jnp.all(jnp.isfinite(frames)))
    print("KERNEL_OK")
</pallas_src>

<mosaic_0001>
module attributes {stable_mosaic.version = 11 : i64} {
  func.func @_encoder_kernel(%arg0: memref<16x32xf32, #tpu.memory_space<vmem>>, %arg1: memref<32x64xbf16, #tpu.memory_space<vmem>>, %arg2: memref<1x64xf32, #tpu.memory_space<vmem>>, %arg3: memref<64x64xbf16, #tpu.memory_space<vmem>>, %arg4: memref<16x64xf32, #tpu.memory_space<vmem>>, %arg5: memref<16x64xf32, #tpu.memory_space<vmem>>) attributes {dimension_semantics = [], scalar_prefetch = 0 : i64, scratch_operands = 0 : i64, tpu.core_type = #tpu.core_type<tc>} {
    %c0 = arith.constant 0 : index
    %c0_0 = arith.constant 0 : index
    %0 = vector.load %arg0[%c0, %c0_0] : memref<16x32xf32, #tpu.memory_space<vmem>>, vector<16x32xf32>
    %1 = arith.truncf %0 : vector<16x32xf32> to vector<16x32xbf16>
    %c0_1 = arith.constant 0 : index
    %c0_2 = arith.constant 0 : index
    %2 = vector.load %arg1[%c0_1, %c0_2] : memref<32x64xbf16, #tpu.memory_space<vmem>>, vector<32x64xbf16>
    %cst = arith.constant dense<0.000000e+00> : vector<16x64xf32>
    %3 = tpu.matmul %1, %2, %cst {dimension_numbers = #tpu.dot_dimension_numbers<[1], [0], [0], [1], [0, 0, 1, 1], [], []>} : vector<16x32xbf16>, vector<32x64xbf16>, vector<16x64xf32> -> vector<16x64xf32>
    %c0_3 = arith.constant 0 : index
    %c0_4 = arith.constant 0 : index
    %4 = vector.load %arg2[%c0_3, %c0_4] : memref<1x64xf32, #tpu.memory_space<vmem>>, vector<1x64xf32>
    %5 = vector.broadcast %4 : vector<1x64xf32> to vector<16x64xf32>
    %6 = arith.addf %3, %5 : vector<16x64xf32>
    %7 = math.tanh %6 : vector<16x64xf32>
    %c0_5 = arith.constant 0 : index
    %c0_6 = arith.constant 0 : index
    %8 = vector.load %arg4[%c0_5, %c0_6] : memref<16x64xf32, #tpu.memory_space<vmem>>, vector<16x64xf32>
    tpu.vector_store %arg4[%c0_5, %c0_6], %7 {strides = array<i32>} : memref<16x64xf32, #tpu.memory_space<vmem>>, vector<16x64xf32>,
    %9 = arith.truncf %7 : vector<16x64xf32> to vector<16x64xbf16>
    %c0_7 = arith.constant 0 : index
    %c0_8 = arith.constant 0 : index
    %10 = vector.load %arg3[%c0_7, %c0_8] : memref<64x64xbf16, #tpu.memory_space<vmem>>, vector<64x64xbf16>
    %cst_9 = arith.constant dense<0.000000e+00> : vector<16x64xf32>
    %11 = tpu.matmul %9, %10, %cst_9 {dimension_numbers = #tpu.dot_dimension_numbers<[1], [0], [0], [1], [0, 0, 1, 1], [], []>} : vector<16x64xbf16>, vector<64x64xbf16>, vector<16x64xf32> -> vector<16x64xf32>
    %c0_10 = arith.constant 0 : index
    %c0_11 = arith.constant 0 : index
    %12 = vector.load %arg5[%c0_10, %c0_11] : memref<16x64xf32, #tpu.memory_space<vmem>>, vector<16x64xf32>
    tpu.vector_store %arg5[%c0_10, %c0_11], %11 {strides = array<i32>} : memref<16x64xf32, #tpu.memory_space<vmem>>, vector<16x64xf32>,
    return
  }
}

module attributes {stable_mosaic.version = 11 : i64} {
  func.func @_decoder_kernel(%arg0: i32, %arg1: memref<1x2x80xf32, #tpu.memory_space<vmem>>, %arg2: memref<2x8x64xf32, #tpu.memory_space<vmem>>, %arg3: memref<2x8x64xf32, #tpu.memory_space<vmem>>, %arg4: memref<80x64xbf16, #tpu.memory_space<vmem>>, %arg5: memref<1x64xf32, #tpu.memory_space<vmem>>, %arg6: memref<64x64xbf16, #tpu.memory_space<vmem>>, %arg7: memref<1x64xf32, #tpu.memory_space<vmem>>, %arg8: memref<128x64xbf16, #tpu.memory_space<vmem>>, %arg9: memref<1x64xf32, #tpu.memory_space<vmem>>, %arg10: memref<64x512xbf16, #tpu.memory_space<vmem>>, %arg11: memref<64x512xbf16, #tpu.memory_space<vmem>>, %arg12: memref<128x512xbf16, #tpu.memory_space<vmem>>, %arg13: memref<1x512xf32, #tpu.memory_space<vmem>>, %arg14: memref<128x512xbf16, #tpu.memory_space<vmem>>, %arg15: memref<128x512xbf16, #tpu.memory_space<vmem>>, %arg16: memref<1x512xf32, #tpu.memory_space<vmem>>, %arg17: memref<128x128xbf16, #tpu.memory_space<vmem>>, %arg18: memref<64x128xbf16, #tpu.memory_space<vmem>>, %arg19: memref<1x128xf32, #tpu.memory_space<vmem>>, %arg20: memref<1x2x128xf32, #tpu.memory_space<vmem>>, %arg21: memref<2x128xf32, #tpu.memory_space<vmem>>, %arg22: memref<2x128xf32, #tpu.memory_space<vmem>>, %arg23: memref<2x128xf32, #tpu.memory_space<vmem>>, %arg24: memref<2x128xf32, #tpu.memory_space<vmem>>) attributes {dimension_semantics = [#tpu.dimension_semantics<arbitrary>], iteration_bounds = array<i64: 3>, scalar_prefetch = 0 : i64, scratch_operands = 4 : i64, tpu.core_type = #tpu.core_type<tc>, window_params = [{transform_indices = @transform_0, window_bounds = array<i64: 1, 2, 80>}, {pipeline_mode = #tpu.pipeline_mode<synchronous>, transform_indices = @transform_1, window_bounds = array<i64: 2, 8, 64>}, {pipeline_mode = #tpu.pipeline_mode<synchronous>, transform_indices = @transform_2, window_bounds = array<i64: 2, 8, 64>}, {pipeline_mode = #tpu.pipeline_mode<synchronous>, transform_indices = @transform_3, window_bounds = array<i64: 80, 64>}, {pipeline_mode = #tpu.pipeline_mode<synchronous>, transform_indices = @transform_4, window_bounds = array<i64: 1, 64>}, {pipeline_mode = #tpu.pipeline_mode<synchronous>, transform_indices = @transform_5, window_bounds = array<i64: 64, 64>}, {pipeline_mode = #tpu.pipeline_mode<synchronous>, transform_indices = @transform_6, window_bounds = array<i64: 1, 64>}, {pipeline_mode = #tpu.pipeline_mode<synchronous>, transform_indices = @transform_7, window_bounds = array<i64: 128, 64>}, {pipeline_mode = #tpu.pipeline_mode<synchronous>, transform_indices = @transform_8, window_bounds = array<i64: 1, 64>}, {pipeline_mode = #tpu.pipeline_mode<synchronous>, transform_indices = @transform_9, window_bounds = array<i64: 64, 512>}, {pipeline_mode = #tpu.pipeline_mode<synchronous>, transform_indices = @transform_10, window_bounds = array<i64: 64, 512>}, {pipeline_mode = #tpu.pipeline_mode<synchronous>, transform_indices = @transform_11, window_bounds = array<i64: 128, 512>}, {pipeline_mode = #tpu.pipeline_mode<synchronous>, transform_indices = @transform_12, window_bounds = array<i64: 1, 512>}, {pipeline_mode = #tpu.pipeline_mode<synchronous>, transform_indices = @transform_13, window_bounds = array<i64: 128, 512>}, {pipeline_mode = #tpu.pipeline_mode<synchronous>, transform_indices = @transform_14, window_bounds = array<i64: 128, 512>}, {pipeline_mode = #tpu.pipeline_mode<synchronous>, transform_indices = @transform_15, window_bounds = array<i64: 1, 512>}, {pipeline_mode = #tpu.pipeline_mode<synchronous>, transform_indices = @transform_16, window_bounds = array<i64: 128, 128>}, {pipeline_mode = #tpu.pipeline_mode<synchronous>, transform_indices = @transform_17, window_bounds = array<i64: 64, 128>}, {pipeline_mode = #tpu.pipeline_mode<synchronous>, transform_indices = @transform_18, window_bounds = array<i64: 1, 128>}, {transform_indices = @transform_19, window_bounds = array<i64: 1, 2, 128>}]} {
    %c0_i32 = arith.constant 0 : i32
    %0 = arith.cmpi eq, %arg0, %c0_i32 : i32
    %1 = arith.extui %0 : i1 to i32
    %c0_i32_0 = arith.constant 0 : i32
    %2 = arith.cmpi ne, %1, %c0_i32_0 : i32
    scf.if %2 {
      %cst_83 = arith.constant 0.000000e+00 : f32
      %145 = vector.broadcast %cst_83 : f32 to vector<2x128xf32>
      %c0_84 = arith.constant 0 : index
      %c0_85 = arith.constant 0 : index
      %146 = vector.load %arg21[%c0_84, %c0_85] : memref<2x128xf32, #tpu.memory_space<vmem>>, vector<2x128xf32>
      tpu.vector_store %arg21[%c0_84, %c0_85], %145 {strides = array<i32>} : memref<2x128xf32, #tpu.memory_space<vmem>>, vector<2x128xf32>,
      %cst_86 = arith.constant 0.000000e+00 : f32
      %147 = vector.broadcast %cst_86 : f32 to vector<2x128xf32>
      %c0_87 = arith.constant 0 : index
      %c0_88 = arith.constant 0 : index
      %148 = vector.load %arg22[%c0_87, %c0_88] : memref<2x128xf32, #tpu.memory_space<vmem>>, vector<2x128xf32>
      tpu.vector_store %arg22[%c0_87, %c0_88], %147 {strides = array<i32>} : memref<2x128xf32, #tpu.memory_space<vmem>>, vector<2x128xf32>,
      %cst_89 = arith.constant 0.000000e+00 : f32
      %149 = vector.broadcast %cst_89 : f32 to vector<2x128xf32>
      %c0_90 = arith.constant 0 : index
      %c0_91 = arith.constant 0 : index
      %150 = vector.load %arg23[%c0_90, %c0_91] : memref<2x128xf32, #tpu.memory_space<vmem>>, vector<2x128xf32>
      tpu.vector_store %arg23[%c0_90, %c0_91], %149 {strides = array<i32>} : memref<2x128xf32, #tpu.memory_space<vmem>>, vector<2x128xf32>,
      %cst_92 = arith.constant 0.000000e+00 : f32
      %151 = vector.broadcast %cst_92 : f32 to vector<2x128xf32>
      %c0_93 = arith.constant 0 : index
      %c0_94 = arith.constant 0 : index
      %152 = vector.load %arg24[%c0_93, %c0_94] : memref<2x128xf32, #tpu.memory_space<vmem>>, vector<2x128xf32>
      tpu.vector_store %arg24[%c0_93, %c0_94], %151 {strides = array<i32>} : memref<2x128xf32, #tpu.memory_space<vmem>>, vector<2x128xf32>,
    } else {
    }
    %c0 = arith.constant 0 : index
    %c0_1 = arith.constant 0 : index
    %c0_2 = arith.constant 0 : index
    %3 = vector.load %arg1[%c0, %c0_1, %c0_2] : memref<1x2x80xf32, #tpu.memory_space<vmem>>, vector<1x2x80xf32>
    %4 = vector.shape_cast %3 : vector<1x2x80xf32> to vector<2x80xf32>
    %c0_3 = arith.constant 0 : index
    %c0_4 = arith.constant 0 : index
    %5 = vector.load %arg4[%c0_3, %c0_4] : memref<80x64xbf16, #tpu.memory_space<vmem>>, vector<80x64xbf16>
    %6 = arith.truncf %4 : vector<2x80xf32> to vector<2x80xbf16>
    %cst = arith.constant dense<0.000000e+00> : vector<2x64xf32>
    %7 = tpu.matmul %6, %5, %cst {dimension_numbers = #tpu.dot_dimension_numbers<[1], [0], [0], [1], [0, 0, 1, 1], [], []>} : vector<2x80xbf16>, vector<80x64xbf16>, vector<2x64xf32> -> vector<2x64xf32>
    %c0_5 = arith.constant 0 : index
    %c0_6 = arith.constant 0 : index
    %8 = vector.load %arg5[%c0_5, %c0_6] : memref<1x64xf32, #tpu.memory_space<vmem>>, vector<1x64xf32>
    %9 = vector.broadcast %8 : vector<1x64xf32> to vector<2x64xf32>
    %10 = arith.addf %7, %9 : vector<2x64xf32>
    %cst_7 = arith.constant 0.000000e+00 : f32
    %11 = vector.broadcast %cst_7 : f32 to vector<2x64xf32>
    %12 = arith.maximumf %10, %11 : vector<2x64xf32>
    %c0_8 = arith.constant 0 : index
    %c0_9 = arith.constant 0 : index
    %13 = vector.load %arg6[%c0_8, %c0_9] : memref<64x64xbf16, #tpu.memory_space<vmem>>, vector<64x64xbf16>
    %14 = arith.truncf %12 : vector<2x64xf32> to vector<2x64xbf16>
    %cst_10 = arith.constant dense<0.000000e+00> : vector<2x64xf32>
    %15 = tpu.matmul %14, %13, %cst_10 {dimension_numbers = #tpu.dot_dimension_numbers<[1], [0], [0], [1], [0, 0, 1, 1], [], []>} : vector<2x64xbf16>, vector<64x64xbf16>, vector<2x64xf32> -> vector<2x64xf32>
    %c0_11 = arith.constant 0 : index
    %c0_12 = arith.constant 0 : index
    %16 = vector.load %arg7[%c0_11, %c0_12] : memref<1x64xf32, #tpu.memory_space<vmem>>, vector<1x64xf32>
    %17 = vector.broadcast %16 : vector<1x64xf32> to vector<2x64xf32>
    %18 = arith.addf %15, %17 : vector<2x64xf32>
    %cst_13 = arith.constant 0.000000e+00 : f32
    %19 = vector.broadcast %cst_13 : f32 to vector<2x64xf32>
    %20 = arith.maximumf %18, %19 : vector<2x64xf32>
    %c0_14 = arith.constant 0 : index
    %c0_15 = arith.constant 0 : index
    %21 = vector.load %arg23[%c0_14, %c0_15] : memref<2x128xf32, #tpu.memory_space<vmem>>, vector<2x128xf32>
    %c0_16 = arith.constant 0 : index
    %c0_17 = arith.constant 0 : index
    %22 = vector.load %arg8[%c0_16, %c0_17] : memref<128x64xbf16, #tpu.memory_space<vmem>>, vector<128x64xbf16>
    %23 = arith.truncf %21 : vector<2x128xf32> to vector<2x128xbf16>
    %cst_18 = arith.constant dense<0.000000e+00> : vector<2x64xf32>
    %24 = tpu.matmul %23, %22, %cst_18 {dimension_numbers = #tpu.dot_dimension_numbers<[1], [0], [0], [1], [0, 0, 1, 1], [], []>} : vector<2x128xbf16>, vector<128x64xbf16>, vector<2x64xf32> -> vector<2x64xf32>
    %25 = vector.shape_cast %24 : vector<2x64xf32> to vector<2x1x64xf32>
    %c0_19 = arith.constant 0 : index
    %c0_20 = arith.constant 0 : index
    %c0_21 = arith.constant 0 : index
    %26 = vector.load %arg3[%c0_19, %c0_20, %c0_21] : memref<2x8x64xf32, #tpu.memory_space<vmem>>, vector<2x8x64xf32>
    %27 = vector.broadcast %25 : vector<2x1x64xf32> to vector<2x8x64xf32>
    %28 = arith.addf %27, %26 : vector<2x8x64xf32>
    %29 = math.tanh %28 : vector<2x8x64xf32>
    %c0_22 = arith.constant 0 : index
    %c0_23 = arith.constant 0 : index
    %30 = vector.load %arg9[%c0_22, %c0_23] : memref<1x64xf32, #tpu.memory_space<vmem>>, vector<1x64xf32>
    %31 = vector.shape_cast %30 : vector<1x64xf32> to vector<1x1x64xf32>
    %32 = vector.broadcast %31 : vector<1x1x64xf32> to vector<2x8x64xf32>
    %33 = arith.mulf %29, %32 : vector<2x8x64xf32>
    %cst_24 = arith.constant dense<0.000000e+00> : vector<2x8xf32>
    %34 = vector.multi_reduction <add>, %33, %cst_24 [2] : vector<2x8x64xf32> to vector<2x8xf32>
    %cst_25 = arith.constant dense<0xFF800000> : vector<2xf32>
    %35 = vector.multi_reduction <maximumf>, %34, %cst_25 [1] : vector<2x8xf32> to vector<2xf32>
    %36 = vector.shape_cast %35 : vector<2xf32> to vector<2x1xf32>
    %37 = vector.broadcast %36 : vector<2x1xf32> to vector<2x8xf32>
    %38 = arith.subf %34, %37 : vector<2x8xf32>
    %39 = math.exp %38 : vector<2x8xf32>
    %cst_26 = arith.constant dense<0.000000e+00> : vector<2xf32>
    %40 = vector.multi_reduction <add>, %39, %cst_26 [1] : vector<2x8xf32> to vector<2xf32>
    %41 = vector.shape_cast %40 : vector<2xf32> to vector<2x1xf32>
    %42 = tpu.reciprocal %41 {approx = true} : vector<2x1xf32> -> vector<2x1xf32>
    %43 = vector.broadcast %42 : vector<2x1xf32> to vector<2x8xf32>
    %44 = arith.mulf %39, %43 : vector<2x8xf32>
    %45 = vector.shape_cast %44 : vector<2x8xf32> to vector<2x8x1xf32>
    %c0_27 = arith.constant 0 : index
    %c0_28 = arith.constant 0 : index
    %c0_29 = arith.constant 0 : index
    %46 = vector.load %arg2[%c0_27, %c0_28, %c0_29] : memref<2x8x64xf32, #tpu.memory_space<vmem>>, vector<2x8x64xf32>
    %47 = vector.broadcast %45 : vector<2x8x1xf32> to vector<2x8x64xf32>
    %48 = arith.mulf %47, %46 : vector<2x8x64xf32>
    %cst_30 = arith.constant dense<0.000000e+00> : vector<2x64xf32>
    %49 = vector.multi_reduction <add>, %48, %cst_30 [1] : vector<2x8x64xf32> to vector<2x64xf32>
    %c0_31 = arith.constant 0 : index
    %c0_32 = arith.constant 0 : index
    %50 = vector.load %arg10[%c0_31, %c0_32] : memref<64x512xbf16, #tpu.memory_space<vmem>>, vector<64x512xbf16>
    %51 = arith.truncf %20 : vector<2x64xf32> to vector<2x64xbf16>
    %cst_33 = arith.constant dense<0.000000e+00> : vector<2x512xf32>
    %52 = tpu.matmul %51, %50, %cst_33 {dimension_numbers = #tpu.dot_dimension_numbers<[1], [0], [0], [1], [0, 0, 1, 1], [], []>} : vector<2x64xbf16>, vector<64x512xbf16>, vector<2x512xf32> -> vector<2x512xf32>
    %c0_34 = arith.constant 0 : index
    %c0_35 = arith.constant 0 : index
    %53 = vector.load %arg11[%c0_34, %c0_35] : memref<64x512xbf16, #tpu.memory_space<vmem>>, vector<64x512xbf16>
    %54 = arith.truncf %49 : vector<2x64xf32> to vector<2x64xbf16>
    %cst_36 = arith.constant dense<0.000000e+00> : vector<2x512xf32>
    %55 = tpu.matmul %54, %53, %cst_36 {dimension_numbers = #tpu.dot_dimension_numbers<[1], [0], [0], [1], [0, 0, 1, 1], [], []>} : vector<2x64xbf16>, vector<64x512xbf16>, vector<2x512xf32> -> vector<2x512xf32>
    %56 = arith.addf %52, %55 : vector<2x512xf32>
    %c0_37 = arith.constant 0 : index
    %c0_38 = arith.constant 0 : index
    %57 = vector.load %arg21[%c0_37, %c0_38] : memref<2x128xf32, #tpu.memory_space<vmem>>, vector<2x128xf32>
    %c0_39 = arith.constant 0 : index
    %c0_40 = arith.constant 0 : index
    %58 = vector.load %arg12[%c0_39, %c0_40] : memref<128x512xbf16, #tpu.memory_space<vmem>>, vector<128x512xbf16>
    %59 = arith.truncf %57 : vector<2x128xf32> to vector<2x128xbf16>
    %cst_41 = arith.constant dense<0.000000e+00> : vector<2x512xf32>
    %60 = tpu.matmul %59, %58, %cst_41 {dimension_numbers = #tpu.dot_dimension_numbers<[1], [0], [0], [1], [0, 0, 1, 1], [], []>} : vector<2x128xbf16>, vector<128x512xbf16>, vector<2x512xf32> -> vector<2x512xf32>
    %61 = arith.addf %56, %60 : vector<2x512xf32>
    %c0_42 = arith.constant 0 : index
    %c0_43 = arith.constant 0 : index
    %62 = vector.load %arg13[%c0_42, %c0_43] : memref<1x512xf32, #tpu.memory_space<vmem>>, vector<1x512xf32>
    %63 = vector.broadcast %62 : vector<1x512xf32> to vector<2x512xf32>
    %64 = arith.addf %61, %63 : vector<2x512xf32>
    %65 = vector.extract_strided_slice %64 {offsets = [0, 0], sizes = [2, 128], strides = [1, 1]} : vector<2x512xf32> to vector<2x128xf32>
    %66 = arith.negf %65 : vector<2x128xf32>
    %67 = math.exp %66 : vector<2x128xf32>
    %cst_44 = arith.constant 1.000000e+00 : f32
    %68 = vector.broadcast %cst_44 : f32 to vector<2x128xf32>
    %69 = arith.addf %68, %67 : vector<2x128xf32>
    %70 = arith.divf %68, %69 : vector<2x128xf32>
    %71 = vector.extract_strided_slice %64 {offsets = [0, 128], sizes = [2, 128], strides = [1, 1]} : vector<2x512xf32> to vector<2x128xf32>
    %72 = arith.negf %71 : vector<2x128xf32>
    %73 = math.exp %72 : vector<2x128xf32>
    %cst_45 = arith.constant 1.000000e+00 : f32
    %74 = vector.broadcast %cst_45 : f32 to vector<2x128xf32>
    %75 = arith.addf %74, %73 : vector<2x128xf32>
    %76 = arith.divf %74, %75 : vector<2x128xf32>
    %77 = vector.extract_strided_slice %64 {offsets = [0, 256], sizes = [2, 128], strides = [1, 1]} : vector<2x512xf32> to vector<2x128xf32>
    %78 = math.tanh %77 : vector<2x128xf32>
    %79 = vector.extract_strided_slice %64 {offsets = [0, 384], sizes = [2, 128], strides = [1, 1]} : vector<2x512xf32> to vector<2x128xf32>
    %80 = arith.negf %79 : vector<2x128xf32>
    %81 = math.exp %80 : vector<2x128xf32>
    %cst_46 = arith.constant 1.000000e+00 : f32
    %82 = vector.broadcast %cst_46 : f32 to vector<2x128xf32>
    %83 = arith.addf %82, %81 : vector<2x128xf32>
    %84 = arith.divf %82, %83 : vector<2x128xf32>
    %c0_47 = arith.constant 0 : index
    %c0_48 = arith.constant 0 : index
    %85 = vector.load %arg22[%c0_47, %c0_48] : memref<2x128xf32, #tpu.memory_space<vmem>>, vector<2x128xf32>
    %86 = arith.mulf %76, %85 : vector<2x128xf32>
    %87 = arith.mulf %70, %78 : vector<2x128xf32>
    %88 = arith.addf %86, %87 : vector<2x128xf32>
    %89 = math.tanh %88 : vector<2x128xf32>
    %90 = arith.mulf %84, %89 : vector<2x128xf32>
    %c0_49 = arith.constant 0 : index
    %c0_50 = arith.constant 0 : index
    %91 = vector.load %arg22[%c0_49, %c0_50] : memref<2x128xf32, #tpu.memory_space<vmem>>, vector<2x128xf32>
    tpu.vector_store %arg22[%c0_49, %c0_50], %88 {strides = array<i32>} : memref<2x128xf32, #tpu.memory_space<vmem>>, vector<2x128xf32>,
    %c0_51 = arith.constant 0 : index
    %c0_52 = arith.constant 0 : index
    %92 = vector.load %arg21[%c0_51, %c0_52] : memref<2x128xf32, #tpu.memory_space<vmem>>, vector<2x128xf32>
    tpu.vector_store %arg21[%c0_51, %c0_52], %90 {strides = array<i32>} : memref<2x128xf32, #tpu.memory_space<vmem>>, vector<2x128xf32>,
    %c0_53 = arith.constant 0 : index
    %c0_54 = arith.constant 0 : index
    %93 = vector.load %arg14[%c0_53, %c0_54] : memref<128x512xbf16, #tpu.memory_space<vmem>>, vector<128x512xbf16>
    %94 = arith.truncf %90 : vector<2x128xf32> to vector<2x128xbf16>
    %cst_55 = arith.constant dense<0.000000e+00> : vector<2x512xf32>
    %95 = tpu.matmul %94, %93, %cst_55 {dimension_numbers = #tpu.dot_dimension_numbers<[1], [0], [0], [1], [0, 0, 1, 1], [], []>} : vector<2x128xbf16>, vector<128x512xbf16>, vector<2x512xf32> -> vector<2x512xf32>
    %c0_56 = arith.constant 0 : index
    %c0_57 = arith.constant 0 : index
    %96 = vector.load %arg23[%c0_56, %c0_57] : memref<2x128xf32, #tpu.memory_space<vmem>>, vector<2x128xf32>
    %c0_58 = arith.constant 0 : index
    %c0_59 = arith.constant 0 : index
    %97 = vector.load %arg15[%c0_58, %c0_59] : memref<128x512xbf16, #tpu.memory_space<vmem>>, vector<128x512xbf16>
    %98 = arith.truncf %96 : vector<2x128xf32> to vector<2x128xbf16>
    %cst_60 = arith.constant dense<0.000000e+00> : vector<2x512xf32>
    %99 = tpu.matmul %98, %97, %cst_60 {dimension_numbers = #tpu.dot_dimension_numbers<[1], [0], [0], [1], [0, 0, 1, 1], [], []>} : vector<2x128xbf16>, vector<128x512xbf16>, vector<2x512xf32> -> vector<2x512xf32>
    %100 = arith.addf %95, %99 : vector<2x512xf32>
    %c0_61 = arith.constant 0 : index
    %c0_62 = arith.constant 0 : index
    %101 = vector.load %arg16[%c0_61, %c0_62] : memref<1x512xf32, #tpu.memory_space<vmem>>, vector<1x512xf32>
    %102 = vector.broadcast %101 : vector<1x512xf32> to vector<2x512xf32>
    %103 = arith.addf %100, %102 : vector<2x512xf32>
    %104 = vector.extract_strided_slice %103 {offsets = [0, 0], sizes = [2, 128], strides = [1, 1]} : vector<2x512xf32> to vector<2x128xf32>
    %105 = arith.negf %104 : vector<2x128xf32>
    %106 = math.exp %105 : vector<2x128xf32>
    %cst_63 = arith.constant 1.000000e+00 : f32
    %107 = vector.broadcast %cst_63 : f32 to vector<2x128xf32>
    %108 = arith.addf %107, %106 : vector<2x128xf32>
    %109 = arith.divf %107, %108 : vector<2x128xf32>
    %110 = vector.extract_strided_slice %103 {offsets = [0, 128], sizes = [2, 128], strides = [1, 1]} : vector<2x512xf32> to vector<2x128xf32>
    %111 = arith.negf %110 : vector<2x128xf32>
    %112 = math.exp %111 : vector<2x128xf32>
    %cst_64 = arith.constant 1.000000e+00 : f32
    %113 = vector.broadcast %cst_64 : f32 to vector<2x128xf32>
    %114 = arith.addf %113, %112 : vector<2x128xf32>
    %115 = arith.divf %113, %114 : vector<2x128xf32>
    %116 = vector.extract_strided_slice %103 {offsets = [0, 256], sizes = [2, 128], strides = [1, 1]} : vector<2x512xf32> to vector<2x128xf32>
    %117 = math.tanh %116 : vector<2x128xf32>
    %118 = vector.extract_strided_slice %103 {offsets = [0, 384], sizes = [2, 128], strides = [1, 1]} : vector<2x512xf32> to vector<2x128xf32>
    %119 = arith.negf %118 : vector<2x128xf32>
    %120 = math.exp %119 : vector<2x128xf32>
    %cst_65 = arith.constant 1.000000e+00 : f32
    %121 = vector.broadcast %cst_65 : f32 to vector<2x128xf32>
    %122 = arith.addf %121, %120 : vector<2x128xf32>
    %123 = arith.divf %121, %122 : vector<2x128xf32>
    %c0_66 = arith.constant 0 : index
    %c0_67 = arith.constant 0 : index
    %124 = vector.load %arg24[%c0_66, %c0_67] : memref<2x128xf32, #tpu.memory_space<vmem>>, vector<2x128xf32>
    %125 = arith.mulf %115, %124 : vector<2x128xf32>
    %126 = arith.mulf %109, %117 : vector<2x128xf32>
    %127 = arith.addf %125, %126 : vector<2x128xf32>
    %128 = math.tanh %127 : vector<2x128xf32>
    %129 = arith.mulf %123, %128 : vector<2x128xf32>
    %c0_68 = arith.constant 0 : index
    %c0_69 = arith.constant 0 : index
    %130 = vector.load %arg24[%c0_68, %c0_69] : memref<2x128xf32, #tpu.memory_space<vmem>>, vector<2x128xf32>
    tpu.vector_store %arg24[%c0_68, %c0_69], %127 {strides = array<i32>} : memref<2x128xf32, #tpu.memory_space<vmem>>, vector<2x128xf32>,
    %c0_70 = arith.constant 0 : index
    %c0_71 = arith.constant 0 : index
    %131 = vector.load %arg23[%c0_70, %c0_71] : memref<2x128xf32, #tpu.memory_space<vmem>>, vector<2x128xf32>
    tpu.vector_store %arg23[%c0_70, %c0_71], %129 {strides = array<i32>} : memref<2x128xf32, #tpu.memory_space<vmem>>, vector<2x128xf32>,
    %c0_72 = arith.constant 0 : index
    %c0_73 = arith.constant 0 : index
    %132 = vector.load %arg17[%c0_72, %c0_73] : memref<128x128xbf16, #tpu.memory_space<vmem>>, vector<128x128xbf16>
    %133 = arith.truncf %129 : vector<2x128xf32> to vector<2x128xbf16>
    %cst_74 = arith.constant dense<0.000000e+00> : vector<2x128xf32>
    %134 = tpu.matmul %133, %132, %cst_74 {dimension_numbers = #tpu.dot_dimension_numbers<[1], [0], [0], [1], [0, 0, 1, 1], [], []>} : vector<2x128xbf16>, vector<128x128xbf16>, vector<2x128xf32> -> vector<2x128xf32>
    %c0_75 = arith.constant 0 : index
    %c0_76 = arith.constant 0 : index
    %135 = vector.load %arg18[%c0_75, %c0_76] : memref<64x128xbf16, #tpu.memory_space<vmem>>, vector<64x128xbf16>
    %136 = arith.truncf %49 : vector<2x64xf32> to vector<2x64xbf16>
    %cst_77 = arith.constant dense<0.000000e+00> : vector<2x128xf32>
    %137 = tpu.matmul %136, %135, %cst_77 {dimension_numbers = #tpu.dot_dimension_numbers<[1], [0], [0], [1], [0, 0, 1, 1], [], []>} : vector<2x64xbf16>, vector<64x128xbf16>, vector<2x128xf32> -> vector<2x128xf32>
    %138 = arith.addf %134, %137 : vector<2x128xf32>
    %c0_78 = arith.constant 0 : index
    %c0_79 = arith.constant 0 : index
    %139 = vector.load %arg19[%c0_78, %c0_79] : memref<1x128xf32, #tpu.memory_space<vmem>>, vector<1x128xf32>
    %140 = vector.broadcast %139 : vector<1x128xf32> to vector<2x128xf32>
    %141 = arith.addf %138, %140 : vector<2x128xf32>
    %c0_80 = arith.constant 0 : index
    %c0_81 = arith.constant 0 : index
    %c0_82 = arith.constant 0 : index
    %142 = vector.load %arg20[%c0_80, %c0_81, %c0_82] : memref<1x2x128xf32, #tpu.memory_space<vmem>>, vector<1x2x128xf32>
    %143 = vector.shape_cast %142 : vector<1x2x128xf32> to vector<2x128xf32>
    %144 = vector.shape_cast %141 : vector<2x128xf32> to vector<1x2x128xf32>
    tpu.vector_store %arg20[%c0_80, %c0_81, %c0_82], %144 {strides = array<i32>} : memref<1x2x128xf32, #tpu.memory_space<vmem>>, vector<1x2x128xf32>,
    return
  }
  func.func @transform_0(%arg0: i32) -> (i32, i32, i32) {
    %c0_i32 = arith.constant 0 : i32
    %c0_i32_0 = arith.constant 0 : i32
    %c0_i32_1 = arith.constant 0 : i32
    return %arg0, %c0_i32, %c0_i32_0 : i32, i32, i32
  }
  func.func @transform_1(%arg0: i32) -> (i32, i32, i32) {
    %c0_i32 = arith.constant 0 : i32
    %c0_i32_0 = arith.constant 0 : i32
    %c0_i32_1 = arith.constant 0 : i32
    %c0_i32_2 = arith.constant 0 : i32
    return %c0_i32, %c0_i32_0, %c0_i32_1 : i32, i32, i32
  }
  func.func @transform_2(%arg0: i32) -> (i32, i32, i32) {
    %c0_i32 = arith.constant 0 : i32
    %c0_i32_0 = arith.constant 0 : i32
    %c0_i32_1 = arith.constant 0 : i32
    %c0_i32_2 = arith.constant 0 : i32
    return %c0_i32, %c0_i32_0, %c0_i32_1 : i32, i32, i32
  }
  func.func @transform_3(%arg0: i32) -> (i32, i32) {
    %c0_i32 = arith.constant 0 : i32
    %c0_i32_0 = arith.constant 0 : i32
    %c0_i32_1 = arith.constant 0 : i32
    return %c0_i32, %c0_i32_0 : i32, i32
  }
  func.func @transform_4(%arg0: i32) -> (i32, i32) {
    %c0_i32 = arith.constant 0 : i32
    %c0_i32_0 = arith.constant 0 : i32
    %c0_i32_1 = arith.constant 0 : i32
    return %c0_i32, %c0_i32_0 : i32, i32
  }
  func.func @transform_5(%arg0: i32) -> (i32, i32) {
    %c0_i32 = arith.constant 0 : i32
    %c0_i32_0 = arith.constant 0 : i32
    %c0_i32_1 = arith.constant 0 : i32
    return %c0_i32, %c0_i32_0 : i32, i32
  }
  func.func @transform_6(%arg0: i32) -> (i32, i32) {
    %c0_i32 = arith.constant 0 : i32
    %c0_i32_0 = arith.constant 0 : i32
    %c0_i32_1 = arith.constant 0 : i32
    return %c0_i32, %c0_i32_0 : i32, i32
  }
  func.func @transform_7(%arg0: i32) -> (i32, i32) {
    %c0_i32 = arith.constant 0 : i32
    %c0_i32_0 = arith.constant 0 : i32
    %c0_i32_1 = arith.constant 0 : i32
    return %c0_i32, %c0_i32_0 : i32, i32
  }
  func.func @transform_8(%arg0: i32) -> (i32, i32) {
    %c0_i32 = arith.constant 0 : i32
    %c0_i32_0 = arith.constant 0 : i32
    %c0_i32_1 = arith.constant 0 : i32
    return %c0_i32, %c0_i32_0 : i32, i32
  }
  func.func @transform_9(%arg0: i32) -> (i32, i32) {
    %c0_i32 = arith.constant 0 : i32
    %c0_i32_0 = arith.constant 0 : i32
    %c0_i32_1 = arith.constant 0 : i32
    return %c0_i32, %c0_i32_0 : i32, i32
  }
  func.func @transform_10(%arg0: i32) -> (i32, i32) {
    %c0_i32 = arith.constant 0 : i32
    %c0_i32_0 = arith.constant 0 : i32
    %c0_i32_1 = arith.constant 0 : i32
    return %c0_i32, %c0_i32_0 : i32, i32
  }
  func.func @transform_11(%arg0: i32) -> (i32, i32) {
    %c0_i32 = arith.constant 0 : i32
    %c0_i32_0 = arith.constant 0 : i32
    %c0_i32_1 = arith.constant 0 : i32
    return %c0_i32, %c0_i32_0 : i32, i32
  }
  func.func @transform_12(%arg0: i32) -> (i32, i32) {
    %c0_i32 = arith.constant 0 : i32
    %c0_i32_0 = arith.constant 0 : i32
    %c0_i32_1 = arith.constant 0 : i32
    return %c0_i32, %c0_i32_0 : i32, i32
  }
  func.func @transform_13(%arg0: i32) -> (i32, i32) {
    %c0_i32 = arith.constant 0 : i32
    %c0_i32_0 = arith.constant 0 : i32
    %c0_i32_1 = arith.constant 0 : i32
    return %c0_i32, %c0_i32_0 : i32, i32
  }
  func.func @transform_14(%arg0: i32) -> (i32, i32) {
    %c0_i32 = arith.constant 0 : i32
    %c0_i32_0 = arith.constant 0 : i32
    %c0_i32_1 = arith.constant 0 : i32
    return %c0_i32, %c0_i32_0 : i32, i32
  }
  func.func @transform_15(%arg0: i32) -> (i32, i32) {
    %c0_i32 = arith.constant 0 : i32
    %c0_i32_0 = arith.constant 0 : i32
    %c0_i32_1 = arith.constant 0 : i32
    return %c0_i32, %c0_i32_0 : i32, i32
  }
  func.func @transform_16(%arg0: i32) -> (i32, i32) {
    %c0_i32 = arith.constant 0 : i32
    %c0_i32_0 = arith.constant 0 : i32
    %c0_i32_1 = arith.constant 0 : i32
    return %c0_i32, %c0_i32_0 : i32, i32
  }
  func.func @transform_17(%arg0: i32) -> (i32, i32) {
    %c0_i32 = arith.constant 0 : i32
    %c0_i32_0 = arith.constant 0 : i32
    %c0_i32_1 = arith.constant 0 : i32
    return %c0_i32, %c0_i32_0 : i32, i32
  }
  func.func @transform_18(%arg0: i32) -> (i32, i32) {
    %c0_i32 = arith.constant 0 : i32
    %c0_i32_0 = arith.constant 0 : i32
    %c0_i32_1 = arith.constant 0 : i32
    return %c0_i32, %c0_i32_0 : i32, i32
  }
  func.func @transform_19(%arg0: i32) -> (i32, i32, i32) {
    %c0_i32 = arith.constant 0 : i32
    %c0_i32_0 = arith.constant 0 : i32
    %c0_i32_1 = arith.constant 0 : i32
    return %arg0, %c0_i32, %c0_i32_0 : i32, i32, i32
  }
}

module attributes {stable_mosaic.version = 11 : i64} {
  func.func @_conv_kernel(%arg0: i32, %arg1: memref<240x5xbf16, #tpu.memory_space<vmem>>, %arg2: memref<5x128xbf16, #tpu.memory_space<vmem>>, %arg3: memref<1x128xf32, #tpu.memory_space<vmem>>, %arg4: memref<1x128xf32, #tpu.memory_space<vmem>>, %arg5: memref<240x128xf32, #tpu.memory_space<vmem>>) attributes {dimension_semantics = [#tpu.dimension_semantics<parallel>], iteration_bounds = array<i64: 2>, scalar_prefetch = 0 : i64, scratch_operands = 0 : i64, tpu.core_type = #tpu.core_type<tc>, window_params = [{transform_indices = @transform_0, window_bounds = array<i64: 240, 5>}, {pipeline_mode = #tpu.pipeline_mode<synchronous>, transform_indices = @transform_1, window_bounds = array<i64: 5, 128>}, {pipeline_mode = #tpu.pipeline_mode<synchronous>, transform_indices = @transform_2, window_bounds = array<i64: 1, 128>}, {pipeline_mode = #tpu.pipeline_mode<synchronous>, transform_indices = @transform_3, window_bounds = array<i64: 1, 128>}, {transform_indices = @transform_4, window_bounds = array<i64: 240, 128>}]} {
    %c0 = arith.constant 0 : index
    %c0_0 = arith.constant 0 : index
    %0 = vector.load %arg1[%c0, %c0_0] : memref<240x5xbf16, #tpu.memory_space<vmem>>, vector<240x5xbf16>
    %c0_1 = arith.constant 0 : index
    %c0_2 = arith.constant 0 : index
    %1 = vector.load %arg2[%c0_1, %c0_2] : memref<5x128xbf16, #tpu.memory_space<vmem>>, vector<5x128xbf16>
    %cst = arith.constant dense<0.000000e+00> : vector<240x128xf32>
    %2 = tpu.matmul %0, %1, %cst {dimension_numbers = #tpu.dot_dimension_numbers<[1], [0], [0], [1], [0, 0, 1, 1], [], []>} : vector<240x5xbf16>, vector<5x128xbf16>, vector<240x128xf32> -> vector<240x128xf32>
    %c0_3 = arith.constant 0 : index
    %c0_4 = arith.constant 0 : index
    %3 = vector.load %arg3[%c0_3, %c0_4] : memref<1x128xf32, #tpu.memory_space<vmem>>, vector<1x128xf32>
    %4 = vector.broadcast %3 : vector<1x128xf32> to vector<240x128xf32>
    %5 = arith.mulf %2, %4 : vector<240x128xf32>
    %c0_5 = arith.constant 0 : index
    %c0_6 = arith.constant 0 : index
    %6 = vector.load %arg4[%c0_5, %c0_6] : memref<1x128xf32, #tpu.memory_space<vmem>>, vector<1x128xf32>
    %7 = vector.broadcast %6 : vector<1x128xf32> to vector<240x128xf32>
    %8 = arith.addf %5, %7 : vector<240x128xf32>
    %9 = math.tanh %8 : vector<240x128xf32>
    %c0_7 = arith.constant 0 : index
    %c0_8 = arith.constant 0 : index
    %10 = vector.load %arg5[%c0_7, %c0_8] : memref<240x128xf32, #tpu.memory_space<vmem>>, vector<240x128xf32>
    tpu.vector_store %arg5[%c0_7, %c0_8], %9 {strides = array<i32>} : memref<240x128xf32, #tpu.memory_space<vmem>>, vector<240x128xf32>,
    return
  }
  func.func @transform_0(%arg0: i32) -> (i32, i32) {
    %c0_i32 = arith.constant 0 : i32
    %c0_i32_0 = arith.constant 0 : i32
    return %arg0, %c0_i32 : i32, i32
  }
  func.func @transform_1(%arg0: i32) -> (i32, i32) {
    %c0_i32 = arith.constant 0 : i32
    %c0_i32_0 = arith.constant 0 : i32
    %c0_i32_1 = arith.constant 0 : i32
    return %c0_i32, %c0_i32_0 : i32, i32
  }
  func.func @transform_2(%arg0: i32) -> (i32, i32) {
    %c0_i32 = arith.constant 0 : i32
    %c0_i32_0 = arith.constant 0 : i32
    %c0_i32_1 = arith.constant 0 : i32
    return %c0_i32, %c0_i32_0 : i32, i32
  }
  func.func @transform_3(%arg0: i32) -> (i32, i32) {
    %c0_i32 = arith.constant 0 : i32
    %c0_i32_0 = arith.constant 0 : i32
    %c0_i32_1 = arith.constant 0 : i32
    return %c0_i32, %c0_i32_0 : i32, i32
  }
  func.func @transform_4(%arg0: i32) -> (i32, i32) {
    %c0_i32 = arith.constant 0 : i32
    %c0_i32_0 = arith.constant 0 : i32
    return %arg0, %c0_i32 : i32, i32
  }
}

module attributes {stable_mosaic.version = 11 : i64} {
  func.func @_conv_kernel(%arg0: i32, %arg1: memref<240x640xbf16, #tpu.memory_space<vmem>>, %arg2: memref<640x128xbf16, #tpu.memory_space<vmem>>, %arg3: memref<1x128xf32, #tpu.memory_space<vmem>>, %arg4: memref<1x128xf32, #tpu.memory_space<vmem>>, %arg5: memref<240x128xf32, #tpu.memory_space<vmem>>) attributes {dimension_semantics = [#tpu.dimension_semantics<parallel>], iteration_bounds = array<i64: 2>, scalar_prefetch = 0 : i64, scratch_operands = 0 : i64, tpu.core_type = #tpu.core_type<tc>, window_params = [{transform_indices = @transform_0, window_bounds = array<i64: 240, 640>}, {pipeline_mode = #tpu.pipeline_mode<synchronous>, transform_indices = @transform_1, window_bounds = array<i64: 640, 128>}, {pipeline_mode = #tpu.pipeline_mode<synchronous>, transform_indices = @transform_2, window_bounds = array<i64: 1, 128>}, {pipeline_mode = #tpu.pipeline_mode<synchronous>, transform_indices = @transform_3, window_bounds = array<i64: 1, 128>}, {transform_indices = @transform_4, window_bounds = array<i64: 240, 128>}]} {
    %c0 = arith.constant 0 : index
    %c0_0 = arith.constant 0 : index
    %0 = vector.load %arg1[%c0, %c0_0] : memref<240x640xbf16, #tpu.memory_space<vmem>>, vector<240x640xbf16>
    %c0_1 = arith.constant 0 : index
    %c0_2 = arith.constant 0 : index
    %1 = vector.load %arg2[%c0_1, %c0_2] : memref<640x128xbf16, #tpu.memory_space<vmem>>, vector<640x128xbf16>
    %cst = arith.constant dense<0.000000e+00> : vector<240x128xf32>
    %2 = tpu.matmul %0, %1, %cst {dimension_numbers = #tpu.dot_dimension_numbers<[1], [0], [0], [1], [0, 0, 1, 1], [], []>} : vector<240x640xbf16>, vector<640x128xbf16>, vector<240x128xf32> -> vector<240x128xf32>
    %c0_3 = arith.constant 0 : index
    %c0_4 = arith.constant 0 : index
    %3 = vector.load %arg3[%c0_3, %c0_4] : memref<1x128xf32, #tpu.memory_space<vmem>>, vector<1x128xf32>
    %4 = vector.broadcast %3 : vector<1x128xf32> to vector<240x128xf32>
    %5 = arith.mulf %2, %4 : vector<240x128xf32>
    %c0_5 = arith.constant 0 : index
    %c0_6 = arith.constant 0 : index
    %6 = vector.load %arg4[%c0_5, %c0_6] : memref<1x128xf32, #tpu.memory_space<vmem>>, vector<1x128xf32>
    %7 = vector.broadcast %6 : vector<1x128xf32> to vector<240x128xf32>
    %8 = arith.addf %5, %7 : vector<240x128xf32>
    %9 = math.tanh %8 : vector<240x128xf32>
    %c0_7 = arith.constant 0 : index
    %c0_8 = arith.constant 0 : index
    %10 = vector.load %arg5[%c0_7, %c0_8] : memref<240x128xf32, #tpu.memory_space<vmem>>, vector<240x128xf32>
    tpu.vector_store %arg5[%c0_7, %c0_8], %9 {strides = array<i32>} : memref<240x128xf32, #tpu.memory_space<vmem>>, vector<240x128xf32>,
    return
  }
  func.func @transform_0(%arg0: i32) -> (i32, i32) {
    %c0_i32 = arith.constant 0 : i32
    %c0_i32_0 = arith.constant 0 : i32
    return %arg0, %c0_i32 : i32, i32
  }
  func.func @transform_1(%arg0: i32) -> (i32, i32) {
    %c0_i32 = arith.constant 0 : i32
    %c0_i32_0 = arith.constant 0 : i32
    %c0_i32_1 = arith.constant 0 : i32
    return %c0_i32, %c0_i32_0 : i32, i32
  }
  func.func @transform_2(%arg0: i32) -> (i32, i32) {
    %c0_i32 = arith.constant 0 : i32
    %c0_i32_0 = arith.constant 0 : i32
    %c0_i32_1 = arith.constant 0 : i32
    return %c0_i32, %c0_i32_0 : i32, i32
  }
  func.func @transform_3(%arg0: i32) -> (i32, i32) {
    %c0_i32 = arith.constant 0 : i32
    %c0_i32_0 = arith.constant 0 : i32
    %c0_i32_1 = arith.constant 0 : i32
    return %c0_i32, %c0_i32_0 : i32, i32
  }
  func.func @transform_4(%arg0: i32) -> (i32, i32) {
    %c0_i32 = arith.constant 0 : i32
    %c0_i32_0 = arith.constant 0 : i32
    return %arg0, %c0_i32 : i32, i32
  }
}

module attributes {stable_mosaic.version = 11 : i64} {
  func.func @_conv_kernel(%arg0: i32, %arg1: memref<240x640xbf16, #tpu.memory_space<vmem>>, %arg2: memref<640x128xbf16, #tpu.memory_space<vmem>>, %arg3: memref<1x128xf32, #tpu.memory_space<vmem>>, %arg4: memref<1x128xf32, #tpu.memory_space<vmem>>, %arg5: memref<240x128xf32, #tpu.memory_space<vmem>>) attributes {dimension_semantics = [#tpu.dimension_semantics<parallel>], iteration_bounds = array<i64: 2>, scalar_prefetch = 0 : i64, scratch_operands = 0 : i64, tpu.core_type = #tpu.core_type<tc>, window_params = [{transform_indices = @transform_0, window_bounds = array<i64: 240, 640>}, {pipeline_mode = #tpu.pipeline_mode<synchronous>, transform_indices = @transform_1, window_bounds = array<i64: 640, 128>}, {pipeline_mode = #tpu.pipeline_mode<synchronous>, transform_indices = @transform_2, window_bounds = array<i64: 1, 128>}, {pipeline_mode = #tpu.pipeline_mode<synchronous>, transform_indices = @transform_3, window_bounds = array<i64: 1, 128>}, {transform_indices = @transform_4, window_bounds = array<i64: 240, 128>}]} {
    %c0 = arith.constant 0 : index
    %c0_0 = arith.constant 0 : index
    %0 = vector.load %arg1[%c0, %c0_0] : memref<240x640xbf16, #tpu.memory_space<vmem>>, vector<240x640xbf16>
    %c0_1 = arith.constant 0 : index
    %c0_2 = arith.constant 0 : index
    %1 = vector.load %arg2[%c0_1, %c0_2] : memref<640x128xbf16, #tpu.memory_space<vmem>>, vector<640x128xbf16>
    %cst = arith.constant dense<0.000000e+00> : vector<240x128xf32>
    %2 = tpu.matmul %0, %1, %cst {dimension_numbers = #tpu.dot_dimension_numbers<[1], [0], [0], [1], [0, 0, 1, 1], [], []>} : vector<240x640xbf16>, vector<640x128xbf16>, vector<240x128xf32> -> vector<240x128xf32>
    %c0_3 = arith.constant 0 : index
    %c0_4 = arith.constant 0 : index
    %3 = vector.load %arg3[%c0_3, %c0_4] : memref<1x128xf32, #tpu.memory_space<vmem>>, vector<1x128xf32>
    %4 = vector.broadcast %3 : vector<1x128xf32> to vector<240x128xf32>
    %5 = arith.mulf %2, %4 : vector<240x128xf32>
    %c0_5 = arith.constant 0 : index
    %c0_6 = arith.constant 0 : index
    %6 = vector.load %arg4[%c0_5, %c0_6] : memref<1x128xf32, #tpu.memory_space<vmem>>, vector<1x128xf32>
    %7 = vector.broadcast %6 : vector<1x128xf32> to vector<240x128xf32>
    %8 = arith.addf %5, %7 : vector<240x128xf32>
    %c0_7 = arith.constant 0 : index
    %c0_8 = arith.constant 0 : index
    %9 = vector.load %arg5[%c0_7, %c0_8] : memref<240x128xf32, #tpu.memory_space<vmem>>, vector<240x128xf32>
    tpu.vector_store %arg5[%c0_7, %c0_8], %8 {strides = array<i32>} : memref<240x128xf32, #tpu.memory_space<vmem>>, vector<240x128xf32>,
    return
  }
  func.func @transform_0(%arg0: i32) -> (i32, i32) {
    %c0_i32 = arith.constant 0 : i32
    %c0_i32_0 = arith.constant 0 : i32
    return %arg0, %c0_i32 : i32, i32
  }
  func.func @transform_1(%arg0: i32) -> (i32, i32) {
    %c0_i32 = arith.constant 0 : i32
    %c0_i32_0 = arith.constant 0 : i32
    %c0_i32_1 = arith.constant 0 : i32
    return %c0_i32, %c0_i32_0 : i32, i32
  }
  func.func @transform_2(%arg0: i32) -> (i32, i32) {
    %c0_i32 = arith.constant 0 : i32
    %c0_i32_0 = arith.constant 0 : i32
    %c0_i32_1 = arith.constant 0 : i32
    return %c0_i32, %c0_i32_0 : i32, i32
  }
  func.func @transform_3(%arg0: i32) -> (i32, i32) {
    %c0_i32 = arith.constant 0 : i32
    %c0_i32_0 = arith.constant 0 : i32
    %c0_i32_1 = arith.constant 0 : i32
    return %c0_i32, %c0_i32_0 : i32, i32
  }
  func.func @transform_4(%arg0: i32) -> (i32, i32) {
    %c0_i32 = arith.constant 0 : i32
    %c0_i32_0 = arith.constant 0 : i32
    return %arg0, %c0_i32 : i32, i32
  }
}

</mosaic_0001>

<llo_original>
// kernel: tacotron2_forward.7
$region0: #{tacotron2_forward.7}
  #allocation0 [shape = 'u32[]', space=smem, size = 0x4, offset = 0x4, fixed_abs, tag = 'smem constant byte address 0x4 - core index']
  #allocation1 [shape = 'u32[144,128]{1,0:T(1,128)}', space=vmem, size = 0x12000, scoped, tag = 'internal scratch']
  %s0 = inlined_call_operand.vmem [shape: f32[16,32], index: 0, kind: input, shape index: {}]
  %s1 = inlined_call_operand.vmem [shape: bf16[32,64], index: 1, kind: input, shape index: {}]
  %s2 = inlined_call_operand.vmem [shape: f32[1,64], index: 2, kind: input, shape index: {}]
  %s3 = inlined_call_operand.vmem [shape: bf16[64,64], index: 3, kind: input, shape index: {}]
  %s4 = inlined_call_operand.vmem [shape: f32[16,64], index: 4, kind: output, shape index: {0}]
  %s5 = inlined_call_operand.vmem [shape: f32[16,64], index: 5, kind: output, shape index: {1}]
  %6 = xla_tuple %s4, %s5
  %s7 = sld [smem:[#allocation0]]
  $region34: #{tacotron2_forward.7} parent=0
    _
  %s9 = ssub.s32 1, %s7
  %s10 = scalar_select 0, %s9, %s7
  // Predicated region
  $region2: #{tacotron2_forward.7} parent=0 // pred_check
    _
  $region3: #{tacotron2_forward.7} parent=0 // pred_check_branch
    %12 = sbr.rel (0) target = $region5
  $region4: #{tacotron2_forward.7} parent=0 // pred_region
    _
  $region5: #{tacotron2_forward.7} parent=0 // pred_fallthru
    _
  // Predicated region
  $region6: #{tacotron2_forward.7} parent=0 // pred_check
    _
  $region7: #{tacotron2_forward.7} parent=0 // pred_check_branch
    %14 = sbr.rel (0) target = $region9
  $region8: #{tacotron2_forward.7} parent=0 // pred_region
    _
  $region9: #{tacotron2_forward.7} parent=0 // pred_fallthru
    _
  // Predicated region
  $region10: #{tacotron2_forward.7} parent=0 // pred_check
    _
  $region11: #{tacotron2_forward.7} parent=0 // pred_check_branch
    %16 = sbr.rel (0) target = $region13
  $region12: #{tacotron2_forward.7} parent=0 // pred_region
    _
  $region13: #{tacotron2_forward.7} parent=0 // pred_fallthru
    _
  // Predicated region
  $region14: #{tacotron2_forward.7} parent=0 // pred_check
    _
  $region15: #{tacotron2_forward.7} parent=0 // pred_check_branch
    %18 = sbr.rel (0) target = $region17
  $region16: #{tacotron2_forward.7} parent=0 // pred_region
    _
  $region17: #{tacotron2_forward.7} parent=0 // pred_fallthru
    _
  %v20 = vld [vmem:[%s0] sm:$0xff]
  %v21 = vld [vmem:[%s0 + $0x8] sm:$0xff]
  %v22 = vpack.c.bf16 %v21, %v20
  %v23 = vld [vmem:[%s1] sm:$0xf]
  %v24 = vld [vmem:[%s1 + $0x4] sm:$0xf]
  %v25 = vld [vmem:[%s1 + $0x8] sm:$0xf]
  %v26 = vld [vmem:[%s1 + $0xc] sm:$0xf]
  %v27 = vld [vmem:[%s2] sm:$0x1]
  %v29 = vlaneseq
  %v30 = vshrl.u32 %v29, 7
  %v31 = vsub.s32 0, %v30
  %v32 = vrot.slane %v27, %v31
  %v38 = vunpack.c.l.b16 %v23
  %v39 = vunpack.c.l.b16 %v24
  %v40 = vunpack.c.l.b16 %v25
  %v41 = vunpack.c.l.b16 %v26
  %v42 = vpack.c.b16 %v39, %v38
  %v43 = vpack.c.b16 %v41, %v40
  %vm46 = vcmask 261120
  %v48 = vsel %vm46, %v22, 0
  %50 = vmatprep.subr.bf16.mxu0 0
  %51 = vmatpush1.bf16.msra.mxu0 %v42
  %52 = vmatprep.subr.bf16.mxu0 0
  %53 = vmatpush1.bf16.msra.mxu0 %v43
  %54 = vmatprep.subr.bf16.mxu0 0
  %55 = vmatpush1.bf16.msra.mxu0 0
  %56 = vmatprep.subr.bf16.mxu0 0
  %57 = vmatpush1.bf16.msra.mxu0 0
  %58 = vmatprep.subr.bf16.mxu0 0
  %59 = vmatpush1.bf16.msra.mxu0 0
  %60 = vmatprep.subr.bf16.mxu0 0
  %61 = vmatpush1.bf16.msra.mxu0 0
  %62 = vmatprep.subr.bf16.mxu0 0
  %63 = vmatpush1.bf16.msra.mxu0 0
  %64 = vmatprep.subr.bf16.mxu0 0
  %65 = vmatpush1.bf16.msra.mxu0 0
  %66 = vmatprep.subr.bf16.mxu0 0
  %67 = vmatpush1.bf16.msra.mxu0 0
  %68 = vmatprep.subr.bf16.mxu0 0
  %69 = vmatpush1.bf16.msra.mxu0 0
  %70 = vmatprep.subr.bf16.mxu0 0
  %71 = vmatpush1.bf16.msra.mxu0 0
  %72 = vmatprep.subr.bf16.mxu0 0
  %73 = vmatpush1.bf16.msra.mxu0 0
  %74 = vmatprep.subr.bf16.mxu0 0
  %75 = vmatpush1.bf16.msra.mxu0 0
  %76 = vmatprep.subr.bf16.mxu0 0
  %77 = vmatpush1.bf16.msra.mxu0 0
  %78 = vmatprep.subr.bf16.mxu0 0
  %79 = vmatpush1.bf16.msra.mxu0 0
  %80 = vmatprep.subr.bf16.mxu0 0
  %81 = vmatpush1.bf16.msra.mxu0 0
  %82 = vmatprep.mubr.bf16.mxu0 0
  %83 = vmatmul.mubr.bf16.gmra.mrb[0].mxu0 %v48
  %v84 = vpop.f32.mrb[0].mxu0
  %v85 = vadd.f32 %v32, %v84
  %v86 = vpop.f32.mrb[0].mxu0
  %v87 = vpop.f32.mrb[0].mxu0
  %v88 = vadd.f32 %v32, %v87
  %v89 = vpop.f32.mrb[0].mxu0
  %90 = vdwg.mxu0
  %v91 = vtanh.pop %v85
  %v92 = vtanh.pop %v88
  %vm93 = vcmask 523264
  %94 = vst.msk [vmem:[%s4] sm:$0xff] %vm93, %v91
  %95 = vst.msk [vmem:[%s4 + $0x8] sm:$0xff] %vm93, %v92
  %v96 = vpack.c.bf16 %v92, %v91
  %v97 = vld [vmem:[%s3] sm:$0xf]
  %v98 = vld [vmem:[%s3 + $0x4] sm:$0xf]
  %v99 = vld [vmem:[%s3 + $0x8] sm:$0xf]
  %v100 = vld [vmem:[%s3 + $0xc] sm:$0xf]
  %v101 = vld [vmem:[%s3 + $0x10] sm:$0xf]
  %v102 = vld [vmem:[%s3 + $0x14] sm:$0xf]
  %v103 = vld [vmem:[%s3 + $0x18] sm:$0xf]
  %v104 = vld [vmem:[%s3 + $0x1c] sm:$0xf]
  %v113 = vunpack.c.l.b16 %v97
  %v114 = vunpack.c.l.b16 %v98
  %v115 = vunpack.c.l.b16 %v99
  %v116 = vunpack.c.l.b16 %v100
  %v117 = vunpack.c.l.b16 %v101
  %v118 = vunpack.c.l.b16 %v102
  %v119 = vunpack.c.l.b16 %v103
  %v120 = vunpack.c.l.b16 %v104
  %v121 = vpack.c.b16 %v114, %v113
  %v122 = vpack.c.b16 %v116, %v115
  %v123 = vpack.c.b16 %v118, %v117
  %v124 = vpack.c.b16 %v120, %v119
  %v130 = vsel %vm93, %v96, 0
  %132 = vmatprep.subr.bf16.mxu0 0
  %133 = vmatpush1.bf16.msra.mxu0 %v121
  %134 = vmatprep.subr.bf16.mxu0 0
  %135 = vmatpush1.bf16.msra.mxu0 %v122
  %136 = vmatprep.subr.bf16.mxu0 0
  %137 = vmatpush1.bf16.msra.mxu0 %v123
  %138 = vmatprep.subr.bf16.mxu0 0
  %139 = vmatpush1.bf16.msra.mxu0 %v124
  %140 = vmatprep.subr.bf16.mxu0 0
  %141 = vmatpush1.bf16.msra.mxu0 0
  %142 = vmatprep.subr.bf16.mxu0 0
  %143 = vmatpush1.bf16.msra.mxu0 0
  %144 = vmatprep.subr.bf16.mxu0 0
  %145 = vmatpush1.bf16.msra.mxu0 0
  %146 = vmatprep.subr.bf16.mxu0 0
  %147 = vmatpush1.bf16.msra.mxu0 0
  %148 = vmatprep.subr.bf16.mxu0 0
  %149 = vmatpush1.bf16.msra.mxu0 0
  %150 = vmatprep.subr.bf16.mxu0 0
  %151 = vmatpush1.bf16.msra.mxu0 0
  %152 = vmatprep.subr.bf16.mxu0 0
  %153 = vmatpush1.bf16.msra.mxu0 0
  %154 = vmatprep.subr.bf16.mxu0 0
  %155 = vmatpush1.bf16.msra.mxu0 0
  %156 = vmatprep.subr.bf16.mxu0 0
  %157 = vmatpush1.bf16.msra.mxu0 0
  %158 = vmatprep.subr.bf16.mxu0 0
  %159 = vmatpush1.bf16.msra.mxu0 0
  %160 = vmatprep.subr.bf16.mxu0 0
  %161 = vmatpush1.bf16.msra.mxu0 0
  %162 = vmatprep.subr.bf16.mxu0 0
  %163 = vmatpush1.bf16.msra.mxu0 0
  %164 = vmatprep.mubr.bf16.mxu0 0
  %165 = vmatmul.mubr.bf16.gmra.mrb[0].mxu0 %v130
  %v166 = vpop.f32.mrb[0].mxu0
  %v167 = vadd.f32 0.0, %v166
  %v168 = vpop.f32.mrb[0].mxu0
  %v169 = vpop.f32.mrb[0].mxu0
  %v170 = vadd.f32 0.0, %v169
  %v171 = vpop.f32.mrb[0].mxu0
  %172 = vdwg.mxu0
  %173 = vst.msk [vmem:[%s5] sm:$0xff] %vm93, %v167
  %174 = vst.msk [vmem:[%s5 + $0x8] sm:$0xff] %vm93, %v170
  // Predicated region
  $region18: #{tacotron2_forward.7} parent=0 // pred_check
    _
  $region19: #{tacotron2_forward.7} parent=0 // pred_check_branch
    %176 = sbr.rel (0) target = $region21
  $region20: #{tacotron2_forward.7} parent=0 // pred_region
    _
  $region21: #{tacotron2_forward.7} parent=0 // pred_fallthru
    _
  // Predicated region
  $region22: #{tacotron2_forward.7} parent=0 // pred_check
    _
  $region23: #{tacotron2_forward.7} parent=0 // pred_check_branch
    %178 = sbr.rel (0) target = $region25
  $region24: #{tacotron2_forward.7} parent=0 // pred_region
    _
  $region25: #{tacotron2_forward.7} parent=0 // pred_fallthru
    _
  // Predicated region
  $region26: #{tacotron2_forward.7} parent=0 // pred_check
    _
  $region27: #{tacotron2_forward.7} parent=0 // pred_check_branch
    %180 = sbr.rel (0) target = $region29
  $region28: #{tacotron2_forward.7} parent=0 // pred_region
    _
  $region29: #{tacotron2_forward.7} parent=0 // pred_fallthru
    _
  // Predicated region
  $region30: #{tacotron2_forward.7} parent=0 // pred_check
    _
  $region31: #{tacotron2_forward.7} parent=0 // pred_check_branch
    %182 = sbr.rel (0) target = $region33
  $region32: #{tacotron2_forward.7} parent=0 // pred_region
    _
  $region33: #{tacotron2_forward.7} parent=0 // pred_fallthru
    _

// kernel: tacotron2_forward.9
$region0: #{tacotron2_forward.9}
  #allocation0 [shape = 'u32[]', space=smem, size = 0x4, offset = 0x4, fixed_abs, tag = 'smem constant byte address 0x4 - core index']
  #allocation1 [shape = 'u32[144,128]{1,0:T(1,128)}', space=vmem, size = 0x12000, scoped, tag = 'internal scratch']
  %s0 = inlined_call_operand.vmem [shape: bf16[480,5], index: 0, kind: input, shape index: {}]
  %s1 = inlined_call_operand.vmem [shape: bf16[5,128], index: 1, kind: input, shape index: {}]
  %s2 = inlined_call_operand.vmem [shape: f32[1,128], index: 2, kind: input, shape index: {}]
  %s3 = inlined_call_operand.vmem [shape: f32[1,128], index: 3, kind: input, shape index: {}]
  %s4 = inlined_call_operand.vmem [shape: f32[480,128], index: 4, kind: output, shape index: {}]
  %s5 = sld [smem:[#allocation0]]
  $region49: #{tacotron2_forward.9} parent=0
    _
  %s7 = ssub.s32 1, %s5
  %s8 = scalar_select 0, %s7, %s5
  loop: start=0, step=1, limit=4
  $region2: #{tacotron2_forward.9} parent=0 // loop_pre_header
    _
  $region3: #{tacotron2_forward.9} parent=0 // loop_header
    %s10 = sphi 0, %s14
    %p11 = scmp.ge.s32.totalorder %s10, 4
    %s20 = sphi 0, %s22
    %s23 = sphi 0, %s20
    %s24 = sphi 0, %s23
    %s40 = sphi 0, %s24
    %s44 = sphi 0, %s44
    %s46 = sphi 0, %s44
    %s47 = sphi 0, %s46
    %s61 = sphi 0, %s47
    %s65 = sphi 0, %s65
    %s67 = sphi 0, %s65
    %s68 = sphi 0, %s67
    %s82 = sphi 0, %s68
    %s86 = sphi 0, %s86
    %s88 = sphi 0, %s86
    %s89 = sphi 0, %s88
    %s103 = sphi 0, %s89
    %s109 = sphi 0, %s111
    %s112 = sphi 0, %s109
    %s113 = sphi 0, %s112
    %s129 = sphi 0, %s113
  $region4: #{tacotron2_forward.9} parent=0 // loop_header_branch
    %13 = sbr.rel (%p11) target = $region8
  $region5: #{tacotron2_forward.9} parent=0 // loop_body
    %s15 = ssub.s32 %s10, 1
    %s16 = ssub.s32 %s10, 2
    %s17 = sadd.s32 %s10, 1
    %s18 = ssub.s32 %s10, %s17
    %p19 = scmp.eq.s32.totalorder %s18, 0
    %s21 = sadd.s32 %s20, 1
    %s22 = scalar_select %p19, %s20, %s21
    %p25 = pneg %p19
    %p26 = scmp.eq.s32.totalorder %s10, 1
    %p27 = por %p25, %p26
    %p28 = scmp.ne.s32.totalorder %s20, %s23
    %p29 = scmp.eq.s32.totalorder %s10, 0
    %p30 = por %p28, %p29
    %p31 = scmp.ne.s32.totalorder %s20, %s23
    %p32 = scmp.eq.s32.totalorder %s15, 1
    %p33 = por %p31, %p32
    %p34 = scmp.ne.s32.totalorder %s23, %s24
    %p35 = scmp.eq.s32.totalorder %s15, 0
    %p36 = por %p34, %p35
    %p37 = scmp.ne.s32.totalorder %s23, %s24
    %p38 = scmp.eq.s32.totalorder %s16, 1
    %p39 = por %p37, %p38
    %p41 = scmp.ne.s32.totalorder %s24, %s40
    %p42 = scmp.eq.s32.totalorder %s16, 0
    %p43 = por %p41, %p42
    %s45 = sadd.s32 %s44, 1
    %p48 = scmp.eq.s32.totalorder %s10, 1
    %p49 = scmp.ne.s32.totalorder %s44, %s46
    %p50 = scmp.eq.s32.totalorder %s10, 0
    %p51 = por %p49, %p50
    %p52 = scmp.ne.s32.totalorder %s44, %s46
    %p53 = scmp.eq.s32.totalorder %s15, 1
    %p54 = por %p52, %p53
    %p55 = scmp.ne.s32.totalorder %s46, %s47
    %p56 = scmp.eq.s32.totalorder %s15, 0
    %p57 = por %p55, %p56
    %p58 = scmp.ne.s32.totalorder %s46, %s47
    %p59 = scmp.eq.s32.totalorder %s16, 1
    %p60 = por %p58, %p59
    %p62 = scmp.ne.s32.totalorder %s47, %s61
    %p63 = scmp.eq.s32.totalorder %s16, 0
    %p64 = por %p62, %p63
    %s66 = sadd.s32 %s65, 1
    %p69 = scmp.eq.s32.totalorder %s10, 1
    %p70 = scmp.ne.s32.totalorder %s65, %s67
    %p71 = scmp.eq.s32.totalorder %s10, 0
    %p72 = por %p70, %p71
    %p73 = scmp.ne.s32.totalorder %s65, %s67
    %p74 = scmp.eq.s32.totalorder %s15, 1
    %p75 = por %p73, %p74
    %p76 = scmp.ne.s32.totalorder %s67, %s68
    %p77 = scmp.eq.s32.totalorder %s15, 0
    %p78 = por %p76, %p77
    %p79 = scmp.ne.s32.totalorder %s67, %s68
    %p80 = scmp.eq.s32.totalorder %s16, 1
    %p81 = por %p79, %p80
    %p83 = scmp.ne.s32.totalorder %s68, %s82
    %p84 = scmp.eq.s32.totalorder %s16, 0
    %p85 = por %p83, %p84
    %s87 = sadd.s32 %s86, 1
    %p90 = scmp.eq.s32.totalorder %s10, 1
    %p91 = scmp.ne.s32.totalorder %s86, %s88
    %p92 = scmp.eq.s32.totalorder %s10, 0
    %p93 = por %p91, %p92
    %p94 = scmp.ne.s32.totalorder %s86, %s88
    %p95 = scmp.eq.s32.totalorder %s15, 1
    %p96 = por %p94, %p95
    %p97 = scmp.ne.s32.totalorder %s88, %s89
    %p98 = scmp.eq.s32.totalorder %s15, 0
    %p99 = por %p97, %p98
    %p100 = scmp.ne.s32.totalorder %s88, %s89
    %p101 = scmp.eq.s32.totalorder %s16, 1
    %p102 = por %p100, %p101
    %p104 = scmp.ne.s32.totalorder %s89, %s103
    %p105 = scmp.eq.s32.totalorder %s16, 0
    %p106 = por %p104, %p105
    %s107 = ssub.s32 %s10, %s17
    %p108 = scmp.eq.s32.totalorder %s107, 0
    %s110 = sadd.s32 %s109, 1
    %s111 = scalar_select %p108, %s109, %s110
    %p114 = pneg %p108
    %p115 = scmp.eq.s32.totalorder %s10, 1
    %p116 = por %p114, %p115
    %p117 = scmp.ne.s32.totalorder %s109, %s112
    %p118 = scmp.eq.s32.totalorder %s10, 0
    %p119 = por %p117, %p118
    %p120 = scmp.ne.s32.totalorder %s109, %s112
    %p121 = scmp.eq.s32.totalorder %s15, 1
    %p122 = por %p120, %p121
    %p123 = scmp.ne.s32.totalorder %s112, %s113
    %p124 = scmp.eq.s32.totalorder %s15, 0
    %p125 = por %p123, %p124
    %p126 = scmp.ne.s32.totalorder %s112, %s113
    %p127 = scmp.eq.s32.totalorder %s16, 1
    %p128 = por %p126, %p127
    %p130 = scmp.ne.s32.totalorder %s113, %s129
    %p131 = scmp.eq.s32.totalorder %s16, 0
    %p132 = por %p130, %p131
    %p133 = scmp.le.s32.totalorder 1, %s10
    %p134 = scmp.lt.s32.totalorder %s10, 3
    %p135 = pnand %p133, %p134
    %p136 = pneg %p135
    // Predicated region
    $region9: #{tacotron2_forward.9} parent=5 // pred_check
      _
    $region10: #{tacotron2_forward.9} parent=5 // pred_check_branch
      %138 = sbr.rel (%p135) target = $region12
    $region11: #{tacotron2_forward.9} parent=5 // pred_region
      %s139 = ssub.s32 %s10, 1
      // Predicated region
      $region13: #{tacotron2_forward.9} parent=11 // pred_check
        %p140 = pneg %p57
      $region14: #{tacotron2_forward.9} parent=11 // pred_check_branch
        %142 = sbr.rel (%p140) target = $region16
      $region15: #{tacotron2_forward.9} parent=11 // pred_region
        _
      $region16: #{tacotron2_forward.9} parent=11 // pred_fallthru
        _
      // Predicated region
      $region17: #{tacotron2_forward.9} parent=11 // pred_check
        %p143 = pneg %p78
      $region18: #{tacotron2_forward.9} parent=11 // pred_check_branch
        %145 = sbr.rel (%p143) target = $region20
      $region19: #{tacotron2_forward.9} parent=11 // pred_region
        _
      $region20: #{tacotron2_forward.9} parent=11 // pred_fallthru
        _
      // Predicated region
      $region21: #{tacotron2_forward.9} parent=11 // pred_check
        %p146 = pneg %p99
      $region22: #{tacotron2_forward.9} parent=11 // pred_check_branch
        %148 = sbr.rel (%p146) target = $region24
      $region23: #{tacotron2_forward.9} parent=11 // pred_region
        _
      $region24: #{tacotron2_forward.9} parent=11 // pred_fallthru
        _
    $region12: #{tacotron2_forward.9} parent=5 // pred_fallthru
      _
    %p149 = scmp.lt.s32.totalorder %s10, 2
    // Predicated region
    $region25: #{tacotron2_forward.9} parent=5 // pred_check
      %p150 = pneg %p149
    $region26: #{tacotron2_forward.9} parent=5 // pred_check_branch
      %152 = sbr.rel (%p150) target = $region28
    $region27: #{tacotron2_forward.9} parent=5 // pred_region
      // Predicated region
      $region29: #{tacotron2_forward.9} parent=27 // pred_check
        %p153 = pneg %p30
      $region30: #{tacotron2_forward.9} parent=27 // pred_check_branch
        %155 = sbr.rel (%p153) target = $region32
      $region31: #{tacotron2_forward.9} parent=27 // pred_region
        %s156 = smul.u32 30, %s10
        %p157 = scmp.lt.s32.totalorder %s156, 59
        %s158 = scalar_select %p157, %s156, 59
        %s159 = smul.addr %s158, 4
        %s160 = scalar_lea.vmem %s0, %s159
        %s161 = smul.u32 30, %s10
      $region32: #{tacotron2_forward.9} parent=27 // pred_fallthru
        _
    $region28: #{tacotron2_forward.9} parent=5 // pred_fallthru
      _
    %p162 = scmp.le.s32.totalorder 1, %s10
    %p163 = scmp.lt.s32.totalorder %s10, 3
    %p164 = pnand %p162, %p163
    %p165 = pneg %p164
    // Predicated region
    $region33: #{tacotron2_forward.9} parent=5 // pred_check
      _
    $region34: #{tacotron2_forward.9} parent=5 // pred_check_branch
      %167 = sbr.rel (%p164) target = $region36
    $region35: #{tacotron2_forward.9} parent=5 // pred_region
      %s168 = ssub.s32 %s10, 1
      %s169 = smul.u32 30, %s15
      %p170 = scmp.lt.s32.totalorder %s169, 59
      %s171 = scalar_select %p170, %s169, 59
      %s172 = smul.addr %s171, 4
      %s173 = scalar_lea.vmem %s0, %s172
      %p174 = pneg %p36
      %p175 = pneg %p33
      %p176 = pneg %p57
      %p177 = pneg %p54
      %p178 = pneg %p78
      %p179 = pneg %p75
      %p180 = pneg %p99
      %p181 = pneg %p96
      %p182 = pneg %p125
      %p183 = pneg %p122
      %s184 = smul.u32 30, %s15
      %p185 = scmp.lt.s32.totalorder %s184, 59
      %s186 = scalar_select %p185, %s184, 59
      %s187 = smul.addr %s186, 8
      %s188 = scalar_lea.vmem %s4, %s187
      %s189 = smul.u32 30, %s15
      %p190 = scmp.lt.s32.totalorder %s189, 59
      %s191 = scalar_select %p190, %s189, 59
      %s192 = smul.addr %s191, 4
      %s193 = scalar_lea.vmem %s0, %s192
      %s194 = smul.u32 30, %s15
      %s195 = smul.u32 30, %s15
      %p196 = scmp.lt.s32.totalorder %s195, 59
      %s197 = scalar_select %p196, %s195, 59
      %s198 = smul.addr %s197, 8
      %s199 = scalar_lea.vmem %s4, %s198
      %s200 = smul.u32 30, %s15
      %v202 = vld [vmem:[%s193] sm:$0xf]
      %v203 = vld [vmem:[%s193 + $0x4] sm:$0xf]
      %v204 = vld [vmem:[%s193 + $0x8] sm:$0xf]
      %v205 = vld [vmem:[%s193 + $0xc] sm:$0xf]
      %v206 = vld [vmem:[%s193 + $0x10] sm:$0xf]
      %v207 = vld [vmem:[%s193 + $0x14] sm:$0xf]
      %v208 = vld [vmem:[%s193 + $0x18] sm:$0xf]
      %v209 = vld [vmem:[%s193 + $0x1c] sm:$0xf]
      %v210 = vld [vmem:[%s193 + $0x20] sm:$0xf]
      %v211 = vld [vmem:[%s193 + $0x24] sm:$0xf]
      %v212 = vld [vmem:[%s193 + $0x28] sm:$0xf]
      %v213 = vld [vmem:[%s193 + $0x2c] sm:$0xf]
      %v214 = vld [vmem:[%s193 + $0x30] sm:$0xf]
      %v215 = vld [vmem:[%s193 + $0x34] sm:$0xf]
      %v216 = vld [vmem:[%s193 + $0x38] sm:$0xf]
      %v217 = vld [vmem:[%s193 + $0x3c] sm:$0xf]
      %v218 = vld [vmem:[%s193 + $0x40] sm:$0xf]
      %v219 = vld [vmem:[%s193 + $0x44] sm:$0xf]
      %v220 = vld [vmem:[%s193 + $0x48] sm:$0xf]
      %v221 = vld [vmem:[%s193 + $0x4c] sm:$0xf]
      %v222 = vld [vmem:[%s193 + $0x50] sm:$0xf]
      %v223 = vld [vmem:[%s193 + $0x54] sm:$0xf]
      %v224 = vld [vmem:[%s193 + $0x58] sm:$0xf]
      %v225 = vld [vmem:[%s193 + $0x5c] sm:$0xf]
      %v226 = vld [vmem:[%s193 + $0x60] sm:$0xf]
      %v227 = vld [vmem:[%s193 + $0x64] sm:$0xf]
      %v228 = vld [vmem:[%s193 + $0x68] sm:$0xf]
      %v229 = vld [vmem:[%s193 + $0x6c] sm:$0xf]
      %v230 = vld [vmem:[%s193 + $0x70] sm:$0xf]
      %v231 = vld [vmem:[%s193 + $0x74] sm:$0xf]
      %v232 = vld [vmem:[%s1] sm:$0x7]
      %v263 = vunpack.c.l.b16 %v202
      %v264 = vunpack.c.l.b16 %v203
      %v265 = vunpack.c.l.b16 %v204
      %v266 = vunpack.c.l.b16 %v205
      %v267 = vunpack.c.l.b16 %v206
      %v268 = vunpack.c.l.b16 %v207
      %v269 = vunpack.c.l.b16 %v208
      %v270 = vunpack.c.l.b16 %v209
      %v271 = vunpack.c.l.b16 %v210
      %v272 = vunpack.c.l.b16 %v211
      %v273 = vunpack.c.l.b16 %v212
      %v274 = vunpack.c.l.b16 %v213
      %v275 = vunpack.c.l.b16 %v214
      %v276 = vunpack.c.l.b16 %v215
      %v277 = vunpack.c.l.b16 %v216
      %v278 = vunpack.c.l.b16 %v217
      %v279 = vunpack.c.l.b16 %v218
      %v280 = vunpack.c.l.b16 %v219
      %v281 = vunpack.c.l.b16 %v220
      %v282 = vunpack.c.l.b16 %v221
      %v283 = vunpack.c.l.b16 %v222
      %v284 = vunpack.c.l.b16 %v223
      %v285 = vunpack.c.l.b16 %v224
      %v286 = vunpack.c.l.b16 %v225
      %v287 = vunpack.c.l.b16 %v226
      %v288 = vunpack.c.l.b16 %v227
      %v289 = vunpack.c.l.b16 %v228
      %v290 = vunpack.c.l.b16 %v229
      %v291 = vunpack.c.l.b16 %v230
      %v292 = vunpack.c.l.b16 %v231
      %v293 = vpack.c.b16 %v264, %v263
      %v294 = vpack.c.b16 %v266, %v265
      %v295 = vpack.c.b16 %v268, %v267
      %v296 = vpack.c.b16 %v270, %v269
      %v297 = vpack.c.b16 %v272, %v271
      %v298 = vpack.c.b16 %v274, %v273
      %v299 = vpack.c.b16 %v276, %v275
      %v300 = vpack.c.b16 %v278, %v277
      %v301 = vpack.c.b16 %v280, %v279
      %v302 = vpack.c.b16 %v282, %v281
      %v303 = vpack.c.b16 %v284, %v283
      %v304 = vpack.c.b16 %v286, %v285
      %v305 = vpack.c.b16 %v288, %v287
      %v306 = vpack.c.b16 %v290, %v289
      %v307 = vpack.c.b16 %v292, %v291
      %vm308 = vcmask 39936
      %v310 = vsel %vm308, %v293, 0
      %v313 = vsel %vm308, %v294, 0
      %v316 = vsel %vm308, %v295, 0
      %v319 = vsel %vm308, %v296, 0
      %v322 = vsel %vm308, %v297, 0
      %v325 = vsel %vm308, %v298, 0
      %v328 = vsel %vm308, %v299, 0
      %v331 = vsel %vm308, %v300, 0
      %v334 = vsel %vm308, %v301, 0
      %v337 = vsel %vm308, %v302, 0
      %v340 = vsel %vm308, %v303, 0
      %v343 = vsel %vm308, %v304, 0
      %v346 = vsel %vm308, %v305, 0
      %v349 = vsel %vm308, %v306, 0
      %v352 = vsel %vm308, %v307, 0
      %vm354 = vcmask 1041408
      %vm355 = vcmask 1042432
      %v356 = vsel %vm354, 4294967295, 65535
      %v357 = vsel %vm355, %v356, 0
      %v359 = vand.u32 %v232, %v357
      %361 = vmatprep.subr.bf16.mxu0 0
      %362 = vmatpush1.bf16.msra.mxu0 %v359
      %363 = vmatprep.subr.bf16.mxu0 0
      %364 = vmatpush1.bf16.msra.mxu0 0
      %365 = vmatprep.subr.bf16.mxu0 0
      %366 = vmatpush1.bf16.msra.mxu0 0
      %367 = vmatprep.subr.bf16.mxu0 0
      %368 = vmatpush1.bf16.msra.mxu0 0
      %369 = vmatprep.subr.bf16.mxu0 0
      %370 = vmatpush1.bf16.msra.mxu0 0
      %371 = vmatprep.subr.bf16.mxu0 0
      %372 = vmatpush1.bf16.msra.mxu0 0
      %373 = vmatprep.subr.bf16.mxu0 0
      %374 = vmatpush1.bf16.msra.mxu0 0
      %375 = vmatprep.subr.bf16.mxu0 0
      %376 = vmatpush1.bf16.msra.mxu0 0
      %377 = vmatprep.subr.bf16.mxu0 0
      %378 = vmatpush1.bf16.msra.mxu0 0
      %379 = vmatprep.subr.bf16.mxu0 0
      %380 = vmatpush1.bf16.msra.mxu0 0
      %381 = vmatprep.subr.bf16.mxu0 0
      %382 = vmatpush1.bf16.msra.mxu0 0
      %383 = vmatprep.subr.bf16.mxu0 0
      %384 = vmatpush1.bf16.msra.mxu0 0
      %385 = vmatprep.subr.bf16.mxu0 0
      %386 = vmatpush1.bf16.msra.mxu0 0
      %387 = vmatprep.subr.bf16.mxu0 0
      %388 = vmatpush1.bf16.msra.mxu0 0
      %389 = vmatprep.subr.bf16.mxu0 0
      %390 = vmatpush1.bf16.msra.mxu0 0
      %391 = vmatprep.subr.bf16.mxu0 0
      %392 = vmatpush1.bf16.msra.mxu0 0
      %393 = vmatprep.mubr.bf16.mxu0 0
      %394 = vmatmul.mubr.bf16.gmra.mrb[0].mxu0 %v310
      %v395 = vpop.f32.mrb[0].mxu0
      %v396 = vadd.f32 0.0, %v395
      %v397 = vpop.f32.mrb[0].mxu0
      %v398 = vpop.f32.mrb[0].mxu0
      %v399 = vadd.f32 0.0, %v398
      %v400 = vpop.f32.mrb[0].mxu0
      %401 = vmatprep.mubr.bf16.mxu0 0
      %402 = vmatmul.mubr.bf16.gmra.mrb[0].mxu0 %v313
      %v403 = vpop.f32.mrb[0].mxu0
      %v404 = vadd.f32 0.0, %v403
      %v405 = vpop.f32.mrb[0].mxu0
      %v406 = vpop.f32.mrb[0].mxu0
      %v407 = vadd.f32 0.0, %v406
      %v408 = vpop.f32.mrb[0].mxu0
      %409 = vmatprep.mubr.bf16.mxu0 0
      %410 = vmatmul.mubr.bf16.gmra.mrb[0].mxu0 %v316
      %v411 = vpop.f32.mrb[0].mxu0
      %v412 = vadd.f32 0.0, %v411
      %v413 = vpop.f32.mrb[0].mxu0
      %v414 = vpop.f32.mrb[0].mxu0
      %v415 = vadd.f32 0.0, %v414
      %v416 = vpop.f32.mrb[0].mxu0
      %417 = vmatprep.mubr.bf16.mxu0 0
      %418 = vmatmul.mubr.bf16.gmra.mrb[0].mxu0 %v319
      %v419 = vpop.f32.mrb[0].mxu0
      %v420 = vadd.f32 0.0, %v419
      %v421 = vpop.f32.mrb[0].mxu0
      %v422 = vpop.f32.mrb[0].mxu0
      %v423 = vadd.f32 0.0, %v422
      %v424 = vpop.f32.mrb[0].mxu0
      %425 = vmatprep.mubr.bf16.mxu0 0
      %426 = vmatmul.mubr.bf16.gmra.mrb[0].mxu0 %v322
      %v427 = vpop.f32.mrb[0].mxu0
      %v428 = vadd.f32 0.0, %v427
      %v429 = vpop.f32.mrb[0].mxu0
      %v430 = vpop.f32.mrb[0].mxu0
      %v431 = vadd.f32 0.0, %v430
      %v432 = vpop.f32.mrb[0].mxu0
      %433 = vmatprep.mubr.bf16.mxu0 0
      %434 = vmatmul.mubr.bf16.gmra.mrb[0].mxu0 %v325
      %v435 = vpop.f32.mrb[0].mxu0
      %v436 = vadd.f32 0.0, %v435
      %v437 = vpop.f32.mrb[0].mxu0
      %v438 = vpop.f32.mrb[0].mxu0
      %v439 = vadd.f32 0.0, %v438
      %v440 = vpop.f32.mrb[0].mxu0
      %441 = vmatprep.mubr.bf16.mxu0 0
      %442 = vmatmul.mubr.bf16.gmra.mrb[0].mxu0 %v328
      %v443 = vpop.f32.mrb[0].mxu0
      %v444 = vadd.f32 0.0, %v443
      %v445 = vpop.f32.mrb[0].mxu0
      %v446 = vpop.f32.mrb[0].mxu0
      %v447 = vadd.f32 0.0, %v446
      %v448 = vpop.f32.mrb[0].mxu0
      %449 = vmatprep.mubr.bf16.mxu0 0
      %450 = vmatmul.mubr.bf16.gmra.mrb[0].mxu0 %v331
      %v451 = vpop.f32.mrb[0].mxu0
      %v452 = vadd.f32 0.0, %v451
      %v453 = vpop.f32.mrb[0].mxu0
      %v454 = vpop.f32.mrb[0].mxu0
      %v455 = vadd.f32 0.0, %v454
      %v456 = vpop.f32.mrb[0].mxu0
      %457 = vmatprep.mubr.bf16.mxu0 0
      %458 = vmatmul.mubr.bf16.gmra.mrb[0].mxu0 %v334
      %v459 = vpop.f32.mrb[0].mxu0
      %v460 = vadd.f32 0.0, %v459
      %v461 = vpop.f32.mrb[0].mxu0
      %v462 = vpop.f32.mrb[0].mxu0
      %v463 = vadd.f32 0.0, %v462
      %v464 = vpop.f32.mrb[0].mxu0
      %465 = vmatprep.mubr.bf16.mxu0 0
      %466 = vmatmul.mubr.bf16.gmra.mrb[0].mxu0 %v337
      %v467 = vpop.f32.mrb[0].mxu0
      %v468 = vadd.f32 0.0, %v467
      %v469 = vpop.f32.mrb[0].mxu0
      %v470 = vpop.f32.mrb[0].mxu0
      %v471 = vadd.f32 0.0, %v470
      %v472 = vpop.f32.mrb[0].mxu0
      %473 = vmatprep.mubr.bf16.mxu0 0
      %474 = vmatmul.mubr.bf16.gmra.mrb[0].mxu0 %v340
      %v475 = vpop.f32.mrb[0].mxu0
      %v476 = vadd.f32 0.0, %v475
      %v477 = vpop.f32.mrb[0].mxu0
      %v478 = vpop.f32.mrb[0].mxu0
      %v479 = vadd.f32 0.0, %v478
      %v480 = vpop.f32.mrb[0].mxu0
      %481 = vmatprep.mubr.bf16.mxu0 0
      %482 = vmatmul.mubr.bf16.gmra.mrb[0].mxu0 %v343
      %v483 = vpop.f32.mrb[0].mxu0
      %v484 = vadd.f32 0.0, %v483
      %v485 = vpop.f32.mrb[0].mxu0
      %v486 = vpop.f32.mrb[0].mxu0
      %v487 = vadd.f32 0.0, %v486
      %v488 = vpop.f32.mrb[0].mxu0
      %489 = vmatprep.mubr.bf16.mxu0 0
      %490 = vmatmul.mubr.bf16.gmra.mrb[0].mxu0 %v346
      %v491 = vpop.f32.mrb[0].mxu0
      %v492 = vadd.f32 0.0, %v491
      %v493 = vpop.f32.mrb[0].mxu0
      %v494 = vpop.f32.mrb[0].mxu0
      %v495 = vadd.f32 0.0, %v494
      %v496 = vpop.f32.mrb[0].mxu0
      %497 = vmatprep.mubr.bf16.mxu0 0
      %498 = vmatmul.mubr.bf16.gmra.mrb[0].mxu0 %v349
      %v499 = vpop.f32.mrb[0].mxu0
      %v500 = vadd.f32 0.0, %v499
      %v501 = vpop.f32.mrb[0].mxu0
      %v502 = vpop.f32.mrb[0].mxu0
      %v503 = vadd.f32 0.0, %v502
      %v504 = vpop.f32.mrb[0].mxu0
      %505 = vmatprep.mubr.bf16.mxu0 0
      %506 = vmatmul.mubr.bf16.gmra.mrb[0].mxu0 %v352
      %v507 = vpop.f32.mrb[0].mxu0
      %v508 = vadd.f32 0.0, %v507
      %v509 = vpop.f32.mrb[0].mxu0
      %v510 = vpop.f32.mrb[0].mxu0
      %v511 = vadd.f32 0.0, %v510
      %v512 = vpop.f32.mrb[0].mxu0
      %513 = vdwg.mxu0
      %v514 = vld [vmem:[%s2] sm:$0x1]
      %v516 = vlaneseq
      %v517 = vshrl.u32 %v516, 7
      %v518 = vsub.s32 0, %v517
      %v519 = vrot.slane %v514, %v518
      %v521 = vmul.f32 %v396, %v519
      %v522 = vmul.f32 %v399, %v519
      %v523 = vmul.f32 %v404, %v519
      %v524 = vmul.f32 %v407, %v519
      %v525 = vmul.f32 %v412, %v519
      %v526 = vmul.f32 %v415, %v519
      %v527 = vmul.f32 %v420, %v519
      %v528 = vmul.f32 %v423, %v519
      %v529 = vmul.f32 %v428, %v519
      %v530 = vmul.f32 %v431, %v519
      %v531 = vmul.f32 %v436, %v519
      %v532 = vmul.f32 %v439, %v519
      %v533 = vmul.f32 %v444, %v519
      %v534 = vmul.f32 %v447, %v519
      %v535 = vmul.f32 %v452, %v519
      %v536 = vmul.f32 %v455, %v519
      %v537 = vmul.f32 %v460, %v519
      %v538 = vmul.f32 %v463, %v519
      %v539 = vmul.f32 %v468, %v519
      %v540 = vmul.f32 %v471, %v519
      %v541 = vmul.f32 %v476, %v519
      %v542 = vmul.f32 %v479, %v519
      %v543 = vmul.f32 %v484, %v519
      %v544 = vmul.f32 %v487, %v519
      %v545 = vmul.f32 %v492, %v519
      %v546 = vmul.f32 %v495, %v519
      %v547 = vmul.f32 %v500, %v519
      %v548 = vmul.f32 %v503, %v519
      %v549 = vmul.f32 %v508, %v519
      %v550 = vmul.f32 %v511, %v519
      %v551 = vld [vmem:[%s3] sm:$0x1]
      %v553 = vlaneseq
      %v554 = vshrl.u32 %v553, 7
      %v555 = vsub.s32 0, %v554
      %v556 = vrot.slane %v551, %v555
      %v558 = vadd.f32 %v521, %v556
      %v559 = vadd.f32 %v522, %v556
      %v560 = vadd.f32 %v523, %v556
      %v561 = vadd.f32 %v524, %v556
      %v562 = vadd.f32 %v525, %v556
      %v563 = vadd.f32 %v526, %v556
      %v564 = vadd.f32 %v527, %v556
      %v565 = vadd.f32 %v528, %v556
      %v566 = vadd.f32 %v529, %v556
      %v567 = vadd.f32 %v530, %v556
      %v568 = vadd.f32 %v531, %v556
      %v569 = vadd.f32 %v532, %v556
      %v570 = vadd.f32 %v533, %v556
      %v571 = vadd.f32 %v534, %v556
      %v572 = vadd.f32 %v535, %v556
      %v573 = vadd.f32 %v536, %v556
      %v574 = vadd.f32 %v537, %v556
      %v575 = vadd.f32 %v538, %v556
      %v576 = vadd.f32 %v539, %v556
      %v577 = vadd.f32 %v540, %v556
      %v578 = vadd.f32 %v541, %v556
      %v579 = vadd.f32 %v542, %v556
      %v580 = vadd.f32 %v543, %v556
      %v581 = vadd.f32 %v544, %v556
      %v582 = vadd.f32 %v545, %v556
      %v583 = vadd.f32 %v546, %v556
      %v584 = vadd.f32 %v547, %v556
      %v585 = vadd.f32 %v548, %v556
      %v586 = vadd.f32 %v549, %v556
      %v587 = vadd.f32 %v550, %v556
      %v588 = vtanh.pop %v558
      %v589 = vtanh.pop %v559
      %v590 = vtanh.pop %v560
      %v591 = vtanh.pop %v561
      %v592 = vtanh.pop %v562
      %v593 = vtanh.pop %v563
      %v594 = vtanh.pop %v564
      %v595 = vtanh.pop %v565
      %v596 = vtanh.pop %v566
      %v597 = vtanh.pop %v567
      %v598 = vtanh.pop %v568
      %v599 = vtanh.pop %v569
      %v600 = vtanh.pop %v570
      %v601 = vtanh.pop %v571
      %v602 = vtanh.pop %v572
      %v603 = vtanh.pop %v573
      %v604 = vtanh.pop %v574
      %v605 = vtanh.pop %v575
      %v606 = vtanh.pop %v576
      %v607 = vtanh.pop %v577
      %v608 = vtanh.pop %v578
      %v609 = vtanh.pop %v579
      %v610 = vtanh.pop %v580
      %v611 = vtanh.pop %v581
      %v612 = vtanh.pop %v582
      %v613 = vtanh.pop %v583
      %v614 = vtanh.pop %v584
      %v615 = vtanh.pop %v585
      %v616 = vtanh.pop %v586
      %v617 = vtanh.pop %v587
      %618 = vst [vmem:[%s199] sm:$0xff] %v588
      %619 = vst [vmem:[%s199 + $0x8] sm:$0xff] %v589
      %620 = vst [vmem:[%s199 + $0x10] sm:$0xff] %v590
      %621 = vst [vmem:[%s199 + $0x18] sm:$0xff] %v591
      %622 = vst [vmem:[%s199 + $0x20] sm:$0xff] %v592
      %623 = vst [vmem:[%s199 + $0x28] sm:$0xff] %v593
      %624 = vst [vmem:[%s199 + $0x30] sm:$0xff] %v594
      %625 = vst [vmem:[%s199 + $0x38] sm:$0xff] %v595
      %626 = vst [vmem:[%s199 + $0x40] sm:$0xff] %v596
      %627 = vst [vmem:[%s199 + $0x48] sm:$0xff] %v597
      %628 = vst [vmem:[%s199 + $0x50] sm:$0xff] %v598
      %629 = vst [vmem:[%s199 + $0x58] sm:$0xff] %v599
      %630 = vst [vmem:[%s199 + $0x60] sm:$0xff] %v600
      %631 = vst [vmem:[%s199 + $0x68] sm:$0xff] %v601
      %632 = vst [vmem:[%s199 + $0x70] sm:$0xff] %v602
      %633 = vst [vmem:[%s199 + $0x78] sm:$0xff] %v603
      %634 = vst [vmem:[%s199 + $0x80] sm:$0xff] %v604
      %635 = vst [vmem:[%s199 + $0x88] sm:$0xff] %v605
      %636 = vst [vmem:[%s199 + $0x90] sm:$0xff] %v606
      %637 = vst [vmem:[%s199 + $0x98] sm:$0xff] %v607
      %638 = vst [vmem:[%s199 + $0xa0] sm:$0xff] %v608
      %639 = vst [vmem:[%s199 + $0xa8] sm:$0xff] %v609
      %640 = vst [vmem:[%s199 + $0xb0] sm:$0xff] %v610
      %641 = vst [vmem:[%s199 + $0xb8] sm:$0xff] %v611
      %642 = vst [vmem:[%s199 + $0xc0] sm:$0xff] %v612
      %643 = vst [vmem:[%s199 + $0xc8] sm:$0xff] %v613
      %644 = vst [vmem:[%s199 + $0xd0] sm:$0xff] %v614
      %645 = vst [vmem:[%s199 + $0xd8] sm:$0xff] %v615
      %646 = vst [vmem:[%s199 + $0xe0] sm:$0xff] %v616
      %647 = vst [vmem:[%s199 + $0xe8] sm:$0xff] %v617
      %s648 = smul.u32 30, %s15
      %p649 = scmp.lt.s32.totalorder %s648, 59
      %s650 = scalar_select %p649, %s648, 59
      %s651 = smul.addr %s650, 8
      %s652 = scalar_lea.vmem %s4, %s651
      // Predicated region
      $region37: #{tacotron2_forward.9} parent=35 // pred_check
        %p653 = pneg %p122
      $region38: #{tacotron2_forward.9} parent=35 // pred_check_branch
        %655 = sbr.rel (%p653) target = $region40
      $region39: #{tacotron2_forward.9} parent=35 // pred_region
        %s656 = smul.u32 30, %s15
      $region40: #{tacotron2_forward.9} parent=35 // pred_fallthru
        _
    $region36: #{tacotron2_forward.9} parent=5 // pred_fallthru
      _
    %p657 = scmp.le.s32.totalorder 2, %s10
    // Predicated region
    $region41: #{tacotron2_forward.9} parent=5 // pred_check
      %p658 = pneg %p657
    $region42: #{tacotron2_forward.9} parent=5 // pred_check_branch
      %660 = sbr.rel (%p658) target = $region44
    $region43: #{tacotron2_forward.9} parent=5 // pred_region
      %s661 = ssub.s32 %s10, 2
      // Predicated region
      $region45: #{tacotron2_forward.9} parent=43 // pred_check
        %p662 = pneg %p128
      $region46: #{tacotron2_forward.9} parent=43 // pred_check_branch
        %664 = sbr.rel (%p662) target = $region48
      $region47: #{tacotron2_forward.9} parent=43 // pred_region
        %s665 = smul.u32 30, %s16
        %p666 = scmp.lt.s32.totalorder %s665, 59
        %s667 = scalar_select %p666, %s665, 59
        %s668 = smul.addr %s667, 8
        %s669 = scalar_lea.vmem %s4, %s668
      $region48: #{tacotron2_forward.9} parent=43 // pred_fallthru
        _
    $region44: #{tacotron2_forward.9} parent=5 // pred_fallthru
      _
  $region6: #{tacotron2_forward.9} parent=0 // loop_footer
    %s14 = sadd.s32 1, %s10
  $region7: #{tacotron2_forward.9} parent=0 // loop_footer_branch
    %9 = sbr.rel target = $region3
  $region8: #{tacotron2_forward.9} parent=0 // loop_exit
    _

// kernel: tacotron2_forward.8
$region0: #{tacotron2_forward.8}
  #allocation0 [shape = 'u32[]', space=smem, size = 0x4, offset = 0x4, fixed_abs, tag = 'smem constant byte address 0x4 - core index']
  #allocation1 [shape = 'u32[144,128]{1,0:T(1,128)}', space=vmem, size = 0x12000, scoped, tag = 'internal scratch']
  #allocation2 [shape = 'f32[2,128]{1,0:T(2,128)}', space=vmem, size = 0x400, scoped, tag = 'scratch operand']
  #allocation3 [shape = 'f32[2,128]{1,0:T(2,128)}', space=vmem, size = 0x400, scoped, tag = 'scratch operand']
  #allocation4 [shape = 'f32[2,128]{1,0:T(2,128)}', space=vmem, size = 0x400, scoped, tag = 'scratch operand']
  #allocation5 [shape = 'f32[2,128]{1,0:T(2,128)}', space=vmem, size = 0x400, scoped, tag = 'scratch operand']
  %s0 = inlined_call_operand.vmem [shape: f32[3,2,80], index: 0, kind: input, shape index: {}]
  %s1 = inlined_call_operand.vmem [shape: f32[2,8,64], index: 1, kind: input, shape index: {}]
  %s2 = inlined_call_operand.vmem [shape: f32[2,8,64], index: 2, kind: input, shape index: {}]
  %s3 = inlined_call_operand.vmem [shape: bf16[80,64], index: 3, kind: input, shape index: {}]
  %s4 = inlined_call_operand.vmem [shape: f32[1,64], index: 4, kind: input, shape index: {}]
  %s5 = inlined_call_operand.vmem [shape: bf16[64,64], index: 5, kind: input, shape index: {}]
  %s6 = inlined_call_operand.vmem [shape: f32[1,64], index: 6, kind: input, shape index: {}]
  %s7 = inlined_call_operand.vmem [shape: bf16[128,64], index: 7, kind: input, shape index: {}]
  %s8 = inlined_call_operand.vmem [shape: f32[1,64], index: 8, kind: input, shape index: {}]
  %s9 = inlined_call_operand.vmem [shape: bf16[64,512], index: 9, kind: input, shape index: {}]
  %s10 = inlined_call_operand.vmem [shape: bf16[64,512], index: 10, kind: input, shape index: {}]
  %s11 = inlined_call_operand.vmem [shape: bf16[128,512], index: 11, kind: input, shape index: {}]
  %s12 = inlined_call_operand.vmem [shape: f32[1,512], index: 12, kind: input, shape index: {}]
  %s13 = inlined_call_operand.vmem [shape: bf16[128,512], index: 13, kind: input, shape index: {}]
  %s14 = inlined_call_operand.vmem [shape: bf16[128,512], index: 14, kind: input, shape index: {}]
  %s15 = inlined_call_operand.vmem [shape: f32[1,512], index: 15, kind: input, shape index: {}]
  %s16 = inlined_call_operand.vmem [shape: bf16[128,128], index: 16, kind: input, shape index: {}]
  %s17 = inlined_call_operand.vmem [shape: bf16[64,128], index: 17, kind: input, shape index: {}]
  %s18 = inlined_call_operand.vmem [shape: f32[1,128], index: 18, kind: input, shape index: {}]
  %s19 = inlined_call_operand.vmem [shape: f32[3,2,128], index: 19, kind: output, shape index: {}]
  %s20 = sld [smem:[#allocation0]]
  $region113: #{tacotron2_forward.8} parent=0
    _
  %s22 = ssub.s32 1, %s20
  %s23 = scalar_select 0, %s22, %s20
  loop: start=0, step=1, limit=5
  $region2: #{tacotron2_forward.8} parent=0 // loop_pre_header
    _
  $region3: #{tacotron2_forward.8} parent=0 // loop_header
    %s25 = sphi 0, %s29
    %p26 = scmp.ge.s32.totalorder %s25, 5
    %s35 = sphi 0, %s37
    %s38 = sphi 0, %s35
    %s39 = sphi 0, %s38
    %s55 = sphi 0, %s39
    %s59 = sphi 0, %s59
    %s61 = sphi 0, %s59
    %s62 = sphi 0, %s61
    %s76 = sphi 0, %s62
    %s80 = sphi 0, %s80
    %s82 = sphi 0, %s80
    %s83 = sphi 0, %s82
    %s97 = sphi 0, %s83
    %s101 = sphi 0, %s101
    %s103 = sphi 0, %s101
    %s104 = sphi 0, %s103
    %s118 = sphi 0, %s104
    %s122 = sphi 0, %s122
    %s124 = sphi 0, %s122
    %s125 = sphi 0, %s124
    %s139 = sphi 0, %s125
    %s143 = sphi 0, %s143
    %s145 = sphi 0, %s143
    %s146 = sphi 0, %s145
    %s160 = sphi 0, %s146
    %s164 = sphi 0, %s164
    %s166 = sphi 0, %s164
    %s167 = sphi 0, %s166
    %s181 = sphi 0, %s167
    %s185 = sphi 0, %s185
    %s187 = sphi 0, %s185
    %s188 = sphi 0, %s187
    %s202 = sphi 0, %s188
    %s206 = sphi 0, %s206
    %s208 = sphi 0, %s206
    %s209 = sphi 0, %s208
    %s223 = sphi 0, %s209
    %s227 = sphi 0, %s227
    %s229 = sphi 0, %s227
    %s230 = sphi 0, %s229
    %s244 = sphi 0, %s230
    %s248 = sphi 0, %s248
    %s250 = sphi 0, %s248
    %s251 = sphi 0, %s250
    %s265 = sphi 0, %s251
    %s269 = sphi 0, %s269
    %s271 = sphi 0, %s269
    %s272 = sphi 0, %s271
    %s286 = sphi 0, %s272
    %s290 = sphi 0, %s290
    %s292 = sphi 0, %s290
    %s293 = sphi 0, %s292
    %s307 = sphi 0, %s293
    %s311 = sphi 0, %s311
    %s313 = sphi 0, %s311
    %s314 = sphi 0, %s313
    %s328 = sphi 0, %s314
    %s332 = sphi 0, %s332
    %s334 = sphi 0, %s332
    %s335 = sphi 0, %s334
    %s349 = sphi 0, %s335
    %s353 = sphi 0, %s353
    %s355 = sphi 0, %s353
    %s356 = sphi 0, %s355
    %s370 = sphi 0, %s356
    %s374 = sphi 0, %s374
    %s376 = sphi 0, %s374
    %s377 = sphi 0, %s376
    %s391 = sphi 0, %s377
    %s395 = sphi 0, %s395
    %s397 = sphi 0, %s395
    %s398 = sphi 0, %s397
    %s412 = sphi 0, %s398
    %s416 = sphi 0, %s416
    %s418 = sphi 0, %s416
    %s419 = sphi 0, %s418
    %s433 = sphi 0, %s419
    %s439 = sphi 0, %s441
    %s442 = sphi 0, %s439
    %s443 = sphi 0, %s442
    %s459 = sphi 0, %s443
  $region4: #{tacotron2_forward.8} parent=0 // loop_header_branch
    %28 = sbr.rel (%p26) target = $region8
  $region5: #{tacotron2_forward.8} parent=0 // loop_body
    %s30 = ssub.s32 %s25, 1
    %s31 = ssub.s32 %s25, 2
    %s32 = sadd.s32 %s25, 1
    %s33 = ssub.s32 %s25, %s32
    %p34 = scmp.eq.s32.totalorder %s33, 0
    %s36 = sadd.s32 %s35, 1
    %s37 = scalar_select %p34, %s35, %s36
    %p40 = pneg %p34
    %p41 = scmp.eq.s32.totalorder %s25, 2
    %p42 = por %p40, %p41
    %p43 = scmp.ne.s32.totalorder %s35, %s38
    %p44 = scmp.eq.s32.totalorder %s25, 0
    %p45 = por %p43, %p44
    %p46 = scmp.ne.s32.totalorder %s35, %s38
    %p47 = scmp.eq.s32.totalorder %s30, 2
    %p48 = por %p46, %p47
    %p49 = scmp.ne.s32.totalorder %s38, %s39
    %p50 = scmp.eq.s32.totalorder %s30, 0
    %p51 = por %p49, %p50
    %p52 = scmp.ne.s32.totalorder %s38, %s39
    %p53 = scmp.eq.s32.totalorder %s31, 2
    %p54 = por %p52, %p53
    %p56 = scmp.ne.s32.totalorder %s39, %s55
    %p57 = scmp.eq.s32.totalorder %s31, 0
    %p58 = por %p56, %p57
    %s60 = sadd.s32 %s59, 1
    %p63 = scmp.eq.s32.totalorder %s25, 2
    %p64 = scmp.ne.s32.totalorder %s59, %s61
    %p65 = scmp.eq.s32.totalorder %s25, 0
    %p66 = por %p64, %p65
    %p67 = scmp.ne.s32.totalorder %s59, %s61
    %p68 = scmp.eq.s32.totalorder %s30, 2
    %p69 = por %p67, %p68
    %p70 = scmp.ne.s32.totalorder %s61, %s62
    %p71 = scmp.eq.s32.totalorder %s30, 0
    %p72 = por %p70, %p71
    %p73 = scmp.ne.s32.totalorder %s61, %s62
    %p74 = scmp.eq.s32.totalorder %s31, 2
    %p75 = por %p73, %p74
    %p77 = scmp.ne.s32.totalorder %s62, %s76
    %p78 = scmp.eq.s32.totalorder %s31, 0
    %p79 = por %p77, %p78
    %s81 = sadd.s32 %s80, 1
    %p84 = scmp.eq.s32.totalorder %s25, 2
    %p85 = scmp.ne.s32.totalorder %s80, %s82
    %p86 = scmp.eq.s32.totalorder %s25, 0
    %p87 = por %p85, %p86
    %p88 = scmp.ne.s32.totalorder %s80, %s82
    %p89 = scmp.eq.s32.totalorder %s30, 2
    %p90 = por %p88, %p89
    %p91 = scmp.ne.s32.totalorder %s82, %s83
    %p92 = scmp.eq.s32.totalorder %s30, 0
    %p93 = por %p91, %p92
    %p94 = scmp.ne.s32.totalorder %s82, %s83
    %p95 = scmp.eq.s32.totalorder %s31, 2
    %p96 = por %p94, %p95
    %p98 = scmp.ne.s32.totalorder %s83, %s97
    %p99 = scmp.eq.s32.totalorder %s31, 0
    %p100 = por %p98, %p99
    %s102 = sadd.s32 %s101, 1
    %p105 = scmp.eq.s32.totalorder %s25, 2
    %p106 = scmp.ne.s32.totalorder %s101, %s103
    %p107 = scmp.eq.s32.totalorder %s25, 0
    %p108 = por %p106, %p107
    %p109 = scmp.ne.s32.totalorder %s101, %s103
    %p110 = scmp.eq.s32.totalorder %s30, 2
    %p111 = por %p109, %p110
    %p112 = scmp.ne.s32.totalorder %s103, %s104
    %p113 = scmp.eq.s32.totalorder %s30, 0
    %p114 = por %p112, %p113
    %p115 = scmp.ne.s32.totalorder %s103, %s104
    %p116 = scmp.eq.s32.totalorder %s31, 2
    %p117 = por %p115, %p116
    %p119 = scmp.ne.s32.totalorder %s104, %s118
    %p120 = scmp.eq.s32.totalorder %s31, 0
    %p121 = por %p119, %p120
    %s123 = sadd.s32 %s122, 1
    %p126 = scmp.eq.s32.totalorder %s25, 2
    %p127 = scmp.ne.s32.totalorder %s122, %s124
    %p128 = scmp.eq.s32.totalorder %s25, 0
    %p129 = por %p127, %p128
    %p130 = scmp.ne.s32.totalorder %s122, %s124
    %p131 = scmp.eq.s32.totalorder %s30, 2
    %p132 = por %p130, %p131
    %p133 = scmp.ne.s32.totalorder %s124, %s125
    %p134 = scmp.eq.s32.totalorder %s30, 0
    %p135 = por %p133, %p134
    %p136 = scmp.ne.s32.totalorder %s124, %s125
    %p137 = scmp.eq.s32.totalorder %s31, 2
    %p138 = por %p136, %p137
    %p140 = scmp.ne.s32.totalorder %s125, %s139
    %p141 = scmp.eq.s32.totalorder %s31, 0
    %p142 = por %p140, %p141
    %s144 = sadd.s32 %s143, 1
    %p147 = scmp.eq.s32.totalorder %s25, 2
    %p148 = scmp.ne.s32.totalorder %s143, %s145
    %p149 = scmp.eq.s32.totalorder %s25, 0
    %p150 = por %p148, %p149
    %p151 = scmp.ne.s32.totalorder %s143, %s145
    %p152 = scmp.eq.s32.totalorder %s30, 2
    %p153 = por %p151, %p152
    %p154 = scmp.ne.s32.totalorder %s145, %s146
    %p155 = scmp.eq.s32.totalorder %s30, 0
    %p156 = por %p154, %p155
    %p157 = scmp.ne.s32.totalorder %s145, %s146
    %p158 = scmp.eq.s32.totalorder %s31, 2
    %p159 = por %p157, %p158
    %p161 = scmp.ne.s32.totalorder %s146, %s160
    %p162 = scmp.eq.s32.totalorder %s31, 0
    %p163 = por %p161, %p162
    %s165 = sadd.s32 %s164, 1
    %p168 = scmp.eq.s32.totalorder %s25, 2
    %p169 = scmp.ne.s32.totalorder %s164, %s166
    %p170 = scmp.eq.s32.totalorder %s25, 0
    %p171 = por %p169, %p170
    %p172 = scmp.ne.s32.totalorder %s164, %s166
    %p173 = scmp.eq.s32.totalorder %s30, 2
    %p174 = por %p172, %p173
    %p175 = scmp.ne.s32.totalorder %s166, %s167
    %p176 = scmp.eq.s32.totalorder %s30, 0
    %p177 = por %p175, %p176
    %p178 = scmp.ne.s32.totalorder %s166, %s167
    %p179 = scmp.eq.s32.totalorder %s31, 2
    %p180 = por %p178, %p179
    %p182 = scmp.ne.s32.totalorder %s167, %s181
    %p183 = scmp.eq.s32.totalorder %s31, 0
    %p184 = por %p182, %p183
    %s186 = sadd.s32 %s185, 1
    %p189 = scmp.eq.s32.totalorder %s25, 2
    %p190 = scmp.ne.s32.totalorder %s185, %s187
    %p191 = scmp.eq.s32.totalorder %s25, 0
    %p192 = por %p190, %p191
    %p193 = scmp.ne.s32.totalorder %s185, %s187
    %p194 = scmp.eq.s32.totalorder %s30, 2
    %p195 = por %p193, %p194
    %p196 = scmp.ne.s32.totalorder %s187, %s188
    %p197 = scmp.eq.s32.totalorder %s30, 0
    %p198 = por %p196, %p197
    %p199 = scmp.ne.s32.totalorder %s187, %s188
    %p200 = scmp.eq.s32.totalorder %s31, 2
    %p201 = por %p199, %p200
    %p203 = scmp.ne.s32.totalorder %s188, %s202
    %p204 = scmp.eq.s32.totalorder %s31, 0
    %p205 = por %p203, %p204
    %s207 = sadd.s32 %s206, 1
    %p210 = scmp.eq.s32.totalorder %s25, 2
    %p211 = scmp.ne.s32.totalorder %s206, %s208
    %p212 = scmp.eq.s32.totalorder %s25, 0
    %p213 = por %p211, %p212
    %p214 = scmp.ne.s32.totalorder %s206, %s208
    %p215 = scmp.eq.s32.totalorder %s30, 2
    %p216 = por %p214, %p215
    %p217 = scmp.ne.s32.totalorder %s208, %s209
    %p218 = scmp.eq.s32.totalorder %s30, 0
    %p219 = por %p217, %p218
    %p220 = scmp.ne.s32.totalorder %s208, %s209
    %p221 = scmp.eq.s32.totalorder %s31, 2
    %p222 = por %p220, %p221
    %p224 = scmp.ne.s32.totalorder %s209, %s223
    %p225 = scmp.eq.s32.totalorder %s31, 0
    %p226 = por %p224, %p225
    %s228 = sadd.s32 %s227, 1
    %p231 = scmp.eq.s32.totalorder %s25, 2
    %p232 = scmp.ne.s32.totalorder %s227, %s229
    %p233 = scmp.eq.s32.totalorder %s25, 0
    %p234 = por %p232, %p233
    %p235 = scmp.ne.s32.totalorder %s227, %s229
    %p236 = scmp.eq.s32.totalorder %s30, 2
    %p237 = por %p235, %p236
    %p238 = scmp.ne.s32.totalorder %s229, %s230
    %p239 = scmp.eq.s32.totalorder %s30, 0
    %p240 = por %p238, %p239
    %p241 = scmp.ne.s32.totalorder %s229, %s230
    %p242 = scmp.eq.s32.totalorder %s31, 2
    %p243 = por %p241, %p242
    %p245 = scmp.ne.s32.totalorder %s230, %s244
    %p246 = scmp.eq.s32.totalorder %s31, 0
    %p247 = por %p245, %p246
    %s249 = sadd.s32 %s248, 1
    %p252 = scmp.eq.s32.totalorder %s25, 2
    %p253 = scmp.ne.s32.totalorder %s248, %s250
    %p254 = scmp.eq.s32.totalorder %s25, 0
    %p255 = por %p253, %p254
    %p256 = scmp.ne.s32.totalorder %s248, %s250
    %p257 = scmp.eq.s32.totalorder %s30, 2
    %p258 = por %p256, %p257
    %p259 = scmp.ne.s32.totalorder %s250, %s251
    %p260 = scmp.eq.s32.totalorder %s30, 0
    %p261 = por %p259, %p260
    %p262 = scmp.ne.s32.totalorder %s250, %s251
    %p263 = scmp.eq.s32.totalorder %s31, 2
    %p264 = por %p262, %p263
    %p266 = scmp.ne.s32.totalorder %s251, %s265
    %p267 = scmp.eq.s32.totalorder %s31, 0
    %p268 = por %p266, %p267
    %s270 = sadd.s32 %s269, 1
    %p273 = scmp.eq.s32.totalorder %s25, 2
    %p274 = scmp.ne.s32.totalorder %s269, %s271
    %p275 = scmp.eq.s32.totalorder %s25, 0
    %p276 = por %p274, %p275
    %p277 = scmp.ne.s32.totalorder %s269, %s271
    %p278 = scmp.eq.s32.totalorder %s30, 2
    %p279 = por %p277, %p278
    %p280 = scmp.ne.s32.totalorder %s271, %s272
    %p281 = scmp.eq.s32.totalorder %s30, 0
    %p282 = por %p280, %p281
    %p283 = scmp.ne.s32.totalorder %s271, %s272
    %p284 = scmp.eq.s32.totalorder %s31, 2
    %p285 = por %p283, %p284
    %p287 = scmp.ne.s32.totalorder %s272, %s286
    %p288 = scmp.eq.s32.totalorder %s31, 0
    %p289 = por %p287, %p288
    %s291 = sadd.s32 %s290, 1
    %p294 = scmp.eq.s32.totalorder %s25, 2
    %p295 = scmp.ne.s32.totalorder %s290, %s292
    %p296 = scmp.eq.s32.totalorder %s25, 0
    %p297 = por %p295, %p296
    %p298 = scmp.ne.s32.totalorder %s290, %s292
    %p299 = scmp.eq.s32.totalorder %s30, 2
    %p300 = por %p298, %p299
    %p301 = scmp.ne.s32.totalorder %s292, %s293
    %p302 = scmp.eq.s32.totalorder %s30, 0
    %p303 = por %p301, %p302
    %p304 = scmp.ne.s32.totalorder %s292, %s293
    %p305 = scmp.eq.s32.totalorder %s31, 2
    %p306 = por %p304, %p305
    %p308 = scmp.ne.s32.totalorder %s293, %s307
    %p309 = scmp.eq.s32.totalorder %s31, 0
    %p310 = por %p308, %p309
    %s312 = sadd.s32 %s311, 1
    %p315 = scmp.eq.s32.totalorder %s25, 2
    %p316 = scmp.ne.s32.totalorder %s311, %s313
    %p317 = scmp.eq.s32.totalorder %s25, 0
    %p318 = por %p316, %p317
    %p319 = scmp.ne.s32.totalorder %s311, %s313
    %p320 = scmp.eq.s32.totalorder %s30, 2
    %p321 = por %p319, %p320
    %p322 = scmp.ne.s32.totalorder %s313, %s314
    %p323 = scmp.eq.s32.totalorder %s30, 0
    %p324 = por %p322, %p323
    %p325 = scmp.ne.s32.totalorder %s313, %s314
    %p326 = scmp.eq.s32.totalorder %s31, 2
    %p327 = por %p325, %p326
    %p329 = scmp.ne.s32.totalorder %s314, %s328
    %p330 = scmp.eq.s32.totalorder %s31, 0
    %p331 = por %p329, %p330
    %s333 = sadd.s32 %s332, 1
    %p336 = scmp.eq.s32.totalorder %s25, 2
    %p337 = scmp.ne.s32.totalorder %s332, %s334
    %p338 = scmp.eq.s32.totalorder %s25, 0
    %p339 = por %p337, %p338
    %p340 = scmp.ne.s32.totalorder %s332, %s334
    %p341 = scmp.eq.s32.totalorder %s30, 2
    %p342 = por %p340, %p341
    %p343 = scmp.ne.s32.totalorder %s334, %s335
    %p344 = scmp.eq.s32.totalorder %s30, 0
    %p345 = por %p343, %p344
    %p346 = scmp.ne.s32.totalorder %s334, %s335
    %p347 = scmp.eq.s32.totalorder %s31, 2
    %p348 = por %p346, %p347
    %p350 = scmp.ne.s32.totalorder %s335, %s349
    %p351 = scmp.eq.s32.totalorder %s31, 0
    %p352 = por %p350, %p351
    %s354 = sadd.s32 %s353, 1
    %p357 = scmp.eq.s32.totalorder %s25, 2
    %p358 = scmp.ne.s32.totalorder %s353, %s355
    %p359 = scmp.eq.s32.totalorder %s25, 0
    %p360 = por %p358, %p359
    %p361 = scmp.ne.s32.totalorder %s353, %s355
    %p362 = scmp.eq.s32.totalorder %s30, 2
    %p363 = por %p361, %p362
    %p364 = scmp.ne.s32.totalorder %s355, %s356
    %p365 = scmp.eq.s32.totalorder %s30, 0
    %p366 = por %p364, %p365
    %p367 = scmp.ne.s32.totalorder %s355, %s356
    %p368 = scmp.eq.s32.totalorder %s31, 2
    %p369 = por %p367, %p368
    %p371 = scmp.ne.s32.totalorder %s356, %s370
    %p372 = scmp.eq.s32.totalorder %s31, 0
    %p373 = por %p371, %p372
    %s375 = sadd.s32 %s374, 1
    %p378 = scmp.eq.s32.totalorder %s25, 2
    %p379 = scmp.ne.s32.totalorder %s374, %s376
    %p380 = scmp.eq.s32.totalorder %s25, 0
    %p381 = por %p379, %p380
    %p382 = scmp.ne.s32.totalorder %s374, %s376
    %p383 = scmp.eq.s32.totalorder %s30, 2
    %p384 = por %p382, %p383
    %p385 = scmp.ne.s32.totalorder %s376, %s377
    %p386 = scmp.eq.s32.totalorder %s30, 0
    %p387 = por %p385, %p386
    %p388 = scmp.ne.s32.totalorder %s376, %s377
    %p389 = scmp.eq.s32.totalorder %s31, 2
    %p390 = por %p388, %p389
    %p392 = scmp.ne.s32.totalorder %s377, %s391
    %p393 = scmp.eq.s32.totalorder %s31, 0
    %p394 = por %p392, %p393
    %s396 = sadd.s32 %s395, 1
    %p399 = scmp.eq.s32.totalorder %s25, 2
    %p400 = scmp.ne.s32.totalorder %s395, %s397
    %p401 = scmp.eq.s32.totalorder %s25, 0
    %p402 = por %p400, %p401
    %p403 = scmp.ne.s32.totalorder %s395, %s397
    %p404 = scmp.eq.s32.totalorder %s30, 2
    %p405 = por %p403, %p404
    %p406 = scmp.ne.s32.totalorder %s397, %s398
    %p407 = scmp.eq.s32.totalorder %s30, 0
    %p408 = por %p406, %p407
    %p409 = scmp.ne.s32.totalorder %s397, %s398
    %p410 = scmp.eq.s32.totalorder %s31, 2
    %p411 = por %p409, %p410
    %p413 = scmp.ne.s32.totalorder %s398, %s412
    %p414 = scmp.eq.s32.totalorder %s31, 0
    %p415 = por %p413, %p414
    %s417 = sadd.s32 %s416, 1
    %p420 = scmp.eq.s32.totalorder %s25, 2
    %p421 = scmp.ne.s32.totalorder %s416, %s418
    %p422 = scmp.eq.s32.totalorder %s25, 0
    %p423 = por %p421, %p422
    %p424 = scmp.ne.s32.totalorder %s416, %s418
    %p425 = scmp.eq.s32.totalorder %s30, 2
    %p426 = por %p424, %p425
    %p427 = scmp.ne.s32.totalorder %s418, %s419
    %p428 = scmp.eq.s32.totalorder %s30, 0
    %p429 = por %p427, %p428
    %p430 = scmp.ne.s32.totalorder %s418, %s419
    %p431 = scmp.eq.s32.totalorder %s31, 2
    %p432 = por %p430, %p431
    %p434 = scmp.ne.s32.totalorder %s419, %s433
    %p435 = scmp.eq.s32.totalorder %s31, 0
    %p436 = por %p434, %p435
    %s437 = ssub.s32 %s25, %s32
    %p438 = scmp.eq.s32.totalorder %s437, 0
    %s440 = sadd.s32 %s439, 1
    %s441 = scalar_select %p438, %s439, %s440
    %p444 = pneg %p438
    %p445 = scmp.eq.s32.totalorder %s25, 2
    %p446 = por %p444, %p445
    %p447 = scmp.ne.s32.totalorder %s439, %s442
    %p448 = scmp.eq.s32.totalorder %s25, 0
    %p449 = por %p447, %p448
    %p450 = scmp.ne.s32.totalorder %s439, %s442
    %p451 = scmp.eq.s32.totalorder %s30, 2
    %p452 = por %p450, %p451
    %p453 = scmp.ne.s32.totalorder %s442, %s443
    %p454 = scmp.eq.s32.totalorder %s30, 0
    %p455 = por %p453, %p454
    %p456 = scmp.ne.s32.totalorder %s442, %s443
    %p457 = scmp.eq.s32.totalorder %s31, 2
    %p458 = por %p456, %p457
    %p460 = scmp.ne.s32.totalorder %s443, %s459
    %p461 = scmp.eq.s32.totalorder %s31, 0
    %p462 = por %p460, %p461
    %p463 = scmp.le.s32.totalorder 1, %s25
    %p464 = scmp.lt.s32.totalorder %s25, 4
    %p465 = pnand %p463, %p464
    %p466 = pneg %p465
    // Predicated region
    $region9: #{tacotron2_forward.8} parent=5 // pred_check
      _
    $region10: #{tacotron2_forward.8} parent=5 // pred_check_branch
      %468 = sbr.rel (%p465) target = $region12
    $region11: #{tacotron2_forward.8} parent=5 // pred_region
      %s469 = ssub.s32 %s25, 1
      // Predicated region
      $region13: #{tacotron2_forward.8} parent=11 // pred_check
        %p470 = pneg %p72
      $region14: #{tacotron2_forward.8} parent=11 // pred_check_branch
        %472 = sbr.rel (%p470) target = $region16
      $region15: #{tacotron2_forward.8} parent=11 // pred_region
        _
      $region16: #{tacotron2_forward.8} parent=11 // pred_fallthru
        _
      // Predicated region
      $region17: #{tacotron2_forward.8} parent=11 // pred_check
        %p473 = pneg %p93
      $region18: #{tacotron2_forward.8} parent=11 // pred_check_branch
        %475 = sbr.rel (%p473) target = $region20
      $region19: #{tacotron2_forward.8} parent=11 // pred_region
        _
      $region20: #{tacotron2_forward.8} parent=11 // pred_fallthru
        _
      // Predicated region
      $region21: #{tacotron2_forward.8} parent=11 // pred_check
        %p476 = pneg %p114
      $region22: #{tacotron2_forward.8} parent=11 // pred_check_branch
        %478 = sbr.rel (%p476) target = $region24
      $region23: #{tacotron2_forward.8} parent=11 // pred_region
        _
      $region24: #{tacotron2_forward.8} parent=11 // pred_fallthru
        _
      // Predicated region
      $region25: #{tacotron2_forward.8} parent=11 // pred_check
        %p479 = pneg %p135
      $region26: #{tacotron2_forward.8} parent=11 // pred_check_branch
        %481 = sbr.rel (%p479) target = $region28
      $region27: #{tacotron2_forward.8} parent=11 // pred_region
        _
      $region28: #{tacotron2_forward.8} parent=11 // pred_fallthru
        _
      // Predicated region
      $region29: #{tacotron2_forward.8} parent=11 // pred_check
        %p482 = pneg %p156
      $region30: #{tacotron2_forward.8} parent=11 // pred_check_branch
        %484 = sbr.rel (%p482) target = $region32
      $region31: #{tacotron2_forward.8} parent=11 // pred_region
        _
      $region32: #{tacotron2_forward.8} parent=11 // pred_fallthru
        _
      // Predicated region
      $region33: #{tacotron2_forward.8} parent=11 // pred_check
        %p485 = pneg %p177
      $region34: #{tacotron2_forward.8} parent=11 // pred_check_branch
        %487 = sbr.rel (%p485) target = $region36
      $region35: #{tacotron2_forward.8} parent=11 // pred_region
        _
      $region36: #{tacotron2_forward.8} parent=11 // pred_fallthru
        _
      // Predicated region
      $region37: #{tacotron2_forward.8} parent=11 // pred_check
        %p488 = pneg %p198
      $region38: #{tacotron2_forward.8} parent=11 // pred_check_branch
        %490 = sbr.rel (%p488) target = $region40
      $region39: #{tacotron2_forward.8} parent=11 // pred_region
        _
      $region40: #{tacotron2_forward.8} parent=11 // pred_fallthru
        _
      // Predicated region
      $region41: #{tacotron2_forward.8} parent=11 // pred_check
        %p491 = pneg %p219
      $region42: #{tacotron2_forward.8} parent=11 // pred_check_branch
        %493 = sbr.rel (%p491) target = $region44
      $region43: #{tacotron2_forward.8} parent=11 // pred_region
        _
      $region44: #{tacotron2_forward.8} parent=11 // pred_fallthru
        _
      // Predicated region
      $region45: #{tacotron2_forward.8} parent=11 // pred_check
        %p494 = pneg %p240
      $region46: #{tacotron2_forward.8} parent=11 // pred_check_branch
        %496 = sbr.rel (%p494) target = $region48
      $region47: #{tacotron2_forward.8} parent=11 // pred_region
        _
      $region48: #{tacotron2_forward.8} parent=11 // pred_fallthru
        _
      // Predicated region
      $region49: #{tacotron2_forward.8} parent=11 // pred_check
        %p497 = pneg %p261
      $region50: #{tacotron2_forward.8} parent=11 // pred_check_branch
        %499 = sbr.rel (%p497) target = $region52
      $region51: #{tacotron2_forward.8} parent=11 // pred_region
        _
      $region52: #{tacotron2_forward.8} parent=11 // pred_fallthru
        _
      // Predicated region
      $region53: #{tacotron2_forward.8} parent=11 // pred_check
        %p500 = pneg %p282
      $region54: #{tacotron2_forward.8} parent=11 // pred_check_branch
        %502 = sbr.rel (%p500) target = $region56
      $region55: #{tacotron2_forward.8} parent=11 // pred_region
        _
      $region56: #{tacotron2_forward.8} parent=11 // pred_fallthru
        _
      // Predicated region
      $region57: #{tacotron2_forward.8} parent=11 // pred_check
        %p503 = pneg %p303
      $region58: #{tacotron2_forward.8} parent=11 // pred_check_branch
        %505 = sbr.rel (%p503) target = $region60
      $region59: #{tacotron2_forward.8} parent=11 // pred_region
        _
      $region60: #{tacotron2_forward.8} parent=11 // pred_fallthru
        _
      // Predicated region
      $region61: #{tacotron2_forward.8} parent=11 // pred_check
        %p506 = pneg %p324
      $region62: #{tacotron2_forward.8} parent=11 // pred_check_branch
        %508 = sbr.rel (%p506) target = $region64
      $region63: #{tacotron2_forward.8} parent=11 // pred_region
        _
      $region64: #{tacotron2_forward.8} parent=11 // pred_fallthru
        _
      // Predicated region
      $region65: #{tacotron2_forward.8} parent=11 // pred_check
        %p509 = pneg %p345
      $region66: #{tacotron2_forward.8} parent=11 // pred_check_branch
        %511 = sbr.rel (%p509) target = $region68
      $region67: #{tacotron2_forward.8} parent=11 // pred_region
        _
      $region68: #{tacotron2_forward.8} parent=11 // pred_fallthru
        _
      // Predicated region
      $region69: #{tacotron2_forward.8} parent=11 // pred_check
        %p512 = pneg %p366
      $region70: #{tacotron2_forward.8} parent=11 // pred_check_branch
        %514 = sbr.rel (%p512) target = $region72
      $region71: #{tacotron2_forward.8} parent=11 // pred_region
        _
      $region72: #{tacotron2_forward.8} parent=11 // pred_fallthru
        _
      // Predicated region
      $region73: #{tacotron2_forward.8} parent=11 // pred_check
        %p515 = pneg %p387
      $region74: #{tacotron2_forward.8} parent=11 // pred_check_branch
        %517 = sbr.rel (%p515) target = $region76
      $region75: #{tacotron2_forward.8} parent=11 // pred_region
        _
      $region76: #{tacotron2_forward.8} parent=11 // pred_fallthru
        _
      // Predicated region
      $region77: #{tacotron2_forward.8} parent=11 // pred_check
        %p518 = pneg %p408
      $region78: #{tacotron2_forward.8} parent=11 // pred_check_branch
        %520 = sbr.rel (%p518) target = $region80
      $region79: #{tacotron2_forward.8} parent=11 // pred_region
        _
      $region80: #{tacotron2_forward.8} parent=11 // pred_fallthru
        _
      // Predicated region
      $region81: #{tacotron2_forward.8} parent=11 // pred_check
        %p521 = pneg %p429
      $region82: #{tacotron2_forward.8} parent=11 // pred_check_branch
        %523 = sbr.rel (%p521) target = $region84
      $region83: #{tacotron2_forward.8} parent=11 // pred_region
        _
      $region84: #{tacotron2_forward.8} parent=11 // pred_fallthru
        _
    $region12: #{tacotron2_forward.8} parent=5 // pred_fallthru
      _
    %p524 = scmp.lt.s32.totalorder %s25, 3
    // Predicated region
    $region85: #{tacotron2_forward.8} parent=5 // pred_check
      %p525 = pneg %p524
    $region86: #{tacotron2_forward.8} parent=5 // pred_check_branch
      %527 = sbr.rel (%p525) target = $region88
    $region87: #{tacotron2_forward.8} parent=5 // pred_region
      // Predicated region
      $region89: #{tacotron2_forward.8} parent=87 // pred_check
        %p528 = pneg %p45
      $region90: #{tacotron2_forward.8} parent=87 // pred_check_branch
        %530 = sbr.rel (%p528) target = $region92
      $region91: #{tacotron2_forward.8} parent=87 // pred_region
        %p531 = scmp.lt.s32.totalorder %s25, 2
        %s532 = scalar_select %p531, %s25, 2
        %s533 = smul.addr %s532, 2
        %s534 = scalar_lea.vmem %s0, %s533
      $region92: #{tacotron2_forward.8} parent=87 // pred_fallthru
        _
    $region88: #{tacotron2_forward.8} parent=5 // pred_fallthru
      _
    %p535 = scmp.le.s32.totalorder 1, %s25
    %p536 = scmp.lt.s32.totalorder %s25, 4
    %p537 = pnand %p535, %p536
    %p538 = pneg %p537
    // Predicated region
    $region93: #{tacotron2_forward.8} parent=5 // pred_check
      _
    $region94: #{tacotron2_forward.8} parent=5 // pred_check_branch
      %540 = sbr.rel (%p537) target = $region96
    $region95: #{tacotron2_forward.8} parent=5 // pred_region
      %s541 = ssub.s32 %s25, 1
      %p542 = scmp.lt.s32.totalorder %s30, 2
      %s543 = scalar_select %p542, %s30, 2
      %s544 = smul.addr %s543, 2
      %s545 = scalar_lea.vmem %s0, %s544
      %p546 = pneg %p51
      %p547 = pneg %p48
      %p548 = pneg %p72
      %p549 = pneg %p69
      %p550 = pneg %p93
      %p551 = pneg %p90
      %p552 = pneg %p114
      %p553 = pneg %p111
      %p554 = pneg %p135
      %p555 = pneg %p132
      %p556 = pneg %p156
      %p557 = pneg %p153
      %p558 = pneg %p177
      %p559 = pneg %p174
      %p560 = pneg %p198
      %p561 = pneg %p195
      %p562 = pneg %p219
      %p563 = pneg %p216
      %p564 = pneg %p240
      %p565 = pneg %p237
      %p566 = pneg %p261
      %p567 = pneg %p258
      %p568 = pneg %p282
      %p569 = pneg %p279
      %p570 = pneg %p303
      %p571 = pneg %p300
      %p572 = pneg %p324
      %p573 = pneg %p321
      %p574 = pneg %p345
      %p575 = pneg %p342
      %p576 = pneg %p366
      %p577 = pneg %p363
      %p578 = pneg %p387
      %p579 = pneg %p384
      %p580 = pneg %p408
      %p581 = pneg %p405
      %p582 = pneg %p429
      %p583 = pneg %p426
      %p584 = pneg %p455
      %p585 = pneg %p452
      %p586 = scmp.lt.s32.totalorder %s30, 2
      %s587 = scalar_select %p586, %s30, 2
      %s588 = smul.addr %s587, 2
      %s589 = scalar_lea.vmem %s19, %s588
      %p590 = scmp.lt.s32.totalorder %s30, 2
      %s591 = scalar_select %p590, %s30, 2
      %s592 = smul.addr %s591, 2
      %s593 = scalar_lea.vmem %s0, %s592
      %p594 = scmp.lt.s32.totalorder %s30, 2
      %s595 = scalar_select %p594, %s30, 2
      %s596 = smul.addr %s595, 2
      %s597 = scalar_lea.vmem %s19, %s596
      %p599 = scmp.eq.s32.totalorder %s30, 0
      // Predicated region
      $region97: #{tacotron2_forward.8} parent=95 // pred_check
        %p600 = pneg %p599
      $region98: #{tacotron2_forward.8} parent=95 // pred_check_branch
        %602 = sbr.rel (%p600) target = $region100
      $region99: #{tacotron2_forward.8} parent=95 // pred_region
        %603 = vst [vmem:[#allocation2] sm:$0x3] 0.0
        %604 = vst [vmem:[#allocation3] sm:$0x3] 0.0
        %605 = vst [vmem:[#allocation4] sm:$0x3] 0.0
        %606 = vst [vmem:[#allocation5] sm:$0x3] 0.0
      $region100: #{tacotron2_forward.8} parent=95 // pred_fallthru
        _
      %v607 = vld [vmem:[%s593] sm:$0x3]
      %v608 = vld [vmem:[%s3] sm:$0xf]
      %v609 = vld [vmem:[%s3 + $0x4] sm:$0xf]
      %v610 = vld [vmem:[%s3 + $0x8] sm:$0xf]
      %v611 = vld [vmem:[%s3 + $0xc] sm:$0xf]
      %v612 = vld [vmem:[%s3 + $0x10] sm:$0xf]
      %v613 = vld [vmem:[%s3 + $0x14] sm:$0xf]
      %v614 = vld [vmem:[%s3 + $0x18] sm:$0xf]
      %v615 = vld [vmem:[%s3 + $0x1c] sm:$0xf]
      %v616 = vld [vmem:[%s3 + $0x20] sm:$0xf]
      %v617 = vld [vmem:[%s3 + $0x24] sm:$0xf]
      %v618 = vpack.c.bf16 %v607, %v607
      %v619 = vld [vmem:[%s4] sm:$0x1]
      %v621 = vlaneseq
      %v622 = vshrl.u32 %v621, 7
      %v623 = vsub.s32 0, %v622
      %v624 = vrot.slane %v619, %v623
      %v636 = vunpack.c.l.b16 %v608
      %v637 = vunpack.c.l.b16 %v609
      %v638 = vunpack.c.l.b16 %v610
      %v639 = vunpack.c.l.b16 %v611
      %v640 = vunpack.c.l.b16 %v612
      %v641 = vunpack.c.l.b16 %v613
      %v642 = vunpack.c.l.b16 %v614
      %v643 = vunpack.c.l.b16 %v615
      %v644 = vunpack.c.l.b16 %v616
      %v645 = vunpack.c.l.b16 %v617
      %v646 = vpack.c.b16 %v637, %v636
      %v647 = vpack.c.b16 %v639, %v638
      %v648 = vpack.c.b16 %v641, %v640
      %v649 = vpack.c.b16 %v643, %v642
      %v650 = vpack.c.b16 %v645, %v644
      %vm656 = vcmask 654336
      %v658 = vsel %vm656, %v618, 0
      %660 = vmatprep.subr.bf16.mxu0 0
      %661 = vmatpush1.bf16.msra.mxu0 %v646
      %662 = vmatprep.subr.bf16.mxu0 0
      %663 = vmatpush1.bf16.msra.mxu0 %v647
      %664 = vmatprep.subr.bf16.mxu0 0
      %665 = vmatpush1.bf16.msra.mxu0 %v648
      %666 = vmatprep.subr.bf16.mxu0 0
      %667 = vmatpush1.bf16.msra.mxu0 %v649
      %668 = vmatprep.subr.bf16.mxu0 0
      %669 = vmatpush1.bf16.msra.mxu0 %v650
      %670 = vmatprep.subr.bf16.mxu0 0
      %671 = vmatpush1.bf16.msra.mxu0 0
      %672 = vmatprep.subr.bf16.mxu0 0
      %673 = vmatpush1.bf16.msra.mxu0 0
      %674 = vmatprep.subr.bf16.mxu0 0
      %675 = vmatpush1.bf16.msra.mxu0 0
      %676 = vmatprep.subr.bf16.mxu0 0
      %677 = vmatpush1.bf16.msra.mxu0 0
      %678 = vmatprep.subr.bf16.mxu0 0
      %679 = vmatpush1.bf16.msra.mxu0 0
      %680 = vmatprep.subr.bf16.mxu0 0
      %681 = vmatpush1.bf16.msra.mxu0 0
      %682 = vmatprep.subr.bf16.mxu0 0
      %683 = vmatpush1.bf16.msra.mxu0 0
      %684 = vmatprep.subr.bf16.mxu0 0
      %685 = vmatpush1.bf16.msra.mxu0 0
      %686 = vmatprep.subr.bf16.mxu0 0
      %687 = vmatpush1.bf16.msra.mxu0 0
      %688 = vmatprep.subr.bf16.mxu0 0
      %689 = vmatpush1.bf16.msra.mxu0 0
      %690 = vmatprep.subr.bf16.mxu0 0
      %691 = vmatpush1.bf16.msra.mxu0 0
      %692 = vmatprep.mubr.bf16.mxu0 0
      %693 = vmatmul.mubr.bf16.gmra.mrb[0].mxu0 %v658
      %v694 = vpop.f32.mrb[0].mxu0
      %v695 = vadd.f32 %v624, %v694
      %v696 = vpop.f32.mrb[0].mxu0
      %v697 = vpop.f32.mrb[0].mxu0
      %v698 = vpop.f32.mrb[0].mxu0
      %699 = vdwg.mxu0
      %v700 = vmax.f32 %v695, 0.0
      %v701 = vld [vmem:[%s5] sm:$0xf]
      %v702 = vld [vmem:[%s5 + $0x4] sm:$0xf]
      %v703 = vld [vmem:[%s5 + $0x8] sm:$0xf]
      %v704 = vld [vmem:[%s5 + $0xc] sm:$0xf]
      %v705 = vld [vmem:[%s5 + $0x10] sm:$0xf]
      %v706 = vld [vmem:[%s5 + $0x14] sm:$0xf]
      %v707 = vld [vmem:[%s5 + $0x18] sm:$0xf]
      %v708 = vld [vmem:[%s5 + $0x1c] sm:$0xf]
      %v709 = vpack.c.bf16 %v700, %v700
      %v710 = vld [vmem:[%s6] sm:$0x1]
      %v712 = vlaneseq
      %v713 = vshrl.u32 %v712, 7
      %v714 = vsub.s32 0, %v713
      %v715 = vrot.slane %v710, %v714
      %v725 = vunpack.c.l.b16 %v701
      %v726 = vunpack.c.l.b16 %v702
      %v727 = vunpack.c.l.b16 %v703
      %v728 = vunpack.c.l.b16 %v704
      %v729 = vunpack.c.l.b16 %v705
      %v730 = vunpack.c.l.b16 %v706
      %v731 = vunpack.c.l.b16 %v707
      %v732 = vunpack.c.l.b16 %v708
      %v733 = vpack.c.b16 %v726, %v725
      %v734 = vpack.c.b16 %v728, %v727
      %v735 = vpack.c.b16 %v730, %v729
      %v736 = vpack.c.b16 %v732, %v731
      %vm741 = vcmask 523264
      %v743 = vsel %vm741, %v709, 0
      %745 = vmatprep.subr.bf16.mxu0 0
      %746 = vmatpush1.bf16.msra.mxu0 %v733
      %747 = vmatprep.subr.bf16.mxu0 0
      %748 = vmatpush1.bf16.msra.mxu0 %v734
      %749 = vmatprep.subr.bf16.mxu0 0
      %750 = vmatpush1.bf16.msra.mxu0 %v735
      %751 = vmatprep.subr.bf16.mxu0 0
      %752 = vmatpush1.bf16.msra.mxu0 %v736
      %753 = vmatprep.subr.bf16.mxu0 0
      %754 = vmatpush1.bf16.msra.mxu0 0
      %755 = vmatprep.subr.bf16.mxu0 0
      %756 = vmatpush1.bf16.msra.mxu0 0
      %757 = vmatprep.subr.bf16.mxu0 0
      %758 = vmatpush1.bf16.msra.mxu0 0
      %759 = vmatprep.subr.bf16.mxu0 0
      %760 = vmatpush1.bf16.msra.mxu0 0
      %761 = vmatprep.subr.bf16.mxu0 0
      %762 = vmatpush1.bf16.msra.mxu0 0
      %763 = vmatprep.subr.bf16.mxu0 0
      %764 = vmatpush1.bf16.msra.mxu0 0
      %765 = vmatprep.subr.bf16.mxu0 0
      %766 = vmatpush1.bf16.msra.mxu0 0
      %767 = vmatprep.subr.bf16.mxu0 0
      %768 = vmatpush1.bf16.msra.mxu0 0
      %769 = vmatprep.subr.bf16.mxu0 0
      %770 = vmatpush1.bf16.msra.mxu0 0
      %771 = vmatprep.subr.bf16.mxu0 0
      %772 = vmatpush1.bf16.msra.mxu0 0
      %773 = vmatprep.subr.bf16.mxu0 0
      %774 = vmatpush1.bf16.msra.mxu0 0
      %775 = vmatprep.subr.bf16.mxu0 0
      %776 = vmatpush1.bf16.msra.mxu0 0
      %777 = vmatprep.mubr.bf16.mxu0 0
      %778 = vmatmul.mubr.bf16.gmra.mrb[0].mxu0 %v743
      %v779 = vpop.f32.mrb[0].mxu0
      %v780 = vadd.f32 %v715, %v779
      %v781 = vpop.f32.mrb[0].mxu0
      %v782 = vpop.f32.mrb[0].mxu0
      %v783 = vpop.f32.mrb[0].mxu0
      %784 = vdwg.mxu0
      %v785 = vmax.f32 %v780, 0.0
      %v786 = vld [vmem:[#allocation4] sm:$0x3]
      %v787 = vld [vmem:[%s7] sm:$0xf]
      %v788 = vld [vmem:[%s7 + $0x4] sm:$0xf]
      %v789 = vld [vmem:[%s7 + $0x8] sm:$0xf]
      %v790 = vld [vmem:[%s7 + $0xc] sm:$0xf]
      %v791 = vld [vmem:[%s7 + $0x10] sm:$0xf]
      %v792 = vld [vmem:[%s7 + $0x14] sm:$0xf]
      %v793 = vld [vmem:[%s7 + $0x18] sm:$0xf]
      %v794 = vld [vmem:[%s7 + $0x1c] sm:$0xf]
      %v795 = vld [vmem:[%s7 + $0x20] sm:$0xf]
      %v796 = vld [vmem:[%s7 + $0x24] sm:$0xf]
      %v797 = vld [vmem:[%s7 + $0x28] sm:$0xf]
      %v798 = vld [vmem:[%s7 + $0x2c] sm:$0xf]
      %v799 = vld [vmem:[%s7 + $0x30] sm:$0xf]
      %v800 = vld [vmem:[%s7 + $0x34] sm:$0xf]
      %v801 = vld [vmem:[%s7 + $0x38] sm:$0xf]
      %v802 = vld [vmem:[%s7 + $0x3c] sm:$0xf]
      %v803 = vpack.c.bf16 %v786, %v786
      %v820 = vunpack.c.l.b16 %v787
      %v821 = vunpack.c.l.b16 %v788
      %v822 = vunpack.c.l.b16 %v789
      %v823 = vunpack.c.l.b16 %v790
      %v824 = vunpack.c.l.b16 %v791
      %v825 = vunpack.c.l.b16 %v792
      %v826 = vunpack.c.l.b16 %v793
      %v827 = vunpack.c.l.b16 %v794
      %v828 = vunpack.c.l.b16 %v795
      %v829 = vunpack.c.l.b16 %v796
      %v830 = vunpack.c.l.b16 %v797
      %v831 = vunpack.c.l.b16 %v798
      %v832 = vunpack.c.l.b16 %v799
      %v833 = vunpack.c.l.b16 %v800
      %v834 = vunpack.c.l.b16 %v801
      %v835 = vunpack.c.l.b16 %v802
      %v836 = vpack.c.b16 %v821, %v820
      %v837 = vpack.c.b16 %v823, %v822
      %v838 = vpack.c.b16 %v825, %v824
      %v839 = vpack.c.b16 %v827, %v826
      %v840 = vpack.c.b16 %v829, %v828
      %v841 = vpack.c.b16 %v831, %v830
      %v842 = vpack.c.b16 %v833, %v832
      %v843 = vpack.c.b16 %v835, %v834
      %852 = vmatprep.subr.bf16.mxu0 0
      %853 = vmatpush1.bf16.msra.mxu0 %v836
      %854 = vmatprep.subr.bf16.mxu0 0
      %855 = vmatpush1.bf16.msra.mxu0 %v837
      %856 = vmatprep.subr.bf16.mxu0 0
      %857 = vmatpush1.bf16.msra.mxu0 %v838
      %858 = vmatprep.subr.bf16.mxu0 0
      %859 = vmatpush1.bf16.msra.mxu0 %v839
      %860 = vmatprep.subr.bf16.mxu0 0
      %861 = vmatpush1.bf16.msra.mxu0 %v840
      %862 = vmatprep.subr.bf16.mxu0 0
      %863 = vmatpush1.bf16.msra.mxu0 %v841
      %864 = vmatprep.subr.bf16.mxu0 0
      %865 = vmatpush1.bf16.msra.mxu0 %v842
      %866 = vmatprep.subr.bf16.mxu0 0
      %867 = vmatpush1.bf16.msra.mxu0 %v843
      %868 = vmatprep.subr.bf16.mxu0 0
      %869 = vmatpush1.bf16.msra.mxu0 0
      %870 = vmatprep.subr.bf16.mxu0 0
      %871 = vmatpush1.bf16.msra.mxu0 0
      %872 = vmatprep.subr.bf16.mxu0 0
      %873 = vmatpush1.bf16.msra.mxu0 0
      %874 = vmatprep.subr.bf16.mxu0 0
      %875 = vmatpush1.bf16.msra.mxu0 0
      %876 = vmatprep.subr.bf16.mxu0 0
      %877 = vmatpush1.bf16.msra.mxu0 0
      %878 = vmatprep.subr.bf16.mxu0 0
      %879 = vmatpush1.bf16.msra.mxu0 0
      %880 = vmatprep.subr.bf16.mxu0 0
      %881 = vmatpush1.bf16.msra.mxu0 0
      %882 = vmatprep.subr.bf16.mxu0 0
      %883 = vmatpush1.bf16.msra.mxu0 0
      %884 = vmatprep.mubr.bf16.mxu0 0
      %885 = vmatmul.mubr.bf16.gmra.mrb[0].mxu0 %v803
      %v886 = vpop.f32.mrb[0].mxu0
      %v887 = vadd.f32 0.0, %v886
      %v888 = vpop.f32.mrb[0].mxu0
      %v889 = vpop.f32.mrb[0].mxu0
      %v890 = vpop.f32.mrb[0].mxu0
      %891 = vdwg.mxu0
      %v894 = vunpack.c.l.s4 1966171168
      %v895 = vunpack.c.0.s8 %v894
      %v896 = vlaneseq
      %v897 = vshrl.u32 %v896, 7
      %v898 = vsub.s32 %v895, %v897
      %v899 = vrot.slane %v887, %v898
      %v900 = vcombine.high %v899, %v899
      %v902 = vunpack.c.l.s4 1966171168
      %v903 = vunpack.c.0.s8 %v902
      %v904 = vlaneseq
      %v905 = vshrl.u32 %v904, 7
      %v906 = vsub.s32 %v903, %v905
      %v907 = vrot.slane %v899, %v906
      %v909 = vunpack.c.l.s4 1966171168
      %v910 = vunpack.c.0.s8 %v909
      %v911 = vlaneseq
      %v912 = vshrl.u32 %v911, 7
      %v913 = vsub.s32 %v910, %v912
      %v914 = vrot.slane %v900, %v913
      %v915 = vld [vmem:[%s2] sm:$0xff]
      %v916 = vld [vmem:[%s2 + $0x8] sm:$0xff]
      %v917 = vlaneseq
      %v918 = vshrl.u32 %v917, 7
      %v919 = vsub.s32 0, %v918
      %v920 = vrot.slane %v907, %v919
      %v921 = vlaneseq
      %v922 = vshrl.u32 %v921, 7
      %v923 = vsub.s32 0, %v922
      %v924 = vrot.slane %v914, %v923
      %v927 = vadd.f32 %v920, %v915
      %v928 = vadd.f32 %v924, %v916
      %v929 = vtanh.pop %v927
      %v930 = vtanh.pop %v928
      %v931 = vld [vmem:[%s8] sm:$0x1]
      %v933 = vlaneseq
      %v934 = vshrl.u32 %v933, 7
      %v935 = vsub.s32 0, %v934
      %v936 = vrot.slane %v931, %v935
      %v938 = vmul.f32 %v929, %v936
      %v939 = vmul.f32 %v930, %v936
      %v940 = vsel %vm741, %v938, 0.0
      %941 = vadd.xlane.f32.xlu0 %v940
      %v942 = vpop.xlane.xlu0 %941
      %v943 = vsel %vm741, %v939, 0.0
      %944 = vadd.xlane.f32.xlu0 %v943
      %v945 = vpop.xlane.xlu0 %944
      %v948 = vlaneseq
      %v949 = vand.u32 %v948, 127
      %v950 = vlaneseq
      %v951 = vshrl.u32 %v950, 7
      %v952 = vsub.s32 %v949, %v951
      %v953 = vrot.slane %v942, %v952
      %v954 = vlaneseq
      %v955 = vshrl.u32 %v954, 7
      %v956 = vsub.s32 %v949, %v955
      %v957 = vrot.slane %v945, %v956
      %vm958 = vcmask 1041409
      %v959 = vsel %vm958, %v957, %v953
      %vm961 = vcmask 58368
      %v962 = vsel %vm961, %v959, -inf
      %963 = vmax.xlane.f32.xlu0 %v962
      %v964 = vpop.xlane.xlu0 %963
      %v966 = vlaneseq
      %v967 = vshrl.u32 %v966, 7
      %v968 = vsub.s32 0, %v967
      %v969 = vrot.slane %v964, %v968
      %v970 = vlaneseq
      %v971 = vshrl.u32 %v970, 7
      %v972 = vsub.s32 1, %v971
      %v973 = vrot.slane %v964, %v972
      %v976 = vsub.f32 %v942, %v969
      %v977 = vsub.f32 %v945, %v973
      %v978 = vmul.f32 %v976, 1.442695
      %v979 = vpow.pop %v978
      %v980 = vmul.f32 %v977, 1.442695
      %v981 = vpow.pop %v980
      %984 = vset.pattern.permute.xlu0 0
      %985 = vperm.xlu0 %984, %v979
      %v986 = vpop.permute.xlu0 %985
      %987 = vset.pattern.permute.xlu0 0
      %988 = vperm.xlu0 %987, %v981
      %v989 = vpop.permute.xlu0 %988
      %v990 = vlaneseq
      %v991 = vshrl.u32 %v990, 7
      %v992 = vsub.s32 %v949, %v991
      %v993 = vrot.slane %v986, %v992
      %v994 = vlaneseq
      %v995 = vshrl.u32 %v994, 7
      %v996 = vsub.s32 %v949, %v995
      %v997 = vrot.slane %v989, %v996
      %v998 = vsel %vm958, %v997, %v993
      %v1000 = vsel %vm961, %v998, 0.0
      %1001 = vadd.xlane.f32.xlu0 %v1000
      %v1002 = vpop.xlane.xlu0 %1001
      %v1003 = vrcp.pop %v1002
      %v1005 = vlaneseq
      %v1006 = vshrl.u32 %v1005, 7
      %v1007 = vsub.s32 0, %v1006
      %v1008 = vrot.slane %v1003, %v1007
      %v1009 = vlaneseq
      %v1010 = vshrl.u32 %v1009, 7
      %v1011 = vsub.s32 1, %v1010
      %v1012 = vrot.slane %v1003, %v1011
      %v1015 = vmul.f32 %v979, %v1008
      %v1016 = vmul.f32 %v981, %v1012
      %v1017 = vld [vmem:[%s1] sm:$0xff]
      %v1018 = vld [vmem:[%s1 + $0x8] sm:$0xff]
      %1020 = vset.pattern.permute.xlu0 0
      %1021 = vperm.xlu0 %1020, %v1015
      %v1022 = vpop.permute.xlu0 %1021
      %1025 = vset.pattern.permute.xlu0 0
      %1026 = vperm.xlu0 %1025, %v1016
      %v1027 = vpop.permute.xlu0 %1026
      %v1029 = vmul.f32 %v1022, %v1017
      %v1030 = vmul.f32 %v1027, %v1018
      %v1031 = vsel %vm741, %v1029, 0.0
      %v1032 = vrot.slane %v1031, 4
      %v1033 = vadd.f32 %v1031, %v1032
      %v1034 = vrot.slane %v1033, 2
      %v1035 = vadd.f32 %v1033, %v1034
      %v1036 = vrot.slane %v1035, 1
      %v1037 = vadd.f32 %v1035, %v1036
      %v1038 = vsel %vm741, %v1030, 0.0
      %v1039 = vrot.slane %v1038, 4
      %v1040 = vadd.f32 %v1038, %v1039
      %v1041 = vrot.slane %v1040, 2
      %v1042 = vadd.f32 %v1040, %v1041
      %v1043 = vrot.slane %v1042, 1
      %v1044 = vadd.f32 %v1042, %v1043
      %v1045 = vld [vmem:[%s9] sm:$0xff]
      %v1046 = vld [vmem:[%s9 + $0x8] sm:$0xff]
      %v1047 = vld [vmem:[%s9 + $0x10] sm:$0xff]
      %v1048 = vld [vmem:[%s9 + $0x18] sm:$0xff]
      %v1049 = vld [vmem:[%s9 + $0x20] sm:$0xff]
      %v1050 = vld [vmem:[%s9 + $0x28] sm:$0xff]
      %v1051 = vld [vmem:[%s9 + $0x30] sm:$0xff]
      %v1052 = vld [vmem:[%s9 + $0x38] sm:$0xff]
      %v1053 = vld [vmem:[%s9 + $0x40] sm:$0xff]
      %v1054 = vld [vmem:[%s9 + $0x48] sm:$0xff]
      %v1055 = vld [vmem:[%s9 + $0x50] sm:$0xff]
      %v1056 = vld [vmem:[%s9 + $0x58] sm:$0xff]
      %v1057 = vld [vmem:[%s9 + $0x60] sm:$0xff]
      %v1058 = vld [vmem:[%s9 + $0x68] sm:$0xff]
      %v1059 = vld [vmem:[%s9 + $0x70] sm:$0xff]
      %v1060 = vld [vmem:[%s9 + $0x78] sm:$0xff]
      %v1061 = vpack.c.bf16 %v785, %v785
      %v1062 = vld [vmem:[%s10] sm:$0xff]
      %v1063 = vld [vmem:[%s10 + $0x8] sm:$0xff]
      %v1064 = vld [vmem:[%s10 + $0x10] sm:$0xff]
      %v1065 = vld [vmem:[%s10 + $0x18] sm:$0xff]
      %v1066 = vld [vmem:[%s10 + $0x20] sm:$0xff]
      %v1067 = vld [vmem:[%s10 + $0x28] sm:$0xff]
      %v1068 = vld [vmem:[%s10 + $0x30] sm:$0xff]
      %v1069 = vld [vmem:[%s10 + $0x38] sm:$0xff]
      %v1070 = vld [vmem:[%s10 + $0x40] sm:$0xff]
      %v1071 = vld [vmem:[%s10 + $0x48] sm:$0xff]
      %v1072 = vld [vmem:[%s10 + $0x50] sm:$0xff]
      %v1073 = vld [vmem:[%s10 + $0x58] sm:$0xff]
      %v1074 = vld [vmem:[%s10 + $0x60] sm:$0xff]
      %v1075 = vld [vmem:[%s10 + $0x68] sm:$0xff]
      %v1076 = vld [vmem:[%s10 + $0x70] sm:$0xff]
      %v1077 = vld [vmem:[%s10 + $0x78] sm:$0xff]
      %v1078 = vpack.c.bf16 %v1037, %v1037
      %v1079 = vpack.c.bf16 %v1044, %v1044
      %v1082 = vunpack.c.l.b16 %v1078
      %v1083 = vunpack.c.l.b16 %v1079
      %v1084 = vsel %vm958, %v1083, %v1082
      %v1085 = vpack.c.b16 %v1084, %v1084
      %v1102 = vunpack.c.l.b16 %v1062
      %v1103 = vunpack.c.h.b16 %v1062
      %v1104 = vunpack.c.l.b16 %v1063
      %v1105 = vunpack.c.h.b16 %v1063
      %v1106 = vunpack.c.l.b16 %v1064
      %v1107 = vunpack.c.h.b16 %v1064
      %v1108 = vunpack.c.l.b16 %v1065
      %v1109 = vunpack.c.h.b16 %v1065
      %v1110 = vunpack.c.l.b16 %v1066
      %v1111 = vunpack.c.h.b16 %v1066
      %v1112 = vunpack.c.l.b16 %v1067
      %v1113 = vunpack.c.h.b16 %v1067
      %v1114 = vunpack.c.l.b16 %v1068
      %v1115 = vunpack.c.h.b16 %v1068
      %v1116 = vunpack.c.l.b16 %v1069
      %v1117 = vunpack.c.h.b16 %v1069
      %v1118 = vunpack.c.l.b16 %v1070
      %v1119 = vunpack.c.h.b16 %v1070
      %v1120 = vunpack.c.l.b16 %v1071
      %v1121 = vunpack.c.h.b16 %v1071
      %v1122 = vunpack.c.l.b16 %v1072
      %v1123 = vunpack.c.h.b16 %v1072
      %v1124 = vunpack.c.l.b16 %v1073
      %v1125 = vunpack.c.h.b16 %v1073
      %v1126 = vunpack.c.l.b16 %v1074
      %v1127 = vunpack.c.h.b16 %v1074
      %v1128 = vunpack.c.l.b16 %v1075
      %v1129 = vunpack.c.h.b16 %v1075
      %v1130 = vunpack.c.l.b16 %v1076
      %v1131 = vunpack.c.h.b16 %v1076
      %v1132 = vunpack.c.l.b16 %v1077
      %v1133 = vunpack.c.h.b16 %v1077
      %v1134 = vpack.c.b16 %v1106, %v1102
      %v1135 = vpack.c.b16 %v1107, %v1103
      %v1136 = vpack.c.b16 %v1108, %v1104
      %v1137 = vpack.c.b16 %v1109, %v1105
      %v1138 = vpack.c.b16 %v1114, %v1110
      %v1139 = vpack.c.b16 %v1115, %v1111
      %v1140 = vpack.c.b16 %v1116, %v1112
      %v1141 = vpack.c.b16 %v1117, %v1113
      %v1142 = vpack.c.b16 %v1122, %v1118
      %v1143 = vpack.c.b16 %v1123, %v1119
      %v1144 = vpack.c.b16 %v1124, %v1120
      %v1145 = vpack.c.b16 %v1125, %v1121
      %v1146 = vpack.c.b16 %v1130, %v1126
      %v1147 = vpack.c.b16 %v1131, %v1127
      %v1148 = vpack.c.b16 %v1132, %v1128
      %v1149 = vpack.c.b16 %v1133, %v1129
      %v1167 = vsel %vm741, %v1085, 0
      %1169 = vmatprep.subr.bf16.mxu0 %v1135
      %1170 = vmatpush1.bf16.msra.mxu0 %v1134
      %1171 = vmatprep.subr.bf16.mxu0 %v1139
      %1172 = vmatpush1.bf16.msra.mxu0 %v1138
      %1173 = vmatprep.subr.bf16.mxu0 %v1143
      %1174 = vmatpush1.bf16.msra.mxu0 %v1142
      %1175 = vmatprep.subr.bf16.mxu0 %v1147
      %1176 = vmatpush1.bf16.msra.mxu0 %v1146
      %1177 = vmatprep.subr.bf16.mxu0 0
      %1178 = vmatpush1.bf16.msra.mxu0 0
      %1179 = vmatprep.subr.bf16.mxu0 0
      %1180 = vmatpush1.bf16.msra.mxu0 0
      %1181 = vmatprep.subr.bf16.mxu0 0
      %1182 = vmatpush1.bf16.msra.mxu0 0
      %1183 = vmatprep.subr.bf16.mxu0 0
      %1184 = vmatpush1.bf16.msra.mxu0 0
      %1185 = vmatprep.subr.bf16.mxu0 0
      %1186 = vmatpush1.bf16.msra.mxu0 0
      %1187 = vmatprep.subr.bf16.mxu0 0
      %1188 = vmatpush1.bf16.msra.mxu0 0
      %1189 = vmatprep.subr.bf16.mxu0 0
      %1190 = vmatpush1.bf16.msra.mxu0 0
      %1191 = vmatprep.subr.bf16.mxu0 0
      %1192 = vmatpush1.bf16.msra.mxu0 0
      %1193 = vmatprep.subr.bf16.mxu0 0
      %1194 = vmatpush1.bf16.msra.mxu0 0
      %1195 = vmatprep.subr.bf16.mxu0 0
      %1196 = vmatpush1.bf16.msra.mxu0 0
      %1197 = vmatprep.subr.bf16.mxu0 0
      %1198 = vmatpush1.bf16.msra.mxu0 0
      %1199 = vmatprep.subr.bf16.mxu0 0
      %1200 = vmatpush1.bf16.msra.mxu0 0
      %1201 = vmatprep.mubr.bf16.mxu0 0
      %1202 = vmatmul.mubr.bf16.gmra.mrb[0].mxu0 %v1167
      %v1203 = vpop.f32.mrb[0].mxu0
      %v1204 = vadd.f32 0.0, %v1203
      %v1205 = vpop.f32.mrb[0].mxu0
      %v1206 = vadd.f32 0.0, %v1205
      %v1207 = vpop.f32.mrb[0].mxu0
      %v1208 = vpop.f32.mrb[0].mxu0
      %1209 = vdwg.mxu0
      %1210 = vmatprep.subr.bf16.mxu0 %v1137
      %1211 = vmatpush1.bf16.msra.mxu0 %v1136
      %1212 = vmatprep.subr.bf16.mxu0 %v1141
      %1213 = vmatpush1.bf16.msra.mxu0 %v1140
      %1214 = vmatprep.subr.bf16.mxu0 %v1145
      %1215 = vmatpush1.bf16.msra.mxu0 %v1144
      %1216 = vmatprep.subr.bf16.mxu0 %v1149
      %1217 = vmatpush1.bf16.msra.mxu0 %v1148
      %1218 = vmatprep.subr.bf16.mxu0 0
      %1219 = vmatpush1.bf16.msra.mxu0 0
      %1220 = vmatprep.subr.bf16.mxu0 0
      %1221 = vmatpush1.bf16.msra.mxu0 0
      %1222 = vmatprep.subr.bf16.mxu0 0
      %1223 = vmatpush1.bf16.msra.mxu0 0
      %1224 = vmatprep.subr.bf16.mxu0 0
      %1225 = vmatpush1.bf16.msra.mxu0 0
      %1226 = vmatprep.subr.bf16.mxu0 0
      %1227 = vmatpush1.bf16.msra.mxu0 0
      %1228 = vmatprep.subr.bf16.mxu0 0
      %1229 = vmatpush1.bf16.msra.mxu0 0
      %1230 = vmatprep.subr.bf16.mxu0 0
      %1231 = vmatpush1.bf16.msra.mxu0 0
      %1232 = vmatprep.subr.bf16.mxu0 0
      %1233 = vmatpush1.bf16.msra.mxu0 0
      %1234 = vmatprep.subr.bf16.mxu0 0
      %1235 = vmatpush1.bf16.msra.mxu0 0
      %1236 = vmatprep.subr.bf16.mxu0 0
      %1237 = vmatpush1.bf16.msra.mxu0 0
      %1238 = vmatprep.subr.bf16.mxu0 0
      %1239 = vmatpush1.bf16.msra.mxu0 0
      %1240 = vmatprep.subr.bf16.mxu0 0
      %1241 = vmatpush1.bf16.msra.mxu0 0
      %1242 = vmatprep.mubr.bf16.mxu0 0
      %1243 = vmatmul.mubr.bf16.gmra.mrb[0].mxu0 %v1167
      %v1244 = vpop.f32.mrb[0].mxu0
      %v1245 = vadd.f32 0.0, %v1244
      %v1246 = vpop.f32.mrb[0].mxu0
      %v1247 = vadd.f32 0.0, %v1246
      %v1248 = vpop.f32.mrb[0].mxu0
      %v1249 = vpop.f32.mrb[0].mxu0
      %1250 = vdwg.mxu0
      %v1267 = vunpack.c.l.b16 %v1045
      %v1268 = vunpack.c.h.b16 %v1045
      %v1269 = vunpack.c.l.b16 %v1046
      %v1270 = vunpack.c.h.b16 %v1046
      %v1271 = vunpack.c.l.b16 %v1047
      %v1272 = vunpack.c.h.b16 %v1047
      %v1273 = vunpack.c.l.b16 %v1048
      %v1274 = vunpack.c.h.b16 %v1048
      %v1275 = vunpack.c.l.b16 %v1049
      %v1276 = vunpack.c.h.b16 %v1049
      %v1277 = vunpack.c.l.b16 %v1050
      %v1278 = vunpack.c.h.b16 %v1050
      %v1279 = vunpack.c.l.b16 %v1051
      %v1280 = vunpack.c.h.b16 %v1051
      %v1281 = vunpack.c.l.b16 %v1052
      %v1282 = vunpack.c.h.b16 %v1052
      %v1283 = vunpack.c.l.b16 %v1053
      %v1284 = vunpack.c.h.b16 %v1053
      %v1285 = vunpack.c.l.b16 %v1054
      %v1286 = vunpack.c.h.b16 %v1054
      %v1287 = vunpack.c.l.b16 %v1055
      %v1288 = vunpack.c.h.b16 %v1055
      %v1289 = vunpack.c.l.b16 %v1056
      %v1290 = vunpack.c.h.b16 %v1056
      %v1291 = vunpack.c.l.b16 %v1057
      %v1292 = vunpack.c.h.b16 %v1057
      %v1293 = vunpack.c.l.b16 %v1058
      %v1294 = vunpack.c.h.b16 %v1058
      %v1295 = vunpack.c.l.b16 %v1059
      %v1296 = vunpack.c.h.b16 %v1059
      %v1297 = vunpack.c.l.b16 %v1060
      %v1298 = vunpack.c.h.b16 %v1060
      %v1299 = vpack.c.b16 %v1271, %v1267
      %v1300 = vpack.c.b16 %v1272, %v1268
      %v1301 = vpack.c.b16 %v1273, %v1269
      %v1302 = vpack.c.b16 %v1274, %v1270
      %v1303 = vpack.c.b16 %v1279, %v1275
      %v1304 = vpack.c.b16 %v1280, %v1276
      %v1305 = vpack.c.b16 %v1281, %v1277
      %v1306 = vpack.c.b16 %v1282, %v1278
      %v1307 = vpack.c.b16 %v1287, %v1283
      %v1308 = vpack.c.b16 %v1288, %v1284
      %v1309 = vpack.c.b16 %v1289, %v1285
      %v1310 = vpack.c.b16 %v1290, %v1286
      %v1311 = vpack.c.b16 %v1295, %v1291
      %v1312 = vpack.c.b16 %v1296, %v1292
      %v1313 = vpack.c.b16 %v1297, %v1293
      %v1314 = vpack.c.b16 %v1298, %v1294
      %v1332 = vsel %vm741, %v1061, 0
      %1334 = vmatprep.subr.bf16.mxu0 %v1300
      %1335 = vmatpush1.bf16.msra.mxu0 %v1299
      %1336 = vmatprep.subr.bf16.mxu0 %v1304
      %1337 = vmatpush1.bf16.msra.mxu0 %v1303
      %1338 = vmatprep.subr.bf16.mxu0 %v1308
      %1339 = vmatpush1.bf16.msra.mxu0 %v1307
      %1340 = vmatprep.subr.bf16.mxu0 %v1312
      %1341 = vmatpush1.bf16.msra.mxu0 %v1311
      %1342 = vmatprep.subr.bf16.mxu0 0
      %1343 = vmatpush1.bf16.msra.mxu0 0
      %1344 = vmatprep.subr.bf16.mxu0 0
      %1345 = vmatpush1.bf16.msra.mxu0 0
      %1346 = vmatprep.subr.bf16.mxu0 0
      %1347 = vmatpush1.bf16.msra.mxu0 0
      %1348 = vmatprep.subr.bf16.mxu0 0
      %1349 = vmatpush1.bf16.msra.mxu0 0
      %1350 = vmatprep.subr.bf16.mxu0 0
      %1351 = vmatpush1.bf16.msra.mxu0 0
      %1352 = vmatprep.subr.bf16.mxu0 0
      %1353 = vmatpush1.bf16.msra.mxu0 0
      %1354 = vmatprep.subr.bf16.mxu0 0
      %1355 = vmatpush1.bf16.msra.mxu0 0
      %1356 = vmatprep.subr.bf16.mxu0 0
      %1357 = vmatpush1.bf16.msra.mxu0 0
      %1358 = vmatprep.subr.bf16.mxu0 0
      %1359 = vmatpush1.bf16.msra.mxu0 0
      %1360 = vmatprep.subr.bf16.mxu0 0
      %1361 = vmatpush1.bf16.msra.mxu0 0
      %1362 = vmatprep.subr.bf16.mxu0 0
      %1363 = vmatpush1.bf16.msra.mxu0 0
      %1364 = vmatprep.subr.bf16.mxu0 0
      %1365 = vmatpush1.bf16.msra.mxu0 0
      %1366 = vmatprep.mubr.bf16.mxu0 0
      %1367 = vmatmul.mubr.bf16.gmra.mrb[0].mxu0 %v1332
      %v1368 = vpop.f32.mrb[0].mxu0
      %v1369 = vadd.f32 %v1204, %v1368
      %v1370 = vpop.f32.mrb[0].mxu0
      %v1371 = vadd.f32 %v1206, %v1370
      %v1372 = vpop.f32.mrb[0].mxu0
      %v1373 = vpop.f32.mrb[0].mxu0
      %1374 = vdwg.mxu0
      %1375 = vmatprep.subr.bf16.mxu0 %v1302
      %1376 = vmatpush1.bf16.msra.mxu0 %v1301
      %1377 = vmatprep.subr.bf16.mxu0 %v1306
      %1378 = vmatpush1.bf16.msra.mxu0 %v1305
      %1379 = vmatprep.subr.bf16.mxu0 %v1310
      %1380 = vmatpush1.bf16.msra.mxu0 %v1309
      %1381 = vmatprep.subr.bf16.mxu0 %v1314
      %1382 = vmatpush1.bf16.msra.mxu0 %v1313
      %1383 = vmatprep.subr.bf16.mxu0 0
      %1384 = vmatpush1.bf16.msra.mxu0 0
      %1385 = vmatprep.subr.bf16.mxu0 0
      %1386 = vmatpush1.bf16.msra.mxu0 0
      %1387 = vmatprep.subr.bf16.mxu0 0
      %1388 = vmatpush1.bf16.msra.mxu0 0
      %1389 = vmatprep.subr.bf16.mxu0 0
      %1390 = vmatpush1.bf16.msra.mxu0 0
      %1391 = vmatprep.subr.bf16.mxu0 0
      %1392 = vmatpush1.bf16.msra.mxu0 0
      %1393 = vmatprep.subr.bf16.mxu0 0
      %1394 = vmatpush1.bf16.msra.mxu0 0
      %1395 = vmatprep.subr.bf16.mxu0 0
      %1396 = vmatpush1.bf16.msra.mxu0 0
      %1397 = vmatprep.subr.bf16.mxu0 0
      %1398 = vmatpush1.bf16.msra.mxu0 0
      %1399 = vmatprep.subr.bf16.mxu0 0
      %1400 = vmatpush1.bf16.msra.mxu0 0
      %1401 = vmatprep.subr.bf16.mxu0 0
      %1402 = vmatpush1.bf16.msra.mxu0 0
      %1403 = vmatprep.subr.bf16.mxu0 0
      %1404 = vmatpush1.bf16.msra.mxu0 0
      %1405 = vmatprep.subr.bf16.mxu0 0
      %1406 = vmatpush1.bf16.msra.mxu0 0
      %1407 = vmatprep.mubr.bf16.mxu0 0
      %1408 = vmatmul.mubr.bf16.gmra.mrb[0].mxu0 %v1332
      %v1409 = vpop.f32.mrb[0].mxu0
      %v1410 = vadd.f32 %v1245, %v1409
      %v1411 = vpop.f32.mrb[0].mxu0
      %v1412 = vadd.f32 %v1247, %v1411
      %v1413 = vpop.f32.mrb[0].mxu0
      %v1414 = vpop.f32.mrb[0].mxu0
      %1415 = vdwg.mxu0
      %v1416 = vld [vmem:[#allocation2] sm:$0x3]
      %v1417 = vld [vmem:[%s11] sm:$0xff]
      %v1418 = vld [vmem:[%s11 + $0x8] sm:$0xff]
      %v1419 = vld [vmem:[%s11 + $0x10] sm:$0xff]
      %v1420 = vld [vmem:[%s11 + $0x18] sm:$0xff]
      %v1421 = vld [vmem:[%s11 + $0x20] sm:$0xff]
      %v1422 = vld [vmem:[%s11 + $0x28] sm:$0xff]
      %v1423 = vld [vmem:[%s11 + $0x30] sm:$0xff]
      %v1424 = vld [vmem:[%s11 + $0x38] sm:$0xff]
      %v1425 = vld [vmem:[%s11 + $0x40] sm:$0xff]
      %v1426 = vld [vmem:[%s11 + $0x48] sm:$0xff]
      %v1427 = vld [vmem:[%s11 + $0x50] sm:$0xff]
      %v1428 = vld [vmem:[%s11 + $0x58] sm:$0xff]
      %v1429 = vld [vmem:[%s11 + $0x60] sm:$0xff]
      %v1430 = vld [vmem:[%s11 + $0x68] sm:$0xff]
      %v1431 = vld [vmem:[%s11 + $0x70] sm:$0xff]
      %v1432 = vld [vmem:[%s11 + $0x78] sm:$0xff]
      %v1433 = vld [vmem:[%s11 + $0x80] sm:$0xff]
      %v1434 = vld [vmem:[%s11 + $0x88] sm:$0xff]
      %v1435 = vld [vmem:[%s11 + $0x90] sm:$0xff]
      %v1436 = vld [vmem:[%s11 + $0x98] sm:$0xff]
      %v1437 = vld [vmem:[%s11 + $0xa0] sm:$0xff]
      %v1438 = vld [vmem:[%s11 + $0xa8] sm:$0xff]
      %v1439 = vld [vmem:[%s11 + $0xb0] sm:$0xff]
      %v1440 = vld [vmem:[%s11 + $0xb8] sm:$0xff]
      %v1441 = vld [vmem:[%s11 + $0xc0] sm:$0xff]
      %v1442 = vld [vmem:[%s11 + $0xc8] sm:$0xff]
      %v1443 = vld [vmem:[%s11 + $0xd0] sm:$0xff]
      %v1444 = vld [vmem:[%s11 + $0xd8] sm:$0xff]
      %v1445 = vld [vmem:[%s11 + $0xe0] sm:$0xff]
      %v1446 = vld [vmem:[%s11 + $0xe8] sm:$0xff]
      %v1447 = vld [vmem:[%s11 + $0xf0] sm:$0xff]
      %v1448 = vld [vmem:[%s11 + $0xf8] sm:$0xff]
      %v1449 = vpack.c.bf16 %v1416, %v1416
      %v1482 = vunpack.c.l.b16 %v1417
      %v1483 = vunpack.c.h.b16 %v1417
      %v1484 = vunpack.c.l.b16 %v1418
      %v1485 = vunpack.c.h.b16 %v1418
      %v1486 = vunpack.c.l.b16 %v1419
      %v1487 = vunpack.c.h.b16 %v1419
      %v1488 = vunpack.c.l.b16 %v1420
      %v1489 = vunpack.c.h.b16 %v1420
      %v1490 = vunpack.c.l.b16 %v1421
      %v1491 = vunpack.c.h.b16 %v1421
      %v1492 = vunpack.c.l.b16 %v1422
      %v1493 = vunpack.c.h.b16 %v1422
      %v1494 = vunpack.c.l.b16 %v1423
      %v1495 = vunpack.c.h.b16 %v1423
      %v1496 = vunpack.c.l.b16 %v1424
      %v1497 = vunpack.c.h.b16 %v1424
      %v1498 = vunpack.c.l.b16 %v1425
      %v1499 = vunpack.c.h.b16 %v1425
      %v1500 = vunpack.c.l.b16 %v1426
      %v1501 = vunpack.c.h.b16 %v1426
      %v1502 = vunpack.c.l.b16 %v1427
      %v1503 = vunpack.c.h.b16 %v1427
      %v1504 = vunpack.c.l.b16 %v1428
      %v1505 = vunpack.c.h.b16 %v1428
      %v1506 = vunpack.c.l.b16 %v1429
      %v1507 = vunpack.c.h.b16 %v1429
      %v1508 = vunpack.c.l.b16 %v1430
      %v1509 = vunpack.c.h.b16 %v1430
      %v1510 = vunpack.c.l.b16 %v1431
      %v1511 = vunpack.c.h.b16 %v1431
      %v1512 = vunpack.c.l.b16 %v1432
      %v1513 = vunpack.c.h.b16 %v1432
      %v1514 = vunpack.c.l.b16 %v1433
      %v1515 = vunpack.c.h.b16 %v1433
      %v1516 = vunpack.c.l.b16 %v1434
      %v1517 = vunpack.c.h.b16 %v1434
      %v1518 = vunpack.c.l.b16 %v1435
      %v1519 = vunpack.c.h.b16 %v1435
      %v1520 = vunpack.c.l.b16 %v1436
      %v1521 = vunpack.c.h.b16 %v1436
      %v1522 = vunpack.c.l.b16 %v1437
      %v1523 = vunpack.c.h.b16 %v1437
      %v1524 = vunpack.c.l.b16 %v1438
      %v1525 = vunpack.c.h.b16 %v1438
      %v1526 = vunpack.c.l.b16 %v1439
      %v1527 = vunpack.c.h.b16 %v1439
      %v1528 = vunpack.c.l.b16 %v1440
      %v1529 = vunpack.c.h.b16 %v1440
      %v1530 = vunpack.c.l.b16 %v1441
      %v1531 = vunpack.c.h.b16 %v1441
      %v1532 = vunpack.c.l.b16 %v1442
      %v1533 = vunpack.c.h.b16 %v1442
      %v1534 = vunpack.c.l.b16 %v1443
      %v1535 = vunpack.c.h.b16 %v1443
      %v1536 = vunpack.c.l.b16 %v1444
      %v1537 = vunpack.c.h.b16 %v1444
      %v1538 = vunpack.c.l.b16 %v1445
      %v1539 = vunpack.c.h.b16 %v1445
      %v1540 = vunpack.c.l.b16 %v1446
      %v1541 = vunpack.c.h.b16 %v1446
      %v1542 = vunpack.c.l.b16 %v1447
      %v1543 = vunpack.c.h.b16 %v1447
      %v1544 = vunpack.c.l.b16 %v1448
      %v1545 = vunpack.c.h.b16 %v1448
      %v1546 = vpack.c.b16 %v1486, %v1482
      %v1547 = vpack.c.b16 %v1487, %v1483
      %v1548 = vpack.c.b16 %v1488, %v1484
      %v1549 = vpack.c.b16 %v1489, %v1485
      %v1550 = vpack.c.b16 %v1494, %v1490
      %v1551 = vpack.c.b16 %v1495, %v1491
      %v1552 = vpack.c.b16 %v1496, %v1492
      %v1553 = vpack.c.b16 %v1497, %v1493
      %v1554 = vpack.c.b16 %v1502, %v1498
      %v1555 = vpack.c.b16 %v1503, %v1499
      %v1556 = vpack.c.b16 %v1504, %v1500
      %v1557 = vpack.c.b16 %v1505, %v1501
      %v1558 = vpack.c.b16 %v1510, %v1506
      %v1559 = vpack.c.b16 %v1511, %v1507
      %v1560 = vpack.c.b16 %v1512, %v1508
      %v1561 = vpack.c.b16 %v1513, %v1509
      %v1562 = vpack.c.b16 %v1518, %v1514
      %v1563 = vpack.c.b16 %v1519, %v1515
      %v1564 = vpack.c.b16 %v1520, %v1516
      %v1565 = vpack.c.b16 %v1521, %v1517
      %v1566 = vpack.c.b16 %v1526, %v1522
      %v1567 = vpack.c.b16 %v1527, %v1523
      %v1568 = vpack.c.b16 %v1528, %v1524
      %v1569 = vpack.c.b16 %v1529, %v1525
      %v1570 = vpack.c.b16 %v1534, %v1530
      %v1571 = vpack.c.b16 %v1535, %v1531
      %v1572 = vpack.c.b16 %v1536, %v1532
      %v1573 = vpack.c.b16 %v1537, %v1533
      %v1574 = vpack.c.b16 %v1542, %v1538
      %v1575 = vpack.c.b16 %v1543, %v1539
      %v1576 = vpack.c.b16 %v1544, %v1540
      %v1577 = vpack.c.b16 %v1545, %v1541
      %1610 = vmatprep.subr.bf16.mxu0 %v1547
      %1611 = vmatpush1.bf16.msra.mxu0 %v1546
      %1612 = vmatprep.subr.bf16.mxu0 %v1551
      %1613 = vmatpush1.bf16.msra.mxu0 %v1550
      %1614 = vmatprep.subr.bf16.mxu0 %v1555
      %1615 = vmatpush1.bf16.msra.mxu0 %v1554
      %1616 = vmatprep.subr.bf16.mxu0 %v1559
      %1617 = vmatpush1.bf16.msra.mxu0 %v1558
      %1618 = vmatprep.subr.bf16.mxu0 %v1563
      %1619 = vmatpush1.bf16.msra.mxu0 %v1562
      %1620 = vmatprep.subr.bf16.mxu0 %v1567
      %1621 = vmatpush1.bf16.msra.mxu0 %v1566
      %1622 = vmatprep.subr.bf16.mxu0 %v1571
      %1623 = vmatpush1.bf16.msra.mxu0 %v1570
      %1624 = vmatprep.subr.bf16.mxu0 %v1575
      %1625 = vmatpush1.bf16.msra.mxu0 %v1574
      %1626 = vmatprep.subr.bf16.mxu0 0
      %1627 = vmatpush1.bf16.msra.mxu0 0
      %1628 = vmatprep.subr.bf16.mxu0 0
      %1629 = vmatpush1.bf16.msra.mxu0 0
      %1630 = vmatprep.subr.bf16.mxu0 0
      %1631 = vmatpush1.bf16.msra.mxu0 0
      %1632 = vmatprep.subr.bf16.mxu0 0
      %1633 = vmatpush1.bf16.msra.mxu0 0
      %1634 = vmatprep.subr.bf16.mxu0 0
      %1635 = vmatpush1.bf16.msra.mxu0 0
      %1636 = vmatprep.subr.bf16.mxu0 0
      %1637 = vmatpush1.bf16.msra.mxu0 0
      %1638 = vmatprep.subr.bf16.mxu0 0
      %1639 = vmatpush1.bf16.msra.mxu0 0
      %1640 = vmatprep.subr.bf16.mxu0 0
      %1641 = vmatpush1.bf16.msra.mxu0 0
      %1642 = vmatprep.mubr.bf16.mxu0 0
      %1643 = vmatmul.mubr.bf16.gmra.mrb[0].mxu0 %v1449
      %v1644 = vpop.f32.mrb[0].mxu0
      %v1645 = vadd.f32 0.0, %v1644
      %v1646 = vpop.f32.mrb[0].mxu0
      %v1647 = vadd.f32 0.0, %v1646
      %v1648 = vpop.f32.mrb[0].mxu0
      %v1649 = vpop.f32.mrb[0].mxu0
      %1650 = vdwg.mxu0
      %1651 = vmatprep.subr.bf16.mxu0 %v1549
      %1652 = vmatpush1.bf16.msra.mxu0 %v1548
      %1653 = vmatprep.subr.bf16.mxu0 %v1553
      %1654 = vmatpush1.bf16.msra.mxu0 %v1552
      %1655 = vmatprep.subr.bf16.mxu0 %v1557
      %1656 = vmatpush1.bf16.msra.mxu0 %v1556
      %1657 = vmatprep.subr.bf16.mxu0 %v1561
      %1658 = vmatpush1.bf16.msra.mxu0 %v1560
      %1659 = vmatprep.subr.bf16.mxu0 %v1565
      %1660 = vmatpush1.bf16.msra.mxu0 %v1564
      %1661 = vmatprep.subr.bf16.mxu0 %v1569
      %1662 = vmatpush1.bf16.msra.mxu0 %v1568
      %1663 = vmatprep.subr.bf16.mxu0 %v1573
      %1664 = vmatpush1.bf16.msra.mxu0 %v1572
      %1665 = vmatprep.subr.bf16.mxu0 %v1577
      %1666 = vmatpush1.bf16.msra.mxu0 %v1576
      %1667 = vmatprep.subr.bf16.mxu0 0
      %1668 = vmatpush1.bf16.msra.mxu0 0
      %1669 = vmatprep.subr.bf16.mxu0 0
      %1670 = vmatpush1.bf16.msra.mxu0 0
      %1671 = vmatprep.subr.bf16.mxu0 0
      %1672 = vmatpush1.bf16.msra.mxu0 0
      %1673 = vmatprep.subr.bf16.mxu0 0
      %1674 = vmatpush1.bf16.msra.mxu0 0
      %1675 = vmatprep.subr.bf16.mxu0 0
      %1676 = vmatpush1.bf16.msra.mxu0 0
      %1677 = vmatprep.subr.bf16.mxu0 0
      %1678 = vmatpush1.bf16.msra.mxu0 0
      %1679 = vmatprep.subr.bf16.mxu0 0
      %1680 = vmatpush1.bf16.msra.mxu0 0
      %1681 = vmatprep.subr.bf16.mxu0 0
      %1682 = vmatpush1.bf16.msra.mxu0 0
      %1683 = vmatprep.mubr.bf16.mxu0 0
      %1684 = vmatmul.mubr.bf16.gmra.mrb[0].mxu0 %v1449
      %v1685 = vpop.f32.mrb[0].mxu0
      %v1686 = vadd.f32 0.0, %v1685
      %v1687 = vpop.f32.mrb[0].mxu0
      %v1688 = vadd.f32 0.0, %v1687
      %v1689 = vpop.f32.mrb[0].mxu0
      %v1690 = vpop.f32.mrb[0].mxu0
      %1691 = vdwg.mxu0
      %v1692 = vadd.f32 %v1369, %v1645
      %v1693 = vadd.f32 %v1371, %v1647
      %v1694 = vadd.f32 %v1410, %v1686
      %v1695 = vadd.f32 %v1412, %v1688
      %v1696 = vld [vmem:[%s12] sm:$0xf]
      %v1698 = vlaneseq
      %v1699 = vshrl.u32 %v1698, 7
      %v1700 = vsub.s32 0, %v1699
      %v1701 = vrot.slane %v1696, %v1700
      %v1702 = vlaneseq
      %v1703 = vshrl.u32 %v1702, 7
      %v1704 = vsub.s32 1, %v1703
      %v1705 = vrot.slane %v1696, %v1704
      %v1706 = vlaneseq
      %v1707 = vshrl.u32 %v1706, 7
      %v1708 = vsub.s32 2, %v1707
      %v1709 = vrot.slane %v1696, %v1708
      %v1710 = vlaneseq
      %v1711 = vshrl.u32 %v1710, 7
      %v1712 = vsub.s32 3, %v1711
      %v1713 = vrot.slane %v1696, %v1712
      %v1718 = vadd.f32 %v1692, %v1701
      %v1719 = vadd.f32 %v1693, %v1705
      %v1720 = vadd.f32 %v1694, %v1709
      %v1721 = vadd.f32 %v1695, %v1713
      %v1722 = vxor.u32 %v1718, 2147483648
      %v1723 = vmul.f32 %v1722, 1.442695
      %v1724 = vpow.pop %v1723
      %v1725 = vadd.f32 %v1724, 1.0
      %v1726 = vrcp.pop %v1725
      %v1727 = vmul.f32 1.0, %v1726
      %v1728 = vxor.u32 %v1719, 2147483648
      %v1729 = vmul.f32 %v1728, 1.442695
      %v1730 = vpow.pop %v1729
      %v1731 = vadd.f32 %v1730, 1.0
      %v1732 = vrcp.pop %v1731
      %v1733 = vmul.f32 1.0, %v1732
      %v1734 = vtanh.pop %v1720
      %v1735 = vxor.u32 %v1721, 2147483648
      %v1736 = vmul.f32 %v1735, 1.442695
      %v1737 = vpow.pop %v1736
      %v1738 = vadd.f32 %v1737, 1.0
      %v1739 = vrcp.pop %v1738
      %v1740 = vmul.f32 1.0, %v1739
      %v1741 = vld [vmem:[#allocation3] sm:$0x3]
      %v1742 = vmul.f32 %v1733, %v1741
      %v1743 = vmul.f32 %v1727, %v1734
      %v1744 = vadd.f32 %v1742, %v1743
      %v1745 = vtanh.pop %v1744
      %v1746 = vmul.f32 %v1740, %v1745
      %1747 = vst [vmem:[#allocation3] sm:$0x3] %v1744
      %1748 = vst [vmem:[#allocation2] sm:$0x3] %v1746
      %v1749 = vld [vmem:[%s13] sm:$0xff]
      %v1750 = vld [vmem:[%s13 + $0x8] sm:$0xff]
      %v1751 = vld [vmem:[%s13 + $0x10] sm:$0xff]
      %v1752 = vld [vmem:[%s13 + $0x18] sm:$0xff]
      %v1753 = vld [vmem:[%s13 + $0x20] sm:$0xff]
      %v1754 = vld [vmem:[%s13 + $0x28] sm:$0xff]
      %v1755 = vld [vmem:[%s13 + $0x30] sm:$0xff]
      %v1756 = vld [vmem:[%s13 + $0x38] sm:$0xff]
      %v1757 = vld [vmem:[%s13 + $0x40] sm:$0xff]
      %v1758 = vld [vmem:[%s13 + $0x48] sm:$0xff]
      %v1759 = vld [vmem:[%s13 + $0x50] sm:$0xff]
      %v1760 = vld [vmem:[%s13 + $0x58] sm:$0xff]
      %v1761 = vld [vmem:[%s13 + $0x60] sm:$0xff]
      %v1762 = vld [vmem:[%s13 + $0x68] sm:$0xff]
      %v1763 = vld [vmem:[%s13 + $0x70] sm:$0xff]
      %v1764 = vld [vmem:[%s13 + $0x78] sm:$0xff]
      %v1765 = vld [vmem:[%s13 + $0x80] sm:$0xff]
      %v1766 = vld [vmem:[%s13 + $0x88] sm:$0xff]
      %v1767 = vld [vmem:[%s13 + $0x90] sm:$0xff]
      %v1768 = vld [vmem:[%s13 + $0x98] sm:$0xff]
      %v1769 = vld [vmem:[%s13 + $0xa0] sm:$0xff]
      %v1770 = vld [vmem:[%s13 + $0xa8] sm:$0xff]
      %v1771 = vld [vmem:[%s13 + $0xb0] sm:$0xff]
      %v1772 = vld [vmem:[%s13 + $0xb8] sm:$0xff]
      %v1773 = vld [vmem:[%s13 + $0xc0] sm:$0xff]
      %v1774 = vld [vmem:[%s13 + $0xc8] sm:$0xff]
      %v1775 = vld [vmem:[%s13 + $0xd0] sm:$0xff]
      %v1776 = vld [vmem:[%s13 + $0xd8] sm:$0xff]
      %v1777 = vld [vmem:[%s13 + $0xe0] sm:$0xff]
      %v1778 = vld [vmem:[%s13 + $0xe8] sm:$0xff]
      %v1779 = vld [vmem:[%s13 + $0xf0] sm:$0xff]
      %v1780 = vld [vmem:[%s13 + $0xf8] sm:$0xff]
      %v1781 = vpack.c.bf16 %v1746, %v1746
      %v1782 = vld [vmem:[#allocation4] sm:$0x3]
      %v1783 = vld [vmem:[%s14] sm:$0xff]
      %v1784 = vld [vmem:[%s14 + $0x8] sm:$0xff]
      %v1785 = vld [vmem:[%s14 + $0x10] sm:$0xff]
      %v1786 = vld [vmem:[%s14 + $0x18] sm:$0xff]
      %v1787 = vld [vmem:[%s14 + $0x20] sm:$0xff]
      %v1788 = vld [vmem:[%s14 + $0x28] sm:$0xff]
      %v1789 = vld [vmem:[%s14 + $0x30] sm:$0xff]
      %v1790 = vld [vmem:[%s14 + $0x38] sm:$0xff]
      %v1791 = vld [vmem:[%s14 + $0x40] sm:$0xff]
      %v1792 = vld [vmem:[%s14 + $0x48] sm:$0xff]
      %v1793 = vld [vmem:[%s14 + $0x50] sm:$0xff]
      %v1794 = vld [vmem:[%s14 + $0x58] sm:$0xff]
      %v1795 = vld [vmem:[%s14 + $0x60] sm:$0xff]
      %v1796 = vld [vmem:[%s14 + $0x68] sm:$0xff]
      %v1797 = vld [vmem:[%s14 + $0x70] sm:$0xff]
      %v1798 = vld [vmem:[%s14 + $0x78] sm:$0xff]
      %v1799 = vld [vmem:[%s14 + $0x80] sm:$0xff]
      %v1800 = vld [vmem:[%s14 + $0x88] sm:$0xff]
      %v1801 = vld [vmem:[%s14 + $0x90] sm:$0xff]
      %v1802 = vld [vmem:[%s14 + $0x98] sm:$0xff]
      %v1803 = vld [vmem:[%s14 + $0xa0] sm:$0xff]
      %v1804 = vld [vmem:[%s14 + $0xa8] sm:$0xff]
      %v1805 = vld [vmem:[%s14 + $0xb0] sm:$0xff]
      %v1806 = vld [vmem:[%s14 + $0xb8] sm:$0xff]
      %v1807 = vld [vmem:[%s14 + $0xc0] sm:$0xff]
      %v1808 = vld [vmem:[%s14 + $0xc8] sm:$0xff]
      %v1809 = vld [vmem:[%s14 + $0xd0] sm:$0xff]
      %v1810 = vld [vmem:[%s14 + $0xd8] sm:$0xff]
      %v1811 = vld [vmem:[%s14 + $0xe0] sm:$0xff]
      %v1812 = vld [vmem:[%s14 + $0xe8] sm:$0xff]
      %v1813 = vld [vmem:[%s14 + $0xf0] sm:$0xff]
      %v1814 = vld [vmem:[%s14 + $0xf8] sm:$0xff]
      %v1815 = vpack.c.bf16 %v1782, %v1782
      %v1848 = vunpack.c.l.b16 %v1783
      %v1849 = vunpack.c.h.b16 %v1783
      %v1850 = vunpack.c.l.b16 %v1784
      %v1851 = vunpack.c.h.b16 %v1784
      %v1852 = vunpack.c.l.b16 %v1785
      %v1853 = vunpack.c.h.b16 %v1785
      %v1854 = vunpack.c.l.b16 %v1786
      %v1855 = vunpack.c.h.b16 %v1786
      %v1856 = vunpack.c.l.b16 %v1787
      %v1857 = vunpack.c.h.b16 %v1787
      %v1858 = vunpack.c.l.b16 %v1788
      %v1859 = vunpack.c.h.b16 %v1788
      %v1860 = vunpack.c.l.b16 %v1789
      %v1861 = vunpack.c.h.b16 %v1789
      %v1862 = vunpack.c.l.b16 %v1790
      %v1863 = vunpack.c.h.b16 %v1790
      %v1864 = vunpack.c.l.b16 %v1791
      %v1865 = vunpack.c.h.b16 %v1791
      %v1866 = vunpack.c.l.b16 %v1792
      %v1867 = vunpack.c.h.b16 %v1792
      %v1868 = vunpack.c.l.b16 %v1793
      %v1869 = vunpack.c.h.b16 %v1793
      %v1870 = vunpack.c.l.b16 %v1794
      %v1871 = vunpack.c.h.b16 %v1794
      %v1872 = vunpack.c.l.b16 %v1795
      %v1873 = vunpack.c.h.b16 %v1795
      %v1874 = vunpack.c.l.b16 %v1796
      %v1875 = vunpack.c.h.b16 %v1796
      %v1876 = vunpack.c.l.b16 %v1797
      %v1877 = vunpack.c.h.b16 %v1797
      %v1878 = vunpack.c.l.b16 %v1798
      %v1879 = vunpack.c.h.b16 %v1798
      %v1880 = vunpack.c.l.b16 %v1799
      %v1881 = vunpack.c.h.b16 %v1799
      %v1882 = vunpack.c.l.b16 %v1800
      %v1883 = vunpack.c.h.b16 %v1800
      %v1884 = vunpack.c.l.b16 %v1801
      %v1885 = vunpack.c.h.b16 %v1801
      %v1886 = vunpack.c.l.b16 %v1802
      %v1887 = vunpack.c.h.b16 %v1802
      %v1888 = vunpack.c.l.b16 %v1803
      %v1889 = vunpack.c.h.b16 %v1803
      %v1890 = vunpack.c.l.b16 %v1804
      %v1891 = vunpack.c.h.b16 %v1804
      %v1892 = vunpack.c.l.b16 %v1805
      %v1893 = vunpack.c.h.b16 %v1805
      %v1894 = vunpack.c.l.b16 %v1806
      %v1895 = vunpack.c.h.b16 %v1806
      %v1896 = vunpack.c.l.b16 %v1807
      %v1897 = vunpack.c.h.b16 %v1807
      %v1898 = vunpack.c.l.b16 %v1808
      %v1899 = vunpack.c.h.b16 %v1808
      %v1900 = vunpack.c.l.b16 %v1809
      %v1901 = vunpack.c.h.b16 %v1809
      %v1902 = vunpack.c.l.b16 %v1810
      %v1903 = vunpack.c.h.b16 %v1810
      %v1904 = vunpack.c.l.b16 %v1811
      %v1905 = vunpack.c.h.b16 %v1811
      %v1906 = vunpack.c.l.b16 %v1812
      %v1907 = vunpack.c.h.b16 %v1812
      %v1908 = vunpack.c.l.b16 %v1813
      %v1909 = vunpack.c.h.b16 %v1813
      %v1910 = vunpack.c.l.b16 %v1814
      %v1911 = vunpack.c.h.b16 %v1814
      %v1912 = vpack.c.b16 %v1852, %v1848
      %v1913 = vpack.c.b16 %v1853, %v1849
      %v1914 = vpack.c.b16 %v1854, %v1850
      %v1915 = vpack.c.b16 %v1855, %v1851
      %v1916 = vpack.c.b16 %v1860, %v1856
      %v1917 = vpack.c.b16 %v1861, %v1857
      %v1918 = vpack.c.b16 %v1862, %v1858
      %v1919 = vpack.c.b16 %v1863, %v1859
      %v1920 = vpack.c.b16 %v1868, %v1864
      %v1921 = vpack.c.b16 %v1869, %v1865
      %v1922 = vpack.c.b16 %v1870, %v1866
      %v1923 = vpack.c.b16 %v1871, %v1867
      %v1924 = vpack.c.b16 %v1876, %v1872
      %v1925 = vpack.c.b16 %v1877, %v1873
      %v1926 = vpack.c.b16 %v1878, %v1874
      %v1927 = vpack.c.b16 %v1879, %v1875
      %v1928 = vpack.c.b16 %v1884, %v1880
      %v1929 = vpack.c.b16 %v1885, %v1881
      %v1930 = vpack.c.b16 %v1886, %v1882
      %v1931 = vpack.c.b16 %v1887, %v1883
      %v1932 = vpack.c.b16 %v1892, %v1888
      %v1933 = vpack.c.b16 %v1893, %v1889
      %v1934 = vpack.c.b16 %v1894, %v1890
      %v1935 = vpack.c.b16 %v1895, %v1891
      %v1936 = vpack.c.b16 %v1900, %v1896
      %v1937 = vpack.c.b16 %v1901, %v1897
      %v1938 = vpack.c.b16 %v1902, %v1898
      %v1939 = vpack.c.b16 %v1903, %v1899
      %v1940 = vpack.c.b16 %v1908, %v1904
      %v1941 = vpack.c.b16 %v1909, %v1905
      %v1942 = vpack.c.b16 %v1910, %v1906
      %v1943 = vpack.c.b16 %v1911, %v1907
      %1976 = vmatprep.subr.bf16.mxu0 %v1913
      %1977 = vmatpush1.bf16.msra.mxu0 %v1912
      %1978 = vmatprep.subr.bf16.mxu0 %v1917
      %1979 = vmatpush1.bf16.msra.mxu0 %v1916
      %1980 = vmatprep.subr.bf16.mxu0 %v1921
      %1981 = vmatpush1.bf16.msra.mxu0 %v1920
      %1982 = vmatprep.subr.bf16.mxu0 %v1925
      %1983 = vmatpush1.bf16.msra.mxu0 %v1924
      %1984 = vmatprep.subr.bf16.mxu0 %v1929
      %1985 = vmatpush1.bf16.msra.mxu0 %v1928
      %1986 = vmatprep.subr.bf16.mxu0 %v1933
      %1987 = vmatpush1.bf16.msra.mxu0 %v1932
      %1988 = vmatprep.subr.bf16.mxu0 %v1937
      %1989 = vmatpush1.bf16.msra.mxu0 %v1936
      %1990 = vmatprep.subr.bf16.mxu0 %v1941
      %1991 = vmatpush1.bf16.msra.mxu0 %v1940
      %1992 = vmatprep.subr.bf16.mxu0 0
      %1993 = vmatpush1.bf16.msra.mxu0 0
      %1994 = vmatprep.subr.bf16.mxu0 0
      %1995 = vmatpush1.bf16.msra.mxu0 0
      %1996 = vmatprep.subr.bf16.mxu0 0
      %1997 = vmatpush1.bf16.msra.mxu0 0
      %1998 = vmatprep.subr.bf16.mxu0 0
      %1999 = vmatpush1.bf16.msra.mxu0 0
      %2000 = vmatprep.subr.bf16.mxu0 0
      %2001 = vmatpush1.bf16.msra.mxu0 0
      %2002 = vmatprep.subr.bf16.mxu0 0
      %2003 = vmatpush1.bf16.msra.mxu0 0
      %2004 = vmatprep.subr.bf16.mxu0 0
      %2005 = vmatpush1.bf16.msra.mxu0 0
      %2006 = vmatprep.subr.bf16.mxu0 0
      %2007 = vmatpush1.bf16.msra.mxu0 0
      %2008 = vmatprep.mubr.bf16.mxu0 0
      %2009 = vmatmul.mubr.bf16.gmra.mrb[0].mxu0 %v1815
      %v2010 = vpop.f32.mrb[0].mxu0
      %v2011 = vadd.f32 0.0, %v2010
      %v2012 = vpop.f32.mrb[0].mxu0
      %v2013 = vadd.f32 0.0, %v2012
      %v2014 = vpop.f32.mrb[0].mxu0
      %v2015 = vpop.f32.mrb[0].mxu0
      %2016 = vdwg.mxu0
      %2017 = vmatprep.subr.bf16.mxu0 %v1915
      %2018 = vmatpush1.bf16.msra.mxu0 %v1914
      %2019 = vmatprep.subr.bf16.mxu0 %v1919
      %2020 = vmatpush1.bf16.msra.mxu0 %v1918
      %2021 = vmatprep.subr.bf16.mxu0 %v1923
      %2022 = vmatpush1.bf16.msra.mxu0 %v1922
      %2023 = vmatprep.subr.bf16.mxu0 %v1927
      %2024 = vmatpush1.bf16.msra.mxu0 %v1926
      %2025 = vmatprep.subr.bf16.mxu0 %v1931
      %2026 = vmatpush1.bf16.msra.mxu0 %v1930
      %2027 = vmatprep.subr.bf16.mxu0 %v1935
      %2028 = vmatpush1.bf16.msra.mxu0 %v1934
      %2029 = vmatprep.subr.bf16.mxu0 %v1939
      %2030 = vmatpush1.bf16.msra.mxu0 %v1938
      %2031 = vmatprep.subr.bf16.mxu0 %v1943
      %2032 = vmatpush1.bf16.msra.mxu0 %v1942
      %2033 = vmatprep.subr.bf16.mxu0 0
      %2034 = vmatpush1.bf16.msra.mxu0 0
      %2035 = vmatprep.subr.bf16.mxu0 0
      %2036 = vmatpush1.bf16.msra.mxu0 0
      %2037 = vmatprep.subr.bf16.mxu0 0
      %2038 = vmatpush1.bf16.msra.mxu0 0
      %2039 = vmatprep.subr.bf16.mxu0 0
      %2040 = vmatpush1.bf16.msra.mxu0 0
      %2041 = vmatprep.subr.bf16.mxu0 0
      %2042 = vmatpush1.bf16.msra.mxu0 0
      %2043 = vmatprep.subr.bf16.mxu0 0
      %2044 = vmatpush1.bf16.msra.mxu0 0
      %2045 = vmatprep.subr.bf16.mxu0 0
      %2046 = vmatpush1.bf16.msra.mxu0 0
      %2047 = vmatprep.subr.bf16.mxu0 0
      %2048 = vmatpush1.bf16.msra.mxu0 0
      %2049 = vmatprep.mubr.bf16.mxu0 0
      %2050 = vmatmul.mubr.bf16.gmra.mrb[0].mxu0 %v1815
      %v2051 = vpop.f32.mrb[0].mxu0
      %v2052 = vadd.f32 0.0, %v2051
      %v2053 = vpop.f32.mrb[0].mxu0
      %v2054 = vadd.f32 0.0, %v2053
      %v2055 = vpop.f32.mrb[0].mxu0
      %v2056 = vpop.f32.mrb[0].mxu0
      %2057 = vdwg.mxu0
      %v2090 = vunpack.c.l.b16 %v1749
      %v2091 = vunpack.c.h.b16 %v1749
      %v2092 = vunpack.c.l.b16 %v1750
      %v2093 = vunpack.c.h.b16 %v1750
      %v2094 = vunpack.c.l.b16 %v1751
      %v2095 = vunpack.c.h.b16 %v1751
      %v2096 = vunpack.c.l.b16 %v1752
      %v2097 = vunpack.c.h.b16 %v1752
      %v2098 = vunpack.c.l.b16 %v1753
      %v2099 = vunpack.c.h.b16 %v1753
      %v2100 = vunpack.c.l.b16 %v1754
      %v2101 = vunpack.c.h.b16 %v1754
      %v2102 = vunpack.c.l.b16 %v1755
      %v2103 = vunpack.c.h.b16 %v1755
      %v2104 = vunpack.c.l.b16 %v1756
      %v2105 = vunpack.c.h.b16 %v1756
      %v2106 = vunpack.c.l.b16 %v1757
      %v2107 = vunpack.c.h.b16 %v1757
      %v2108 = vunpack.c.l.b16 %v1758
      %v2109 = vunpack.c.h.b16 %v1758
      %v2110 = vunpack.c.l.b16 %v1759
      %v2111 = vunpack.c.h.b16 %v1759
      %v2112 = vunpack.c.l.b16 %v1760
      %v2113 = vunpack.c.h.b16 %v1760
      %v2114 = vunpack.c.l.b16 %v1761
      %v2115 = vunpack.c.h.b16 %v1761
      %v2116 = vunpack.c.l.b16 %v1762
      %v2117 = vunpack.c.h.b16 %v1762
      %v2118 = vunpack.c.l.b16 %v1763
      %v2119 = vunpack.c.h.b16 %v1763
      %v2120 = vunpack.c.l.b16 %v1764
      %v2121 = vunpack.c.h.b16 %v1764
      %v2122 = vunpack.c.l.b16 %v1765
      %v2123 = vunpack.c.h.b16 %v1765
      %v2124 = vunpack.c.l.b16 %v1766
      %v2125 = vunpack.c.h.b16 %v1766
      %v2126 = vunpack.c.l.b16 %v1767
      %v2127 = vunpack.c.h.b16 %v1767
      %v2128 = vunpack.c.l.b16 %v1768
      %v2129 = vunpack.c.h.b16 %v1768
      %v2130 = vunpack.c.l.b16 %v1769
      %v2131 = vunpack.c.h.b16 %v1769
      %v2132 = vunpack.c.l.b16 %v1770
      %v2133 = vunpack.c.h.b16 %v1770
      %v2134 = vunpack.c.l.b16 %v1771
      %v2135 = vunpack.c.h.b16 %v1771
      %v2136 = vunpack.c.l.b16 %v1772
      %v2137 = vunpack.c.h.b16 %v1772
      %v2138 = vunpack.c.l.b16 %v1773
      %v2139 = vunpack.c.h.b16 %v1773
      %v2140 = vunpack.c.l.b16 %v1774
      %v2141 = vunpack.c.h.b16 %v1774
      %v2142 = vunpack.c.l.b16 %v1775
      %v2143 = vunpack.c.h.b16 %v1775
      %v2144 = vunpack.c.l.b16 %v1776
      %v2145 = vunpack.c.h.b16 %v1776
      %v2146 = vunpack.c.l.b16 %v1777
      %v2147 = vunpack.c.h.b16 %v1777
      %v2148 = vunpack.c.l.b16 %v1778
      %v2149 = vunpack.c.h.b16 %v1778
      %v2150 = vunpack.c.l.b16 %v1779
      %v2151 = vunpack.c.h.b16 %v1779
      %v2152 = vunpack.c.l.b16 %v1780
      %v2153 = vunpack.c.h.b16 %v1780
      %v2154 = vpack.c.b16 %v2094, %v2090
      %v2155 = vpack.c.b16 %v2095, %v2091
      %v2156 = vpack.c.b16 %v2096, %v2092
      %v2157 = vpack.c.b16 %v2097, %v2093
      %v2158 = vpack.c.b16 %v2102, %v2098
      %v2159 = vpack.c.b16 %v2103, %v2099
      %v2160 = vpack.c.b16 %v2104, %v2100
      %v2161 = vpack.c.b16 %v2105, %v2101
      %v2162 = vpack.c.b16 %v2110, %v2106
      %v2163 = vpack.c.b16 %v2111, %v2107
      %v2164 = vpack.c.b16 %v2112, %v2108
      %v2165 = vpack.c.b16 %v2113, %v2109
      %v2166 = vpack.c.b16 %v2118, %v2114
      %v2167 = vpack.c.b16 %v2119, %v2115
      %v2168 = vpack.c.b16 %v2120, %v2116
      %v2169 = vpack.c.b16 %v2121, %v2117
      %v2170 = vpack.c.b16 %v2126, %v2122
      %v2171 = vpack.c.b16 %v2127, %v2123
      %v2172 = vpack.c.b16 %v2128, %v2124
      %v2173 = vpack.c.b16 %v2129, %v2125
      %v2174 = vpack.c.b16 %v2134, %v2130
      %v2175 = vpack.c.b16 %v2135, %v2131
      %v2176 = vpack.c.b16 %v2136, %v2132
      %v2177 = vpack.c.b16 %v2137, %v2133
      %v2178 = vpack.c.b16 %v2142, %v2138
      %v2179 = vpack.c.b16 %v2143, %v2139
      %v2180 = vpack.c.b16 %v2144, %v2140
      %v2181 = vpack.c.b16 %v2145, %v2141
      %v2182 = vpack.c.b16 %v2150, %v2146
      %v2183 = vpack.c.b16 %v2151, %v2147
      %v2184 = vpack.c.b16 %v2152, %v2148
      %v2185 = vpack.c.b16 %v2153, %v2149
      %2218 = vmatprep.subr.bf16.mxu0 %v2155
      %2219 = vmatpush1.bf16.msra.mxu0 %v2154
      %2220 = vmatprep.subr.bf16.mxu0 %v2159
      %2221 = vmatpush1.bf16.msra.mxu0 %v2158
      %2222 = vmatprep.subr.bf16.mxu0 %v2163
      %2223 = vmatpush1.bf16.msra.mxu0 %v2162
      %2224 = vmatprep.subr.bf16.mxu0 %v2167
      %2225 = vmatpush1.bf16.msra.mxu0 %v2166
      %2226 = vmatprep.subr.bf16.mxu0 %v2171
      %2227 = vmatpush1.bf16.msra.mxu0 %v2170
      %2228 = vmatprep.subr.bf16.mxu0 %v2175
      %2229 = vmatpush1.bf16.msra.mxu0 %v2174
      %2230 = vmatprep.subr.bf16.mxu0 %v2179
      %2231 = vmatpush1.bf16.msra.mxu0 %v2178
      %2232 = vmatprep.subr.bf16.mxu0 %v2183
      %2233 = vmatpush1.bf16.msra.mxu0 %v2182
      %2234 = vmatprep.subr.bf16.mxu0 0
      %2235 = vmatpush1.bf16.msra.mxu0 0
      %2236 = vmatprep.subr.bf16.mxu0 0
      %2237 = vmatpush1.bf16.msra.mxu0 0
      %2238 = vmatprep.subr.bf16.mxu0 0
      %2239 = vmatpush1.bf16.msra.mxu0 0
      %2240 = vmatprep.subr.bf16.mxu0 0
      %2241 = vmatpush1.bf16.msra.mxu0 0
      %2242 = vmatprep.subr.bf16.mxu0 0
      %2243 = vmatpush1.bf16.msra.mxu0 0
      %2244 = vmatprep.subr.bf16.mxu0 0
      %2245 = vmatpush1.bf16.msra.mxu0 0
      %2246 = vmatprep.subr.bf16.mxu0 0
      %2247 = vmatpush1.bf16.msra.mxu0 0
      %2248 = vmatprep.subr.bf16.mxu0 0
      %2249 = vmatpush1.bf16.msra.mxu0 0
      %2250 = vmatprep.mubr.bf16.mxu0 0
      %2251 = vmatmul.mubr.bf16.gmra.mrb[0].mxu0 %v1781
      %v2252 = vpop.f32.mrb[0].mxu0
      %v2253 = vadd.f32 %v2011, %v2252
      %v2254 = vpop.f32.mrb[0].mxu0
      %v2255 = vadd.f32 %v2013, %v2254
      %v2256 = vpop.f32.mrb[0].mxu0
      %v2257 = vpop.f32.mrb[0].mxu0
      %2258 = vdwg.mxu0
      %2259 = vmatprep.subr.bf16.mxu0 %v2157
      %2260 = vmatpush1.bf16.msra.mxu0 %v2156
      %2261 = vmatprep.subr.bf16.mxu0 %v2161
      %2262 = vmatpush1.bf16.msra.mxu0 %v2160
      %2263 = vmatprep.subr.bf16.mxu0 %v2165
      %2264 = vmatpush1.bf16.msra.mxu0 %v2164
      %2265 = vmatprep.subr.bf16.mxu0 %v2169
      %2266 = vmatpush1.bf16.msra.mxu0 %v2168
      %2267 = vmatprep.subr.bf16.mxu0 %v2173
      %2268 = vmatpush1.bf16.msra.mxu0 %v2172
      %2269 = vmatprep.subr.bf16.mxu0 %v2177
      %2270 = vmatpush1.bf16.msra.mxu0 %v2176
      %2271 = vmatprep.subr.bf16.mxu0 %v2181
      %2272 = vmatpush1.bf16.msra.mxu0 %v2180
      %2273 = vmatprep.subr.bf16.mxu0 %v2185
      %2274 = vmatpush1.bf16.msra.mxu0 %v2184
      %2275 = vmatprep.subr.bf16.mxu0 0
      %2276 = vmatpush1.bf16.msra.mxu0 0
      %2277 = vmatprep.subr.bf16.mxu0 0
      %2278 = vmatpush1.bf16.msra.mxu0 0
      %2279 = vmatprep.subr.bf16.mxu0 0
      %2280 = vmatpush1.bf16.msra.mxu0 0
      %2281 = vmatprep.subr.bf16.mxu0 0
      %2282 = vmatpush1.bf16.msra.mxu0 0
      %2283 = vmatprep.subr.bf16.mxu0 0
      %2284 = vmatpush1.bf16.msra.mxu0 0
      %2285 = vmatprep.subr.bf16.mxu0 0
      %2286 = vmatpush1.bf16.msra.mxu0 0
      %2287 = vmatprep.subr.bf16.mxu0 0
      %2288 = vmatpush1.bf16.msra.mxu0 0
      %2289 = vmatprep.subr.bf16.mxu0 0
      %2290 = vmatpush1.bf16.msra.mxu0 0
      %2291 = vmatprep.mubr.bf16.mxu0 0
      %2292 = vmatmul.mubr.bf16.gmra.mrb[0].mxu0 %v1781
      %v2293 = vpop.f32.mrb[0].mxu0
      %v2294 = vadd.f32 %v2052, %v2293
      %v2295 = vpop.f32.mrb[0].mxu0
      %v2296 = vadd.f32 %v2054, %v2295
      %v2297 = vpop.f32.mrb[0].mxu0
      %v2298 = vpop.f32.mrb[0].mxu0
      %2299 = vdwg.mxu0
      %v2300 = vld [vmem:[%s15] sm:$0xf]
      %v2302 = vlaneseq
      %v2303 = vshrl.u32 %v2302, 7
      %v2304 = vsub.s32 0, %v2303
      %v2305 = vrot.slane %v2300, %v2304
      %v2306 = vlaneseq
      %v2307 = vshrl.u32 %v2306, 7
      %v2308 = vsub.s32 1, %v2307
      %v2309 = vrot.slane %v2300, %v2308
      %v2310 = vlaneseq
      %v2311 = vshrl.u32 %v2310, 7
      %v2312 = vsub.s32 2, %v2311
      %v2313 = vrot.slane %v2300, %v2312
      %v2314 = vlaneseq
      %v2315 = vshrl.u32 %v2314, 7
      %v2316 = vsub.s32 3, %v2315
      %v2317 = vrot.slane %v2300, %v2316
      %v2322 = vadd.f32 %v2253, %v2305
      %v2323 = vadd.f32 %v2255, %v2309
      %v2324 = vadd.f32 %v2294, %v2313
      %v2325 = vadd.f32 %v2296, %v2317
      %v2326 = vxor.u32 %v2322, 2147483648
      %v2327 = vmul.f32 %v2326, 1.442695
      %v2328 = vpow.pop %v2327
      %v2329 = vadd.f32 %v2328, 1.0
      %v2330 = vrcp.pop %v2329
      %v2331 = vmul.f32 1.0, %v2330
      %v2332 = vxor.u32 %v2323, 2147483648
      %v2333 = vmul.f32 %v2332, 1.442695
      %v2334 = vpow.pop %v2333
      %v2335 = vadd.f32 %v2334, 1.0
      %v2336 = vrcp.pop %v2335
      %v2337 = vmul.f32 1.0, %v2336
      %v2338 = vtanh.pop %v2324
      %v2339 = vxor.u32 %v2325, 2147483648
      %v2340 = vmul.f32 %v2339, 1.442695
      %v2341 = vpow.pop %v2340
      %v2342 = vadd.f32 %v2341, 1.0
      %v2343 = vrcp.pop %v2342
      %v2344 = vmul.f32 1.0, %v2343
      %v2345 = vld [vmem:[#allocation5] sm:$0x3]
      %v2346 = vmul.f32 %v2337, %v2345
      %v2347 = vmul.f32 %v2331, %v2338
      %v2348 = vadd.f32 %v2346, %v2347
      %v2349 = vtanh.pop %v2348
      %v2350 = vmul.f32 %v2344, %v2349
      %2351 = vst [vmem:[#allocation5] sm:$0x3] %v2348
      %2352 = vst [vmem:[#allocation4] sm:$0x3] %v2350
      %v2353 = vld [vmem:[%s16] sm:$0xf]
      %v2354 = vld [vmem:[%s16 + $0x4] sm:$0xf]
      %v2355 = vld [vmem:[%s16 + $0x8] sm:$0xf]
      %v2356 = vld [vmem:[%s16 + $0xc] sm:$0xf]
      %v2357 = vld [vmem:[%s16 + $0x10] sm:$0xf]
      %v2358 = vld [vmem:[%s16 + $0x14] sm:$0xf]
      %v2359 = vld [vmem:[%s16 + $0x18] sm:$0xf]
      %v2360 = vld [vmem:[%s16 + $0x1c] sm:$0xf]
      %v2361 = vld [vmem:[%s16 + $0x20] sm:$0xf]
      %v2362 = vld [vmem:[%s16 + $0x24] sm:$0xf]
      %v2363 = vld [vmem:[%s16 + $0x28] sm:$0xf]
      %v2364 = vld [vmem:[%s16 + $0x2c] sm:$0xf]
      %v2365 = vld [vmem:[%s16 + $0x30] sm:$0xf]
      %v2366 = vld [vmem:[%s16 + $0x34] sm:$0xf]
      %v2367 = vld [vmem:[%s16 + $0x38] sm:$0xf]
      %v2368 = vld [vmem:[%s16 + $0x3c] sm:$0xf]
      %v2369 = vpack.c.bf16 %v2350, %v2350
      %v2370 = vld [vmem:[%s17] sm:$0xf]
      %v2371 = vld [vmem:[%s17 + $0x4] sm:$0xf]
      %v2372 = vld [vmem:[%s17 + $0x8] sm:$0xf]
      %v2373 = vld [vmem:[%s17 + $0xc] sm:$0xf]
      %v2374 = vld [vmem:[%s17 + $0x10] sm:$0xf]
      %v2375 = vld [vmem:[%s17 + $0x14] sm:$0xf]
      %v2376 = vld [vmem:[%s17 + $0x18] sm:$0xf]
      %v2377 = vld [vmem:[%s17 + $0x1c] sm:$0xf]
      %v2386 = vunpack.c.l.b16 %v2370
      %v2387 = vunpack.c.l.b16 %v2371
      %v2388 = vunpack.c.l.b16 %v2372
      %v2389 = vunpack.c.l.b16 %v2373
      %v2390 = vunpack.c.l.b16 %v2374
      %v2391 = vunpack.c.l.b16 %v2375
      %v2392 = vunpack.c.l.b16 %v2376
      %v2393 = vunpack.c.l.b16 %v2377
      %v2394 = vpack.c.b16 %v2387, %v2386
      %v2395 = vpack.c.b16 %v2389, %v2388
      %v2396 = vpack.c.b16 %v2391, %v2390
      %v2397 = vpack.c.b16 %v2393, %v2392
      %2402 = vmatprep.subr.bf16.mxu0 0
      %2403 = vmatpush1.bf16.msra.mxu0 %v2394
      %2404 = vmatprep.subr.bf16.mxu0 0
      %2405 = vmatpush1.bf16.msra.mxu0 %v2395
      %2406 = vmatprep.subr.bf16.mxu0 0
      %2407 = vmatpush1.bf16.msra.mxu0 %v2396
      %2408 = vmatprep.subr.bf16.mxu0 0
      %2409 = vmatpush1.bf16.msra.mxu0 %v2397
      %2410 = vmatprep.subr.bf16.mxu0 0
      %2411 = vmatpush1.bf16.msra.mxu0 0
      %2412 = vmatprep.subr.bf16.mxu0 0
      %2413 = vmatpush1.bf16.msra.mxu0 0
      %2414 = vmatprep.subr.bf16.mxu0 0
      %2415 = vmatpush1.bf16.msra.mxu0 0
      %2416 = vmatprep.subr.bf16.mxu0 0
      %2417 = vmatpush1.bf16.msra.mxu0 0
      %2418 = vmatprep.subr.bf16.mxu0 0
      %2419 = vmatpush1.bf16.msra.mxu0 0
      %2420 = vmatprep.subr.bf16.mxu0 0
      %2421 = vmatpush1.bf16.msra.mxu0 0
      %2422 = vmatprep.subr.bf16.mxu0 0
      %2423 = vmatpush1.bf16.msra.mxu0 0
      %2424 = vmatprep.subr.bf16.mxu0 0
      %2425 = vmatpush1.bf16.msra.mxu0 0
      %2426 = vmatprep.subr.bf16.mxu0 0
      %2427 = vmatpush1.bf16.msra.mxu0 0
      %2428 = vmatprep.subr.bf16.mxu0 0
      %2429 = vmatpush1.bf16.msra.mxu0 0
      %2430 = vmatprep.subr.bf16.mxu0 0
      %2431 = vmatpush1.bf16.msra.mxu0 0
      %2432 = vmatprep.subr.bf16.mxu0 0
      %2433 = vmatpush1.bf16.msra.mxu0 0
      %2434 = vmatprep.mubr.bf16.mxu0 0
      %2435 = vmatmul.mubr.bf16.gmra.mrb[0].mxu0 %v1167
      %v2436 = vpop.f32.mrb[0].mxu0
      %v2437 = vadd.f32 0.0, %v2436
      %v2438 = vpop.f32.mrb[0].mxu0
      %v2439 = vpop.f32.mrb[0].mxu0
      %v2440 = vpop.f32.mrb[0].mxu0
      %2441 = vdwg.mxu0
      %v2458 = vunpack.c.l.b16 %v2353
      %v2459 = vunpack.c.l.b16 %v2354
      %v2460 = vunpack.c.l.b16 %v2355
      %v2461 = vunpack.c.l.b16 %v2356
      %v2462 = vunpack.c.l.b16 %v2357
      %v2463 = vunpack.c.l.b16 %v2358
      %v2464 = vunpack.c.l.b16 %v2359
      %v2465 = vunpack.c.l.b16 %v2360
      %v2466 = vunpack.c.l.b16 %v2361
      %v2467 = vunpack.c.l.b16 %v2362
      %v2468 = vunpack.c.l.b16 %v2363
      %v2469 = vunpack.c.l.b16 %v2364
      %v2470 = vunpack.c.l.b16 %v2365
      %v2471 = vunpack.c.l.b16 %v2366
      %v2472 = vunpack.c.l.b16 %v2367
      %v2473 = vunpack.c.l.b16 %v2368
      %v2474 = vpack.c.b16 %v2459, %v2458
      %v2475 = vpack.c.b16 %v2461, %v2460
      %v2476 = vpack.c.b16 %v2463, %v2462
      %v2477 = vpack.c.b16 %v2465, %v2464
      %v2478 = vpack.c.b16 %v2467, %v2466
      %v2479 = vpack.c.b16 %v2469, %v2468
      %v2480 = vpack.c.b16 %v2471, %v2470
      %v2481 = vpack.c.b16 %v2473, %v2472
      %2490 = vmatprep.subr.bf16.mxu0 0
      %2491 = vmatpush1.bf16.msra.mxu0 %v2474
      %2492 = vmatprep.subr.bf16.mxu0 0
      %2493 = vmatpush1.bf16.msra.mxu0 %v2475
      %2494 = vmatprep.subr.bf16.mxu0 0
      %2495 = vmatpush1.bf16.msra.mxu0 %v2476
      %2496 = vmatprep.subr.bf16.mxu0 0
      %2497 = vmatpush1.bf16.msra.mxu0 %v2477
      %2498 = vmatprep.subr.bf16.mxu0 0
      %2499 = vmatpush1.bf16.msra.mxu0 %v2478
      %2500 = vmatprep.subr.bf16.mxu0 0
      %2501 = vmatpush1.bf16.msra.mxu0 %v2479
      %2502 = vmatprep.subr.bf16.mxu0 0
      %2503 = vmatpush1.bf16.msra.mxu0 %v2480
      %2504 = vmatprep.subr.bf16.mxu0 0
      %2505 = vmatpush1.bf16.msra.mxu0 %v2481
      %2506 = vmatprep.subr.bf16.mxu0 0
      %2507 = vmatpush1.bf16.msra.mxu0 0
      %2508 = vmatprep.subr.bf16.mxu0 0
      %2509 = vmatpush1.bf16.msra.mxu0 0
      %2510 = vmatprep.subr.bf16.mxu0 0
      %2511 = vmatpush1.bf16.msra.mxu0 0
      %2512 = vmatprep.subr.bf16.mxu0 0
      %2513 = vmatpush1.bf16.msra.mxu0 0
      %2514 = vmatprep.subr.bf16.mxu0 0
      %2515 = vmatpush1.bf16.msra.mxu0 0
      %2516 = vmatprep.subr.bf16.mxu0 0
      %2517 = vmatpush1.bf16.msra.mxu0 0
      %2518 = vmatprep.subr.bf16.mxu0 0
      %2519 = vmatpush1.bf16.msra.mxu0 0
      %2520 = vmatprep.subr.bf16.mxu0 0
      %2521 = vmatpush1.bf16.msra.mxu0 0
      %2522 = vmatprep.mubr.bf16.mxu0 0
      %2523 = vmatmul.mubr.bf16.gmra.mrb[0].mxu0 %v2369
      %v2524 = vpop.f32.mrb[0].mxu0
      %v2525 = vadd.f32 %v2437, %v2524
      %v2526 = vpop.f32.mrb[0].mxu0
      %v2527 = vpop.f32.mrb[0].mxu0
      %v2528 = vpop.f32.mrb[0].mxu0
      %2529 = vdwg.mxu0
      %v2530 = vld [vmem:[%s18] sm:$0x1]
      %v2532 = vlaneseq
      %v2533 = vshrl.u32 %v2532, 7
      %v2534 = vsub.s32 0, %v2533
      %v2535 = vrot.slane %v2530, %v2534
      %v2537 = vadd.f32 %v2525, %v2535
      %2538 = vst [vmem:[%s597] sm:$0x3] %v2537
      %p2539 = scmp.lt.s32.totalorder %s30, 2
      %s2540 = scalar_select %p2539, %s30, 2
      %s2541 = smul.addr %s2540, 2
      %s2542 = scalar_lea.vmem %s19, %s2541
      // Predicated region
      $region101: #{tacotron2_forward.8} parent=95 // pred_check
        %p2543 = pneg %p452
      $region102: #{tacotron2_forward.8} parent=95 // pred_check_branch
        %2545 = sbr.rel (%p2543) target = $region104
      $region103: #{tacotron2_forward.8} parent=95 // pred_region
        _
      $region104: #{tacotron2_forward.8} parent=95 // pred_fallthru
        _
    $region96: #{tacotron2_forward.8} parent=5 // pred_fallthru
      _
    %p2546 = scmp.le.s32.totalorder 2, %s25
    // Predicated region
    $region105: #{tacotron2_forward.8} parent=5 // pred_check
      %p2547 = pneg %p2546
    $region106: #{tacotron2_forward.8} parent=5 // pred_check_branch
      %2549 = sbr.rel (%p2547) target = $region108
    $region107: #{tacotron2_forward.8} parent=5 // pred_region
      %s2550 = ssub.s32 %s25, 2
      // Predicated region
      $region109: #{tacotron2_forward.8} parent=107 // pred_check
        %p2551 = pneg %p458
      $region110: #{tacotron2_forward.8} parent=107 // pred_check_branch
        %2553 = sbr.rel (%p2551) target = $region112
      $region111: #{tacotron2_forward.8} parent=107 // pred_region
        %p2554 = scmp.lt.s32.totalorder %s31, 2
        %s2555 = scalar_select %p2554, %s31, 2
        %s2556 = smul.addr %s2555, 2
        %s2557 = scalar_lea.vmem %s19, %s2556
      $region112: #{tacotron2_forward.8} parent=107 // pred_fallthru
        _
    $region108: #{tacotron2_forward.8} parent=5 // pred_fallthru
      _
  $region6: #{tacotron2_forward.8} parent=0 // loop_footer
    %s29 = sadd.s32 1, %s25
  $region7: #{tacotron2_forward.8} parent=0 // loop_footer_branch
    %24 = sbr.rel target = $region3
  $region8: #{tacotron2_forward.8} parent=0 // loop_exit
    _

// kernel: squeeze.3
$region0: #{squeeze.3}
  %s0 = inlined_call_operand.vmem [shape: f32[480], index: 0, kind: input, shape index: {}]
  %s1 = inlined_call_operand.vmem [shape: f32[3,2,80], index: 1, kind: output, shape index: {}]
  $region1: #{squeeze.3} parent=0
    #allocation0 [shape = 'u8[12288]{0}', space=vmem, size = 0x3000, scoped, tag = 'scoped mem for output reshape']
    #allocation1 [shape = 'u8[4096]{0}', space=vmem, size = 0x1000, scoped, tag = 'scoped mem for input reshape']
    %s3 = sshllo.u32 0, 4
    %v4 = vld [vmem:[%s0] sm:%s3]
    %5 = vst [vmem:[#allocation1] sm:%s3] %v4
    %v6 = vld [vmem:[#allocation1] sm:$0x1]
    %vm7 = vcmask 654336
    %8 = vst.msk [vmem:[#allocation0] sm:$0x1] %vm7, %v6
    %s9 = scalar_lea.vmem [#allocation1], 3
    %v10 = vld [vmem:[%s9] sm:$0x1]
    %11 = vrot.lane.b32.xlu0 %v10, 112
    %v12 = vpop.permute.xlu0 %11
    %vm13 = vcmask 654336
    %s14 = scalar_lea.vmem [#allocation0], 17
    %15 = vst.msk [vmem:[%s14] sm:$0x1] %vm13, %v12
    %s16 = scalar_lea.vmem [#allocation1], 1
    %v17 = vld [vmem:[%s16] sm:$0x1]
    %18 = vrot.lane.b32.xlu0 %v17, 96
    %v19 = vpop.permute.xlu0 %18
    %vm20 = vcmask 654336
    %s21 = scalar_lea.vmem [#allocation0], 8
    %22 = vst.msk [vmem:[%s21] sm:$0x1] %vm20, %v19
    %s23 = scalar_lea.vmem [#allocation1], 2
    %v24 = vld [vmem:[%s23] sm:$0x1]
    %s25 = scalar_lea.vmem [#allocation1], 3
    %v26 = vld [vmem:[%s25] sm:$0x1]
    %vm27 = vcmask 523264
    %v28 = vsel %vm27, %v26, %v24
    %29 = vrot.lane.b32.xlu0 %v28, 64
    %v30 = vpop.permute.xlu0 %29
    %vm31 = vcmask 523264
    %s32 = scalar_lea.vmem [#allocation0], 16
    %33 = vst.msk [vmem:[%s32] sm:$0x1] %vm31, %v30
    %vm34 = vcmask 654848
    %s35 = scalar_lea.vmem [#allocation0], 16
    %36 = vst.msk [vmem:[%s35] sm:$0x1] %vm34, %v30
    %v37 = vld [vmem:[#allocation1] sm:$0x1]
    %s38 = scalar_lea.vmem [#allocation1], 1
    %v39 = vld [vmem:[%s38] sm:$0x1]
    %vm40 = vcmask 654336
    %v41 = vsel %vm40, %v39, %v37
    %42 = vrot.lane.b32.xlu0 %v41, 48
    %v43 = vpop.permute.xlu0 %42
    %vm44 = vcmask 392192
    %s45 = scalar_lea.vmem [#allocation0], 1
    %46 = vst.msk [vmem:[%s45] sm:$0x1] %vm44, %v43
    %vm47 = vcmask 654720
    %s48 = scalar_lea.vmem [#allocation0], 1
    %49 = vst.msk [vmem:[%s48] sm:$0x1] %vm47, %v43
    %s50 = scalar_lea.vmem [#allocation1], 1
    %v51 = vld [vmem:[%s50] sm:$0x1]
    %s52 = scalar_lea.vmem [#allocation1], 2
    %v53 = vld [vmem:[%s52] sm:$0x1]
    %vm54 = vcmask 916480
    %v55 = vsel %vm54, %v53, %v51
    %56 = vrot.lane.b32.xlu0 %v55, 16
    %v57 = vpop.permute.xlu0 %56
    %vm58 = vcmask 130048
    %s59 = scalar_lea.vmem [#allocation0], 9
    %60 = vst.msk [vmem:[%s59] sm:$0x1] %vm58, %v57
    %vm61 = vcmask 654464
    %s62 = scalar_lea.vmem [#allocation0], 9
    %63 = vst.msk [vmem:[%s62] sm:$0x1] %vm61, %v57
    %s65 = sshllo.u32 0, 2
    %v67 = vld [vmem:[#allocation0] sm:%s65]
    %s68 = sshllo.u32 0, 2
    %69 = vst [vmem:[%s1] sm:%s68] %v67
    %s70 = scalar_lea.vmem [#allocation0], 8
    %v71 = vld [vmem:[%s70] sm:%s65]
    %s72 = sshllo.u32 0, 2
    %s73 = scalar_lea.vmem %s1, 2
    %74 = vst [vmem:[%s73] sm:%s72] %v71
    %s75 = scalar_lea.vmem [#allocation0], 16
    %v76 = vld [vmem:[%s75] sm:%s65]
    %s77 = sshllo.u32 0, 2
    %s78 = smul.addr 2, 2
    %s79 = scalar_lea.vmem %s1, %s78
    %80 = vst [vmem:[%s79] sm:%s77] %v76

// kernel: tacotron2_forward.10
$region0: #{tacotron2_forward.10}
  #allocation0 [shape = 'u32[]', space=smem, size = 0x4, offset = 0x4, fixed_abs, tag = 'smem constant byte address 0x4 - core index']
  #allocation1 [shape = 'u32[144,128]{1,0:T(1,128)}', space=vmem, size = 0x12000, scoped, tag = 'internal scratch']
  %s0 = inlined_call_operand.vmem [shape: bf16[480,640], index: 0, kind: input, shape index: {}]
  %s1 = inlined_call_operand.vmem [shape: bf16[640,128], index: 1, kind: input, shape index: {}]
  %s2 = inlined_call_operand.vmem [shape: f32[1,128], index: 2, kind: input, shape index: {}]
  %s3 = inlined_call_operand.vmem [shape: f32[1,128], index: 3, kind: input, shape index: {}]
  %s4 = inlined_call_operand.vmem [shape: f32[480,128], index: 4, kind: output, shape index: {}]
  %s5 = sld [smem:[#allocation0]]
  $region49: #{tacotron2_forward.10} parent=0
    _
  %s7 = ssub.s32 1, %s5
  %s8 = scalar_select 0, %s7, %s5
  loop: start=0, step=1, limit=4
  $region2: #{tacotron2_forward.10} parent=0 // loop_pre_header
    _
  $region3: #{tacotron2_forward.10} parent=0 // loop_header
    %s10 = sphi 0, %s14
    %p11 = scmp.ge.s32.totalorder %s10, 4
    %s20 = sphi 0, %s22
    %s23 = sphi 0, %s20
    %s24 = sphi 0, %s23
    %s40 = sphi 0, %s24
    %s44 = sphi 0, %s44
    %s46 = sphi 0, %s44
    %s47 = sphi 0, %s46
    %s61 = sphi 0, %s47
    %s65 = sphi 0, %s65
    %s67 = sphi 0, %s65
    %s68 = sphi 0, %s67
    %s82 = sphi 0, %s68
    %s86 = sphi 0, %s86
    %s88 = sphi 0, %s86
    %s89 = sphi 0, %s88
    %s103 = sphi 0, %s89
    %s109 = sphi 0, %s111
    %s112 = sphi 0, %s109
    %s113 = sphi 0, %s112
    %s129 = sphi 0, %s113
  $region4: #{tacotron2_forward.10} parent=0 // loop_header_branch
    %13 = sbr.rel (%p11) target = $region8
  $region5: #{tacotron2_forward.10} parent=0 // loop_body
    %s15 = ssub.s32 %s10, 1
    %s16 = ssub.s32 %s10, 2
    %s17 = sadd.s32 %s10, 1
    %s18 = ssub.s32 %s10, %s17
    %p19 = scmp.eq.s32.totalorder %s18, 0
    %s21 = sadd.s32 %s20, 1
    %s22 = scalar_select %p19, %s20, %s21
    %p25 = pneg %p19
    %p26 = scmp.eq.s32.totalorder %s10, 1
    %p27 = por %p25, %p26
    %p28 = scmp.ne.s32.totalorder %s20, %s23
    %p29 = scmp.eq.s32.totalorder %s10, 0
    %p30 = por %p28, %p29
    %p31 = scmp.ne.s32.totalorder %s20, %s23
    %p32 = scmp.eq.s32.totalorder %s15, 1
    %p33 = por %p31, %p32
    %p34 = scmp.ne.s32.totalorder %s23, %s24
    %p35 = scmp.eq.s32.totalorder %s15, 0
    %p36 = por %p34, %p35
    %p37 = scmp.ne.s32.totalorder %s23, %s24
    %p38 = scmp.eq.s32.totalorder %s16, 1
    %p39 = por %p37, %p38
    %p41 = scmp.ne.s32.totalorder %s24, %s40
    %p42 = scmp.eq.s32.totalorder %s16, 0
    %p43 = por %p41, %p42
    %s45 = sadd.s32 %s44, 1
    %p48 = scmp.eq.s32.totalorder %s10, 1
    %p49 = scmp.ne.s32.totalorder %s44, %s46
    %p50 = scmp.eq.s32.totalorder %s10, 0
    %p51 = por %p49, %p50
    %p52 = scmp.ne.s32.totalorder %s44, %s46
    %p53 = scmp.eq.s32.totalorder %s15, 1
    %p54 = por %p52, %p53
    %p55 = scmp.ne.s32.totalorder %s46, %s47
    %p56 = scmp.eq.s32.totalorder %s15, 0
    %p57 = por %p55, %p56
    %p58 = scmp.ne.s32.totalorder %s46, %s47
    %p59 = scmp.eq.s32.totalorder %s16, 1
    %p60 = por %p58, %p59
    %p62 = scmp.ne.s32.totalorder %s47, %s61
    %p63 = scmp.eq.s32.totalorder %s16, 0
    %p64 = por %p62, %p63
    %s66 = sadd.s32 %s65, 1
    %p69 = scmp.eq.s32.totalorder %s10, 1
    %p70 = scmp.ne.s32.totalorder %s65, %s67
    %p71 = scmp.eq.s32.totalorder %s10, 0
    %p72 = por %p70, %p71
    %p73 = scmp.ne.s32.totalorder %s65, %s67
    %p74 = scmp.eq.s32.totalorder %s15, 1
    %p75 = por %p73, %p74
    %p76 = scmp.ne.s32.totalorder %s67, %s68
    %p77 = scmp.eq.s32.totalorder %s15, 0
    %p78 = por %p76, %p77
    %p79 = scmp.ne.s32.totalorder %s67, %s68
    %p80 = scmp.eq.s32.totalorder %s16, 1
    %p81 = por %p79, %p80
    %p83 = scmp.ne.s32.totalorder %s68, %s82
    %p84 = scmp.eq.s32.totalorder %s16, 0
    %p85 = por %p83, %p84
    %s87 = sadd.s32 %s86, 1
    %p90 = scmp.eq.s32.totalorder %s10, 1
    %p91 = scmp.ne.s32.totalorder %s86, %s88
    %p92 = scmp.eq.s32.totalorder %s10, 0
    %p93 = por %p91, %p92
    %p94 = scmp.ne.s32.totalorder %s86, %s88
    %p95 = scmp.eq.s32.totalorder %s15, 1
    %p96 = por %p94, %p95
    %p97 = scmp.ne.s32.totalorder %s88, %s89
    %p98 = scmp.eq.s32.totalorder %s15, 0
    %p99 = por %p97, %p98
    %p100 = scmp.ne.s32.totalorder %s88, %s89
    %p101 = scmp.eq.s32.totalorder %s16, 1
    %p102 = por %p100, %p101
    %p104 = scmp.ne.s32.totalorder %s89, %s103
    %p105 = scmp.eq.s32.totalorder %s16, 0
    %p106 = por %p104, %p105
    %s107 = ssub.s32 %s10, %s17
    %p108 = scmp.eq.s32.totalorder %s107, 0
    %s110 = sadd.s32 %s109, 1
    %s111 = scalar_select %p108, %s109, %s110
    %p114 = pneg %p108
    %p115 = scmp.eq.s32.totalorder %s10, 1
    %p116 = por %p114, %p115
    %p117 = scmp.ne.s32.totalorder %s109, %s112
    %p118 = scmp.eq.s32.totalorder %s10, 0
    %p119 = por %p117, %p118
    %p120 = scmp.ne.s32.totalorder %s109, %s112
    %p121 = scmp.eq.s32.totalorder %s15, 1
    %p122 = por %p120, %p121
    %p123 = scmp.ne.s32.totalorder %s112, %s113
    %p124 = scmp.eq.s32.totalorder %s15, 0
    %p125 = por %p123, %p124
    %p126 = scmp.ne.s32.totalorder %s112, %s113
    %p127 = scmp.eq.s32.totalorder %s16, 1
    %p128 = por %p126, %p127
    %p130 = scmp.ne.s32.totalorder %s113, %s129
    %p131 = scmp.eq.s32.totalorder %s16, 0
    %p132 = por %p130, %p131
    %p133 = scmp.le.s32.totalorder 1, %s10
    %p134 = scmp.lt.s32.totalorder %s10, 3
    %p135 = pnand %p133, %p134
    %p136 = pneg %p135
    // Predicated region
    $region9: #{tacotron2_forward.10} parent=5 // pred_check
      _
    $region10: #{tacotron2_forward.10} parent=5 // pred_check_branch
      %138 = sbr.rel (%p135) target = $region12
    $region11: #{tacotron2_forward.10} parent=5 // pred_region
      %s139 = ssub.s32 %s10, 1
      // Predicated region
      $region13: #{tacotron2_forward.10} parent=11 // pred_check
        %p140 = pneg %p57
      $region14: #{tacotron2_forward.10} parent=11 // pred_check_branch
        %142 = sbr.rel (%p140) target = $region16
      $region15: #{tacotron2_forward.10} parent=11 // pred_region
        _
      $region16: #{tacotron2_forward.10} parent=11 // pred_fallthru
        _
      // Predicated region
      $region17: #{tacotron2_forward.10} parent=11 // pred_check
        %p143 = pneg %p78
      $region18: #{tacotron2_forward.10} parent=11 // pred_check_branch
        %145 = sbr.rel (%p143) target = $region20
      $region19: #{tacotron2_forward.10} parent=11 // pred_region
        _
      $region20: #{tacotron2_forward.10} parent=11 // pred_fallthru
        _
      // Predicated region
      $region21: #{tacotron2_forward.10} parent=11 // pred_check
        %p146 = pneg %p99
      $region22: #{tacotron2_forward.10} parent=11 // pred_check_branch
        %148 = sbr.rel (%p146) target = $region24
      $region23: #{tacotron2_forward.10} parent=11 // pred_region
        _
      $region24: #{tacotron2_forward.10} parent=11 // pred_fallthru
        _
    $region12: #{tacotron2_forward.10} parent=5 // pred_fallthru
      _
    %p149 = scmp.lt.s32.totalorder %s10, 2
    // Predicated region
    $region25: #{tacotron2_forward.10} parent=5 // pred_check
      %p150 = pneg %p149
    $region26: #{tacotron2_forward.10} parent=5 // pred_check_branch
      %152 = sbr.rel (%p150) target = $region28
    $region27: #{tacotron2_forward.10} parent=5 // pred_region
      // Predicated region
      $region29: #{tacotron2_forward.10} parent=27 // pred_check
        %p153 = pneg %p30
      $region30: #{tacotron2_forward.10} parent=27 // pred_check_branch
        %155 = sbr.rel (%p153) target = $region32
      $region31: #{tacotron2_forward.10} parent=27 // pred_region
        %s156 = smul.u32 30, %s10
        %p157 = scmp.lt.s32.totalorder %s156, 59
        %s158 = scalar_select %p157, %s156, 59
        %s159 = smul.addr %s158, 5
        %s160 = smul.addr %s159, 4
        %s161 = scalar_lea.vmem %s0, %s160
        %s162 = smul.u32 30, %s10
      $region32: #{tacotron2_forward.10} parent=27 // pred_fallthru
        _
    $region28: #{tacotron2_forward.10} parent=5 // pred_fallthru
      _
    %p163 = scmp.le.s32.totalorder 1, %s10
    %p164 = scmp.lt.s32.totalorder %s10, 3
    %p165 = pnand %p163, %p164
    %p166 = pneg %p165
    // Predicated region
    $region33: #{tacotron2_forward.10} parent=5 // pred_check
      _
    $region34: #{tacotron2_forward.10} parent=5 // pred_check_branch
      %168 = sbr.rel (%p165) target = $region36
    $region35: #{tacotron2_forward.10} parent=5 // pred_region
      %s169 = ssub.s32 %s10, 1
      %s170 = smul.u32 30, %s15
      %p171 = scmp.lt.s32.totalorder %s170, 59
      %s172 = scalar_select %p171, %s170, 59
      %s173 = smul.addr %s172, 5
      %s174 = smul.addr %s173, 4
      %s175 = scalar_lea.vmem %s0, %s174
      %p176 = pneg %p36
      %p177 = pneg %p33
      %p178 = pneg %p57
      %p179 = pneg %p54
      %p180 = pneg %p78
      %p181 = pneg %p75
      %p182 = pneg %p99
      %p183 = pneg %p96
      %p184 = pneg %p125
      %p185 = pneg %p122
      %s186 = smul.u32 30, %s15
      %p187 = scmp.lt.s32.totalorder %s186, 59
      %s188 = scalar_select %p187, %s186, 59
      %s189 = smul.addr %s188, 8
      %s190 = scalar_lea.vmem %s4, %s189
      %s191 = smul.u32 30, %s15
      %p192 = scmp.lt.s32.totalorder %s191, 59
      %s193 = scalar_select %p192, %s191, 59
      %s194 = smul.addr %s193, 5
      %s195 = smul.addr %s194, 4
      %s196 = scalar_lea.vmem %s0, %s195
      %s197 = smul.u32 30, %s15
      %s198 = smul.u32 30, %s15
      %p199 = scmp.lt.s32.totalorder %s198, 59
      %s200 = scalar_select %p199, %s198, 59
      %s201 = smul.addr %s200, 8
      %s202 = scalar_lea.vmem %s4, %s201
      %s203 = smul.u32 30, %s15
      %v205 = vld [vmem:[%s196] sm:$0xff]
      %v206 = vld [vmem:[%s196 + $0x8] sm:$0xff]
      %v207 = vld [vmem:[%s196 + $0x10] sm:$0xf]
      %v208 = vld [vmem:[%s196 + $0x14] sm:$0xff]
      %v209 = vld [vmem:[%s196 + $0x1c] sm:$0xff]
      %v210 = vld [vmem:[%s196 + $0x24] sm:$0xf]
      %v211 = vld [vmem:[%s196 + $0x28] sm:$0xff]
      %v212 = vld [vmem:[%s196 + $0x30] sm:$0xff]
      %v213 = vld [vmem:[%s196 + $0x38] sm:$0xf]
      %v214 = vld [vmem:[%s196 + $0x3c] sm:$0xff]
      %v215 = vld [vmem:[%s196 + $0x44] sm:$0xff]
      %v216 = vld [vmem:[%s196 + $0x4c] sm:$0xf]
      %v217 = vld [vmem:[%s196 + $0x50] sm:$0xff]
      %v218 = vld [vmem:[%s196 + $0x58] sm:$0xff]
      %v219 = vld [vmem:[%s196 + $0x60] sm:$0xf]
      %v220 = vld [vmem:[%s196 + $0x64] sm:$0xff]
      %v221 = vld [vmem:[%s196 + $0x6c] sm:$0xff]
      %v222 = vld [vmem:[%s196 + $0x74] sm:$0xf]
      %v223 = vld [vmem:[%s196 + $0x78] sm:$0xff]
      %v224 = vld [vmem:[%s196 + $0x80] sm:$0xff]
      %v225 = vld [vmem:[%s196 + $0x88] sm:$0xf]
      %v226 = vld [vmem:[%s196 + $0x8c] sm:$0xff]
      %v227 = vld [vmem:[%s196 + $0x94] sm:$0xff]
      %v228 = vld [vmem:[%s196 + $0x9c] sm:$0xf]
      %v229 = vld [vmem:[%s196 + $0xa0] sm:$0xff]
      %v230 = vld [vmem:[%s196 + $0xa8] sm:$0xff]
      %v231 = vld [vmem:[%s196 + $0xb0] sm:$0xf]
      %v232 = vld [vmem:[%s196 + $0xb4] sm:$0xff]
      %v233 = vld [vmem:[%s196 + $0xbc] sm:$0xff]
      %v234 = vld [vmem:[%s196 + $0xc4] sm:$0xf]
      %v235 = vld [vmem:[%s196 + $0xc8] sm:$0xff]
      %v236 = vld [vmem:[%s196 + $0xd0] sm:$0xff]
      %v237 = vld [vmem:[%s196 + $0xd8] sm:$0xf]
      %v238 = vld [vmem:[%s196 + $0xdc] sm:$0xff]
      %v239 = vld [vmem:[%s196 + $0xe4] sm:$0xff]
      %v240 = vld [vmem:[%s196 + $0xec] sm:$0xf]
      %v241 = vld [vmem:[%s196 + $0xf0] sm:$0xff]
      %v242 = vld [vmem:[%s196 + $0xf8] sm:$0xff]
      %v243 = vld [vmem:[%s196 + $0x100] sm:$0xf]
      %v244 = vld [vmem:[%s196 + $0x104] sm:$0xff]
      %v245 = vld [vmem:[%s196 + $0x10c] sm:$0xff]
      %v246 = vld [vmem:[%s196 + $0x114] sm:$0xf]
      %v247 = vld [vmem:[%s196 + $0x118] sm:$0xff]
      %v248 = vld [vmem:[%s196 + $0x120] sm:$0xff]
      %v249 = vld [vmem:[%s196 + $0x128] sm:$0xf]
      %v250 = vld [vmem:[%s196 + $0x12c] sm:$0xff]
      %v251 = vld [vmem:[%s196 + $0x134] sm:$0xff]
      %v252 = vld [vmem:[%s196 + $0x13c] sm:$0xf]
      %v253 = vld [vmem:[%s196 + $0x140] sm:$0xff]
      %v254 = vld [vmem:[%s196 + $0x148] sm:$0xff]
      %v255 = vld [vmem:[%s196 + $0x150] sm:$0xf]
      %v256 = vld [vmem:[%s196 + $0x154] sm:$0xff]
      %v257 = vld [vmem:[%s196 + $0x15c] sm:$0xff]
      %v258 = vld [vmem:[%s196 + $0x164] sm:$0xf]
      %v259 = vld [vmem:[%s196 + $0x168] sm:$0xff]
      %v260 = vld [vmem:[%s196 + $0x170] sm:$0xff]
      %v261 = vld [vmem:[%s196 + $0x178] sm:$0xf]
      %v262 = vld [vmem:[%s196 + $0x17c] sm:$0xff]
      %v263 = vld [vmem:[%s196 + $0x184] sm:$0xff]
      %v264 = vld [vmem:[%s196 + $0x18c] sm:$0xf]
      %v265 = vld [vmem:[%s196 + $0x190] sm:$0xff]
      %v266 = vld [vmem:[%s196 + $0x198] sm:$0xff]
      %v267 = vld [vmem:[%s196 + $0x1a0] sm:$0xf]
      %v268 = vld [vmem:[%s196 + $0x1a4] sm:$0xff]
      %v269 = vld [vmem:[%s196 + $0x1ac] sm:$0xff]
      %v270 = vld [vmem:[%s196 + $0x1b4] sm:$0xf]
      %v271 = vld [vmem:[%s196 + $0x1b8] sm:$0xff]
      %v272 = vld [vmem:[%s196 + $0x1c0] sm:$0xff]
      %v273 = vld [vmem:[%s196 + $0x1c8] sm:$0xf]
      %v274 = vld [vmem:[%s196 + $0x1cc] sm:$0xff]
      %v275 = vld [vmem:[%s196 + $0x1d4] sm:$0xff]
      %v276 = vld [vmem:[%s196 + $0x1dc] sm:$0xf]
      %v277 = vld [vmem:[%s196 + $0x1e0] sm:$0xff]
      %v278 = vld [vmem:[%s196 + $0x1e8] sm:$0xff]
      %v279 = vld [vmem:[%s196 + $0x1f0] sm:$0xf]
      %v280 = vld [vmem:[%s196 + $0x1f4] sm:$0xff]
      %v281 = vld [vmem:[%s196 + $0x1fc] sm:$0xff]
      %v282 = vld [vmem:[%s196 + $0x204] sm:$0xf]
      %v283 = vld [vmem:[%s196 + $0x208] sm:$0xff]
      %v284 = vld [vmem:[%s196 + $0x210] sm:$0xff]
      %v285 = vld [vmem:[%s196 + $0x218] sm:$0xf]
      %v286 = vld [vmem:[%s196 + $0x21c] sm:$0xff]
      %v287 = vld [vmem:[%s196 + $0x224] sm:$0xff]
      %v288 = vld [vmem:[%s196 + $0x22c] sm:$0xf]
      %v289 = vld [vmem:[%s196 + $0x230] sm:$0xff]
      %v290 = vld [vmem:[%s196 + $0x238] sm:$0xff]
      %v291 = vld [vmem:[%s196 + $0x240] sm:$0xf]
      %v292 = vld [vmem:[%s196 + $0x244] sm:$0xff]
      %v293 = vld [vmem:[%s196 + $0x24c] sm:$0xff]
      %v294 = vld [vmem:[%s196 + $0x254] sm:$0xf]
      %v295 = vld [vmem:[%s1] sm:$0xf]
      %v296 = vld [vmem:[%s1 + $0x4] sm:$0xf]
      %v297 = vld [vmem:[%s1 + $0x8] sm:$0xf]
      %v298 = vld [vmem:[%s1 + $0xc] sm:$0xf]
      %v299 = vld [vmem:[%s1 + $0x10] sm:$0xf]
      %v300 = vld [vmem:[%s1 + $0x14] sm:$0xf]
      %v301 = vld [vmem:[%s1 + $0x18] sm:$0xf]
      %v302 = vld [vmem:[%s1 + $0x1c] sm:$0xf]
      %v303 = vld [vmem:[%s1 + $0x20] sm:$0xf]
      %v304 = vld [vmem:[%s1 + $0x24] sm:$0xf]
      %v305 = vld [vmem:[%s1 + $0x28] sm:$0xf]
      %v306 = vld [vmem:[%s1 + $0x2c] sm:$0xf]
      %v307 = vld [vmem:[%s1 + $0x30] sm:$0xf]
      %v308 = vld [vmem:[%s1 + $0x34] sm:$0xf]
      %v309 = vld [vmem:[%s1 + $0x38] sm:$0xf]
      %v310 = vld [vmem:[%s1 + $0x3c] sm:$0xf]
      %v311 = vld [vmem:[%s1 + $0x40] sm:$0xf]
      %v312 = vld [vmem:[%s1 + $0x44] sm:$0xf]
      %v313 = vld [vmem:[%s1 + $0x48] sm:$0xf]
      %v314 = vld [vmem:[%s1 + $0x4c] sm:$0xf]
      %v315 = vld [vmem:[%s1 + $0x50] sm:$0xf]
      %v316 = vld [vmem:[%s1 + $0x54] sm:$0xf]
      %v317 = vld [vmem:[%s1 + $0x58] sm:$0xf]
      %v318 = vld [vmem:[%s1 + $0x5c] sm:$0xf]
      %v319 = vld [vmem:[%s1 + $0x60] sm:$0xf]
      %v320 = vld [vmem:[%s1 + $0x64] sm:$0xf]
      %v321 = vld [vmem:[%s1 + $0x68] sm:$0xf]
      %v322 = vld [vmem:[%s1 + $0x6c] sm:$0xf]
      %v323 = vld [vmem:[%s1 + $0x70] sm:$0xf]
      %v324 = vld [vmem:[%s1 + $0x74] sm:$0xf]
      %v325 = vld [vmem:[%s1 + $0x78] sm:$0xf]
      %v326 = vld [vmem:[%s1 + $0x7c] sm:$0xf]
      %v327 = vld [vmem:[%s1 + $0x80] sm:$0xf]
      %v328 = vld [vmem:[%s1 + $0x84] sm:$0xf]
      %v329 = vld [vmem:[%s1 + $0x88] sm:$0xf]
      %v330 = vld [vmem:[%s1 + $0x8c] sm:$0xf]
      %v331 = vld [vmem:[%s1 + $0x90] sm:$0xf]
      %v332 = vld [vmem:[%s1 + $0x94] sm:$0xf]
      %v333 = vld [vmem:[%s1 + $0x98] sm:$0xf]
      %v334 = vld [vmem:[%s1 + $0x9c] sm:$0xf]
      %v335 = vld [vmem:[%s1 + $0xa0] sm:$0xf]
      %v336 = vld [vmem:[%s1 + $0xa4] sm:$0xf]
      %v337 = vld [vmem:[%s1 + $0xa8] sm:$0xf]
      %v338 = vld [vmem:[%s1 + $0xac] sm:$0xf]
      %v339 = vld [vmem:[%s1 + $0xb0] sm:$0xf]
      %v340 = vld [vmem:[%s1 + $0xb4] sm:$0xf]
      %v341 = vld [vmem:[%s1 + $0xb8] sm:$0xf]
      %v342 = vld [vmem:[%s1 + $0xbc] sm:$0xf]
      %v343 = vld [vmem:[%s1 + $0xc0] sm:$0xf]
      %v344 = vld [vmem:[%s1 + $0xc4] sm:$0xf]
      %v345 = vld [vmem:[%s1 + $0xc8] sm:$0xf]
      %v346 = vld [vmem:[%s1 + $0xcc] sm:$0xf]
      %v347 = vld [vmem:[%s1 + $0xd0] sm:$0xf]
      %v348 = vld [vmem:[%s1 + $0xd4] sm:$0xf]
      %v349 = vld [vmem:[%s1 + $0xd8] sm:$0xf]
      %v350 = vld [vmem:[%s1 + $0xdc] sm:$0xf]
      %v351 = vld [vmem:[%s1 + $0xe0] sm:$0xf]
      %v352 = vld [vmem:[%s1 + $0xe4] sm:$0xf]
      %v353 = vld [vmem:[%s1 + $0xe8] sm:$0xf]
      %v354 = vld [vmem:[%s1 + $0xec] sm:$0xf]
      %v355 = vld [vmem:[%s1 + $0xf0] sm:$0xf]
      %v356 = vld [vmem:[%s1 + $0xf4] sm:$0xf]
      %v357 = vld [vmem:[%s1 + $0xf8] sm:$0xf]
      %v358 = vld [vmem:[%s1 + $0xfc] sm:$0xf]
      %v359 = vld [vmem:[%s1 + $0x100] sm:$0xf]
      %v360 = vld [vmem:[%s1 + $0x104] sm:$0xf]
      %v361 = vld [vmem:[%s1 + $0x108] sm:$0xf]
      %v362 = vld [vmem:[%s1 + $0x10c] sm:$0xf]
      %v363 = vld [vmem:[%s1 + $0x110] sm:$0xf]
      %v364 = vld [vmem:[%s1 + $0x114] sm:$0xf]
      %v365 = vld [vmem:[%s1 + $0x118] sm:$0xf]
      %v366 = vld [vmem:[%s1 + $0x11c] sm:$0xf]
      %v367 = vld [vmem:[%s1 + $0x120] sm:$0xf]
      %v368 = vld [vmem:[%s1 + $0x124] sm:$0xf]
      %v369 = vld [vmem:[%s1 + $0x128] sm:$0xf]
      %v370 = vld [vmem:[%s1 + $0x12c] sm:$0xf]
      %v371 = vld [vmem:[%s1 + $0x130] sm:$0xf]
      %v372 = vld [vmem:[%s1 + $0x134] sm:$0xf]
      %v373 = vld [vmem:[%s1 + $0x138] sm:$0xf]
      %v374 = vld [vmem:[%s1 + $0x13c] sm:$0xf]
      %v465 = vunpack.c.l.b16 %v205
      %v466 = vunpack.c.h.b16 %v205
      %v467 = vunpack.c.l.b16 %v206
      %v468 = vunpack.c.h.b16 %v206
      %v469 = vunpack.c.l.b16 %v207
      %v470 = vunpack.c.l.b16 %v208
      %v471 = vunpack.c.h.b16 %v208
      %v472 = vunpack.c.l.b16 %v209
      %v473 = vunpack.c.h.b16 %v209
      %v474 = vunpack.c.l.b16 %v210
      %v475 = vunpack.c.l.b16 %v211
      %v476 = vunpack.c.h.b16 %v211
      %v477 = vunpack.c.l.b16 %v212
      %v478 = vunpack.c.h.b16 %v212
      %v479 = vunpack.c.l.b16 %v213
      %v480 = vunpack.c.l.b16 %v214
      %v481 = vunpack.c.h.b16 %v214
      %v482 = vunpack.c.l.b16 %v215
      %v483 = vunpack.c.h.b16 %v215
      %v484 = vunpack.c.l.b16 %v216
      %v485 = vunpack.c.l.b16 %v217
      %v486 = vunpack.c.h.b16 %v217
      %v487 = vunpack.c.l.b16 %v218
      %v488 = vunpack.c.h.b16 %v218
      %v489 = vunpack.c.l.b16 %v219
      %v490 = vunpack.c.l.b16 %v220
      %v491 = vunpack.c.h.b16 %v220
      %v492 = vunpack.c.l.b16 %v221
      %v493 = vunpack.c.h.b16 %v221
      %v494 = vunpack.c.l.b16 %v222
      %v495 = vunpack.c.l.b16 %v223
      %v496 = vunpack.c.h.b16 %v223
      %v497 = vunpack.c.l.b16 %v224
      %v498 = vunpack.c.h.b16 %v224
      %v499 = vunpack.c.l.b16 %v225
      %v500 = vunpack.c.l.b16 %v226
      %v501 = vunpack.c.h.b16 %v226
      %v502 = vunpack.c.l.b16 %v227
      %v503 = vunpack.c.h.b16 %v227
      %v504 = vunpack.c.l.b16 %v228
      %v505 = vunpack.c.l.b16 %v229
      %v506 = vunpack.c.h.b16 %v229
      %v507 = vunpack.c.l.b16 %v230
      %v508 = vunpack.c.h.b16 %v230
      %v509 = vunpack.c.l.b16 %v231
      %v510 = vunpack.c.l.b16 %v232
      %v511 = vunpack.c.h.b16 %v232
      %v512 = vunpack.c.l.b16 %v233
      %v513 = vunpack.c.h.b16 %v233
      %v514 = vunpack.c.l.b16 %v234
      %v515 = vunpack.c.l.b16 %v235
      %v516 = vunpack.c.h.b16 %v235
      %v517 = vunpack.c.l.b16 %v236
      %v518 = vunpack.c.h.b16 %v236
      %v519 = vunpack.c.l.b16 %v237
      %v520 = vunpack.c.l.b16 %v238
      %v521 = vunpack.c.h.b16 %v238
      %v522 = vunpack.c.l.b16 %v239
      %v523 = vunpack.c.h.b16 %v239
      %v524 = vunpack.c.l.b16 %v240
      %v525 = vunpack.c.l.b16 %v241
      %v526 = vunpack.c.h.b16 %v241
      %v527 = vunpack.c.l.b16 %v242
      %v528 = vunpack.c.h.b16 %v242
      %v529 = vunpack.c.l.b16 %v243
      %v530 = vunpack.c.l.b16 %v244
      %v531 = vunpack.c.h.b16 %v244
      %v532 = vunpack.c.l.b16 %v245
      %v533 = vunpack.c.h.b16 %v245
      %v534 = vunpack.c.l.b16 %v246
      %v535 = vunpack.c.l.b16 %v247
      %v536 = vunpack.c.h.b16 %v247
      %v537 = vunpack.c.l.b16 %v248
      %v538 = vunpack.c.h.b16 %v248
      %v539 = vunpack.c.l.b16 %v249
      %v540 = vunpack.c.l.b16 %v250
      %v541 = vunpack.c.h.b16 %v250
      %v542 = vunpack.c.l.b16 %v251
      %v543 = vunpack.c.h.b16 %v251
      %v544 = vunpack.c.l.b16 %v252
      %v545 = vunpack.c.l.b16 %v253
      %v546 = vunpack.c.h.b16 %v253
      %v547 = vunpack.c.l.b16 %v254
      %v548 = vunpack.c.h.b16 %v254
      %v549 = vunpack.c.l.b16 %v255
      %v550 = vunpack.c.l.b16 %v256
      %v551 = vunpack.c.h.b16 %v256
      %v552 = vunpack.c.l.b16 %v257
      %v553 = vunpack.c.h.b16 %v257
      %v554 = vunpack.c.l.b16 %v258
      %v555 = vunpack.c.l.b16 %v259
      %v556 = vunpack.c.h.b16 %v259
      %v557 = vunpack.c.l.b16 %v260
      %v558 = vunpack.c.h.b16 %v260
      %v559 = vunpack.c.l.b16 %v261
      %v560 = vunpack.c.l.b16 %v262
      %v561 = vunpack.c.h.b16 %v262
      %v562 = vunpack.c.l.b16 %v263
      %v563 = vunpack.c.h.b16 %v263
      %v564 = vunpack.c.l.b16 %v264
      %v565 = vunpack.c.l.b16 %v265
      %v566 = vunpack.c.h.b16 %v265
      %v567 = vunpack.c.l.b16 %v266
      %v568 = vunpack.c.h.b16 %v266
      %v569 = vunpack.c.l.b16 %v267
      %v570 = vunpack.c.l.b16 %v268
      %v571 = vunpack.c.h.b16 %v268
      %v572 = vunpack.c.l.b16 %v269
      %v573 = vunpack.c.h.b16 %v269
      %v574 = vunpack.c.l.b16 %v270
      %v575 = vunpack.c.l.b16 %v271
      %v576 = vunpack.c.h.b16 %v271
      %v577 = vunpack.c.l.b16 %v272
      %v578 = vunpack.c.h.b16 %v272
      %v579 = vunpack.c.l.b16 %v273
      %v580 = vunpack.c.l.b16 %v274
      %v581 = vunpack.c.h.b16 %v274
      %v582 = vunpack.c.l.b16 %v275
      %v583 = vunpack.c.h.b16 %v275
      %v584 = vunpack.c.l.b16 %v276
      %v585 = vunpack.c.l.b16 %v277
      %v586 = vunpack.c.h.b16 %v277
      %v587 = vunpack.c.l.b16 %v278
      %v588 = vunpack.c.h.b16 %v278
      %v589 = vunpack.c.l.b16 %v279
      %v590 = vunpack.c.l.b16 %v280
      %v591 = vunpack.c.h.b16 %v280
      %v592 = vunpack.c.l.b16 %v281
      %v593 = vunpack.c.h.b16 %v281
      %v594 = vunpack.c.l.b16 %v282
      %v595 = vunpack.c.l.b16 %v283
      %v596 = vunpack.c.h.b16 %v283
      %v597 = vunpack.c.l.b16 %v284
      %v598 = vunpack.c.h.b16 %v284
      %v599 = vunpack.c.l.b16 %v285
      %v600 = vunpack.c.l.b16 %v286
      %v601 = vunpack.c.h.b16 %v286
      %v602 = vunpack.c.l.b16 %v287
      %v603 = vunpack.c.h.b16 %v287
      %v604 = vunpack.c.l.b16 %v288
      %v605 = vunpack.c.l.b16 %v289
      %v606 = vunpack.c.h.b16 %v289
      %v607 = vunpack.c.l.b16 %v290
      %v608 = vunpack.c.h.b16 %v290
      %v609 = vunpack.c.l.b16 %v291
      %v610 = vunpack.c.l.b16 %v292
      %v611 = vunpack.c.h.b16 %v292
      %v612 = vunpack.c.l.b16 %v293
      %v613 = vunpack.c.h.b16 %v293
      %v614 = vunpack.c.l.b16 %v294
      %v615 = vpack.c.b16 %v470, %v465
      %v616 = vpack.c.b16 %v471, %v466
      %v617 = vpack.c.b16 %v472, %v467
      %v618 = vpack.c.b16 %v473, %v468
      %v619 = vpack.c.b16 %v474, %v469
      %v620 = vpack.c.b16 %v480, %v475
      %v621 = vpack.c.b16 %v481, %v476
      %v622 = vpack.c.b16 %v482, %v477
      %v623 = vpack.c.b16 %v483, %v478
      %v624 = vpack.c.b16 %v484, %v479
      %v625 = vpack.c.b16 %v490, %v485
      %v626 = vpack.c.b16 %v491, %v486
      %v627 = vpack.c.b16 %v492, %v487
      %v628 = vpack.c.b16 %v493, %v488
      %v629 = vpack.c.b16 %v494, %v489
      %v630 = vpack.c.b16 %v500, %v495
      %v631 = vpack.c.b16 %v501, %v496
      %v632 = vpack.c.b16 %v502, %v497
      %v633 = vpack.c.b16 %v503, %v498
      %v634 = vpack.c.b16 %v504, %v499
      %v635 = vpack.c.b16 %v510, %v505
      %v636 = vpack.c.b16 %v511, %v506
      %v637 = vpack.c.b16 %v512, %v507
      %v638 = vpack.c.b16 %v513, %v508
      %v639 = vpack.c.b16 %v514, %v509
      %v640 = vpack.c.b16 %v520, %v515
      %v641 = vpack.c.b16 %v521, %v516
      %v642 = vpack.c.b16 %v522, %v517
      %v643 = vpack.c.b16 %v523, %v518
      %v644 = vpack.c.b16 %v524, %v519
      %v645 = vpack.c.b16 %v530, %v525
      %v646 = vpack.c.b16 %v531, %v526
      %v647 = vpack.c.b16 %v532, %v527
      %v648 = vpack.c.b16 %v533, %v528
      %v649 = vpack.c.b16 %v534, %v529
      %v650 = vpack.c.b16 %v540, %v535
      %v651 = vpack.c.b16 %v541, %v536
      %v652 = vpack.c.b16 %v542, %v537
      %v653 = vpack.c.b16 %v543, %v538
      %v654 = vpack.c.b16 %v544, %v539
      %v655 = vpack.c.b16 %v550, %v545
      %v656 = vpack.c.b16 %v551, %v546
      %v657 = vpack.c.b16 %v552, %v547
      %v658 = vpack.c.b16 %v553, %v548
      %v659 = vpack.c.b16 %v554, %v549
      %v660 = vpack.c.b16 %v560, %v555
      %v661 = vpack.c.b16 %v561, %v556
      %v662 = vpack.c.b16 %v562, %v557
      %v663 = vpack.c.b16 %v563, %v558
      %v664 = vpack.c.b16 %v564, %v559
      %v665 = vpack.c.b16 %v570, %v565
      %v666 = vpack.c.b16 %v571, %v566
      %v667 = vpack.c.b16 %v572, %v567
      %v668 = vpack.c.b16 %v573, %v568
      %v669 = vpack.c.b16 %v574, %v569
      %v670 = vpack.c.b16 %v580, %v575
      %v671 = vpack.c.b16 %v581, %v576
      %v672 = vpack.c.b16 %v582, %v577
      %v673 = vpack.c.b16 %v583, %v578
      %v674 = vpack.c.b16 %v584, %v579
      %v675 = vpack.c.b16 %v590, %v585
      %v676 = vpack.c.b16 %v591, %v586
      %v677 = vpack.c.b16 %v592, %v587
      %v678 = vpack.c.b16 %v593, %v588
      %v679 = vpack.c.b16 %v594, %v589
      %v680 = vpack.c.b16 %v600, %v595
      %v681 = vpack.c.b16 %v601, %v596
      %v682 = vpack.c.b16 %v602, %v597
      %v683 = vpack.c.b16 %v603, %v598
      %v684 = vpack.c.b16 %v604, %v599
      %v685 = vpack.c.b16 %v610, %v605
      %v686 = vpack.c.b16 %v611, %v606
      %v687 = vpack.c.b16 %v612, %v607
      %v688 = vpack.c.b16 %v613, %v608
      %v689 = vpack.c.b16 %v614, %v609
      %v845 = vunpack.c.l.b16 %v295
      %v846 = vunpack.c.l.b16 %v296
      %v847 = vunpack.c.l.b16 %v297
      %v848 = vunpack.c.l.b16 %v298
      %v849 = vunpack.c.l.b16 %v299
      %v850 = vunpack.c.l.b16 %v300
      %v851 = vunpack.c.l.b16 %v301
      %v852 = vunpack.c.l.b16 %v302
      %v853 = vunpack.c.l.b16 %v303
      %v854 = vunpack.c.l.b16 %v304
      %v855 = vunpack.c.l.b16 %v305
      %v856 = vunpack.c.l.b16 %v306
      %v857 = vunpack.c.l.b16 %v307
      %v858 = vunpack.c.l.b16 %v308
      %v859 = vunpack.c.l.b16 %v309
      %v860 = vunpack.c.l.b16 %v310
      %v861 = vunpack.c.l.b16 %v311
      %v862 = vunpack.c.l.b16 %v312
      %v863 = vunpack.c.l.b16 %v313
      %v864 = vunpack.c.l.b16 %v314
      %v865 = vunpack.c.l.b16 %v315
      %v866 = vunpack.c.l.b16 %v316
      %v867 = vunpack.c.l.b16 %v317
      %v868 = vunpack.c.l.b16 %v318
      %v869 = vunpack.c.l.b16 %v319
      %v870 = vunpack.c.l.b16 %v320
      %v871 = vunpack.c.l.b16 %v321
      %v872 = vunpack.c.l.b16 %v322
      %v873 = vunpack.c.l.b16 %v323
      %v874 = vunpack.c.l.b16 %v324
      %v875 = vunpack.c.l.b16 %v325
      %v876 = vunpack.c.l.b16 %v326
      %v877 = vunpack.c.l.b16 %v327
      %v878 = vunpack.c.l.b16 %v328
      %v879 = vunpack.c.l.b16 %v329
      %v880 = vunpack.c.l.b16 %v330
      %v881 = vunpack.c.l.b16 %v331
      %v882 = vunpack.c.l.b16 %v332
      %v883 = vunpack.c.l.b16 %v333
      %v884 = vunpack.c.l.b16 %v334
      %v885 = vunpack.c.l.b16 %v335
      %v886 = vunpack.c.l.b16 %v336
      %v887 = vunpack.c.l.b16 %v337
      %v888 = vunpack.c.l.b16 %v338
      %v889 = vunpack.c.l.b16 %v339
      %v890 = vunpack.c.l.b16 %v340
      %v891 = vunpack.c.l.b16 %v341
      %v892 = vunpack.c.l.b16 %v342
      %v893 = vunpack.c.l.b16 %v343
      %v894 = vunpack.c.l.b16 %v344
      %v895 = vunpack.c.l.b16 %v345
      %v896 = vunpack.c.l.b16 %v346
      %v897 = vunpack.c.l.b16 %v347
      %v898 = vunpack.c.l.b16 %v348
      %v899 = vunpack.c.l.b16 %v349
      %v900 = vunpack.c.l.b16 %v350
      %v901 = vunpack.c.l.b16 %v351
      %v902 = vunpack.c.l.b16 %v352
      %v903 = vunpack.c.l.b16 %v353
      %v904 = vunpack.c.l.b16 %v354
      %v905 = vunpack.c.l.b16 %v355
      %v906 = vunpack.c.l.b16 %v356
      %v907 = vunpack.c.l.b16 %v357
      %v908 = vunpack.c.l.b16 %v358
      %v909 = vunpack.c.l.b16 %v359
      %v910 = vunpack.c.l.b16 %v360
      %v911 = vunpack.c.l.b16 %v361
      %v912 = vunpack.c.l.b16 %v362
      %v913 = vunpack.c.l.b16 %v363
      %v914 = vunpack.c.l.b16 %v364
      %v915 = vunpack.c.l.b16 %v365
      %v916 = vunpack.c.l.b16 %v366
      %v917 = vunpack.c.l.b16 %v367
      %v918 = vunpack.c.l.b16 %v368
      %v919 = vunpack.c.l.b16 %v369
      %v920 = vunpack.c.l.b16 %v370
      %v921 = vunpack.c.l.b16 %v371
      %v922 = vunpack.c.l.b16 %v372
      %v923 = vunpack.c.l.b16 %v373
      %v924 = vunpack.c.l.b16 %v374
      %v925 = vpack.c.b16 %v846, %v845
      %v926 = vpack.c.b16 %v848, %v847
      %v927 = vpack.c.b16 %v850, %v849
      %v928 = vpack.c.b16 %v852, %v851
      %v929 = vpack.c.b16 %v854, %v853
      %v930 = vpack.c.b16 %v856, %v855
      %v931 = vpack.c.b16 %v858, %v857
      %v932 = vpack.c.b16 %v860, %v859
      %v933 = vpack.c.b16 %v862, %v861
      %v934 = vpack.c.b16 %v864, %v863
      %v935 = vpack.c.b16 %v866, %v865
      %v936 = vpack.c.b16 %v868, %v867
      %v937 = vpack.c.b16 %v870, %v869
      %v938 = vpack.c.b16 %v872, %v871
      %v939 = vpack.c.b16 %v874, %v873
      %v940 = vpack.c.b16 %v876, %v875
      %v941 = vpack.c.b16 %v878, %v877
      %v942 = vpack.c.b16 %v880, %v879
      %v943 = vpack.c.b16 %v882, %v881
      %v944 = vpack.c.b16 %v884, %v883
      %v945 = vpack.c.b16 %v886, %v885
      %v946 = vpack.c.b16 %v888, %v887
      %v947 = vpack.c.b16 %v890, %v889
      %v948 = vpack.c.b16 %v892, %v891
      %v949 = vpack.c.b16 %v894, %v893
      %v950 = vpack.c.b16 %v896, %v895
      %v951 = vpack.c.b16 %v898, %v897
      %v952 = vpack.c.b16 %v900, %v899
      %v953 = vpack.c.b16 %v902, %v901
      %v954 = vpack.c.b16 %v904, %v903
      %v955 = vpack.c.b16 %v906, %v905
      %v956 = vpack.c.b16 %v908, %v907
      %v957 = vpack.c.b16 %v910, %v909
      %v958 = vpack.c.b16 %v912, %v911
      %v959 = vpack.c.b16 %v914, %v913
      %v960 = vpack.c.b16 %v916, %v915
      %v961 = vpack.c.b16 %v918, %v917
      %v962 = vpack.c.b16 %v920, %v919
      %v963 = vpack.c.b16 %v922, %v921
      %v964 = vpack.c.b16 %v924, %v923
      %1005 = vmatprep.subr.bf16.mxu0 0
      %1006 = vmatpush1.bf16.msra.mxu0 %v925
      %1007 = vmatprep.subr.bf16.mxu0 0
      %1008 = vmatpush1.bf16.msra.mxu0 %v926
      %1009 = vmatprep.subr.bf16.mxu0 0
      %1010 = vmatpush1.bf16.msra.mxu0 %v927
      %1011 = vmatprep.subr.bf16.mxu0 0
      %1012 = vmatpush1.bf16.msra.mxu0 %v928
      %1013 = vmatprep.subr.bf16.mxu0 0
      %1014 = vmatpush1.bf16.msra.mxu0 %v929
      %1015 = vmatprep.subr.bf16.mxu0 0
      %1016 = vmatpush1.bf16.msra.mxu0 %v930
      %1017 = vmatprep.subr.bf16.mxu0 0
      %1018 = vmatpush1.bf16.msra.mxu0 %v931
      %1019 = vmatprep.subr.bf16.mxu0 0
      %1020 = vmatpush1.bf16.msra.mxu0 %v932
      %1021 = vmatprep.subr.bf16.mxu0 0
      %1022 = vmatpush1.bf16.msra.mxu0 %v933
      %1023 = vmatprep.subr.bf16.mxu0 0
      %1024 = vmatpush1.bf16.msra.mxu0 %v934
      %1025 = vmatprep.subr.bf16.mxu0 0
      %1026 = vmatpush1.bf16.msra.mxu0 %v935
      %1027 = vmatprep.subr.bf16.mxu0 0
      %1028 = vmatpush1.bf16.msra.mxu0 %v936
      %1029 = vmatprep.subr.bf16.mxu0 0
      %1030 = vmatpush1.bf16.msra.mxu0 %v937
      %1031 = vmatprep.subr.bf16.mxu0 0
      %1032 = vmatpush1.bf16.msra.mxu0 %v938
      %1033 = vmatprep.subr.bf16.mxu0 0
      %1034 = vmatpush1.bf16.msra.mxu0 %v939
      %1035 = vmatprep.subr.bf16.mxu0 0
      %1036 = vmatpush1.bf16.msra.mxu0 %v940
      %1037 = vmatprep.mubr.bf16.mxu0 %v616
      %1038 = vmatmul.mubr.bf16.gmra.mrb[0].mxu0 %v615
      %v1039 = vpop.f32.mrb[0].mxu0
      %v1040 = vadd.f32 0.0, %v1039
      %v1041 = vpop.f32.mrb[0].mxu0
      %v1042 = vpop.f32.mrb[0].mxu0
      %v1043 = vadd.f32 0.0, %v1042
      %v1044 = vpop.f32.mrb[0].mxu0
      %1045 = vmatprep.mubr.bf16.mxu0 %v621
      %1046 = vmatmul.mubr.bf16.gmra.mrb[0].mxu0 %v620
      %v1047 = vpop.f32.mrb[0].mxu0
      %v1048 = vadd.f32 0.0, %v1047
      %v1049 = vpop.f32.mrb[0].mxu0
      %v1050 = vpop.f32.mrb[0].mxu0
      %v1051 = vadd.f32 0.0, %v1050
      %v1052 = vpop.f32.mrb[0].mxu0
      %1053 = vmatprep.mubr.bf16.mxu0 %v626
      %1054 = vmatmul.mubr.bf16.gmra.mrb[0].mxu0 %v625
      %v1055 = vpop.f32.mrb[0].mxu0
      %v1056 = vadd.f32 0.0, %v1055
      %v1057 = vpop.f32.mrb[0].mxu0
      %v1058 = vpop.f32.mrb[0].mxu0
      %v1059 = vadd.f32 0.0, %v1058
      %v1060 = vpop.f32.mrb[0].mxu0
      %1061 = vmatprep.mubr.bf16.mxu0 %v631
      %1062 = vmatmul.mubr.bf16.gmra.mrb[0].mxu0 %v630
      %v1063 = vpop.f32.mrb[0].mxu0
      %v1064 = vadd.f32 0.0, %v1063
      %v1065 = vpop.f32.mrb[0].mxu0
      %v1066 = vpop.f32.mrb[0].mxu0
      %v1067 = vadd.f32 0.0, %v1066
      %v1068 = vpop.f32.mrb[0].mxu0
      %1069 = vmatprep.mubr.bf16.mxu0 %v636
      %1070 = vmatmul.mubr.bf16.gmra.mrb[0].mxu0 %v635
      %v1071 = vpop.f32.mrb[0].mxu0
      %v1072 = vadd.f32 0.0, %v1071
      %v1073 = vpop.f32.mrb[0].mxu0
      %v1074 = vpop.f32.mrb[0].mxu0
      %v1075 = vadd.f32 0.0, %v1074
      %v1076 = vpop.f32.mrb[0].mxu0
      %1077 = vmatprep.mubr.bf16.mxu0 %v641
      %1078 = vmatmul.mubr.bf16.gmra.mrb[0].mxu0 %v640
      %v1079 = vpop.f32.mrb[0].mxu0
      %v1080 = vadd.f32 0.0, %v1079
      %v1081 = vpop.f32.mrb[0].mxu0
      %v1082 = vpop.f32.mrb[0].mxu0
      %v1083 = vadd.f32 0.0, %v1082
      %v1084 = vpop.f32.mrb[0].mxu0
      %1085 = vmatprep.mubr.bf16.mxu0 %v646
      %1086 = vmatmul.mubr.bf16.gmra.mrb[0].mxu0 %v645
      %v1087 = vpop.f32.mrb[0].mxu0
      %v1088 = vadd.f32 0.0, %v1087
      %v1089 = vpop.f32.mrb[0].mxu0
      %v1090 = vpop.f32.mrb[0].mxu0
      %v1091 = vadd.f32 0.0, %v1090
      %v1092 = vpop.f32.mrb[0].mxu0
      %1093 = vmatprep.mubr.bf16.mxu0 %v651
      %1094 = vmatmul.mubr.bf16.gmra.mrb[0].mxu0 %v650
      %v1095 = vpop.f32.mrb[0].mxu0
      %v1096 = vadd.f32 0.0, %v1095
      %v1097 = vpop.f32.mrb[0].mxu0
      %v1098 = vpop.f32.mrb[0].mxu0
      %v1099 = vadd.f32 0.0, %v1098
      %v1100 = vpop.f32.mrb[0].mxu0
      %1101 = vmatprep.mubr.bf16.mxu0 %v656
      %1102 = vmatmul.mubr.bf16.gmra.mrb[0].mxu0 %v655
      %v1103 = vpop.f32.mrb[0].mxu0
      %v1104 = vadd.f32 0.0, %v1103
      %v1105 = vpop.f32.mrb[0].mxu0
      %v1106 = vpop.f32.mrb[0].mxu0
      %v1107 = vadd.f32 0.0, %v1106
      %v1108 = vpop.f32.mrb[0].mxu0
      %1109 = vmatprep.mubr.bf16.mxu0 %v661
      %1110 = vmatmul.mubr.bf16.gmra.mrb[0].mxu0 %v660
      %v1111 = vpop.f32.mrb[0].mxu0
      %v1112 = vadd.f32 0.0, %v1111
      %v1113 = vpop.f32.mrb[0].mxu0
      %v1114 = vpop.f32.mrb[0].mxu0
      %v1115 = vadd.f32 0.0, %v1114
      %v1116 = vpop.f32.mrb[0].mxu0
      %1117 = vmatprep.mubr.bf16.mxu0 %v666
      %1118 = vmatmul.mubr.bf16.gmra.mrb[0].mxu0 %v665
      %v1119 = vpop.f32.mrb[0].mxu0
      %v1120 = vadd.f32 0.0, %v1119
      %v1121 = vpop.f32.mrb[0].mxu0
      %v1122 = vpop.f32.mrb[0].mxu0
      %v1123 = vadd.f32 0.0, %v1122
      %v1124 = vpop.f32.mrb[0].mxu0
      %1125 = vmatprep.mubr.bf16.mxu0 %v671
      %1126 = vmatmul.mubr.bf16.gmra.mrb[0].mxu0 %v670
      %v1127 = vpop.f32.mrb[0].mxu0
      %v1128 = vadd.f32 0.0, %v1127
      %v1129 = vpop.f32.mrb[0].mxu0
      %v1130 = vpop.f32.mrb[0].mxu0
      %v1131 = vadd.f32 0.0, %v1130
      %v1132 = vpop.f32.mrb[0].mxu0
      %1133 = vmatprep.mubr.bf16.mxu0 %v676
      %1134 = vmatmul.mubr.bf16.gmra.mrb[0].mxu0 %v675
      %v1135 = vpop.f32.mrb[0].mxu0
      %v1136 = vadd.f32 0.0, %v1135
      %v1137 = vpop.f32.mrb[0].mxu0
      %v1138 = vpop.f32.mrb[0].mxu0
      %v1139 = vadd.f32 0.0, %v1138
      %v1140 = vpop.f32.mrb[0].mxu0
      %1141 = vmatprep.mubr.bf16.mxu0 %v681
      %1142 = vmatmul.mubr.bf16.gmra.mrb[0].mxu0 %v680
      %v1143 = vpop.f32.mrb[0].mxu0
      %v1144 = vadd.f32 0.0, %v1143
      %v1145 = vpop.f32.mrb[0].mxu0
      %v1146 = vpop.f32.mrb[0].mxu0
      %v1147 = vadd.f32 0.0, %v1146
      %v1148 = vpop.f32.mrb[0].mxu0
      %1149 = vmatprep.mubr.bf16.mxu0 %v686
      %1150 = vmatmul.mubr.bf16.gmra.mrb[0].mxu0 %v685
      %v1151 = vpop.f32.mrb[0].mxu0
      %v1152 = vadd.f32 0.0, %v1151
      %v1153 = vpop.f32.mrb[0].mxu0
      %v1154 = vpop.f32.mrb[0].mxu0
      %v1155 = vadd.f32 0.0, %v1154
      %v1156 = vpop.f32.mrb[0].mxu0
      %1157 = vdwg.mxu0
      %1158 = vmatprep.subr.bf16.mxu0 0
      %1159 = vmatpush1.bf16.msra.mxu0 %v941
      %1160 = vmatprep.subr.bf16.mxu0 0
      %1161 = vmatpush1.bf16.msra.mxu0 %v942
      %1162 = vmatprep.subr.bf16.mxu0 0
      %1163 = vmatpush1.bf16.msra.mxu0 %v943
      %1164 = vmatprep.subr.bf16.mxu0 0
      %1165 = vmatpush1.bf16.msra.mxu0 %v944
      %1166 = vmatprep.subr.bf16.mxu0 0
      %1167 = vmatpush1.bf16.msra.mxu0 %v945
      %1168 = vmatprep.subr.bf16.mxu0 0
      %1169 = vmatpush1.bf16.msra.mxu0 %v946
      %1170 = vmatprep.subr.bf16.mxu0 0
      %1171 = vmatpush1.bf16.msra.mxu0 %v947
      %1172 = vmatprep.subr.bf16.mxu0 0
      %1173 = vmatpush1.bf16.msra.mxu0 %v948
      %1174 = vmatprep.subr.bf16.mxu0 0
      %1175 = vmatpush1.bf16.msra.mxu0 %v949
      %1176 = vmatprep.subr.bf16.mxu0 0
      %1177 = vmatpush1.bf16.msra.mxu0 %v950
      %1178 = vmatprep.subr.bf16.mxu0 0
      %1179 = vmatpush1.bf16.msra.mxu0 %v951
      %1180 = vmatprep.subr.bf16.mxu0 0
      %1181 = vmatpush1.bf16.msra.mxu0 %v952
      %1182 = vmatprep.subr.bf16.mxu0 0
      %1183 = vmatpush1.bf16.msra.mxu0 %v953
      %1184 = vmatprep.subr.bf16.mxu0 0
      %1185 = vmatpush1.bf16.msra.mxu0 %v954
      %1186 = vmatprep.subr.bf16.mxu0 0
      %1187 = vmatpush1.bf16.msra.mxu0 %v955
      %1188 = vmatprep.subr.bf16.mxu0 0
      %1189 = vmatpush1.bf16.msra.mxu0 %v956
      %1190 = vmatprep.mubr.bf16.mxu0 %v618
      %1191 = vmatmul.mubr.bf16.gmra.mrb[0].mxu0 %v617
      %v1192 = vpop.f32.mrb[0].mxu0
      %v1193 = vadd.f32 %v1040, %v1192
      %v1194 = vpop.f32.mrb[0].mxu0
      %v1195 = vpop.f32.mrb[0].mxu0
      %v1196 = vadd.f32 %v1043, %v1195
      %v1197 = vpop.f32.mrb[0].mxu0
      %1198 = vmatprep.mubr.bf16.mxu0 %v623
      %1199 = vmatmul.mubr.bf16.gmra.mrb[0].mxu0 %v622
      %v1200 = vpop.f32.mrb[0].mxu0
      %v1201 = vadd.f32 %v1048, %v1200
      %v1202 = vpop.f32.mrb[0].mxu0
      %v1203 = vpop.f32.mrb[0].mxu0
      %v1204 = vadd.f32 %v1051, %v1203
      %v1205 = vpop.f32.mrb[0].mxu0
      %1206 = vmatprep.mubr.bf16.mxu0 %v628
      %1207 = vmatmul.mubr.bf16.gmra.mrb[0].mxu0 %v627
      %v1208 = vpop.f32.mrb[0].mxu0
      %v1209 = vadd.f32 %v1056, %v1208
      %v1210 = vpop.f32.mrb[0].mxu0
      %v1211 = vpop.f32.mrb[0].mxu0
      %v1212 = vadd.f32 %v1059, %v1211
      %v1213 = vpop.f32.mrb[0].mxu0
      %1214 = vmatprep.mubr.bf16.mxu0 %v633
      %1215 = vmatmul.mubr.bf16.gmra.mrb[0].mxu0 %v632
      %v1216 = vpop.f32.mrb[0].mxu0
      %v1217 = vadd.f32 %v1064, %v1216
      %v1218 = vpop.f32.mrb[0].mxu0
      %v1219 = vpop.f32.mrb[0].mxu0
      %v1220 = vadd.f32 %v1067, %v1219
      %v1221 = vpop.f32.mrb[0].mxu0
      %1222 = vmatprep.mubr.bf16.mxu0 %v638
      %1223 = vmatmul.mubr.bf16.gmra.mrb[0].mxu0 %v637
      %v1224 = vpop.f32.mrb[0].mxu0
      %v1225 = vadd.f32 %v1072, %v1224
      %v1226 = vpop.f32.mrb[0].mxu0
      %v1227 = vpop.f32.mrb[0].mxu0
      %v1228 = vadd.f32 %v1075, %v1227
      %v1229 = vpop.f32.mrb[0].mxu0
      %1230 = vmatprep.mubr.bf16.mxu0 %v643
      %1231 = vmatmul.mubr.bf16.gmra.mrb[0].mxu0 %v642
      %v1232 = vpop.f32.mrb[0].mxu0
      %v1233 = vadd.f32 %v1080, %v1232
      %v1234 = vpop.f32.mrb[0].mxu0
      %v1235 = vpop.f32.mrb[0].mxu0
      %v1236 = vadd.f32 %v1083, %v1235
      %v1237 = vpop.f32.mrb[0].mxu0
      %1238 = vmatprep.mubr.bf16.mxu0 %v648
      %1239 = vmatmul.mubr.bf16.gmra.mrb[0].mxu0 %v647
      %v1240 = vpop.f32.mrb[0].mxu0
      %v1241 = vadd.f32 %v1088, %v1240
      %v1242 = vpop.f32.mrb[0].mxu0
      %v1243 = vpop.f32.mrb[0].mxu0
      %v1244 = vadd.f32 %v1091, %v1243
      %v1245 = vpop.f32.mrb[0].mxu0
      %1246 = vmatprep.mubr.bf16.mxu0 %v653
      %1247 = vmatmul.mubr.bf16.gmra.mrb[0].mxu0 %v652
      %v1248 = vpop.f32.mrb[0].mxu0
      %v1249 = vadd.f32 %v1096, %v1248
      %v1250 = vpop.f32.mrb[0].mxu0
      %v1251 = vpop.f32.mrb[0].mxu0
      %v1252 = vadd.f32 %v1099, %v1251
      %v1253 = vpop.f32.mrb[0].mxu0
      %1254 = vmatprep.mubr.bf16.mxu0 %v658
      %1255 = vmatmul.mubr.bf16.gmra.mrb[0].mxu0 %v657
      %v1256 = vpop.f32.mrb[0].mxu0
      %v1257 = vadd.f32 %v1104, %v1256
      %v1258 = vpop.f32.mrb[0].mxu0
      %v1259 = vpop.f32.mrb[0].mxu0
      %v1260 = vadd.f32 %v1107, %v1259
      %v1261 = vpop.f32.mrb[0].mxu0
      %1262 = vmatprep.mubr.bf16.mxu0 %v663
      %1263 = vmatmul.mubr.bf16.gmra.mrb[0].mxu0 %v662
      %v1264 = vpop.f32.mrb[0].mxu0
      %v1265 = vadd.f32 %v1112, %v1264
      %v1266 = vpop.f32.mrb[0].mxu0
      %v1267 = vpop.f32.mrb[0].mxu0
      %v1268 = vadd.f32 %v1115, %v1267
      %v1269 = vpop.f32.mrb[0].mxu0
      %1270 = vmatprep.mubr.bf16.mxu0 %v668
      %1271 = vmatmul.mubr.bf16.gmra.mrb[0].mxu0 %v667
      %v1272 = vpop.f32.mrb[0].mxu0
      %v1273 = vadd.f32 %v1120, %v1272
      %v1274 = vpop.f32.mrb[0].mxu0
      %v1275 = vpop.f32.mrb[0].mxu0
      %v1276 = vadd.f32 %v1123, %v1275
      %v1277 = vpop.f32.mrb[0].mxu0
      %1278 = vmatprep.mubr.bf16.mxu0 %v673
      %1279 = vmatmul.mubr.bf16.gmra.mrb[0].mxu0 %v672
      %v1280 = vpop.f32.mrb[0].mxu0
      %v1281 = vadd.f32 %v1128, %v1280
      %v1282 = vpop.f32.mrb[0].mxu0
      %v1283 = vpop.f32.mrb[0].mxu0
      %v1284 = vadd.f32 %v1131, %v1283
      %v1285 = vpop.f32.mrb[0].mxu0
      %1286 = vmatprep.mubr.bf16.mxu0 %v678
      %1287 = vmatmul.mubr.bf16.gmra.mrb[0].mxu0 %v677
      %v1288 = vpop.f32.mrb[0].mxu0
      %v1289 = vadd.f32 %v1136, %v1288
      %v1290 = vpop.f32.mrb[0].mxu0
      %v1291 = vpop.f32.mrb[0].mxu0
      %v1292 = vadd.f32 %v1139, %v1291
      %v1293 = vpop.f32.mrb[0].mxu0
      %1294 = vmatprep.mubr.bf16.mxu0 %v683
      %1295 = vmatmul.mubr.bf16.gmra.mrb[0].mxu0 %v682
      %v1296 = vpop.f32.mrb[0].mxu0
      %v1297 = vadd.f32 %v1144, %v1296
      %v1298 = vpop.f32.mrb[0].mxu0
      %v1299 = vpop.f32.mrb[0].mxu0
      %v1300 = vadd.f32 %v1147, %v1299
      %v1301 = vpop.f32.mrb[0].mxu0
      %1302 = vmatprep.mubr.bf16.mxu0 %v688
      %1303 = vmatmul.mubr.bf16.gmra.mrb[0].mxu0 %v687
      %v1304 = vpop.f32.mrb[0].mxu0
      %v1305 = vadd.f32 %v1152, %v1304
      %v1306 = vpop.f32.mrb[0].mxu0
      %v1307 = vpop.f32.mrb[0].mxu0
      %v1308 = vadd.f32 %v1155, %v1307
      %v1309 = vpop.f32.mrb[0].mxu0
      %1310 = vdwg.mxu0
      %1311 = vmatprep.subr.bf16.mxu0 0
      %1312 = vmatpush1.bf16.msra.mxu0 %v957
      %1313 = vmatprep.subr.bf16.mxu0 0
      %1314 = vmatpush1.bf16.msra.mxu0 %v958
      %1315 = vmatprep.subr.bf16.mxu0 0
      %1316 = vmatpush1.bf16.msra.mxu0 %v959
      %1317 = vmatprep.subr.bf16.mxu0 0
      %1318 = vmatpush1.bf16.msra.mxu0 %v960
      %1319 = vmatprep.subr.bf16.mxu0 0
      %1320 = vmatpush1.bf16.msra.mxu0 %v961
      %1321 = vmatprep.subr.bf16.mxu0 0
      %1322 = vmatpush1.bf16.msra.mxu0 %v962
      %1323 = vmatprep.subr.bf16.mxu0 0
      %1324 = vmatpush1.bf16.msra.mxu0 %v963
      %1325 = vmatprep.subr.bf16.mxu0 0
      %1326 = vmatpush1.bf16.msra.mxu0 %v964
      %1327 = vmatprep.subr.bf16.mxu0 0
      %1328 = vmatpush1.bf16.msra.mxu0 0
      %1329 = vmatprep.subr.bf16.mxu0 0
      %1330 = vmatpush1.bf16.msra.mxu0 0
      %1331 = vmatprep.subr.bf16.mxu0 0
      %1332 = vmatpush1.bf16.msra.mxu0 0
      %1333 = vmatprep.subr.bf16.mxu0 0
      %1334 = vmatpush1.bf16.msra.mxu0 0
      %1335 = vmatprep.subr.bf16.mxu0 0
      %1336 = vmatpush1.bf16.msra.mxu0 0
      %1337 = vmatprep.subr.bf16.mxu0 0
      %1338 = vmatpush1.bf16.msra.mxu0 0
      %1339 = vmatprep.subr.bf16.mxu0 0
      %1340 = vmatpush1.bf16.msra.mxu0 0
      %1341 = vmatprep.subr.bf16.mxu0 0
      %1342 = vmatpush1.bf16.msra.mxu0 0
      %1343 = vmatprep.mubr.bf16.mxu0 0
      %1344 = vmatmul.mubr.bf16.gmra.mrb[0].mxu0 %v619
      %v1345 = vpop.f32.mrb[0].mxu0
      %v1346 = vadd.f32 %v1193, %v1345
      %v1347 = vpop.f32.mrb[0].mxu0
      %v1348 = vpop.f32.mrb[0].mxu0
      %v1349 = vadd.f32 %v1196, %v1348
      %v1350 = vpop.f32.mrb[0].mxu0
      %1351 = vmatprep.mubr.bf16.mxu0 0
      %1352 = vmatmul.mubr.bf16.gmra.mrb[0].mxu0 %v624
      %v1353 = vpop.f32.mrb[0].mxu0
      %v1354 = vadd.f32 %v1201, %v1353
      %v1355 = vpop.f32.mrb[0].mxu0
      %v1356 = vpop.f32.mrb[0].mxu0
      %v1357 = vadd.f32 %v1204, %v1356
      %v1358 = vpop.f32.mrb[0].mxu0
      %1359 = vmatprep.mubr.bf16.mxu0 0
      %1360 = vmatmul.mubr.bf16.gmra.mrb[0].mxu0 %v629
      %v1361 = vpop.f32.mrb[0].mxu0
      %v1362 = vadd.f32 %v1209, %v1361
      %v1363 = vpop.f32.mrb[0].mxu0
      %v1364 = vpop.f32.mrb[0].mxu0
      %v1365 = vadd.f32 %v1212, %v1364
      %v1366 = vpop.f32.mrb[0].mxu0
      %1367 = vmatprep.mubr.bf16.mxu0 0
      %1368 = vmatmul.mubr.bf16.gmra.mrb[0].mxu0 %v634
      %v1369 = vpop.f32.mrb[0].mxu0
      %v1370 = vadd.f32 %v1217, %v1369
      %v1371 = vpop.f32.mrb[0].mxu0
      %v1372 = vpop.f32.mrb[0].mxu0
      %v1373 = vadd.f32 %v1220, %v1372
      %v1374 = vpop.f32.mrb[0].mxu0
      %1375 = vmatprep.mubr.bf16.mxu0 0
      %1376 = vmatmul.mubr.bf16.gmra.mrb[0].mxu0 %v639
      %v1377 = vpop.f32.mrb[0].mxu0
      %v1378 = vadd.f32 %v1225, %v1377
      %v1379 = vpop.f32.mrb[0].mxu0
      %v1380 = vpop.f32.mrb[0].mxu0
      %v1381 = vadd.f32 %v1228, %v1380
      %v1382 = vpop.f32.mrb[0].mxu0
      %1383 = vmatprep.mubr.bf16.mxu0 0
      %1384 = vmatmul.mubr.bf16.gmra.mrb[0].mxu0 %v644
      %v1385 = vpop.f32.mrb[0].mxu0
      %v1386 = vadd.f32 %v1233, %v1385
      %v1387 = vpop.f32.mrb[0].mxu0
      %v1388 = vpop.f32.mrb[0].mxu0
      %v1389 = vadd.f32 %v1236, %v1388
      %v1390 = vpop.f32.mrb[0].mxu0
      %1391 = vmatprep.mubr.bf16.mxu0 0
      %1392 = vmatmul.mubr.bf16.gmra.mrb[0].mxu0 %v649
      %v1393 = vpop.f32.mrb[0].mxu0
      %v1394 = vadd.f32 %v1241, %v1393
      %v1395 = vpop.f32.mrb[0].mxu0
      %v1396 = vpop.f32.mrb[0].mxu0
      %v1397 = vadd.f32 %v1244, %v1396
      %v1398 = vpop.f32.mrb[0].mxu0
      %1399 = vmatprep.mubr.bf16.mxu0 0
      %1400 = vmatmul.mubr.bf16.gmra.mrb[0].mxu0 %v654
      %v1401 = vpop.f32.mrb[0].mxu0
      %v1402 = vadd.f32 %v1249, %v1401
      %v1403 = vpop.f32.mrb[0].mxu0
      %v1404 = vpop.f32.mrb[0].mxu0
      %v1405 = vadd.f32 %v1252, %v1404
      %v1406 = vpop.f32.mrb[0].mxu0
      %1407 = vmatprep.mubr.bf16.mxu0 0
      %1408 = vmatmul.mubr.bf16.gmra.mrb[0].mxu0 %v659
      %v1409 = vpop.f32.mrb[0].mxu0
      %v1410 = vadd.f32 %v1257, %v1409
      %v1411 = vpop.f32.mrb[0].mxu0
      %v1412 = vpop.f32.mrb[0].mxu0
      %v1413 = vadd.f32 %v1260, %v1412
      %v1414 = vpop.f32.mrb[0].mxu0
      %1415 = vmatprep.mubr.bf16.mxu0 0
      %1416 = vmatmul.mubr.bf16.gmra.mrb[0].mxu0 %v664
      %v1417 = vpop.f32.mrb[0].mxu0
      %v1418 = vadd.f32 %v1265, %v1417
      %v1419 = vpop.f32.mrb[0].mxu0
      %v1420 = vpop.f32.mrb[0].mxu0
      %v1421 = vadd.f32 %v1268, %v1420
      %v1422 = vpop.f32.mrb[0].mxu0
      %1423 = vmatprep.mubr.bf16.mxu0 0
      %1424 = vmatmul.mubr.bf16.gmra.mrb[0].mxu0 %v669
      %v1425 = vpop.f32.mrb[0].mxu0
      %v1426 = vadd.f32 %v1273, %v1425
      %v1427 = vpop.f32.mrb[0].mxu0
      %v1428 = vpop.f32.mrb[0].mxu0
      %v1429 = vadd.f32 %v1276, %v1428
      %v1430 = vpop.f32.mrb[0].mxu0
      %1431 = vmatprep.mubr.bf16.mxu0 0
      %1432 = vmatmul.mubr.bf16.gmra.mrb[0].mxu0 %v674
      %v1433 = vpop.f32.mrb[0].mxu0
      %v1434 = vadd.f32 %v1281, %v1433
      %v1435 = vpop.f32.mrb[0].mxu0
      %v1436 = vpop.f32.mrb[0].mxu0
      %v1437 = vadd.f32 %v1284, %v1436
      %v1438 = vpop.f32.mrb[0].mxu0
      %1439 = vmatprep.mubr.bf16.mxu0 0
      %1440 = vmatmul.mubr.bf16.gmra.mrb[0].mxu0 %v679
      %v1441 = vpop.f32.mrb[0].mxu0
      %v1442 = vadd.f32 %v1289, %v1441
      %v1443 = vpop.f32.mrb[0].mxu0
      %v1444 = vpop.f32.mrb[0].mxu0
      %v1445 = vadd.f32 %v1292, %v1444
      %v1446 = vpop.f32.mrb[0].mxu0
      %1447 = vmatprep.mubr.bf16.mxu0 0
      %1448 = vmatmul.mubr.bf16.gmra.mrb[0].mxu0 %v684
      %v1449 = vpop.f32.mrb[0].mxu0
      %v1450 = vadd.f32 %v1297, %v1449
      %v1451 = vpop.f32.mrb[0].mxu0
      %v1452 = vpop.f32.mrb[0].mxu0
      %v1453 = vadd.f32 %v1300, %v1452
      %v1454 = vpop.f32.mrb[0].mxu0
      %1455 = vmatprep.mubr.bf16.mxu0 0
      %1456 = vmatmul.mubr.bf16.gmra.mrb[0].mxu0 %v689
      %v1457 = vpop.f32.mrb[0].mxu0
      %v1458 = vadd.f32 %v1305, %v1457
      %v1459 = vpop.f32.mrb[0].mxu0
      %v1460 = vpop.f32.mrb[0].mxu0
      %v1461 = vadd.f32 %v1308, %v1460
      %v1462 = vpop.f32.mrb[0].mxu0
      %1463 = vdwg.mxu0
      %v1464 = vld [vmem:[%s2] sm:$0x1]
      %v1466 = vlaneseq
      %v1467 = vshrl.u32 %v1466, 7
      %v1468 = vsub.s32 0, %v1467
      %v1469 = vrot.slane %v1464, %v1468
      %v1471 = vmul.f32 %v1346, %v1469
      %v1472 = vmul.f32 %v1349, %v1469
      %v1473 = vmul.f32 %v1354, %v1469
      %v1474 = vmul.f32 %v1357, %v1469
      %v1475 = vmul.f32 %v1362, %v1469
      %v1476 = vmul.f32 %v1365, %v1469
      %v1477 = vmul.f32 %v1370, %v1469
      %v1478 = vmul.f32 %v1373, %v1469
      %v1479 = vmul.f32 %v1378, %v1469
      %v1480 = vmul.f32 %v1381, %v1469
      %v1481 = vmul.f32 %v1386, %v1469
      %v1482 = vmul.f32 %v1389, %v1469
      %v1483 = vmul.f32 %v1394, %v1469
      %v1484 = vmul.f32 %v1397, %v1469
      %v1485 = vmul.f32 %v1402, %v1469
      %v1486 = vmul.f32 %v1405, %v1469
      %v1487 = vmul.f32 %v1410, %v1469
      %v1488 = vmul.f32 %v1413, %v1469
      %v1489 = vmul.f32 %v1418, %v1469
      %v1490 = vmul.f32 %v1421, %v1469
      %v1491 = vmul.f32 %v1426, %v1469
      %v1492 = vmul.f32 %v1429, %v1469
      %v1493 = vmul.f32 %v1434, %v1469
      %v1494 = vmul.f32 %v1437, %v1469
      %v1495 = vmul.f32 %v1442, %v1469
      %v1496 = vmul.f32 %v1445, %v1469
      %v1497 = vmul.f32 %v1450, %v1469
      %v1498 = vmul.f32 %v1453, %v1469
      %v1499 = vmul.f32 %v1458, %v1469
      %v1500 = vmul.f32 %v1461, %v1469
      %v1501 = vld [vmem:[%s3] sm:$0x1]
      %v1503 = vlaneseq
      %v1504 = vshrl.u32 %v1503, 7
      %v1505 = vsub.s32 0, %v1504
      %v1506 = vrot.slane %v1501, %v1505
      %v1508 = vadd.f32 %v1471, %v1506
      %v1509 = vadd.f32 %v1472, %v1506
      %v1510 = vadd.f32 %v1473, %v1506
      %v1511 = vadd.f32 %v1474, %v1506
      %v1512 = vadd.f32 %v1475, %v1506
      %v1513 = vadd.f32 %v1476, %v1506
      %v1514 = vadd.f32 %v1477, %v1506
      %v1515 = vadd.f32 %v1478, %v1506
      %v1516 = vadd.f32 %v1479, %v1506
      %v1517 = vadd.f32 %v1480, %v1506
      %v1518 = vadd.f32 %v1481, %v1506
      %v1519 = vadd.f32 %v1482, %v1506
      %v1520 = vadd.f32 %v1483, %v1506
      %v1521 = vadd.f32 %v1484, %v1506
      %v1522 = vadd.f32 %v1485, %v1506
      %v1523 = vadd.f32 %v1486, %v1506
      %v1524 = vadd.f32 %v1487, %v1506
      %v1525 = vadd.f32 %v1488, %v1506
      %v1526 = vadd.f32 %v1489, %v1506
      %v1527 = vadd.f32 %v1490, %v1506
      %v1528 = vadd.f32 %v1491, %v1506
      %v1529 = vadd.f32 %v1492, %v1506
      %v1530 = vadd.f32 %v1493, %v1506
      %v1531 = vadd.f32 %v1494, %v1506
      %v1532 = vadd.f32 %v1495, %v1506
      %v1533 = vadd.f32 %v1496, %v1506
      %v1534 = vadd.f32 %v1497, %v1506
      %v1535 = vadd.f32 %v1498, %v1506
      %v1536 = vadd.f32 %v1499, %v1506
      %v1537 = vadd.f32 %v1500, %v1506
      %v1538 = vtanh.pop %v1508
      %v1539 = vtanh.pop %v1509
      %v1540 = vtanh.pop %v1510
      %v1541 = vtanh.pop %v1511
      %v1542 = vtanh.pop %v1512
      %v1543 = vtanh.pop %v1513
      %v1544 = vtanh.pop %v1514
      %v1545 = vtanh.pop %v1515
      %v1546 = vtanh.pop %v1516
      %v1547 = vtanh.pop %v1517
      %v1548 = vtanh.pop %v1518
      %v1549 = vtanh.pop %v1519
      %v1550 = vtanh.pop %v1520
      %v1551 = vtanh.pop %v1521
      %v1552 = vtanh.pop %v1522
      %v1553 = vtanh.pop %v1523
      %v1554 = vtanh.pop %v1524
      %v1555 = vtanh.pop %v1525
      %v1556 = vtanh.pop %v1526
      %v1557 = vtanh.pop %v1527
      %v1558 = vtanh.pop %v1528
      %v1559 = vtanh.pop %v1529
      %v1560 = vtanh.pop %v1530
      %v1561 = vtanh.pop %v1531
      %v1562 = vtanh.pop %v1532
      %v1563 = vtanh.pop %v1533
      %v1564 = vtanh.pop %v1534
      %v1565 = vtanh.pop %v1535
      %v1566 = vtanh.pop %v1536
      %v1567 = vtanh.pop %v1537
      %1568 = vst [vmem:[%s202] sm:$0xff] %v1538
      %1569 = vst [vmem:[%s202 + $0x8] sm:$0xff] %v1539
      %1570 = vst [vmem:[%s202 + $0x10] sm:$0xff] %v1540
      %1571 = vst [vmem:[%s202 + $0x18] sm:$0xff] %v1541
      %1572 = vst [vmem:[%s202 + $0x20] sm:$0xff] %v1542
      %1573 = vst [vmem:[%s202 + $0x28] sm:$0xff] %v1543
      %1574 = vst [vmem:[%s202 + $0x30] sm:$0xff] %v1544
      %1575 = vst [vmem:[%s202 + $0x38] sm:$0xff] %v1545
      %1576 = vst [vmem:[%s202 + $0x40] sm:$0xff] %v1546
      %1577 = vst [vmem:[%s202 + $0x48] sm:$0xff] %v1547
      %1578 = vst [vmem:[%s202 + $0x50] sm:$0xff] %v1548
      %1579 = vst [vmem:[%s202 + $0x58] sm:$0xff] %v1549
      %1580 = vst [vmem:[%s202 + $0x60] sm:$0xff] %v1550
      %1581 = vst [vmem:[%s202 + $0x68] sm:$0xff] %v1551
      %1582 = vst [vmem:[%s202 + $0x70] sm:$0xff] %v1552
      %1583 = vst [vmem:[%s202 + $0x78] sm:$0xff] %v1553
      %1584 = vst [vmem:[%s202 + $0x80] sm:$0xff] %v1554
      %1585 = vst [vmem:[%s202 + $0x88] sm:$0xff] %v1555
      %1586 = vst [vmem:[%s202 + $0x90] sm:$0xff] %v1556
      %1587 = vst [vmem:[%s202 + $0x98] sm:$0xff] %v1557
      %1588 = vst [vmem:[%s202 + $0xa0] sm:$0xff] %v1558
      %1589 = vst [vmem:[%s202 + $0xa8] sm:$0xff] %v1559
      %1590 = vst [vmem:[%s202 + $0xb0] sm:$0xff] %v1560
      %1591 = vst [vmem:[%s202 + $0xb8] sm:$0xff] %v1561
      %1592 = vst [vmem:[%s202 + $0xc0] sm:$0xff] %v1562
      %1593 = vst [vmem:[%s202 + $0xc8] sm:$0xff] %v1563
      %1594 = vst [vmem:[%s202 + $0xd0] sm:$0xff] %v1564
      %1595 = vst [vmem:[%s202 + $0xd8] sm:$0xff] %v1565
      %1596 = vst [vmem:[%s202 + $0xe0] sm:$0xff] %v1566
      %1597 = vst [vmem:[%s202 + $0xe8] sm:$0xff] %v1567
      %s1598 = smul.u32 30, %s15
      %p1599 = scmp.lt.s32.totalorder %s1598, 59
      %s1600 = scalar_select %p1599, %s1598, 59
      %s1601 = smul.addr %s1600, 8
      %s1602 = scalar_lea.vmem %s4, %s1601
      // Predicated region
      $region37: #{tacotron2_forward.10} parent=35 // pred_check
        %p1603 = pneg %p122
      $region38: #{tacotron2_forward.10} parent=35 // pred_check_branch
        %1605 = sbr.rel (%p1603) target = $region40
      $region39: #{tacotron2_forward.10} parent=35 // pred_region
        %s1606 = smul.u32 30, %s15
      $region40: #{tacotron2_forward.10} parent=35 // pred_fallthru
        _
    $region36: #{tacotron2_forward.10} parent=5 // pred_fallthru
      _
    %p1607 = scmp.le.s32.totalorder 2, %s10
    // Predicated region
    $region41: #{tacotron2_forward.10} parent=5 // pred_check
      %p1608 = pneg %p1607
    $region42: #{tacotron2_forward.10} parent=5 // pred_check_branch
      %1610 = sbr.rel (%p1608) target = $region44
    $region43: #{tacotron2_forward.10} parent=5 // pred_region
      %s1611 = ssub.s32 %s10, 2
      // Predicated region
      $region45: #{tacotron2_forward.10} parent=43 // pred_check
        %p1612 = pneg %p128
      $region46: #{tacotron2_forward.10} parent=43 // pred_check_branch
        %1614 = sbr.rel (%p1612) target = $region48
      $region47: #{tacotron2_forward.10} parent=43 // pred_region
        %s1615 = smul.u32 30, %s16
        %p1616 = scmp.lt.s32.totalorder %s1615, 59
        %s1617 = scalar_select %p1616, %s1615, 59
        %s1618 = smul.addr %s1617, 8
        %s1619 = scalar_lea.vmem %s4, %s1618
      $region48: #{tacotron2_forward.10} parent=43 // pred_fallthru
        _
    $region44: #{tacotron2_forward.10} parent=5 // pred_fallthru
      _
  $region6: #{tacotron2_forward.10} parent=0 // loop_footer
    %s14 = sadd.s32 1, %s10
  $region7: #{tacotron2_forward.10} parent=0 // loop_footer_branch
    %9 = sbr.rel target = $region3
  $region8: #{tacotron2_forward.10} parent=0 // loop_exit
    _

// kernel: tacotron2_forward.13
$region0: #{tacotron2_forward.13}
  #allocation0 [shape = 'u32[]', space=smem, size = 0x4, offset = 0x4, fixed_abs, tag = 'smem constant byte address 0x4 - core index']
  #allocation1 [shape = 'u32[144,128]{1,0:T(1,128)}', space=vmem, size = 0x12000, scoped, tag = 'internal scratch']
  %s0 = inlined_call_operand.vmem [shape: bf16[480,640], index: 0, kind: input, shape index: {}]
  %s1 = inlined_call_operand.vmem [shape: bf16[640,128], index: 1, kind: input, shape index: {}]
  %s2 = inlined_call_operand.vmem [shape: f32[1,128], index: 2, kind: input, shape index: {}]
  %s3 = inlined_call_operand.vmem [shape: f32[1,128], index: 3, kind: input, shape index: {}]
  %s4 = inlined_call_operand.vmem [shape: f32[480,128], index: 4, kind: output, shape index: {}]
  %s5 = sld [smem:[#allocation0]]
  $region49: #{tacotron2_forward.13} parent=0
    _
  %s7 = ssub.s32 1, %s5
  %s8 = scalar_select 0, %s7, %s5
  loop: start=0, step=1, limit=4
  $region2: #{tacotron2_forward.13} parent=0 // loop_pre_header
    _
  $region3: #{tacotron2_forward.13} parent=0 // loop_header
    %s10 = sphi 0, %s14
    %p11 = scmp.ge.s32.totalorder %s10, 4
    %s20 = sphi 0, %s22
    %s23 = sphi 0, %s20
    %s24 = sphi 0, %s23
    %s40 = sphi 0, %s24
    %s44 = sphi 0, %s44
    %s46 = sphi 0, %s44
    %s47 = sphi 0, %s46
    %s61 = sphi 0, %s47
    %s65 = sphi 0, %s65
    %s67 = sphi 0, %s65
    %s68 = sphi 0, %s67
    %s82 = sphi 0, %s68
    %s86 = sphi 0, %s86
    %s88 = sphi 0, %s86
    %s89 = sphi 0, %s88
    %s103 = sphi 0, %s89
    %s109 = sphi 0, %s111
    %s112 = sphi 0, %s109
    %s113 = sphi 0, %s112
    %s129 = sphi 0, %s113
  $region4: #{tacotron2_forward.13} parent=0 // loop_header_branch
    %13 = sbr.rel (%p11) target = $region8
  $region5: #{tacotron2_forward.13} parent=0 // loop_body
    %s15 = ssub.s32 %s10, 1
    %s16 = ssub.s32 %s10, 2
    %s17 = sadd.s32 %s10, 1
    %s18 = ssub.s32 %s10, %s17
    %p19 = scmp.eq.s32.totalorder %s18, 0
    %s21 = sadd.s32 %s20, 1
    %s22 = scalar_select %p19, %s20, %s21
    %p25 = pneg %p19
    %p26 = scmp.eq.s32.totalorder %s10, 1
    %p27 = por %p25, %p26
    %p28 = scmp.ne.s32.totalorder %s20, %s23
    %p29 = scmp.eq.s32.totalorder %s10, 0
    %p30 = por %p28, %p29
    %p31 = scmp.ne.s32.totalorder %s20, %s23
    %p32 = scmp.eq.s32.totalorder %s15, 1
    %p33 = por %p31, %p32
    %p34 = scmp.ne.s32.totalorder %s23, %s24
    %p35 = scmp.eq.s32.totalorder %s15, 0
    %p36 = por %p34, %p35
    %p37 = scmp.ne.s32.totalorder %s23, %s24
    %p38 = scmp.eq.s32.totalorder %s16, 1
    %p39 = por %p37, %p38
    %p41 = scmp.ne.s32.totalorder %s24, %s40
    %p42 = scmp.eq.s32.totalorder %s16, 0
    %p43 = por %p41, %p42
    %s45 = sadd.s32 %s44, 1
    %p48 = scmp.eq.s32.totalorder %s10, 1
    %p49 = scmp.ne.s32.totalorder %s44, %s46
    %p50 = scmp.eq.s32.totalorder %s10, 0
    %p51 = por %p49, %p50
    %p52 = scmp.ne.s32.totalorder %s44, %s46
    %p53 = scmp.eq.s32.totalorder %s15, 1
    %p54 = por %p52, %p53
    %p55 = scmp.ne.s32.totalorder %s46, %s47
    %p56 = scmp.eq.s32.totalorder %s15, 0
    %p57 = por %p55, %p56
    %p58 = scmp.ne.s32.totalorder %s46, %s47
    %p59 = scmp.eq.s32.totalorder %s16, 1
    %p60 = por %p58, %p59
    %p62 = scmp.ne.s32.totalorder %s47, %s61
    %p63 = scmp.eq.s32.totalorder %s16, 0
    %p64 = por %p62, %p63
    %s66 = sadd.s32 %s65, 1
    %p69 = scmp.eq.s32.totalorder %s10, 1
    %p70 = scmp.ne.s32.totalorder %s65, %s67
    %p71 = scmp.eq.s32.totalorder %s10, 0
    %p72 = por %p70, %p71
    %p73 = scmp.ne.s32.totalorder %s65, %s67
    %p74 = scmp.eq.s32.totalorder %s15, 1
    %p75 = por %p73, %p74
    %p76 = scmp.ne.s32.totalorder %s67, %s68
    %p77 = scmp.eq.s32.totalorder %s15, 0
    %p78 = por %p76, %p77
    %p79 = scmp.ne.s32.totalorder %s67, %s68
    %p80 = scmp.eq.s32.totalorder %s16, 1
    %p81 = por %p79, %p80
    %p83 = scmp.ne.s32.totalorder %s68, %s82
    %p84 = scmp.eq.s32.totalorder %s16, 0
    %p85 = por %p83, %p84
    %s87 = sadd.s32 %s86, 1
    %p90 = scmp.eq.s32.totalorder %s10, 1
    %p91 = scmp.ne.s32.totalorder %s86, %s88
    %p92 = scmp.eq.s32.totalorder %s10, 0
    %p93 = por %p91, %p92
    %p94 = scmp.ne.s32.totalorder %s86, %s88
    %p95 = scmp.eq.s32.totalorder %s15, 1
    %p96 = por %p94, %p95
    %p97 = scmp.ne.s32.totalorder %s88, %s89
    %p98 = scmp.eq.s32.totalorder %s15, 0
    %p99 = por %p97, %p98
    %p100 = scmp.ne.s32.totalorder %s88, %s89
    %p101 = scmp.eq.s32.totalorder %s16, 1
    %p102 = por %p100, %p101
    %p104 = scmp.ne.s32.totalorder %s89, %s103
    %p105 = scmp.eq.s32.totalorder %s16, 0
    %p106 = por %p104, %p105
    %s107 = ssub.s32 %s10, %s17
    %p108 = scmp.eq.s32.totalorder %s107, 0
    %s110 = sadd.s32 %s109, 1
    %s111 = scalar_select %p108, %s109, %s110
    %p114 = pneg %p108
    %p115 = scmp.eq.s32.totalorder %s10, 1
    %p116 = por %p114, %p115
    %p117 = scmp.ne.s32.totalorder %s109, %s112
    %p118 = scmp.eq.s32.totalorder %s10, 0
    %p119 = por %p117, %p118
    %p120 = scmp.ne.s32.totalorder %s109, %s112
    %p121 = scmp.eq.s32.totalorder %s15, 1
    %p122 = por %p120, %p121
    %p123 = scmp.ne.s32.totalorder %s112, %s113
    %p124 = scmp.eq.s32.totalorder %s15, 0
    %p125 = por %p123, %p124
    %p126 = scmp.ne.s32.totalorder %s112, %s113
    %p127 = scmp.eq.s32.totalorder %s16, 1
    %p128 = por %p126, %p127
    %p130 = scmp.ne.s32.totalorder %s113, %s129
    %p131 = scmp.eq.s32.totalorder %s16, 0
    %p132 = por %p130, %p131
    %p133 = scmp.le.s32.totalorder 1, %s10
    %p134 = scmp.lt.s32.totalorder %s10, 3
    %p135 = pnand %p133, %p134
    %p136 = pneg %p135
    // Predicated region
    $region9: #{tacotron2_forward.13} parent=5 // pred_check
      _
    $region10: #{tacotron2_forward.13} parent=5 // pred_check_branch
      %138 = sbr.rel (%p135) target = $region12
    $region11: #{tacotron2_forward.13} parent=5 // pred_region
      %s139 = ssub.s32 %s10, 1
      // Predicated region
      $region13: #{tacotron2_forward.13} parent=11 // pred_check
        %p140 = pneg %p57
      $region14: #{tacotron2_forward.13} parent=11 // pred_check_branch
        %142 = sbr.rel (%p140) target = $region16
      $region15: #{tacotron2_forward.13} parent=11 // pred_region
        _
      $region16: #{tacotron2_forward.13} parent=11 // pred_fallthru
        _
      // Predicated region
      $region17: #{tacotron2_forward.13} parent=11 // pred_check
        %p143 = pneg %p78
      $region18: #{tacotron2_forward.13} parent=11 // pred_check_branch
        %145 = sbr.rel (%p143) target = $region20
      $region19: #{tacotron2_forward.13} parent=11 // pred_region
        _
      $region20: #{tacotron2_forward.13} parent=11 // pred_fallthru
        _
      // Predicated region
      $region21: #{tacotron2_forward.13} parent=11 // pred_check
        %p146 = pneg %p99
      $region22: #{tacotron2_forward.13} parent=11 // pred_check_branch
        %148 = sbr.rel (%p146) target = $region24
      $region23: #{tacotron2_forward.13} parent=11 // pred_region
        _
      $region24: #{tacotron2_forward.13} parent=11 // pred_fallthru
        _
    $region12: #{tacotron2_forward.13} parent=5 // pred_fallthru
      _
    %p149 = scmp.lt.s32.totalorder %s10, 2
    // Predicated region
    $region25: #{tacotron2_forward.13} parent=5 // pred_check
      %p150 = pneg %p149
    $region26: #{tacotron2_forward.13} parent=5 // pred_check_branch
      %152 = sbr.rel (%p150) target = $region28
    $region27: #{tacotron2_forward.13} parent=5 // pred_region
      // Predicated region
      $region29: #{tacotron2_forward.13} parent=27 // pred_check
        %p153 = pneg %p30
      $region30: #{tacotron2_forward.13} parent=27 // pred_check_branch
        %155 = sbr.rel (%p153) target = $region32
      $region31: #{tacotron2_forward.13} parent=27 // pred_region
        %s156 = smul.u32 30, %s10
        %p157 = scmp.lt.s32.totalorder %s156, 59
        %s158 = scalar_select %p157, %s156, 59
        %s159 = smul.addr %s158, 5
        %s160 = smul.addr %s159, 4
        %s161 = scalar_lea.vmem %s0, %s160
        %s162 = smul.u32 30, %s10
      $region32: #{tacotron2_forward.13} parent=27 // pred_fallthru
        _
    $region28: #{tacotron2_forward.13} parent=5 // pred_fallthru
      _
    %p163 = scmp.le.s32.totalorder 1, %s10
    %p164 = scmp.lt.s32.totalorder %s10, 3
    %p165 = pnand %p163, %p164
    %p166 = pneg %p165
    // Predicated region
    $region33: #{tacotron2_forward.13} parent=5 // pred_check
      _
    $region34: #{tacotron2_forward.13} parent=5 // pred_check_branch
      %168 = sbr.rel (%p165) target = $region36
    $region35: #{tacotron2_forward.13} parent=5 // pred_region
      %s169 = ssub.s32 %s10, 1
      %s170 = smul.u32 30, %s15
      %p171 = scmp.lt.s32.totalorder %s170, 59
      %s172 = scalar_select %p171, %s170, 59
      %s173 = smul.addr %s172, 5
      %s174 = smul.addr %s173, 4
      %s175 = scalar_lea.vmem %s0, %s174
      %p176 = pneg %p36
      %p177 = pneg %p33
      %p178 = pneg %p57
      %p179 = pneg %p54
      %p180 = pneg %p78
      %p181 = pneg %p75
      %p182 = pneg %p99
      %p183 = pneg %p96
      %p184 = pneg %p125
      %p185 = pneg %p122
      %s186 = smul.u32 30, %s15
      %p187 = scmp.lt.s32.totalorder %s186, 59
      %s188 = scalar_select %p187, %s186, 59
      %s189 = smul.addr %s188, 8
      %s190 = scalar_lea.vmem %s4, %s189
      %s191 = smul.u32 30, %s15
      %p192 = scmp.lt.s32.totalorder %s191, 59
      %s193 = scalar_select %p192, %s191, 59
      %s194 = smul.addr %s193, 5
      %s195 = smul.addr %s194, 4
      %s196 = scalar_lea.vmem %s0, %s195
      %s197 = smul.u32 30, %s15
      %s198 = smul.u32 30, %s15
      %p199 = scmp.lt.s32.totalorder %s198, 59
      %s200 = scalar_select %p199, %s198, 59
      %s201 = smul.addr %s200, 8
      %s202 = scalar_lea.vmem %s4, %s201
      %s203 = smul.u32 30, %s15
      %v205 = vld [vmem:[%s196] sm:$0xff]
      %v206 = vld [vmem:[%s196 + $0x8] sm:$0xff]
      %v207 = vld [vmem:[%s196 + $0x10] sm:$0xf]
      %v208 = vld [vmem:[%s196 + $0x14] sm:$0xff]
      %v209 = vld [vmem:[%s196 + $0x1c] sm:$0xff]
      %v210 = vld [vmem:[%s196 + $0x24] sm:$0xf]
      %v211 = vld [vmem:[%s196 + $0x28] sm:$0xff]
      %v212 = vld [vmem:[%s196 + $0x30] sm:$0xff]
      %v213 = vld [vmem:[%s196 + $0x38] sm:$0xf]
      %v214 = vld [vmem:[%s196 + $0x3c] sm:$0xff]
      %v215 = vld [vmem:[%s196 + $0x44] sm:$0xff]
      %v216 = vld [vmem:[%s196 + $0x4c] sm:$0xf]
      %v217 = vld [vmem:[%s196 + $0x50] sm:$0xff]
      %v218 = vld [vmem:[%s196 + $0x58] sm:$0xff]
      %v219 = vld [vmem:[%s196 + $0x60] sm:$0xf]
      %v220 = vld [vmem:[%s196 + $0x64] sm:$0xff]
      %v221 = vld [vmem:[%s196 + $0x6c] sm:$0xff]
      %v222 = vld [vmem:[%s196 + $0x74] sm:$0xf]
      %v223 = vld [vmem:[%s196 + $0x78] sm:$0xff]
      %v224 = vld [vmem:[%s196 + $0x80] sm:$0xff]
      %v225 = vld [vmem:[%s196 + $0x88] sm:$0xf]
      %v226 = vld [vmem:[%s196 + $0x8c] sm:$0xff]
      %v227 = vld [vmem:[%s196 + $0x94] sm:$0xff]
      %v228 = vld [vmem:[%s196 + $0x9c] sm:$0xf]
      %v229 = vld [vmem:[%s196 + $0xa0] sm:$0xff]
      %v230 = vld [vmem:[%s196 + $0xa8] sm:$0xff]
      %v231 = vld [vmem:[%s196 + $0xb0] sm:$0xf]
      %v232 = vld [vmem:[%s196 + $0xb4] sm:$0xff]
      %v233 = vld [vmem:[%s196 + $0xbc] sm:$0xff]
      %v234 = vld [vmem:[%s196 + $0xc4] sm:$0xf]
      %v235 = vld [vmem:[%s196 + $0xc8] sm:$0xff]
      %v236 = vld [vmem:[%s196 + $0xd0] sm:$0xff]
      %v237 = vld [vmem:[%s196 + $0xd8] sm:$0xf]
      %v238 = vld [vmem:[%s196 + $0xdc] sm:$0xff]
      %v239 = vld [vmem:[%s196 + $0xe4] sm:$0xff]
      %v240 = vld [vmem:[%s196 + $0xec] sm:$0xf]
      %v241 = vld [vmem:[%s196 + $0xf0] sm:$0xff]
      %v242 = vld [vmem:[%s196 + $0xf8] sm:$0xff]
      %v243 = vld [vmem:[%s196 + $0x100] sm:$0xf]
      %v244 = vld [vmem:[%s196 + $0x104] sm:$0xff]
      %v245 = vld [vmem:[%s196 + $0x10c] sm:$0xff]
      %v246 = vld [vmem:[%s196 + $0x114] sm:$0xf]
      %v247 = vld [vmem:[%s196 + $0x118] sm:$0xff]
      %v248 = vld [vmem:[%s196 + $0x120] sm:$0xff]
      %v249 = vld [vmem:[%s196 + $0x128] sm:$0xf]
      %v250 = vld [vmem:[%s196 + $0x12c] sm:$0xff]
      %v251 = vld [vmem:[%s196 + $0x134] sm:$0xff]
      %v252 = vld [vmem:[%s196 + $0x13c] sm:$0xf]
      %v253 = vld [vmem:[%s196 + $0x140] sm:$0xff]
      %v254 = vld [vmem:[%s196 + $0x148] sm:$0xff]
      %v255 = vld [vmem:[%s196 + $0x150] sm:$0xf]
      %v256 = vld [vmem:[%s196 + $0x154] sm:$0xff]
      %v257 = vld [vmem:[%s196 + $0x15c] sm:$0xff]
      %v258 = vld [vmem:[%s196 + $0x164] sm:$0xf]
      %v259 = vld [vmem:[%s196 + $0x168] sm:$0xff]
      %v260 = vld [vmem:[%s196 + $0x170] sm:$0xff]
      %v261 = vld [vmem:[%s196 + $0x178] sm:$0xf]
      %v262 = vld [vmem:[%s196 + $0x17c] sm:$0xff]
      %v263 = vld [vmem:[%s196 + $0x184] sm:$0xff]
      %v264 = vld [vmem:[%s196 + $0x18c] sm:$0xf]
      %v265 = vld [vmem:[%s196 + $0x190] sm:$0xff]
      %v266 = vld [vmem:[%s196 + $0x198] sm:$0xff]
      %v267 = vld [vmem:[%s196 + $0x1a0] sm:$0xf]
      %v268 = vld [vmem:[%s196 + $0x1a4] sm:$0xff]
      %v269 = vld [vmem:[%s196 + $0x1ac] sm:$0xff]
      %v270 = vld [vmem:[%s196 + $0x1b4] sm:$0xf]
      %v271 = vld [vmem:[%s196 + $0x1b8] sm:$0xff]
      %v272 = vld [vmem:[%s196 + $0x1c0] sm:$0xff]
      %v273 = vld [vmem:[%s196 + $0x1c8] sm:$0xf]
      %v274 = vld [vmem:[%s196 + $0x1cc] sm:$0xff]
      %v275 = vld [vmem:[%s196 + $0x1d4] sm:$0xff]
      %v276 = vld [vmem:[%s196 + $0x1dc] sm:$0xf]
      %v277 = vld [vmem:[%s196 + $0x1e0] sm:$0xff]
      %v278 = vld [vmem:[%s196 + $0x1e8] sm:$0xff]
      %v279 = vld [vmem:[%s196 + $0x1f0] sm:$0xf]
      %v280 = vld [vmem:[%s196 + $0x1f4] sm:$0xff]
      %v281 = vld [vmem:[%s196 + $0x1fc] sm:$0xff]
      %v282 = vld [vmem:[%s196 + $0x204] sm:$0xf]
      %v283 = vld [vmem:[%s196 + $0x208] sm:$0xff]
      %v284 = vld [vmem:[%s196 + $0x210] sm:$0xff]
      %v285 = vld [vmem:[%s196 + $0x218] sm:$0xf]
      %v286 = vld [vmem:[%s196 + $0x21c] sm:$0xff]
      %v287 = vld [vmem:[%s196 + $0x224] sm:$0xff]
      %v288 = vld [vmem:[%s196 + $0x22c] sm:$0xf]
      %v289 = vld [vmem:[%s196 + $0x230] sm:$0xff]
      %v290 = vld [vmem:[%s196 + $0x238] sm:$0xff]
      %v291 = vld [vmem:[%s196 + $0x240] sm:$0xf]
      %v292 = vld [vmem:[%s196 + $0x244] sm:$0xff]
      %v293 = vld [vmem:[%s196 + $0x24c] sm:$0xff]
      %v294 = vld [vmem:[%s196 + $0x254] sm:$0xf]
      %v295 = vld [vmem:[%s1] sm:$0xf]
      %v296 = vld [vmem:[%s1 + $0x4] sm:$0xf]
      %v297 = vld [vmem:[%s1 + $0x8] sm:$0xf]
      %v298 = vld [vmem:[%s1 + $0xc] sm:$0xf]
      %v299 = vld [vmem:[%s1 + $0x10] sm:$0xf]
      %v300 = vld [vmem:[%s1 + $0x14] sm:$0xf]
      %v301 = vld [vmem:[%s1 + $0x18] sm:$0xf]
      %v302 = vld [vmem:[%s1 + $0x1c] sm:$0xf]
      %v303 = vld [vmem:[%s1 + $0x20] sm:$0xf]
      %v304 = vld [vmem:[%s1 + $0x24] sm:$0xf]
      %v305 = vld [vmem:[%s1 + $0x28] sm:$0xf]
      %v306 = vld [vmem:[%s1 + $0x2c] sm:$0xf]
      %v307 = vld [vmem:[%s1 + $0x30] sm:$0xf]
      %v308 = vld [vmem:[%s1 + $0x34] sm:$0xf]
      %v309 = vld [vmem:[%s1 + $0x38] sm:$0xf]
      %v310 = vld [vmem:[%s1 + $0x3c] sm:$0xf]
      %v311 = vld [vmem:[%s1 + $0x40] sm:$0xf]
      %v312 = vld [vmem:[%s1 + $0x44] sm:$0xf]
      %v313 = vld [vmem:[%s1 + $0x48] sm:$0xf]
      %v314 = vld [vmem:[%s1 + $0x4c] sm:$0xf]
      %v315 = vld [vmem:[%s1 + $0x50] sm:$0xf]
      %v316 = vld [vmem:[%s1 + $0x54] sm:$0xf]
      %v317 = vld [vmem:[%s1 + $0x58] sm:$0xf]
      %v318 = vld [vmem:[%s1 + $0x5c] sm:$0xf]
      %v319 = vld [vmem:[%s1 + $0x60] sm:$0xf]
      %v320 = vld [vmem:[%s1 + $0x64] sm:$0xf]
      %v321 = vld [vmem:[%s1 + $0x68] sm:$0xf]
      %v322 = vld [vmem:[%s1 + $0x6c] sm:$0xf]
      %v323 = vld [vmem:[%s1 + $0x70] sm:$0xf]
      %v324 = vld [vmem:[%s1 + $0x74] sm:$0xf]
      %v325 = vld [vmem:[%s1 + $0x78] sm:$0xf]
      %v326 = vld [vmem:[%s1 + $0x7c] sm:$0xf]
      %v327 = vld [vmem:[%s1 + $0x80] sm:$0xf]
      %v328 = vld [vmem:[%s1 + $0x84] sm:$0xf]
      %v329 = vld [vmem:[%s1 + $0x88] sm:$0xf]
      %v330 = vld [vmem:[%s1 + $0x8c] sm:$0xf]
      %v331 = vld [vmem:[%s1 + $0x90] sm:$0xf]
      %v332 = vld [vmem:[%s1 + $0x94] sm:$0xf]
      %v333 = vld [vmem:[%s1 + $0x98] sm:$0xf]
      %v334 = vld [vmem:[%s1 + $0x9c] sm:$0xf]
      %v335 = vld [vmem:[%s1 + $0xa0] sm:$0xf]
      %v336 = vld [vmem:[%s1 + $0xa4] sm:$0xf]
      %v337 = vld [vmem:[%s1 + $0xa8] sm:$0xf]
      %v338 = vld [vmem:[%s1 + $0xac] sm:$0xf]
      %v339 = vld [vmem:[%s1 + $0xb0] sm:$0xf]
      %v340 = vld [vmem:[%s1 + $0xb4] sm:$0xf]
      %v341 = vld [vmem:[%s1 + $0xb8] sm:$0xf]
      %v342 = vld [vmem:[%s1 + $0xbc] sm:$0xf]
      %v343 = vld [vmem:[%s1 + $0xc0] sm:$0xf]
      %v344 = vld [vmem:[%s1 + $0xc4] sm:$0xf]
      %v345 = vld [vmem:[%s1 + $0xc8] sm:$0xf]
      %v346 = vld [vmem:[%s1 + $0xcc] sm:$0xf]
      %v347 = vld [vmem:[%s1 + $0xd0] sm:$0xf]
      %v348 = vld [vmem:[%s1 + $0xd4] sm:$0xf]
      %v349 = vld [vmem:[%s1 + $0xd8] sm:$0xf]
      %v350 = vld [vmem:[%s1 + $0xdc] sm:$0xf]
      %v351 = vld [vmem:[%s1 + $0xe0] sm:$0xf]
      %v352 = vld [vmem:[%s1 + $0xe4] sm:$0xf]
      %v353 = vld [vmem:[%s1 + $0xe8] sm:$0xf]
      %v354 = vld [vmem:[%s1 + $0xec] sm:$0xf]
      %v355 = vld [vmem:[%s1 + $0xf0] sm:$0xf]
      %v356 = vld [vmem:[%s1 + $0xf4] sm:$0xf]
      %v357 = vld [vmem:[%s1 + $0xf8] sm:$0xf]
      %v358 = vld [vmem:[%s1 + $0xfc] sm:$0xf]
      %v359 = vld [vmem:[%s1 + $0x100] sm:$0xf]
      %v360 = vld [vmem:[%s1 + $0x104] sm:$0xf]
      %v361 = vld [vmem:[%s1 + $0x108] sm:$0xf]
      %v362 = vld [vmem:[%s1 + $0x10c] sm:$0xf]
      %v363 = vld [vmem:[%s1 + $0x110] sm:$0xf]
      %v364 = vld [vmem:[%s1 + $0x114] sm:$0xf]
      %v365 = vld [vmem:[%s1 + $0x118] sm:$0xf]
      %v366 = vld [vmem:[%s1 + $0x11c] sm:$0xf]
      %v367 = vld [vmem:[%s1 + $0x120] sm:$0xf]
      %v368 = vld [vmem:[%s1 + $0x124] sm:$0xf]
      %v369 = vld [vmem:[%s1 + $0x128] sm:$0xf]
      %v370 = vld [vmem:[%s1 + $0x12c] sm:$0xf]
      %v371 = vld [vmem:[%s1 + $0x130] sm:$0xf]
      %v372 = vld [vmem:[%s1 + $0x134] sm:$0xf]
      %v373 = vld [vmem:[%s1 + $0x138] sm:$0xf]
      %v374 = vld [vmem:[%s1 + $0x13c] sm:$0xf]
      %v465 = vunpack.c.l.b16 %v205
      %v466 = vunpack.c.h.b16 %v205
      %v467 = vunpack.c.l.b16 %v206
      %v468 = vunpack.c.h.b16 %v206
      %v469 = vunpack.c.l.b16 %v207
      %v470 = vunpack.c.l.b16 %v208
      %v471 = vunpack.c.h.b16 %v208
      %v472 = vunpack.c.l.b16 %v209
      %v473 = vunpack.c.h.b16 %v209
      %v474 = vunpack.c.l.b16 %v210
      %v475 = vunpack.c.l.b16 %v211
      %v476 = vunpack.c.h.b16 %v211
      %v477 = vunpack.c.l.b16 %v212
      %v478 = vunpack.c.h.b16 %v212
      %v479 = vunpack.c.l.b16 %v213
      %v480 = vunpack.c.l.b16 %v214
      %v481 = vunpack.c.h.b16 %v214
      %v482 = vunpack.c.l.b16 %v215
      %v483 = vunpack.c.h.b16 %v215
      %v484 = vunpack.c.l.b16 %v216
      %v485 = vunpack.c.l.b16 %v217
      %v486 = vunpack.c.h.b16 %v217
      %v487 = vunpack.c.l.b16 %v218
      %v488 = vunpack.c.h.b16 %v218
      %v489 = vunpack.c.l.b16 %v219
      %v490 = vunpack.c.l.b16 %v220
      %v491 = vunpack.c.h.b16 %v220
      %v492 = vunpack.c.l.b16 %v221
      %v493 = vunpack.c.h.b16 %v221
      %v494 = vunpack.c.l.b16 %v222
      %v495 = vunpack.c.l.b16 %v223
      %v496 = vunpack.c.h.b16 %v223
      %v497 = vunpack.c.l.b16 %v224
      %v498 = vunpack.c.h.b16 %v224
      %v499 = vunpack.c.l.b16 %v225
      %v500 = vunpack.c.l.b16 %v226
      %v501 = vunpack.c.h.b16 %v226
      %v502 = vunpack.c.l.b16 %v227
      %v503 = vunpack.c.h.b16 %v227
      %v504 = vunpack.c.l.b16 %v228
      %v505 = vunpack.c.l.b16 %v229
      %v506 = vunpack.c.h.b16 %v229
      %v507 = vunpack.c.l.b16 %v230
      %v508 = vunpack.c.h.b16 %v230
      %v509 = vunpack.c.l.b16 %v231
      %v510 = vunpack.c.l.b16 %v232
      %v511 = vunpack.c.h.b16 %v232
      %v512 = vunpack.c.l.b16 %v233
      %v513 = vunpack.c.h.b16 %v233
      %v514 = vunpack.c.l.b16 %v234
      %v515 = vunpack.c.l.b16 %v235
      %v516 = vunpack.c.h.b16 %v235
      %v517 = vunpack.c.l.b16 %v236
      %v518 = vunpack.c.h.b16 %v236
      %v519 = vunpack.c.l.b16 %v237
      %v520 = vunpack.c.l.b16 %v238
      %v521 = vunpack.c.h.b16 %v238
      %v522 = vunpack.c.l.b16 %v239
      %v523 = vunpack.c.h.b16 %v239
      %v524 = vunpack.c.l.b16 %v240
      %v525 = vunpack.c.l.b16 %v241
      %v526 = vunpack.c.h.b16 %v241
      %v527 = vunpack.c.l.b16 %v242
      %v528 = vunpack.c.h.b16 %v242
      %v529 = vunpack.c.l.b16 %v243
      %v530 = vunpack.c.l.b16 %v244
      %v531 = vunpack.c.h.b16 %v244
      %v532 = vunpack.c.l.b16 %v245
      %v533 = vunpack.c.h.b16 %v245
      %v534 = vunpack.c.l.b16 %v246
      %v535 = vunpack.c.l.b16 %v247
      %v536 = vunpack.c.h.b16 %v247
      %v537 = vunpack.c.l.b16 %v248
      %v538 = vunpack.c.h.b16 %v248
      %v539 = vunpack.c.l.b16 %v249
      %v540 = vunpack.c.l.b16 %v250
      %v541 = vunpack.c.h.b16 %v250
      %v542 = vunpack.c.l.b16 %v251
      %v543 = vunpack.c.h.b16 %v251
      %v544 = vunpack.c.l.b16 %v252
      %v545 = vunpack.c.l.b16 %v253
      %v546 = vunpack.c.h.b16 %v253
      %v547 = vunpack.c.l.b16 %v254
      %v548 = vunpack.c.h.b16 %v254
      %v549 = vunpack.c.l.b16 %v255
      %v550 = vunpack.c.l.b16 %v256
      %v551 = vunpack.c.h.b16 %v256
      %v552 = vunpack.c.l.b16 %v257
      %v553 = vunpack.c.h.b16 %v257
      %v554 = vunpack.c.l.b16 %v258
      %v555 = vunpack.c.l.b16 %v259
      %v556 = vunpack.c.h.b16 %v259
      %v557 = vunpack.c.l.b16 %v260
      %v558 = vunpack.c.h.b16 %v260
      %v559 = vunpack.c.l.b16 %v261
      %v560 = vunpack.c.l.b16 %v262
      %v561 = vunpack.c.h.b16 %v262
      %v562 = vunpack.c.l.b16 %v263
      %v563 = vunpack.c.h.b16 %v263
      %v564 = vunpack.c.l.b16 %v264
      %v565 = vunpack.c.l.b16 %v265
      %v566 = vunpack.c.h.b16 %v265
      %v567 = vunpack.c.l.b16 %v266
      %v568 = vunpack.c.h.b16 %v266
      %v569 = vunpack.c.l.b16 %v267
      %v570 = vunpack.c.l.b16 %v268
      %v571 = vunpack.c.h.b16 %v268
      %v572 = vunpack.c.l.b16 %v269
      %v573 = vunpack.c.h.b16 %v269
      %v574 = vunpack.c.l.b16 %v270
      %v575 = vunpack.c.l.b16 %v271
      %v576 = vunpack.c.h.b16 %v271
      %v577 = vunpack.c.l.b16 %v272
      %v578 = vunpack.c.h.b16 %v272
      %v579 = vunpack.c.l.b16 %v273
      %v580 = vunpack.c.l.b16 %v274
      %v581 = vunpack.c.h.b16 %v274
      %v582 = vunpack.c.l.b16 %v275
      %v583 = vunpack.c.h.b16 %v275
      %v584 = vunpack.c.l.b16 %v276
      %v585 = vunpack.c.l.b16 %v277
      %v586 = vunpack.c.h.b16 %v277
      %v587 = vunpack.c.l.b16 %v278
      %v588 = vunpack.c.h.b16 %v278
      %v589 = vunpack.c.l.b16 %v279
      %v590 = vunpack.c.l.b16 %v280
      %v591 = vunpack.c.h.b16 %v280
      %v592 = vunpack.c.l.b16 %v281
      %v593 = vunpack.c.h.b16 %v281
      %v594 = vunpack.c.l.b16 %v282
      %v595 = vunpack.c.l.b16 %v283
      %v596 = vunpack.c.h.b16 %v283
      %v597 = vunpack.c.l.b16 %v284
      %v598 = vunpack.c.h.b16 %v284
      %v599 = vunpack.c.l.b16 %v285
      %v600 = vunpack.c.l.b16 %v286
      %v601 = vunpack.c.h.b16 %v286
      %v602 = vunpack.c.l.b16 %v287
      %v603 = vunpack.c.h.b16 %v287
      %v604 = vunpack.c.l.b16 %v288
      %v605 = vunpack.c.l.b16 %v289
      %v606 = vunpack.c.h.b16 %v289
      %v607 = vunpack.c.l.b16 %v290
      %v608 = vunpack.c.h.b16 %v290
      %v609 = vunpack.c.l.b16 %v291
      %v610 = vunpack.c.l.b16 %v292
      %v611 = vunpack.c.h.b16 %v292
      %v612 = vunpack.c.l.b16 %v293
      %v613 = vunpack.c.h.b16 %v293
      %v614 = vunpack.c.l.b16 %v294
      %v615 = vpack.c.b16 %v470, %v465
      %v616 = vpack.c.b16 %v471, %v466
      %v617 = vpack.c.b16 %v472, %v467
      %v618 = vpack.c.b16 %v473, %v468
      %v619 = vpack.c.b16 %v474, %v469
      %v620 = vpack.c.b16 %v480, %v475
      %v621 = vpack.c.b16 %v481, %v476
      %v622 = vpack.c.b16 %v482, %v477
      %v623 = vpack.c.b16 %v483, %v478
      %v624 = vpack.c.b16 %v484, %v479
      %v625 = vpack.c.b16 %v490, %v485
      %v626 = vpack.c.b16 %v491, %v486
      %v627 = vpack.c.b16 %v492, %v487
      %v628 = vpack.c.b16 %v493, %v488
      %v629 = vpack.c.b16 %v494, %v489
      %v630 = vpack.c.b16 %v500, %v495
      %v631 = vpack.c.b16 %v501, %v496
      %v632 = vpack.c.b16 %v502, %v497
      %v633 = vpack.c.b16 %v503, %v498
      %v634 = vpack.c.b16 %v504, %v499
      %v635 = vpack.c.b16 %v510, %v505
      %v636 = vpack.c.b16 %v511, %v506
      %v637 = vpack.c.b16 %v512, %v507
      %v638 = vpack.c.b16 %v513, %v508
      %v639 = vpack.c.b16 %v514, %v509
      %v640 = vpack.c.b16 %v520, %v515
      %v641 = vpack.c.b16 %v521, %v516
      %v642 = vpack.c.b16 %v522, %v517
      %v643 = vpack.c.b16 %v523, %v518
      %v644 = vpack.c.b16 %v524, %v519
      %v645 = vpack.c.b16 %v530, %v525
      %v646 = vpack.c.b16 %v531, %v526
      %v647 = vpack.c.b16 %v532, %v527
      %v648 = vpack.c.b16 %v533, %v528
      %v649 = vpack.c.b16 %v534, %v529
      %v650 = vpack.c.b16 %v540, %v535
      %v651 = vpack.c.b16 %v541, %v536
      %v652 = vpack.c.b16 %v542, %v537
      %v653 = vpack.c.b16 %v543, %v538
      %v654 = vpack.c.b16 %v544, %v539
      %v655 = vpack.c.b16 %v550, %v545
      %v656 = vpack.c.b16 %v551, %v546
      %v657 = vpack.c.b16 %v552, %v547
      %v658 = vpack.c.b16 %v553, %v548
      %v659 = vpack.c.b16 %v554, %v549
      %v660 = vpack.c.b16 %v560, %v555
      %v661 = vpack.c.b16 %v561, %v556
      %v662 = vpack.c.b16 %v562, %v557
      %v663 = vpack.c.b16 %v563, %v558
      %v664 = vpack.c.b16 %v564, %v559
      %v665 = vpack.c.b16 %v570, %v565
      %v666 = vpack.c.b16 %v571, %v566
      %v667 = vpack.c.b16 %v572, %v567
      %v668 = vpack.c.b16 %v573, %v568
      %v669 = vpack.c.b16 %v574, %v569
      %v670 = vpack.c.b16 %v580, %v575
      %v671 = vpack.c.b16 %v581, %v576
      %v672 = vpack.c.b16 %v582, %v577
      %v673 = vpack.c.b16 %v583, %v578
      %v674 = vpack.c.b16 %v584, %v579
      %v675 = vpack.c.b16 %v590, %v585
      %v676 = vpack.c.b16 %v591, %v586
      %v677 = vpack.c.b16 %v592, %v587
      %v678 = vpack.c.b16 %v593, %v588
      %v679 = vpack.c.b16 %v594, %v589
      %v680 = vpack.c.b16 %v600, %v595
      %v681 = vpack.c.b16 %v601, %v596
      %v682 = vpack.c.b16 %v602, %v597
      %v683 = vpack.c.b16 %v603, %v598
      %v684 = vpack.c.b16 %v604, %v599
      %v685 = vpack.c.b16 %v610, %v605
      %v686 = vpack.c.b16 %v611, %v606
      %v687 = vpack.c.b16 %v612, %v607
      %v688 = vpack.c.b16 %v613, %v608
      %v689 = vpack.c.b16 %v614, %v609
      %v845 = vunpack.c.l.b16 %v295
      %v846 = vunpack.c.l.b16 %v296
      %v847 = vunpack.c.l.b16 %v297
      %v848 = vunpack.c.l.b16 %v298
      %v849 = vunpack.c.l.b16 %v299
      %v850 = vunpack.c.l.b16 %v300
      %v851 = vunpack.c.l.b16 %v301
      %v852 = vunpack.c.l.b16 %v302
      %v853 = vunpack.c.l.b16 %v303
      %v854 = vunpack.c.l.b16 %v304
      %v855 = vunpack.c.l.b16 %v305
      %v856 = vunpack.c.l.b16 %v306
      %v857 = vunpack.c.l.b16 %v307
      %v858 = vunpack.c.l.b16 %v308
      %v859 = vunpack.c.l.b16 %v309
      %v860 = vunpack.c.l.b16 %v310
      %v861 = vunpack.c.l.b16 %v311
      %v862 = vunpack.c.l.b16 %v312
      %v863 = vunpack.c.l.b16 %v313
      %v864 = vunpack.c.l.b16 %v314
      %v865 = vunpack.c.l.b16 %v315
      %v866 = vunpack.c.l.b16 %v316
      %v867 = vunpack.c.l.b16 %v317
      %v868 = vunpack.c.l.b16 %v318
      %v869 = vunpack.c.l.b16 %v319
      %v870 = vunpack.c.l.b16 %v320
      %v871 = vunpack.c.l.b16 %v321
      %v872 = vunpack.c.l.b16 %v322
      %v873 = vunpack.c.l.b16 %v323
      %v874 = vunpack.c.l.b16 %v324
      %v875 = vunpack.c.l.b16 %v325
      %v876 = vunpack.c.l.b16 %v326
      %v877 = vunpack.c.l.b16 %v327
      %v878 = vunpack.c.l.b16 %v328
      %v879 = vunpack.c.l.b16 %v329
      %v880 = vunpack.c.l.b16 %v330
      %v881 = vunpack.c.l.b16 %v331
      %v882 = vunpack.c.l.b16 %v332
      %v883 = vunpack.c.l.b16 %v333
      %v884 = vunpack.c.l.b16 %v334
      %v885 = vunpack.c.l.b16 %v335
      %v886 = vunpack.c.l.b16 %v336
      %v887 = vunpack.c.l.b16 %v337
      %v888 = vunpack.c.l.b16 %v338
      %v889 = vunpack.c.l.b16 %v339
      %v890 = vunpack.c.l.b16 %v340
      %v891 = vunpack.c.l.b16 %v341
      %v892 = vunpack.c.l.b16 %v342
      %v893 = vunpack.c.l.b16 %v343
      %v894 = vunpack.c.l.b16 %v344
      %v895 = vunpack.c.l.b16 %v345
      %v896 = vunpack.c.l.b16 %v346
      %v897 = vunpack.c.l.b16 %v347
      %v898 = vunpack.c.l.b16 %v348
      %v899 = vunpack.c.l.b16 %v349
      %v900 = vunpack.c.l.b16 %v350
      %v901 = vunpack.c.l.b16 %v351
      %v902 = vunpack.c.l.b16 %v352
      %v903 = vunpack.c.l.b16 %v353
      %v904 = vunpack.c.l.b16 %v354
      %v905 = vunpack.c.l.b16 %v355
      %v906 = vunpack.c.l.b16 %v356
      %v907 = vunpack.c.l.b16 %v357
      %v908 = vunpack.c.l.b16 %v358
      %v909 = vunpack.c.l.b16 %v359
      %v910 = vunpack.c.l.b16 %v360
      %v911 = vunpack.c.l.b16 %v361
      %v912 = vunpack.c.l.b16 %v362
      %v913 = vunpack.c.l.b16 %v363
      %v914 = vunpack.c.l.b16 %v364
      %v915 = vunpack.c.l.b16 %v365
      %v916 = vunpack.c.l.b16 %v366
      %v917 = vunpack.c.l.b16 %v367
      %v918 = vunpack.c.l.b16 %v368
      %v919 = vunpack.c.l.b16 %v369
      %v920 = vunpack.c.l.b16 %v370
      %v921 = vunpack.c.l.b16 %v371
      %v922 = vunpack.c.l.b16 %v372
      %v923 = vunpack.c.l.b16 %v373
      %v924 = vunpack.c.l.b16 %v374
      %v925 = vpack.c.b16 %v846, %v845
      %v926 = vpack.c.b16 %v848, %v847
      %v927 = vpack.c.b16 %v850, %v849
      %v928 = vpack.c.b16 %v852, %v851
      %v929 = vpack.c.b16 %v854, %v853
      %v930 = vpack.c.b16 %v856, %v855
      %v931 = vpack.c.b16 %v858, %v857
      %v932 = vpack.c.b16 %v860, %v859
      %v933 = vpack.c.b16 %v862, %v861
      %v934 = vpack.c.b16 %v864, %v863
      %v935 = vpack.c.b16 %v866, %v865
      %v936 = vpack.c.b16 %v868, %v867
      %v937 = vpack.c.b16 %v870, %v869
      %v938 = vpack.c.b16 %v872, %v871
      %v939 = vpack.c.b16 %v874, %v873
      %v940 = vpack.c.b16 %v876, %v875
      %v941 = vpack.c.b16 %v878, %v877
      %v942 = vpack.c.b16 %v880, %v879
      %v943 = vpack.c.b16 %v882, %v881
      %v944 = vpack.c.b16 %v884, %v883
      %v945 = vpack.c.b16 %v886, %v885
      %v946 = vpack.c.b16 %v888, %v887
      %v947 = vpack.c.b16 %v890, %v889
      %v948 = vpack.c.b16 %v892, %v891
      %v949 = vpack.c.b16 %v894, %v893
      %v950 = vpack.c.b16 %v896, %v895
      %v951 = vpack.c.b16 %v898, %v897
      %v952 = vpack.c.b16 %v900, %v899
      %v953 = vpack.c.b16 %v902, %v901
      %v954 = vpack.c.b16 %v904, %v903
      %v955 = vpack.c.b16 %v906, %v905
      %v956 = vpack.c.b16 %v908, %v907
      %v957 = vpack.c.b16 %v910, %v909
      %v958 = vpack.c.b16 %v912, %v911
      %v959 = vpack.c.b16 %v914, %v913
      %v960 = vpack.c.b16 %v916, %v915
      %v961 = vpack.c.b16 %v918, %v917
      %v962 = vpack.c.b16 %v920, %v919
      %v963 = vpack.c.b16 %v922, %v921
      %v964 = vpack.c.b16 %v924, %v923
      %1005 = vmatprep.subr.bf16.mxu0 0
      %1006 = vmatpush1.bf16.msra.mxu0 %v925
      %1007 = vmatprep.subr.bf16.mxu0 0
      %1008 = vmatpush1.bf16.msra.mxu0 %v926
      %1009 = vmatprep.subr.bf16.mxu0 0
      %1010 = vmatpush1.bf16.msra.mxu0 %v927
      %1011 = vmatprep.subr.bf16.mxu0 0
      %1012 = vmatpush1.bf16.msra.mxu0 %v928
      %1013 = vmatprep.subr.bf16.mxu0 0
      %1014 = vmatpush1.bf16.msra.mxu0 %v929
      %1015 = vmatprep.subr.bf16.mxu0 0
      %1016 = vmatpush1.bf16.msra.mxu0 %v930
      %1017 = vmatprep.subr.bf16.mxu0 0
      %1018 = vmatpush1.bf16.msra.mxu0 %v931
      %1019 = vmatprep.subr.bf16.mxu0 0
      %1020 = vmatpush1.bf16.msra.mxu0 %v932
      %1021 = vmatprep.subr.bf16.mxu0 0
      %1022 = vmatpush1.bf16.msra.mxu0 %v933
      %1023 = vmatprep.subr.bf16.mxu0 0
      %1024 = vmatpush1.bf16.msra.mxu0 %v934
      %1025 = vmatprep.subr.bf16.mxu0 0
      %1026 = vmatpush1.bf16.msra.mxu0 %v935
      %1027 = vmatprep.subr.bf16.mxu0 0
      %1028 = vmatpush1.bf16.msra.mxu0 %v936
      %1029 = vmatprep.subr.bf16.mxu0 0
      %1030 = vmatpush1.bf16.msra.mxu0 %v937
      %1031 = vmatprep.subr.bf16.mxu0 0
      %1032 = vmatpush1.bf16.msra.mxu0 %v938
      %1033 = vmatprep.subr.bf16.mxu0 0
      %1034 = vmatpush1.bf16.msra.mxu0 %v939
      %1035 = vmatprep.subr.bf16.mxu0 0
      %1036 = vmatpush1.bf16.msra.mxu0 %v940
      %1037 = vmatprep.mubr.bf16.mxu0 %v616
      %1038 = vmatmul.mubr.bf16.gmra.mrb[0].mxu0 %v615
      %v1039 = vpop.f32.mrb[0].mxu0
      %v1040 = vadd.f32 0.0, %v1039
      %v1041 = vpop.f32.mrb[0].mxu0
      %v1042 = vpop.f32.mrb[0].mxu0
      %v1043 = vadd.f32 0.0, %v1042
      %v1044 = vpop.f32.mrb[0].mxu0
      %1045 = vmatprep.mubr.bf16.mxu0 %v621
      %1046 = vmatmul.mubr.bf16.gmra.mrb[0].mxu0 %v620
      %v1047 = vpop.f32.mrb[0].mxu0
      %v1048 = vadd.f32 0.0, %v1047
      %v1049 = vpop.f32.mrb[0].mxu0
      %v1050 = vpop.f32.mrb[0].mxu0
      %v1051 = vadd.f32 0.0, %v1050
      %v1052 = vpop.f32.mrb[0].mxu0
      %1053 = vmatprep.mubr.bf16.mxu0 %v626
      %1054 = vmatmul.mubr.bf16.gmra.mrb[0].mxu0 %v625
      %v1055 = vpop.f32.mrb[0].mxu0
      %v1056 = vadd.f32 0.0, %v1055
      %v1057 = vpop.f32.mrb[0].mxu0
      %v1058 = vpop.f32.mrb[0].mxu0
      %v1059 = vadd.f32 0.0, %v1058
      %v1060 = vpop.f32.mrb[0].mxu0
      %1061 = vmatprep.mubr.bf16.mxu0 %v631
      %1062 = vmatmul.mubr.bf16.gmra.mrb[0].mxu0 %v630
      %v1063 = vpop.f32.mrb[0].mxu0
      %v1064 = vadd.f32 0.0, %v1063
      %v1065 = vpop.f32.mrb[0].mxu0
      %v1066 = vpop.f32.mrb[0].mxu0
      %v1067 = vadd.f32 0.0, %v1066
      %v1068 = vpop.f32.mrb[0].mxu0
      %1069 = vmatprep.mubr.bf16.mxu0 %v636
      %1070 = vmatmul.mubr.bf16.gmra.mrb[0].mxu0 %v635
      %v1071 = vpop.f32.mrb[0].mxu0
      %v1072 = vadd.f32 0.0, %v1071
      %v1073 = vpop.f32.mrb[0].mxu0
      %v1074 = vpop.f32.mrb[0].mxu0
      %v1075 = vadd.f32 0.0, %v1074
      %v1076 = vpop.f32.mrb[0].mxu0
      %1077 = vmatprep.mubr.bf16.mxu0 %v641
      %1078 = vmatmul.mubr.bf16.gmra.mrb[0].mxu0 %v640
      %v1079 = vpop.f32.mrb[0].mxu0
      %v1080 = vadd.f32 0.0, %v1079
      %v1081 = vpop.f32.mrb[0].mxu0
      %v1082 = vpop.f32.mrb[0].mxu0
      %v1083 = vadd.f32 0.0, %v1082
      %v1084 = vpop.f32.mrb[0].mxu0
      %1085 = vmatprep.mubr.bf16.mxu0 %v646
      %1086 = vmatmul.mubr.bf16.gmra.mrb[0].mxu0 %v645
      %v1087 = vpop.f32.mrb[0].mxu0
      %v1088 = vadd.f32 0.0, %v1087
      %v1089 = vpop.f32.mrb[0].mxu0
      %v1090 = vpop.f32.mrb[0].mxu0
      %v1091 = vadd.f32 0.0, %v1090
      %v1092 = vpop.f32.mrb[0].mxu0
      %1093 = vmatprep.mubr.bf16.mxu0 %v651
      %1094 = vmatmul.mubr.bf16.gmra.mrb[0].mxu0 %v650
      %v1095 = vpop.f32.mrb[0].mxu0
      %v1096 = vadd.f32 0.0, %v1095
      %v1097 = vpop.f32.mrb[0].mxu0
      %v1098 = vpop.f32.mrb[0].mxu0
      %v1099 = vadd.f32 0.0, %v1098
      %v1100 = vpop.f32.mrb[0].mxu0
      %1101 = vmatprep.mubr.bf16.mxu0 %v656
      %1102 = vmatmul.mubr.bf16.gmra.mrb[0].mxu0 %v655
      %v1103 = vpop.f32.mrb[0].mxu0
      %v1104 = vadd.f32 0.0, %v1103
      %v1105 = vpop.f32.mrb[0].mxu0
      %v1106 = vpop.f32.mrb[0].mxu0
      %v1107 = vadd.f32 0.0, %v1106
      %v1108 = vpop.f32.mrb[0].mxu0
      %1109 = vmatprep.mubr.bf16.mxu0 %v661
      %1110 = vmatmul.mubr.bf16.gmra.mrb[0].mxu0 %v660
      %v1111 = vpop.f32.mrb[0].mxu0
      %v1112 = vadd.f32 0.0, %v1111
      %v1113 = vpop.f32.mrb[0].mxu0
      %v1114 = vpop.f32.mrb[0].mxu0
      %v1115 = vadd.f32 0.0, %v1114
      %v1116 = vpop.f32.mrb[0].mxu0
      %1117 = vmatprep.mubr.bf16.mxu0 %v666
      %1118 = vmatmul.mubr.bf16.gmra.mrb[0].mxu0 %v665
      %v1119 = vpop.f32.mrb[0].mxu0
      %v1120 = vadd.f32 0.0, %v1119
      %v1121 = vpop.f32.mrb[0].mxu0
      %v1122 = vpop.f32.mrb[0].mxu0
      %v1123 = vadd.f32 0.0, %v1122
      %v1124 = vpop.f32.mrb[0].mxu0
      %1125 = vmatprep.mubr.bf16.mxu0 %v671
      %1126 = vmatmul.mubr.bf16.gmra.mrb[0].mxu0 %v670
      %v1127 = vpop.f32.mrb[0].mxu0
      %v1128 = vadd.f32 0.0, %v1127
      %v1129 = vpop.f32.mrb[0].mxu0
      %v1130 = vpop.f32.mrb[0].mxu0
      %v1131 = vadd.f32 0.0, %v1130
      %v1132 = vpop.f32.mrb[0].mxu0
      %1133 = vmatprep.mubr.bf16.mxu0 %v676
      %1134 = vmatmul.mubr.bf16.gmra.mrb[0].mxu0 %v675
      %v1135 = vpop.f32.mrb[0].mxu0
      %v1136 = vadd.f32 0.0, %v1135
      %v1137 = vpop.f32.mrb[0].mxu0
      %v1138 = vpop.f32.mrb[0].mxu0
      %v1139 = vadd.f32 0.0, %v1138
      %v1140 = vpop.f32.mrb[0].mxu0
      %1141 = vmatprep.mubr.bf16.mxu0 %v681
      %1142 = vmatmul.mubr.bf16.gmra.mrb[0].mxu0 %v680
      %v1143 = vpop.f32.mrb[0].mxu0
      %v1144 = vadd.f32 0.0, %v1143
      %v1145 = vpop.f32.mrb[0].mxu0
      %v1146 = vpop.f32.mrb[0].mxu0
      %v1147 = vadd.f32 0.0, %v1146
      %v1148 = vpop.f32.mrb[0].mxu0
      %1149 = vmatprep.mubr.bf16.mxu0 %v686
      %1150 = vmatmul.mubr.bf16.gmra.mrb[0].mxu0 %v685
      %v1151 = vpop.f32.mrb[0].mxu0
      %v1152 = vadd.f32 0.0, %v1151
      %v1153 = vpop.f32.mrb[0].mxu0
      %v1154 = vpop.f32.mrb[0].mxu0
      %v1155 = vadd.f32 0.0, %v1154
      %v1156 = vpop.f32.mrb[0].mxu0
      %1157 = vdwg.mxu0
      %1158 = vmatprep.subr.bf16.mxu0 0
      %1159 = vmatpush1.bf16.msra.mxu0 %v941
      %1160 = vmatprep.subr.bf16.mxu0 0
      %1161 = vmatpush1.bf16.msra.mxu0 %v942
      %1162 = vmatprep.subr.bf16.mxu0 0
      %1163 = vmatpush1.bf16.msra.mxu0 %v943
      %1164 = vmatprep.subr.bf16.mxu0 0
      %1165 = vmatpush1.bf16.msra.mxu0 %v944
      %1166 = vmatprep.subr.bf16.mxu0 0
      %1167 = vmatpush1.bf16.msra.mxu0 %v945
      %1168 = vmatprep.subr.bf16.mxu0 0
      %1169 = vmatpush1.bf16.msra.mxu0 %v946
      %1170 = vmatprep.subr.bf16.mxu0 0
      %1171 = vmatpush1.bf16.msra.mxu0 %v947
      %1172 = vmatprep.subr.bf16.mxu0 0
      %1173 = vmatpush1.bf16.msra.mxu0 %v948
      %1174 = vmatprep.subr.bf16.mxu0 0
      %1175 = vmatpush1.bf16.msra.mxu0 %v949
      %1176 = vmatprep.subr.bf16.mxu0 0
      %1177 = vmatpush1.bf16.msra.mxu0 %v950
      %1178 = vmatprep.subr.bf16.mxu0 0
      %1179 = vmatpush1.bf16.msra.mxu0 %v951
      %1180 = vmatprep.subr.bf16.mxu0 0
      %1181 = vmatpush1.bf16.msra.mxu0 %v952
      %1182 = vmatprep.subr.bf16.mxu0 0
      %1183 = vmatpush1.bf16.msra.mxu0 %v953
      %1184 = vmatprep.subr.bf16.mxu0 0
      %1185 = vmatpush1.bf16.msra.mxu0 %v954
      %1186 = vmatprep.subr.bf16.mxu0 0
      %1187 = vmatpush1.bf16.msra.mxu0 %v955
      %1188 = vmatprep.subr.bf16.mxu0 0
      %1189 = vmatpush1.bf16.msra.mxu0 %v956
      %1190 = vmatprep.mubr.bf16.mxu0 %v618
      %1191 = vmatmul.mubr.bf16.gmra.mrb[0].mxu0 %v617
      %v1192 = vpop.f32.mrb[0].mxu0
      %v1193 = vadd.f32 %v1040, %v1192
      %v1194 = vpop.f32.mrb[0].mxu0
      %v1195 = vpop.f32.mrb[0].mxu0
      %v1196 = vadd.f32 %v1043, %v1195
      %v1197 = vpop.f32.mrb[0].mxu0
      %1198 = vmatprep.mubr.bf16.mxu0 %v623
      %1199 = vmatmul.mubr.bf16.gmra.mrb[0].mxu0 %v622
      %v1200 = vpop.f32.mrb[0].mxu0
      %v1201 = vadd.f32 %v1048, %v1200
      %v1202 = vpop.f32.mrb[0].mxu0
      %v1203 = vpop.f32.mrb[0].mxu0
      %v1204 = vadd.f32 %v1051, %v1203
      %v1205 = vpop.f32.mrb[0].mxu0
      %1206 = vmatprep.mubr.bf16.mxu0 %v628
      %1207 = vmatmul.mubr.bf16.gmra.mrb[0].mxu0 %v627
      %v1208 = vpop.f32.mrb[0].mxu0
      %v1209 = vadd.f32 %v1056, %v1208
      %v1210 = vpop.f32.mrb[0].mxu0
      %v1211 = vpop.f32.mrb[0].mxu0
      %v1212 = vadd.f32 %v1059, %v1211
      %v1213 = vpop.f32.mrb[0].mxu0
      %1214 = vmatprep.mubr.bf16.mxu0 %v633
      %1215 = vmatmul.mubr.bf16.gmra.mrb[0].mxu0 %v632
      %v1216 = vpop.f32.mrb[0].mxu0
      %v1217 = vadd.f32 %v1064, %v1216
      %v1218 = vpop.f32.mrb[0].mxu0
      %v1219 = vpop.f32.mrb[0].mxu0
      %v1220 = vadd.f32 %v1067, %v1219
      %v1221 = vpop.f32.mrb[0].mxu0
      %1222 = vmatprep.mubr.bf16.mxu0 %v638
      %1223 = vmatmul.mubr.bf16.gmra.mrb[0].mxu0 %v637
      %v1224 = vpop.f32.mrb[0].mxu0
      %v1225 = vadd.f32 %v1072, %v1224
      %v1226 = vpop.f32.mrb[0].mxu0
      %v1227 = vpop.f32.mrb[0].mxu0
      %v1228 = vadd.f32 %v1075, %v1227
      %v1229 = vpop.f32.mrb[0].mxu0
      %1230 = vmatprep.mubr.bf16.mxu0 %v643
      %1231 = vmatmul.mubr.bf16.gmra.mrb[0].mxu0 %v642
      %v1232 = vpop.f32.mrb[0].mxu0
      %v1233 = vadd.f32 %v1080, %v1232
      %v1234 = vpop.f32.mrb[0].mxu0
      %v1235 = vpop.f32.mrb[0].mxu0
      %v1236 = vadd.f32 %v1083, %v1235
      %v1237 = vpop.f32.mrb[0].mxu0
      %1238 = vmatprep.mubr.bf16.mxu0 %v648
      %1239 = vmatmul.mubr.bf16.gmra.mrb[0].mxu0 %v647
      %v1240 = vpop.f32.mrb[0].mxu0
      %v1241 = vadd.f32 %v1088, %v1240
      %v1242 = vpop.f32.mrb[0].mxu0
      %v1243 = vpop.f32.mrb[0].mxu0
      %v1244 = vadd.f32 %v1091, %v1243
      %v1245 = vpop.f32.mrb[0].mxu0
      %1246 = vmatprep.mubr.bf16.mxu0 %v653
      %1247 = vmatmul.mubr.bf16.gmra.mrb[0].mxu0 %v652
      %v1248 = vpop.f32.mrb[0].mxu0
      %v1249 = vadd.f32 %v1096, %v1248
      %v1250 = vpop.f32.mrb[0].mxu0
      %v1251 = vpop.f32.mrb[0].mxu0
      %v1252 = vadd.f32 %v1099, %v1251
      %v1253 = vpop.f32.mrb[0].mxu0
      %1254 = vmatprep.mubr.bf16.mxu0 %v658
      %1255 = vmatmul.mubr.bf16.gmra.mrb[0].mxu0 %v657
      %v1256 = vpop.f32.mrb[0].mxu0
      %v1257 = vadd.f32 %v1104, %v1256
      %v1258 = vpop.f32.mrb[0].mxu0
      %v1259 = vpop.f32.mrb[0].mxu0
      %v1260 = vadd.f32 %v1107, %v1259
      %v1261 = vpop.f32.mrb[0].mxu0
      %1262 = vmatprep.mubr.bf16.mxu0 %v663
      %1263 = vmatmul.mubr.bf16.gmra.mrb[0].mxu0 %v662
      %v1264 = vpop.f32.mrb[0].mxu0
      %v1265 = vadd.f32 %v1112, %v1264
      %v1266 = vpop.f32.mrb[0].mxu0
      %v1267 = vpop.f32.mrb[0].mxu0
      %v1268 = vadd.f32 %v1115, %v1267
      %v1269 = vpop.f32.mrb[0].mxu0
      %1270 = vmatprep.mubr.bf16.mxu0 %v668
      %1271 = vmatmul.mubr.bf16.gmra.mrb[0].mxu0 %v667
      %v1272 = vpop.f32.mrb[0].mxu0
      %v1273 = vadd.f32 %v1120, %v1272
      %v1274 = vpop.f32.mrb[0].mxu0
      %v1275 = vpop.f32.mrb[0].mxu0
      %v1276 = vadd.f32 %v1123, %v1275
      %v1277 = vpop.f32.mrb[0].mxu0
      %1278 = vmatprep.mubr.bf16.mxu0 %v673
      %1279 = vmatmul.mubr.bf16.gmra.mrb[0].mxu0 %v672
      %v1280 = vpop.f32.mrb[0].mxu0
      %v1281 = vadd.f32 %v1128, %v1280
      %v1282 = vpop.f32.mrb[0].mxu0
      %v1283 = vpop.f32.mrb[0].mxu0
      %v1284 = vadd.f32 %v1131, %v1283
      %v1285 = vpop.f32.mrb[0].mxu0
      %1286 = vmatprep.mubr.bf16.mxu0 %v678
      %1287 = vmatmul.mubr.bf16.gmra.mrb[0].mxu0 %v677
      %v1288 = vpop.f32.mrb[0].mxu0
      %v1289 = vadd.f32 %v1136, %v1288
      %v1290 = vpop.f32.mrb[0].mxu0
      %v1291 = vpop.f32.mrb[0].mxu0
      %v1292 = vadd.f32 %v1139, %v1291
      %v1293 = vpop.f32.mrb[0].mxu0
      %1294 = vmatprep.mubr.bf16.mxu0 %v683
      %1295 = vmatmul.mubr.bf16.gmra.mrb[0].mxu0 %v682
      %v1296 = vpop.f32.mrb[0].mxu0
      %v1297 = vadd.f32 %v1144, %v1296
      %v1298 = vpop.f32.mrb[0].mxu0
      %v1299 = vpop.f32.mrb[0].mxu0
      %v1300 = vadd.f32 %v1147, %v1299
      %v1301 = vpop.f32.mrb[0].mxu0
      %1302 = vmatprep.mubr.bf16.mxu0 %v688
      %1303 = vmatmul.mubr.bf16.gmra.mrb[0].mxu0 %v687
      %v1304 = vpop.f32.mrb[0].mxu0
      %v1305 = vadd.f32 %v1152, %v1304
      %v1306 = vpop.f32.mrb[0].mxu0
      %v1307 = vpop.f32.mrb[0].mxu0
      %v1308 = vadd.f32 %v1155, %v1307
      %v1309 = vpop.f32.mrb[0].mxu0
      %1310 = vdwg.mxu0
      %1311 = vmatprep.subr.bf16.mxu0 0
      %1312 = vmatpush1.bf16.msra.mxu0 %v957
      %1313 = vmatprep.subr.bf16.mxu0 0
      %1314 = vmatpush1.bf16.msra.mxu0 %v958
      %1315 = vmatprep.subr.bf16.mxu0 0
      %1316 = vmatpush1.bf16.msra.mxu0 %v959
      %1317 = vmatprep.subr.bf16.mxu0 0
      %1318 = vmatpush1.bf16.msra.mxu0 %v960
      %1319 = vmatprep.subr.bf16.mxu0 0
      %1320 = vmatpush1.bf16.msra.mxu0 %v961
      %1321 = vmatprep.subr.bf16.mxu0 0
      %1322 = vmatpush1.bf16.msra.mxu0 %v962
      %1323 = vmatprep.subr.bf16.mxu0 0
      %1324 = vmatpush1.bf16.msra.mxu0 %v963
      %1325 = vmatprep.subr.bf16.mxu0 0
      %1326 = vmatpush1.bf16.msra.mxu0 %v964
      %1327 = vmatprep.subr.bf16.mxu0 0
      %1328 = vmatpush1.bf16.msra.mxu0 0
      %1329 = vmatprep.subr.bf16.mxu0 0
      %1330 = vmatpush1.bf16.msra.mxu0 0
      %1331 = vmatprep.subr.bf16.mxu0 0
      %1332 = vmatpush1.bf16.msra.mxu0 0
      %1333 = vmatprep.subr.bf16.mxu0 0
      %1334 = vmatpush1.bf16.msra.mxu0 0
      %1335 = vmatprep.subr.bf16.mxu0 0
      %1336 = vmatpush1.bf16.msra.mxu0 0
      %1337 = vmatprep.subr.bf16.mxu0 0
      %1338 = vmatpush1.bf16.msra.mxu0 0
      %1339 = vmatprep.subr.bf16.mxu0 0
      %1340 = vmatpush1.bf16.msra.mxu0 0
      %1341 = vmatprep.subr.bf16.mxu0 0
      %1342 = vmatpush1.bf16.msra.mxu0 0
      %1343 = vmatprep.mubr.bf16.mxu0 0
      %1344 = vmatmul.mubr.bf16.gmra.mrb[0].mxu0 %v619
      %v1345 = vpop.f32.mrb[0].mxu0
      %v1346 = vadd.f32 %v1193, %v1345
      %v1347 = vpop.f32.mrb[0].mxu0
      %v1348 = vpop.f32.mrb[0].mxu0
      %v1349 = vadd.f32 %v1196, %v1348
      %v1350 = vpop.f32.mrb[0].mxu0
      %1351 = vmatprep.mubr.bf16.mxu0 0
      %1352 = vmatmul.mubr.bf16.gmra.mrb[0].mxu0 %v624
      %v1353 = vpop.f32.mrb[0].mxu0
      %v1354 = vadd.f32 %v1201, %v1353
      %v1355 = vpop.f32.mrb[0].mxu0
      %v1356 = vpop.f32.mrb[0].mxu0
      %v1357 = vadd.f32 %v1204, %v1356
      %v1358 = vpop.f32.mrb[0].mxu0
      %1359 = vmatprep.mubr.bf16.mxu0 0
      %1360 = vmatmul.mubr.bf16.gmra.mrb[0].mxu0 %v629
      %v1361 = vpop.f32.mrb[0].mxu0
      %v1362 = vadd.f32 %v1209, %v1361
      %v1363 = vpop.f32.mrb[0].mxu0
      %v1364 = vpop.f32.mrb[0].mxu0
      %v1365 = vadd.f32 %v1212, %v1364
      %v1366 = vpop.f32.mrb[0].mxu0
      %1367 = vmatprep.mubr.bf16.mxu0 0
      %1368 = vmatmul.mubr.bf16.gmra.mrb[0].mxu0 %v634
      %v1369 = vpop.f32.mrb[0].mxu0
      %v1370 = vadd.f32 %v1217, %v1369
      %v1371 = vpop.f32.mrb[0].mxu0
      %v1372 = vpop.f32.mrb[0].mxu0
      %v1373 = vadd.f32 %v1220, %v1372
      %v1374 = vpop.f32.mrb[0].mxu0
      %1375 = vmatprep.mubr.bf16.mxu0 0
      %1376 = vmatmul.mubr.bf16.gmra.mrb[0].mxu0 %v639
      %v1377 = vpop.f32.mrb[0].mxu0
      %v1378 = vadd.f32 %v1225, %v1377
      %v1379 = vpop.f32.mrb[0].mxu0
      %v1380 = vpop.f32.mrb[0].mxu0
      %v1381 = vadd.f32 %v1228, %v1380
      %v1382 = vpop.f32.mrb[0].mxu0
      %1383 = vmatprep.mubr.bf16.mxu0 0
      %1384 = vmatmul.mubr.bf16.gmra.mrb[0].mxu0 %v644
      %v1385 = vpop.f32.mrb[0].mxu0
      %v1386 = vadd.f32 %v1233, %v1385
      %v1387 = vpop.f32.mrb[0].mxu0
      %v1388 = vpop.f32.mrb[0].mxu0
      %v1389 = vadd.f32 %v1236, %v1388
      %v1390 = vpop.f32.mrb[0].mxu0
      %1391 = vmatprep.mubr.bf16.mxu0 0
      %1392 = vmatmul.mubr.bf16.gmra.mrb[0].mxu0 %v649
      %v1393 = vpop.f32.mrb[0].mxu0
      %v1394 = vadd.f32 %v1241, %v1393
      %v1395 = vpop.f32.mrb[0].mxu0
      %v1396 = vpop.f32.mrb[0].mxu0
      %v1397 = vadd.f32 %v1244, %v1396
      %v1398 = vpop.f32.mrb[0].mxu0
      %1399 = vmatprep.mubr.bf16.mxu0 0
      %1400 = vmatmul.mubr.bf16.gmra.mrb[0].mxu0 %v654
      %v1401 = vpop.f32.mrb[0].mxu0
      %v1402 = vadd.f32 %v1249, %v1401
      %v1403 = vpop.f32.mrb[0].mxu0
      %v1404 = vpop.f32.mrb[0].mxu0
      %v1405 = vadd.f32 %v1252, %v1404
      %v1406 = vpop.f32.mrb[0].mxu0
      %1407 = vmatprep.mubr.bf16.mxu0 0
      %1408 = vmatmul.mubr.bf16.gmra.mrb[0].mxu0 %v659
      %v1409 = vpop.f32.mrb[0].mxu0
      %v1410 = vadd.f32 %v1257, %v1409
      %v1411 = vpop.f32.mrb[0].mxu0
      %v1412 = vpop.f32.mrb[0].mxu0
      %v1413 = vadd.f32 %v1260, %v1412
      %v1414 = vpop.f32.mrb[0].mxu0
      %1415 = vmatprep.mubr.bf16.mxu0 0
      %1416 = vmatmul.mubr.bf16.gmra.mrb[0].mxu0 %v664
      %v1417 = vpop.f32.mrb[0].mxu0
      %v1418 = vadd.f32 %v1265, %v1417
      %v1419 = vpop.f32.mrb[0].mxu0
      %v1420 = vpop.f32.mrb[0].mxu0
      %v1421 = vadd.f32 %v1268, %v1420
      %v1422 = vpop.f32.mrb[0].mxu0
      %1423 = vmatprep.mubr.bf16.mxu0 0
      %1424 = vmatmul.mubr.bf16.gmra.mrb[0].mxu0 %v669
      %v1425 = vpop.f32.mrb[0].mxu0
      %v1426 = vadd.f32 %v1273, %v1425
      %v1427 = vpop.f32.mrb[0].mxu0
      %v1428 = vpop.f32.mrb[0].mxu0
      %v1429 = vadd.f32 %v1276, %v1428
      %v1430 = vpop.f32.mrb[0].mxu0
      %1431 = vmatprep.mubr.bf16.mxu0 0
      %1432 = vmatmul.mubr.bf16.gmra.mrb[0].mxu0 %v674
      %v1433 = vpop.f32.mrb[0].mxu0
      %v1434 = vadd.f32 %v1281, %v1433
      %v1435 = vpop.f32.mrb[0].mxu0
      %v1436 = vpop.f32.mrb[0].mxu0
      %v1437 = vadd.f32 %v1284, %v1436
      %v1438 = vpop.f32.mrb[0].mxu0
      %1439 = vmatprep.mubr.bf16.mxu0 0
      %1440 = vmatmul.mubr.bf16.gmra.mrb[0].mxu0 %v679
      %v1441 = vpop.f32.mrb[0].mxu0
      %v1442 = vadd.f32 %v1289, %v1441
      %v1443 = vpop.f32.mrb[0].mxu0
      %v1444 = vpop.f32.mrb[0].mxu0
      %v1445 = vadd.f32 %v1292, %v1444
      %v1446 = vpop.f32.mrb[0].mxu0
      %1447 = vmatprep.mubr.bf16.mxu0 0
      %1448 = vmatmul.mubr.bf16.gmra.mrb[0].mxu0 %v684
      %v1449 = vpop.f32.mrb[0].mxu0
      %v1450 = vadd.f32 %v1297, %v1449
      %v1451 = vpop.f32.mrb[0].mxu0
      %v1452 = vpop.f32.mrb[0].mxu0
      %v1453 = vadd.f32 %v1300, %v1452
      %v1454 = vpop.f32.mrb[0].mxu0
      %1455 = vmatprep.mubr.bf16.mxu0 0
      %1456 = vmatmul.mubr.bf16.gmra.mrb[0].mxu0 %v689
      %v1457 = vpop.f32.mrb[0].mxu0
      %v1458 = vadd.f32 %v1305, %v1457
      %v1459 = vpop.f32.mrb[0].mxu0
      %v1460 = vpop.f32.mrb[0].mxu0
      %v1461 = vadd.f32 %v1308, %v1460
      %v1462 = vpop.f32.mrb[0].mxu0
      %1463 = vdwg.mxu0
      %v1464 = vld [vmem:[%s2] sm:$0x1]
      %v1466 = vlaneseq
      %v1467 = vshrl.u32 %v1466, 7
      %v1468 = vsub.s32 0, %v1467
      %v1469 = vrot.slane %v1464, %v1468
      %v1471 = vmul.f32 %v1346, %v1469
      %v1472 = vmul.f32 %v1349, %v1469
      %v1473 = vmul.f32 %v1354, %v1469
      %v1474 = vmul.f32 %v1357, %v1469
      %v1475 = vmul.f32 %v1362, %v1469
      %v1476 = vmul.f32 %v1365, %v1469
      %v1477 = vmul.f32 %v1370, %v1469
      %v1478 = vmul.f32 %v1373, %v1469
      %v1479 = vmul.f32 %v1378, %v1469
      %v1480 = vmul.f32 %v1381, %v1469
      %v1481 = vmul.f32 %v1386, %v1469
      %v1482 = vmul.f32 %v1389, %v1469
      %v1483 = vmul.f32 %v1394, %v1469
      %v1484 = vmul.f32 %v1397, %v1469
      %v1485 = vmul.f32 %v1402, %v1469
      %v1486 = vmul.f32 %v1405, %v1469
      %v1487 = vmul.f32 %v1410, %v1469
      %v1488 = vmul.f32 %v1413, %v1469
      %v1489 = vmul.f32 %v1418, %v1469
      %v1490 = vmul.f32 %v1421, %v1469
      %v1491 = vmul.f32 %v1426, %v1469
      %v1492 = vmul.f32 %v1429, %v1469
      %v1493 = vmul.f32 %v1434, %v1469
      %v1494 = vmul.f32 %v1437, %v1469
      %v1495 = vmul.f32 %v1442, %v1469
      %v1496 = vmul.f32 %v1445, %v1469
      %v1497 = vmul.f32 %v1450, %v1469
      %v1498 = vmul.f32 %v1453, %v1469
      %v1499 = vmul.f32 %v1458, %v1469
      %v1500 = vmul.f32 %v1461, %v1469
      %v1501 = vld [vmem:[%s3] sm:$0x1]
      %v1503 = vlaneseq
      %v1504 = vshrl.u32 %v1503, 7
      %v1505 = vsub.s32 0, %v1504
      %v1506 = vrot.slane %v1501, %v1505
      %v1508 = vadd.f32 %v1471, %v1506
      %v1509 = vadd.f32 %v1472, %v1506
      %v1510 = vadd.f32 %v1473, %v1506
      %v1511 = vadd.f32 %v1474, %v1506
      %v1512 = vadd.f32 %v1475, %v1506
      %v1513 = vadd.f32 %v1476, %v1506
      %v1514 = vadd.f32 %v1477, %v1506
      %v1515 = vadd.f32 %v1478, %v1506
      %v1516 = vadd.f32 %v1479, %v1506
      %v1517 = vadd.f32 %v1480, %v1506
      %v1518 = vadd.f32 %v1481, %v1506
      %v1519 = vadd.f32 %v1482, %v1506
      %v1520 = vadd.f32 %v1483, %v1506
      %v1521 = vadd.f32 %v1484, %v1506
      %v1522 = vadd.f32 %v1485, %v1506
      %v1523 = vadd.f32 %v1486, %v1506
      %v1524 = vadd.f32 %v1487, %v1506
      %v1525 = vadd.f32 %v1488, %v1506
      %v1526 = vadd.f32 %v1489, %v1506
      %v1527 = vadd.f32 %v1490, %v1506
      %v1528 = vadd.f32 %v1491, %v1506
      %v1529 = vadd.f32 %v1492, %v1506
      %v1530 = vadd.f32 %v1493, %v1506
      %v1531 = vadd.f32 %v1494, %v1506
      %v1532 = vadd.f32 %v1495, %v1506
      %v1533 = vadd.f32 %v1496, %v1506
      %v1534 = vadd.f32 %v1497, %v1506
      %v1535 = vadd.f32 %v1498, %v1506
      %v1536 = vadd.f32 %v1499, %v1506
      %v1537 = vadd.f32 %v1500, %v1506
      %1538 = vst [vmem:[%s202] sm:$0xff] %v1508
      %1539 = vst [vmem:[%s202 + $0x8] sm:$0xff] %v1509
      %1540 = vst [vmem:[%s202 + $0x10] sm:$0xff] %v1510
      %1541 = vst [vmem:[%s202 + $0x18] sm:$0xff] %v1511
      %1542 = vst [vmem:[%s202 + $0x20] sm:$0xff] %v1512
      %1543 = vst [vmem:[%s202 + $0x28] sm:$0xff] %v1513
      %1544 = vst [vmem:[%s202 + $0x30] sm:$0xff] %v1514
      %1545 = vst [vmem:[%s202 + $0x38] sm:$0xff] %v1515
      %1546 = vst [vmem:[%s202 + $0x40] sm:$0xff] %v1516
      %1547 = vst [vmem:[%s202 + $0x48] sm:$0xff] %v1517
      %1548 = vst [vmem:[%s202 + $0x50] sm:$0xff] %v1518
      %1549 = vst [vmem:[%s202 + $0x58] sm:$0xff] %v1519
      %1550 = vst [vmem:[%s202 + $0x60] sm:$0xff] %v1520
      %1551 = vst [vmem:[%s202 + $0x68] sm:$0xff] %v1521
      %1552 = vst [vmem:[%s202 + $0x70] sm:$0xff] %v1522
      %1553 = vst [vmem:[%s202 + $0x78] sm:$0xff] %v1523
      %1554 = vst [vmem:[%s202 + $0x80] sm:$0xff] %v1524
      %1555 = vst [vmem:[%s202 + $0x88] sm:$0xff] %v1525
      %1556 = vst [vmem:[%s202 + $0x90] sm:$0xff] %v1526
      %1557 = vst [vmem:[%s202 + $0x98] sm:$0xff] %v1527
      %1558 = vst [vmem:[%s202 + $0xa0] sm:$0xff] %v1528
      %1559 = vst [vmem:[%s202 + $0xa8] sm:$0xff] %v1529
      %1560 = vst [vmem:[%s202 + $0xb0] sm:$0xff] %v1530
      %1561 = vst [vmem:[%s202 + $0xb8] sm:$0xff] %v1531
      %1562 = vst [vmem:[%s202 + $0xc0] sm:$0xff] %v1532
      %1563 = vst [vmem:[%s202 + $0xc8] sm:$0xff] %v1533
      %1564 = vst [vmem:[%s202 + $0xd0] sm:$0xff] %v1534
      %1565 = vst [vmem:[%s202 + $0xd8] sm:$0xff] %v1535
      %1566 = vst [vmem:[%s202 + $0xe0] sm:$0xff] %v1536
      %1567 = vst [vmem:[%s202 + $0xe8] sm:$0xff] %v1537
      %s1568 = smul.u32 30, %s15
      %p1569 = scmp.lt.s32.totalorder %s1568, 59
      %s1570 = scalar_select %p1569, %s1568, 59
      %s1571 = smul.addr %s1570, 8
      %s1572 = scalar_lea.vmem %s4, %s1571
      // Predicated region
      $region37: #{tacotron2_forward.13} parent=35 // pred_check
        %p1573 = pneg %p122
      $region38: #{tacotron2_forward.13} parent=35 // pred_check_branch
        %1575 = sbr.rel (%p1573) target = $region40
      $region39: #{tacotron2_forward.13} parent=35 // pred_region
        %s1576 = smul.u32 30, %s15
      $region40: #{tacotron2_forward.13} parent=35 // pred_fallthru
        _
    $region36: #{tacotron2_forward.13} parent=5 // pred_fallthru
      _
    %p1577 = scmp.le.s32.totalorder 2, %s10
    // Predicated region
    $region41: #{tacotron2_forward.13} parent=5 // pred_check
      %p1578 = pneg %p1577
    $region42: #{tacotron2_forward.13} parent=5 // pred_check_branch
      %1580 = sbr.rel (%p1578) target = $region44
    $region43: #{tacotron2_forward.13} parent=5 // pred_region
      %s1581 = ssub.s32 %s10, 2
      // Predicated region
      $region45: #{tacotron2_forward.13} parent=43 // pred_check
        %p1582 = pneg %p128
      $region46: #{tacotron2_forward.13} parent=43 // pred_check_branch
        %1584 = sbr.rel (%p1582) target = $region48
      $region47: #{tacotron2_forward.13} parent=43 // pred_region
        %s1585 = smul.u32 30, %s16
        %p1586 = scmp.lt.s32.totalorder %s1585, 59
        %s1587 = scalar_select %p1586, %s1585, 59
        %s1588 = smul.addr %s1587, 8
        %s1589 = scalar_lea.vmem %s4, %s1588
      $region48: #{tacotron2_forward.13} parent=43 // pred_fallthru
        _
    $region44: #{tacotron2_forward.13} parent=5 // pred_fallthru
      _
  $region6: #{tacotron2_forward.13} parent=0 // loop_footer
    %s14 = sadd.s32 1, %s10
  $region7: #{tacotron2_forward.13} parent=0 // loop_footer_branch
    %9 = sbr.rel target = $region3
  $region8: #{tacotron2_forward.13} parent=0 // loop_exit
    _

</llo_original>
